<compile_context>
chip_gen: v7x
topology: tpu7x:2x2x1
jax: 0.10.0
libtpu: 0.0.40
codegen_flags: <defaults>
</compile_context>

<pallas_src>
import math
import functools

import jax
import jax.numpy as jnp
from jax import lax
from jax.experimental import pallas as pl
from jax.experimental.pallas import tpu as pltpu

# Above default scoped VMEM (16/32 MiB), below v7x's 64 MiB physical.
_VMEM_LIMIT = 48 * 1024 * 1024


def _ln(v, g, b, eps=1e-5):
    mu = jnp.mean(v, axis=-1, keepdims=True)
    var = jnp.mean(jnp.square(v - mu), axis=-1, keepdims=True)
    return (v - mu) * lax.rsqrt(var + eps) * g + b


# ----------------------------------------------------------------------------
# Fused transformer layer kernel (attention + FFN + both LayerNorms)
# ----------------------------------------------------------------------------

def layer_kernel(x_ref, keep_ref, bias_ref,
                 wqkv_ref, bqkv_ref, wo_ref, bo_ref, ln1g_ref, ln1b_ref,
                 w1_ref, b1_ref, w2_ref, b2_ref, ln2g_ref, ln2b_ref,
                 o_ref, attn_sc, pad_sc,
                 *, nheads, T, H, F, K, pad_l, tq):
    f32, bf16 = jnp.float32, jnp.bfloat16
    D = H // nheads
    scale = 1.0 / math.sqrt(D)

    x = x_ref[...]                 # (T, H) f32
    keep = keep_ref[...]           # (T, 1) f32, 1 = valid
    bias = bias_ref[...]           # (1, T) f32, -1e9 on padded keys
    xb = x.astype(bf16)            # cast once, reused (v5e VALU budget)

    # ---- fused QKV projection: one (H, 3H) MXU matmul --------------------
    qkv = jnp.dot(xb, wqkv_ref[...],
                  preferred_element_type=f32) + bqkv_ref[...]   # (T, 3H)

    # ---- multi-head attention, query-tiled so live scores are (tq, T);
    #      per-head outputs written to a bf16 scratch, then ONE (T,H)x(H,H)
    #      output projection -----------------------------------------------
    # TODO(synk): per-head column slices are not 128-lane aligned when
    # D < 128; padding D to 128 would remove the per-head relayout copies.
    nq = (T + tq - 1) // tq
    for hd in range(nheads):
        k = qkv[:, H + hd * D:H + (hd + 1) * D].astype(bf16)          # (T, D)
        v = qkv[:, 2 * H + hd * D:2 * H + (hd + 1) * D].astype(bf16)  # (T, D)
        for qi in range(nq):
            lo = qi * tq
            hi = min(T, lo + tq)
            q = qkv[lo:hi, hd * D:(hd + 1) * D].astype(bf16)          # (tq, D)
            s = lax.dot_general(q, k, (((1,), (1,)), ((), ())),
                                preferred_element_type=f32) * scale + bias
            s = s - jnp.max(s, axis=-1, keepdims=True)
            p = jnp.exp(s)
            p = p * pl.reciprocal(jnp.sum(p, axis=-1, keepdims=True),
                                  approx=True)
            o_h = jnp.dot(p.astype(bf16), v, preferred_element_type=f32)
            attn_sc[lo:hi, hd * D:(hd + 1) * D] = o_h.astype(bf16)

    attn = jnp.dot(attn_sc[...], wo_ref[...],
                   preferred_element_type=f32) + bo_ref[...]           # (T, H)

    x1 = _ln(x + attn, ln1g_ref[...], ln1b_ref[...]) * keep

    # ---- position-wise FFN: conv1d(K) + ReLU + conv1d(1), 'same' padding.
    #      Only the K-1 halo rows of the scratch are zeroed per step. -------
    if pad_l > 0:
        pad_sc[0:pad_l, :] = jnp.zeros((pad_l, H), f32)
    if K - 1 - pad_l > 0:
        pad_sc[pad_l + T:, :] = jnp.zeros((K - 1 - pad_l, H), f32)
    pad_sc[pad_l:pad_l + T, :] = x1
    acc = jnp.zeros((T, F), f32)
    for kk in range(K):
        acc = acc + jnp.dot(pad_sc[kk:kk + T, :].astype(bf16), w1_ref[kk],
                            preferred_element_type=f32)
    hmid = jnp.maximum(acc + b1_ref[...], 0.0)
    h2 = jnp.dot(hmid.astype(bf16), w2_ref[...],
                 preferred_element_type=f32) + b2_ref[...]

    o_ref[...] = _ln(x1 + h2, ln2g_ref[...], ln2b_ref[...]) * keep


def fused_transformer_layer(x, keep, bias, p, nheads):
    B, T, H = x.shape
    K, _, F = p["ffn_w1"].shape
    pad_l = (K - 1) // 2
    tq = T if T <= 256 else 256     # bound live attention intermediates

    xmap = lambda b: (b, 0, 0)
    w2d = lambda b: (0, 0)
    w3d = lambda b: (0, 0, 0)

    return pl.pallas_call(
        functools.partial(layer_kernel, nheads=nheads, T=T, H=H, F=F, K=K,
                          pad_l=pad_l, tq=tq),
        out_shape=jax.ShapeDtypeStruct((B, T, H), jnp.float32),
        grid=(B,),
        in_specs=[
            pl.BlockSpec((None, T, H), xmap),        # x
            pl.BlockSpec((None, T, 1), xmap),        # keep mask (rows)
            pl.BlockSpec((None, 1, T), xmap),        # additive key bias
            pl.BlockSpec((H, 3 * H), w2d),           # wqkv (bf16)
            pl.BlockSpec((1, 3 * H), w2d),           # bqkv
            pl.BlockSpec((H, H), w2d),               # wo (bf16)
            pl.BlockSpec((1, H), w2d),               # bo
            pl.BlockSpec((1, H), w2d),               # ln1 gamma
            pl.BlockSpec((1, H), w2d),               # ln1 beta
            pl.BlockSpec((K, H, F), w3d),            # ffn conv1 (bf16)
            pl.BlockSpec((1, F), w2d),               # ffn b1
            pl.BlockSpec((F, H), w2d),               # ffn conv2 k=1 (bf16)
            pl.BlockSpec((1, H), w2d),               # ffn b2
            pl.BlockSpec((1, H), w2d),               # ln2 gamma
            pl.BlockSpec((1, H), w2d),               # ln2 beta
        ],
        out_specs=pl.BlockSpec((None, T, H), xmap),
        scratch_shapes=[pltpu.VMEM((T, H), jnp.bfloat16),           # attn concat
                        pltpu.VMEM((T + K - 1, H), jnp.float32)],   # conv pad
        compiler_params=pltpu.CompilerParams(
            dimension_semantics=("parallel",),
            vmem_limit_bytes=_VMEM_LIMIT),
    )(x, keep, bias, p["wqkv"], p["bqkv"], p["wo"], p["bo"],
      p["ln1_g"], p["ln1_b"], p["ffn_w1"], p["ffn_b1"],
      p["ffn_w2"], p["ffn_b2"], p["ln2_g"], p["ln2_b"])


# ----------------------------------------------------------------------------
# Fused variance predictor kernel (conv+ReLU+LN, conv+ReLU+LN, proj, mask)
# grid = (B, 3): x block index depends only on b, so the input is DMA'd once
# per batch row and stays resident while the 3 predictors iterate.
# ----------------------------------------------------------------------------

def predictor_kernel(x_ref, keep_ref,
                     w1_ref, b1_ref, g1_ref, be1_ref,
                     w2_ref, b2_ref, g2_ref, be2_ref,
                     wo_ref, bo_ref, o_ref, pad_sc,
                     *, T, H, F, K, pad_l):
    f32, bf16 = jnp.float32, jnp.bfloat16
    Cmax = max(H, F)

    # zero only the halo rows (cheap, megacore-safe)
    if pad_l > 0:
        pad_sc[0:pad_l, :] = jnp.zeros((pad_l, Cmax), f32)
    if K - 1 - pad_l > 0:
        pad_sc[pad_l + T:, :] = jnp.zeros((K - 1 - pad_l, Cmax), f32)

    x = x_ref[...]                                   # (T, H)
    pad_sc[pad_l:pad_l + T, :H] = x
    acc = jnp.zeros((T, F), f32)
    for kk in range(K):
        acc = acc + jnp.dot(pad_sc[kk:kk + T, :H].astype(bf16), w1_ref[kk],
                            preferred_element_type=f32)
    h = _ln(jnp.maximum(acc + b1_ref[...], 0.0), g1_ref[...], be1_ref[...])

    pad_sc[pad_l:pad_l + T, :F] = h
    acc = jnp.zeros((T, F), f32)
    for kk in range(K):
        acc = acc + jnp.dot(pad_sc[kk:kk + T, :F].astype(bf16), w2_ref[kk],
                            preferred_element_type=f32)
    h = _ln(jnp.maximum(acc + b2_ref[...], 0.0), g2_ref[...], be2_ref[...])

    # lane-dense (1, T) output: contract F between (1, F) weight and (T, F) h.
    out_row = lax.dot_general(wo_ref[...], h, (((1,), (1,)), ((), ())),
                              preferred_element_type=f32)     # (1, T)
    o_ref[...] = (out_row + bo_ref[...]) * keep_ref[...]


def fused_variance_predictors(x, keep_row, vp):
    B, T, H = x.shape
    _, K, _, F = vp["w1"].shape
    pad_l = (K - 1) // 2

    xmap = lambda b, pi: (b, 0, 0)      # constant across inner axis -> 1 DMA / b
    pw4 = lambda b, pi: (pi, 0, 0, 0)
    pw3 = lambda b, pi: (pi, 0, 0)

    out = pl.pallas_call(
        functools.partial(predictor_kernel, T=T, H=H, F=F, K=K, pad_l=pad_l),
        out_shape=jax.ShapeDtypeStruct((3, B, 1, T), jnp.float32),
        grid=(B, 3),
        in_specs=[
            pl.BlockSpec((None, T, H), xmap),        # shared input
            pl.BlockSpec((None, 1, T), xmap),        # keep mask, lane-dense
            pl.BlockSpec((None, K, H, F), pw4),
            pl.BlockSpec((None, 1, F), pw3),
            pl.BlockSpec((None, 1, F), pw3),
            pl.BlockSpec((None, 1, F), pw3),
            pl.BlockSpec((None, K, F, F), pw4),
            pl.BlockSpec((None, 1, F), pw3),
            pl.BlockSpec((None, 1, F), pw3),
            pl.BlockSpec((None, 1, F), pw3),
            pl.BlockSpec((None, 1, F), pw3),
            pl.BlockSpec((None, 1, 1), pw3),
        ],
        out_specs=pl.BlockSpec((None, None, 1, T), lambda b, pi: (pi, b, 0, 0)),
        scratch_shapes=[pltpu.VMEM((T + K - 1, max(H, F)), jnp.float32)],
        compiler_params=pltpu.CompilerParams(
            dimension_semantics=("parallel", "arbitrary"),
            vmem_limit_bytes=_VMEM_LIMIT),
    )(x, keep_row, vp["w1"], vp["b1"], vp["g1"], vp["be1"],
      vp["w2"], vp["b2"], vp["g2"], vp["be2"], vp["wo"], vp["bo"])
    return out[:, :, 0, :]          # (3, B, T)


# ----------------------------------------------------------------------------
# Fused postnet kernel (3 convs + tanh + residual add)
# ----------------------------------------------------------------------------

def postnet_kernel(x_ref, w1_ref, b1_ref, w2_ref, b2_ref, w3_ref, b3_ref,
                   o_ref, pad_sc, *, T, C0, C1, K, pad_l):
    # TODO(synk): Postnet BatchNorm1d (eval-mode affine from running stats) and
    # dropout are omitted; fold BN gamma/beta/mean/var into conv weights/biases
    # to match the PyTorch reference exactly.
    f32, bf16 = jnp.float32, jnp.bfloat16
    Cmax = max(C0, C1)
    x = x_ref[...]                                   # (T, C0)

    if pad_l > 0:
        pad_sc[0:pad_l, :] = jnp.zeros((pad_l, Cmax), f32)
    if K - 1 - pad_l > 0:
        pad_sc[pad_l + T:, :] = jnp.zeros((K - 1 - pad_l, Cmax), f32)

    pad_sc[pad_l:pad_l + T, :C0] = x
    acc = jnp.zeros((T, C1), f32)
    for kk in range(K):
        acc = acc + jnp.dot(pad_sc[kk:kk + T, :C0].astype(bf16), w1_ref[kk],
                            preferred_element_type=f32)
    h = jnp.tanh(acc + b1_ref[...])

    pad_sc[pad_l:pad_l + T, :C1] = h
    acc = jnp.zeros((T, C1), f32)
    for kk in range(K):
        acc = acc + jnp.dot(pad_sc[kk:kk + T, :C1].astype(bf16), w2_ref[kk],
                            preferred_element_type=f32)
    h = jnp.tanh(acc + b2_ref[...])

    pad_sc[pad_l:pad_l + T, :C1] = h
    acc = jnp.zeros((T, C0), f32)
    for kk in range(K):
        acc = acc + jnp.dot(pad_sc[kk:kk + T, :C1].astype(bf16), w3_ref[kk],
                            preferred_element_type=f32)
    o_ref[...] = acc + b3_ref[...] + x               # fused +outs residual


def pallas_postnet(x, p):
    # TODO(synk): on v7x, add a second (time-tile) parallel grid axis with
    # K-1 row halos so both TensorCores stay busy at small batch.
    B, T, C0 = x.shape
    K, _, C1 = p["w1"].shape
    pad_l = (K - 1) // 2
    xmap = lambda b: (b, 0, 0)
    w3d = lambda b: (0, 0, 0)
    w2d = lambda b: (0, 0)
    return pl.pallas_call(
        functools.partial(postnet_kernel, T=T, C0=C0, C1=C1, K=K, pad_l=pad_l),
        out_shape=jax.ShapeDtypeStruct((B, T, C0), jnp.float32),
        grid=(B,),
        in_specs=[
            pl.BlockSpec((None, T, C0), xmap),
            pl.BlockSpec((K, C0, C1), w3d), pl.BlockSpec((1, C1), w2d),
            pl.BlockSpec((K, C1, C1), w3d), pl.BlockSpec((1, C1), w2d),
            pl.BlockSpec((K, C1, C0), w3d), pl.BlockSpec((1, C0), w2d),
        ],
        out_specs=pl.BlockSpec((None, T, C0), xmap),
        scratch_shapes=[pltpu.VMEM((T + K - 1, max(C0, C1)), jnp.float32)],
        compiler_params=pltpu.CompilerParams(
            dimension_semantics=("parallel",),
            vmem_limit_bytes=_VMEM_LIMIT),
    )(x, p["w1"], p["b1"], p["w2"], p["b2"], p["w3"], p["b3"])


# ----------------------------------------------------------------------------
# Feats projection: row-tiled, pipelined linear with lane-dense (128-padded)
# output channels.
# ----------------------------------------------------------------------------

def _linear_kernel(x_ref, w_ref, b_ref, o_ref):
    o_ref[...] = jnp.dot(x_ref[...].astype(jnp.bfloat16), w_ref[...],
                         preferred_element_type=jnp.float32) + b_ref[...]


def pallas_linear(x, w, b):
    orig = x.shape
    Kd = orig[-1]
    N = w.shape[1]
    Np = ((N + 127) // 128) * 128                 # lane-dense output stores
    w_p = jnp.zeros((Kd, Np), w.dtype).at[:, :N].set(w)
    b_p = jnp.zeros((1, Np), jnp.float32).at[:, :N].set(b.reshape(1, N))
    x2 = x.reshape(-1, Kd)
    rows = x2.shape[0]
    rt = rows if rows < 256 else 256              # row tile (full block if tiny)
    out = pl.pallas_call(
        _linear_kernel,
        out_shape=jax.ShapeDtypeStruct((rows, Np), jnp.float32),
        grid=(pl.cdiv(rows, rt),),
        in_specs=[pl.BlockSpec((rt, Kd), lambda i: (i, 0)),
                  pl.BlockSpec((Kd, Np), lambda i: (0, 0)),
                  pl.BlockSpec((1, Np), lambda i: (0, 0))],
        out_specs=pl.BlockSpec((rt, Np), lambda i: (i, 0)),
        compiler_params=pltpu.CompilerParams(
            dimension_semantics=("parallel",),
            vmem_limit_bytes=_VMEM_LIMIT),
    )(x2, w_p, b_p)
    return out[:, :N].reshape(orig[:-1] + (N,))


# ----------------------------------------------------------------------------
# Model glue
# ----------------------------------------------------------------------------

def get_mask_from_lengths(lengths, max_len):
    # True = padded position (FastSpeech2 convention).
    ids = jnp.arange(max_len)[None, :]
    return ids >= lengths[:, None]


def encoder_fwd(text, keep, bias, params, nheads):
    emb = jnp.take(params["tok_emb"], text, axis=0)          # (B, T, H)
    T = text.shape[1]
    x = (emb + params["pe"][:T][None]) * keep
    for lp in params["layers"]:
        x = fused_transformer_layer(x, keep, bias, lp, nheads)
    return x, emb


def decoder_fwd(x, keep, bias, params, nheads):
    T = x.shape[1]
    x = (x + params["pe"][:T][None]) * keep
    for lp in params["layers"]:
        x = fused_transformer_layer(x, keep, bias, lp, nheads)
    return x


def variance_adaptor(hs, keep_txt, spk_emb, pitch_t, energy_t, duration_t,
                     params, max_mel):
    hs = hs + spk_emb[:, None, :]

    keep_row = jnp.swapaxes(keep_txt, 1, 2)                    # (B, 1, T)
    preds = fused_variance_predictors(hs, keep_row, params)    # (3, B, T)
    log_d_outs, p_outs, e_outs = preds[0], preds[1], preds[2]

    # pitch/energy scalar embeddings (Conv1d(1, H, k=1) equivalent) -- glue
    pitch_emb = (pitch_t[..., None] * params["pitch_emb_w"][None, None, :]
                 + params["pitch_emb_b"])
    energy_emb = (energy_t[..., None] * params["energy_emb_w"][None, None, :]
                  + params["energy_emb_b"])
    hs = (hs + pitch_emb + energy_emb) * keep_txt

    # length regulator (gather by cumulative durations); max_mel is STATIC
    mel_lens = jnp.sum(duration_t, axis=1).astype(jnp.int32)
    cum = jnp.cumsum(duration_t, axis=1)                       # (B, T)
    pos = jnp.arange(max_mel)
    idx = jnp.sum(pos[None, None, :] >= cum[:, :, None], axis=1)
    idx = jnp.clip(idx, 0, hs.shape[1] - 1)
    hs_mel = jnp.take_along_axis(hs, idx[..., None], axis=1)   # (B, max_mel, H)
    mel_mask = get_mask_from_lengths(mel_lens, max_mel)
    hs_mel = hs_mel * (~mel_mask).astype(jnp.float32)[..., None]
    return hs_mel, log_d_outs, p_outs, e_outs, mel_lens, mel_mask


def fastspeech2_forward(params, cfg, text, text_lengths, feats, feats_lengths,
                        duration, pitch, energy, sids):
    nheads = cfg["nheads"]
    # Static max lengths from array shapes -> no host syncs, fully jittable.
    max_text_length = text.shape[1]
    max_feats_length = feats.shape[1]
    text_masks = get_mask_from_lengths(text_lengths, max_text_length)
    feats_masks = get_mask_from_lengths(feats_lengths, max_feats_length)

    keep_txt = (~text_masks).astype(jnp.float32)[..., None]    # (B, T, 1)
    bias_txt = jnp.where(text_masks, -1e9, 0.0)[:, None, :]    # (B, 1, T)

    hs, text_embs = encoder_fwd(text, keep_txt, bias_txt,
                                params["encoder"], nheads)
    # use_cvae=False, spk_dims=-1  ->  nn.Embedding speaker lookup
    sid_embs = jnp.take(params["spk_emb"], sids, axis=0)

    (hs_mel, log_d_outs, p_outs, e_outs, feats_lengths_out, feats_masks_out) = (
        variance_adaptor(hs, keep_txt, sid_embs, pitch, energy, duration,
                         params["variance"], max_feats_length))
    attn_outs = None   # learn_alignment=False (duration target supplied)

    keep_mel = (~feats_masks_out).astype(jnp.float32)[..., None]
    bias_mel = jnp.where(feats_masks_out, -1e9, 0.0)[:, None, :]
    hs_dec = decoder_fwd(hs_mel, keep_mel, bias_mel, params["decoder"], nheads)

    outs = pallas_linear(hs_dec, params["feats_w"], params["feats_b"])
    postnet_outs = pallas_postnet(outs, params["postnet"])     # includes +outs
    accent_probs = None
    return ((outs, postnet_outs, log_d_outs, p_outs, e_outs,
             text_lengths, text_masks, feats_lengths_out, feats_masks_out,
             accent_probs, attn_outs, sid_embs),
            (duration, pitch, energy))


# ----------------------------------------------------------------------------
# Deterministic parameter construction
# ----------------------------------------------------------------------------

def _key_stream(key):
    while True:
        key, sub = jax.random.split(key)
        yield sub


def _init(k, shape, scale=0.02):
    return scale * jax.random.normal(k, shape, jnp.float32)


def _sinusoid_pe(max_len, dim):
    pos = jnp.arange(max_len, dtype=jnp.float32)[:, None]
    i = jnp.arange(dim, dtype=jnp.float32)[None, :]
    angle = pos / jnp.power(10000.0, (2.0 * jnp.floor(i / 2.0)) / dim)
    return jnp.where(i % 2 == 0, jnp.sin(angle), jnp.cos(angle))


def _layer_params(ki, H, F, K):
    bf16 = jnp.bfloat16
    return dict(
        wqkv=_init(next(ki), (H, 3 * H)).astype(bf16),
        bqkv=jnp.zeros((1, 3 * H), jnp.float32),
        wo=_init(next(ki), (H, H)).astype(bf16),
        bo=jnp.zeros((1, H), jnp.float32),
        ln1_g=jnp.ones((1, H), jnp.float32), ln1_b=jnp.zeros((1, H), jnp.float32),
        ffn_w1=_init(next(ki), (K, H, F)).astype(bf16),
        ffn_b1=jnp.zeros((1, F), jnp.float32),
        ffn_w2=_init(next(ki), (F, H)).astype(bf16),
        ffn_b2=jnp.zeros((1, H), jnp.float32),
        ln2_g=jnp.ones((1, H), jnp.float32), ln2_b=jnp.zeros((1, H), jnp.float32),
    )


def _variance_params(ki, H, F, K):
    bf16 = jnp.bfloat16

    def stack3(shape):
        return jnp.stack([_init(next(ki), shape) for _ in range(3)])

    return dict(
        # stacked predictor weights: order = [duration, pitch, energy]
        w1=stack3((K, H, F)).astype(bf16),
        b1=jnp.zeros((3, 1, F), jnp.float32),
        g1=jnp.ones((3, 1, F), jnp.float32),
        be1=jnp.zeros((3, 1, F), jnp.float32),
        w2=stack3((K, F, F)).astype(bf16),
        b2=jnp.zeros((3, 1, F), jnp.float32),
        g2=jnp.ones((3, 1, F), jnp.float32),
        be2=jnp.zeros((3, 1, F), jnp.float32),
        wo=stack3((1, F)),
        bo=jnp.zeros((3, 1, 1), jnp.float32),
        pitch_emb_w=_init(next(ki), (H,)), pitch_emb_b=jnp.zeros((H,), jnp.float32),
        energy_emb_w=_init(next(ki), (H,)), energy_emb_b=jnp.zeros((H,), jnp.float32),
    )


def make_params(key, cfg):
    ki = _key_stream(key)
    bf16 = jnp.bfloat16
    H = cfg["hidden"]
    pe = _sinusoid_pe(cfg["max_seq_len"], H)
    encoder = dict(
        tok_emb=_init(next(ki), (cfg["n_symbols"], H), 0.1),
        pe=pe,
        layers=[_layer_params(ki, H, cfg["ffn"], cfg["ffn_kernel"])
                for _ in range(cfg["encoder_layers"])],
    )
    decoder = dict(
        pe=pe,
        layers=[_layer_params(ki, H, cfg["ffn"], cfg["ffn_kernel"])
                for _ in range(cfg["decoder_layers"])],
    )
    variance = _variance_params(ki, H, cfg["var_filter"], cfg["var_kernel"])
    P = cfg["postnet_channels"]
    Kp = cfg["postnet_kernel"]
    odim = cfg["odim"]
    postnet = dict(
        w1=_init(next(ki), (Kp, odim, P)).astype(bf16), b1=jnp.zeros((1, P), jnp.float32),
        w2=_init(next(ki), (Kp, P, P)).astype(bf16), b2=jnp.zeros((1, P), jnp.float32),
        w3=_init(next(ki), (Kp, P, odim)).astype(bf16), b3=jnp.zeros((1, odim), jnp.float32),
    )
    return dict(
        encoder=encoder,
        decoder=decoder,
        spk_emb=_init(next(ki), (cfg["n_speakers"], H), 0.1),
        variance=variance,
        feats_w=_init(next(ki), (H, odim)).astype(bf16),
        feats_b=jnp.zeros((odim,), jnp.float32),
        postnet=postnet,
    )


# ----------------------------------------------------------------------------
# Main
# ----------------------------------------------------------------------------

if __name__ == "__main__":
    cfg = dict(
        n_symbols=40, odim=16, hidden=32, nheads=2,
        encoder_layers=2, decoder_layers=2,
        ffn=64, ffn_kernel=3,
        var_filter=32, var_kernel=3,
        postnet_channels=32, postnet_kernel=5,
        n_speakers=4, max_seq_len=128,
    )

    params = make_params(jax.random.PRNGKey(0), cfg)

    key = jax.random.PRNGKey(0)
    k1, k2, k3, k4, k5, k6 = jax.random.split(key, 6)

    B, T = 2, 8
    text_lengths = jnp.array([8, 6], dtype=jnp.int32)
    valid = jnp.arange(T)[None, :] < text_lengths[:, None]
    text = jnp.where(valid, jax.random.randint(k1, (B, T), 1, cfg["n_symbols"]), 0)
    duration = jnp.where(valid, jax.random.randint(k2, (B, T), 1, 4), 0).astype(jnp.int32)
    feats_lengths = jnp.sum(duration, axis=1).astype(jnp.int32)
    max_mel = int(jnp.max(feats_lengths))          # host-side input construction only
    feats = jax.random.normal(k3, (B, max_mel, cfg["odim"]), jnp.float32)
    pitch = jnp.where(valid, jax.random.normal(k4, (B, T)), 0.0).astype(jnp.float32)
    energy = jnp.where(valid, jax.random.normal(k5, (B, T)), 0.0).astype(jnp.float32)
    sids = jax.random.randint(k6, (B,), 0, cfg["n_speakers"])

    fwd = jax.jit(lambda p, *args: fastspeech2_forward(p, cfg, *args))
    result = fwd(params, text, text_lengths, feats, feats_lengths,
                 duration, pitch, energy, sids)
    jax.block_until_ready(result)

    (outs, postnet_outs, log_d, p_outs, e_outs, *_), _ = result
    assert outs.shape == (B, max_mel, cfg["odim"])
    assert postnet_outs.shape == (B, max_mel, cfg["odim"])
    assert log_d.shape == (B, T) and p_outs.shape == (B, T) and e_outs.shape == (B, T)
    assert bool(jnp.all(jnp.isfinite(outs))) and bool(jnp.all(jnp.isfinite(postnet_outs)))
    print("KERNEL_OK")
</pallas_src>

<mosaic_0001>
module attributes {stable_mosaic.version = 11 : i64} {
  func.func @layer_kernel(%arg0: i32, %arg1: memref<1x8x32xf32, #tpu.memory_space<vmem>>, %arg2: memref<1x8x1xf32, #tpu.memory_space<vmem>>, %arg3: memref<1x1x8xf32, #tpu.memory_space<vmem>>, %arg4: memref<32x96xbf16, #tpu.memory_space<vmem>>, %arg5: memref<1x96xf32, #tpu.memory_space<vmem>>, %arg6: memref<32x32xbf16, #tpu.memory_space<vmem>>, %arg7: memref<1x32xf32, #tpu.memory_space<vmem>>, %arg8: memref<1x32xf32, #tpu.memory_space<vmem>>, %arg9: memref<1x32xf32, #tpu.memory_space<vmem>>, %arg10: memref<3x32x64xbf16, #tpu.memory_space<vmem>>, %arg11: memref<1x64xf32, #tpu.memory_space<vmem>>, %arg12: memref<64x32xbf16, #tpu.memory_space<vmem>>, %arg13: memref<1x32xf32, #tpu.memory_space<vmem>>, %arg14: memref<1x32xf32, #tpu.memory_space<vmem>>, %arg15: memref<1x32xf32, #tpu.memory_space<vmem>>, %arg16: memref<1x8x32xf32, #tpu.memory_space<vmem>>, %arg17: memref<8x32xbf16, #tpu.memory_space<vmem>>, %arg18: memref<10x32xf32, #tpu.memory_space<vmem>>) attributes {dimension_semantics = [#tpu.dimension_semantics<parallel>], iteration_bounds = array<i64: 2>, scalar_prefetch = 0 : i64, scratch_operands = 2 : i64, tpu.core_type = #tpu.core_type<tc>, window_params = [{transform_indices = @transform_0, window_bounds = array<i64: 1, 8, 32>}, {transform_indices = @transform_1, window_bounds = array<i64: 1, 8, 1>}, {transform_indices = @transform_2, window_bounds = array<i64: 1, 1, 8>}, {pipeline_mode = #tpu.pipeline_mode<synchronous>, transform_indices = @transform_3, window_bounds = array<i64: 32, 96>}, {pipeline_mode = #tpu.pipeline_mode<synchronous>, transform_indices = @transform_4, window_bounds = array<i64: 1, 96>}, {pipeline_mode = #tpu.pipeline_mode<synchronous>, transform_indices = @transform_5, window_bounds = array<i64: 32, 32>}, {pipeline_mode = #tpu.pipeline_mode<synchronous>, transform_indices = @transform_6, window_bounds = array<i64: 1, 32>}, {pipeline_mode = #tpu.pipeline_mode<synchronous>, transform_indices = @transform_7, window_bounds = array<i64: 1, 32>}, {pipeline_mode = #tpu.pipeline_mode<synchronous>, transform_indices = @transform_8, window_bounds = array<i64: 1, 32>}, {pipeline_mode = #tpu.pipeline_mode<synchronous>, transform_indices = @transform_9, window_bounds = array<i64: 3, 32, 64>}, {pipeline_mode = #tpu.pipeline_mode<synchronous>, transform_indices = @transform_10, window_bounds = array<i64: 1, 64>}, {pipeline_mode = #tpu.pipeline_mode<synchronous>, transform_indices = @transform_11, window_bounds = array<i64: 64, 32>}, {pipeline_mode = #tpu.pipeline_mode<synchronous>, transform_indices = @transform_12, window_bounds = array<i64: 1, 32>}, {pipeline_mode = #tpu.pipeline_mode<synchronous>, transform_indices = @transform_13, window_bounds = array<i64: 1, 32>}, {pipeline_mode = #tpu.pipeline_mode<synchronous>, transform_indices = @transform_14, window_bounds = array<i64: 1, 32>}, {transform_indices = @transform_15, window_bounds = array<i64: 1, 8, 32>}]} {
    %c0 = arith.constant 0 : index
    %c0_0 = arith.constant 0 : index
    %c0_1 = arith.constant 0 : index
    %0 = vector.load %arg1[%c0, %c0_0, %c0_1] : memref<1x8x32xf32, #tpu.memory_space<vmem>>, vector<1x8x32xf32>
    %1 = vector.shape_cast %0 : vector<1x8x32xf32> to vector<8x32xf32>
    %c0_2 = arith.constant 0 : index
    %c0_3 = arith.constant 0 : index
    %c0_4 = arith.constant 0 : index
    %2 = vector.load %arg2[%c0_2, %c0_3, %c0_4] : memref<1x8x1xf32, #tpu.memory_space<vmem>>, vector<1x8x1xf32>
    %3 = vector.shape_cast %2 : vector<1x8x1xf32> to vector<8x1xf32>
    %c0_5 = arith.constant 0 : index
    %c0_6 = arith.constant 0 : index
    %c0_7 = arith.constant 0 : index
    %4 = vector.load %arg3[%c0_5, %c0_6, %c0_7] : memref<1x1x8xf32, #tpu.memory_space<vmem>>, vector<1x1x8xf32>
    %5 = vector.shape_cast %4 : vector<1x1x8xf32> to vector<1x8xf32>
    %6 = arith.truncf %1 : vector<8x32xf32> to vector<8x32xbf16>
    %c0_8 = arith.constant 0 : index
    %c0_9 = arith.constant 0 : index
    %7 = vector.load %arg4[%c0_8, %c0_9] : memref<32x96xbf16, #tpu.memory_space<vmem>>, vector<32x96xbf16>
    %cst = arith.constant dense<0.000000e+00> : vector<8x96xf32>
    %8 = tpu.matmul %6, %7, %cst {dimension_numbers = #tpu.dot_dimension_numbers<[1], [0], [0], [1], [0, 0, 1, 1], [], []>} : vector<8x32xbf16>, vector<32x96xbf16>, vector<8x96xf32> -> vector<8x96xf32>
    %c0_10 = arith.constant 0 : index
    %c0_11 = arith.constant 0 : index
    %9 = vector.load %arg5[%c0_10, %c0_11] : memref<1x96xf32, #tpu.memory_space<vmem>>, vector<1x96xf32>
    %10 = vector.broadcast %9 : vector<1x96xf32> to vector<8x96xf32>
    %11 = arith.addf %8, %10 : vector<8x96xf32>
    %12 = vector.extract_strided_slice %11 {offsets = [0, 32], sizes = [8, 16], strides = [1, 1]} : vector<8x96xf32> to vector<8x16xf32>
    %13 = arith.truncf %12 : vector<8x16xf32> to vector<8x16xbf16>
    %14 = vector.extract_strided_slice %11 {offsets = [0, 64], sizes = [8, 16], strides = [1, 1]} : vector<8x96xf32> to vector<8x16xf32>
    %15 = arith.truncf %14 : vector<8x16xf32> to vector<8x16xbf16>
    %16 = vector.extract_strided_slice %11 {offsets = [0, 0], sizes = [8, 16], strides = [1, 1]} : vector<8x96xf32> to vector<8x16xf32>
    %17 = arith.truncf %16 : vector<8x16xf32> to vector<8x16xbf16>
    %cst_12 = arith.constant dense<0.000000e+00> : vector<8x8xf32>
    %18 = tpu.matmul %17, %13, %cst_12 {dimension_numbers = #tpu.dot_dimension_numbers<[1], [1], [0], [0], [0, 0, 1, 0], [], []>} : vector<8x16xbf16>, vector<8x16xbf16>, vector<8x8xf32> -> vector<8x8xf32>
    %cst_13 = arith.constant 2.500000e-01 : f32
    %19 = vector.broadcast %cst_13 : f32 to vector<8x8xf32>
    %20 = arith.mulf %18, %19 : vector<8x8xf32>
    %21 = vector.broadcast %5 : vector<1x8xf32> to vector<8x8xf32>
    %22 = arith.addf %20, %21 : vector<8x8xf32>
    %cst_14 = arith.constant dense<0xFF800000> : vector<8xf32>
    %23 = vector.multi_reduction <maximumf>, %22, %cst_14 [1] : vector<8x8xf32> to vector<8xf32>
    %24 = vector.shape_cast %23 : vector<8xf32> to vector<8x1xf32>
    %25 = vector.broadcast %24 : vector<8x1xf32> to vector<8x8xf32>
    %26 = arith.subf %22, %25 : vector<8x8xf32>
    %27 = math.exp %26 : vector<8x8xf32>
    %cst_15 = arith.constant dense<0.000000e+00> : vector<8xf32>
    %28 = vector.multi_reduction <add>, %27, %cst_15 [1] : vector<8x8xf32> to vector<8xf32>
    %29 = vector.shape_cast %28 : vector<8xf32> to vector<8x1xf32>
    %30 = tpu.reciprocal %29 {approx = true} : vector<8x1xf32> -> vector<8x1xf32>
    %31 = vector.broadcast %30 : vector<8x1xf32> to vector<8x8xf32>
    %32 = arith.mulf %27, %31 : vector<8x8xf32>
    %33 = arith.truncf %32 : vector<8x8xf32> to vector<8x8xbf16>
    %cst_16 = arith.constant dense<0.000000e+00> : vector<8x16xf32>
    %34 = tpu.matmul %33, %15, %cst_16 {dimension_numbers = #tpu.dot_dimension_numbers<[1], [0], [0], [1], [0, 0, 1, 1], [], []>} : vector<8x8xbf16>, vector<8x16xbf16>, vector<8x16xf32> -> vector<8x16xf32>
    %35 = arith.truncf %34 : vector<8x16xf32> to vector<8x16xbf16>
    %c0_17 = arith.constant 0 : index
    %c0_18 = arith.constant 0 : index
    %36 = vector.load %arg17[%c0_17, %c0_18] : memref<8x32xbf16, #tpu.memory_space<vmem>>, vector<8x16xbf16>
    tpu.vector_store %arg17[%c0_17, %c0_18], %35 {strides = array<i32>} : memref<8x32xbf16, #tpu.memory_space<vmem>>, vector<8x16xbf16>,
    %37 = vector.extract_strided_slice %11 {offsets = [0, 48], sizes = [8, 16], strides = [1, 1]} : vector<8x96xf32> to vector<8x16xf32>
    %38 = arith.truncf %37 : vector<8x16xf32> to vector<8x16xbf16>
    %39 = vector.extract_strided_slice %11 {offsets = [0, 80], sizes = [8, 16], strides = [1, 1]} : vector<8x96xf32> to vector<8x16xf32>
    %40 = arith.truncf %39 : vector<8x16xf32> to vector<8x16xbf16>
    %41 = vector.extract_strided_slice %11 {offsets = [0, 16], sizes = [8, 16], strides = [1, 1]} : vector<8x96xf32> to vector<8x16xf32>
    %42 = arith.truncf %41 : vector<8x16xf32> to vector<8x16xbf16>
    %cst_19 = arith.constant dense<0.000000e+00> : vector<8x8xf32>
    %43 = tpu.matmul %42, %38, %cst_19 {dimension_numbers = #tpu.dot_dimension_numbers<[1], [1], [0], [0], [0, 0, 1, 0], [], []>} : vector<8x16xbf16>, vector<8x16xbf16>, vector<8x8xf32> -> vector<8x8xf32>
    %cst_20 = arith.constant 2.500000e-01 : f32
    %44 = vector.broadcast %cst_20 : f32 to vector<8x8xf32>
    %45 = arith.mulf %43, %44 : vector<8x8xf32>
    %46 = vector.broadcast %5 : vector<1x8xf32> to vector<8x8xf32>
    %47 = arith.addf %45, %46 : vector<8x8xf32>
    %cst_21 = arith.constant dense<0xFF800000> : vector<8xf32>
    %48 = vector.multi_reduction <maximumf>, %47, %cst_21 [1] : vector<8x8xf32> to vector<8xf32>
    %49 = vector.shape_cast %48 : vector<8xf32> to vector<8x1xf32>
    %50 = vector.broadcast %49 : vector<8x1xf32> to vector<8x8xf32>
    %51 = arith.subf %47, %50 : vector<8x8xf32>
    %52 = math.exp %51 : vector<8x8xf32>
    %cst_22 = arith.constant dense<0.000000e+00> : vector<8xf32>
    %53 = vector.multi_reduction <add>, %52, %cst_22 [1] : vector<8x8xf32> to vector<8xf32>
    %54 = vector.shape_cast %53 : vector<8xf32> to vector<8x1xf32>
    %55 = tpu.reciprocal %54 {approx = true} : vector<8x1xf32> -> vector<8x1xf32>
    %56 = vector.broadcast %55 : vector<8x1xf32> to vector<8x8xf32>
    %57 = arith.mulf %52, %56 : vector<8x8xf32>
    %58 = arith.truncf %57 : vector<8x8xf32> to vector<8x8xbf16>
    %cst_23 = arith.constant dense<0.000000e+00> : vector<8x16xf32>
    %59 = tpu.matmul %58, %40, %cst_23 {dimension_numbers = #tpu.dot_dimension_numbers<[1], [0], [0], [1], [0, 0, 1, 1], [], []>} : vector<8x8xbf16>, vector<8x16xbf16>, vector<8x16xf32> -> vector<8x16xf32>
    %60 = arith.truncf %59 : vector<8x16xf32> to vector<8x16xbf16>
    %c0_24 = arith.constant 0 : index
    %c16 = arith.constant 16 : index
    %61 = vector.load %arg17[%c0_24, %c16] : memref<8x32xbf16, #tpu.memory_space<vmem>>, vector<8x16xbf16>
    tpu.vector_store %arg17[%c0_24, %c16], %60 {strides = array<i32>} : memref<8x32xbf16, #tpu.memory_space<vmem>>, vector<8x16xbf16>,
    %c0_25 = arith.constant 0 : index
    %c0_26 = arith.constant 0 : index
    %62 = vector.load %arg17[%c0_25, %c0_26] : memref<8x32xbf16, #tpu.memory_space<vmem>>, vector<8x32xbf16>
    %c0_27 = arith.constant 0 : index
    %c0_28 = arith.constant 0 : index
    %63 = vector.load %arg6[%c0_27, %c0_28] : memref<32x32xbf16, #tpu.memory_space<vmem>>, vector<32x32xbf16>
    %cst_29 = arith.constant dense<0.000000e+00> : vector<8x32xf32>
    %64 = tpu.matmul %62, %63, %cst_29 {dimension_numbers = #tpu.dot_dimension_numbers<[1], [0], [0], [1], [0, 0, 1, 1], [], []>} : vector<8x32xbf16>, vector<32x32xbf16>, vector<8x32xf32> -> vector<8x32xf32>
    %c0_30 = arith.constant 0 : index
    %c0_31 = arith.constant 0 : index
    %65 = vector.load %arg7[%c0_30, %c0_31] : memref<1x32xf32, #tpu.memory_space<vmem>>, vector<1x32xf32>
    %66 = vector.broadcast %65 : vector<1x32xf32> to vector<8x32xf32>
    %67 = arith.addf %64, %66 : vector<8x32xf32>
    %68 = arith.addf %1, %67 : vector<8x32xf32>
    %c0_32 = arith.constant 0 : index
    %c0_33 = arith.constant 0 : index
    %69 = vector.load %arg8[%c0_32, %c0_33] : memref<1x32xf32, #tpu.memory_space<vmem>>, vector<1x32xf32>
    %c0_34 = arith.constant 0 : index
    %c0_35 = arith.constant 0 : index
    %70 = vector.load %arg9[%c0_34, %c0_35] : memref<1x32xf32, #tpu.memory_space<vmem>>, vector<1x32xf32>
    %cst_36 = arith.constant dense<0.000000e+00> : vector<8xf32>
    %71 = vector.multi_reduction <add>, %68, %cst_36 [1] : vector<8x32xf32> to vector<8xf32>
    %72 = vector.shape_cast %71 : vector<8xf32> to vector<8x1xf32>
    %cst_37 = arith.constant 3.200000e+01 : f32
    %73 = vector.broadcast %cst_37 : f32 to vector<8x1xf32>
    %74 = arith.divf %72, %73 : vector<8x1xf32>
    %75 = vector.broadcast %74 : vector<8x1xf32> to vector<8x32xf32>
    %76 = arith.subf %68, %75 : vector<8x32xf32>
    %77 = arith.mulf %76, %76 : vector<8x32xf32>
    %cst_38 = arith.constant dense<0.000000e+00> : vector<8xf32>
    %78 = vector.multi_reduction <add>, %77, %cst_38 [1] : vector<8x32xf32> to vector<8xf32>
    %79 = vector.shape_cast %78 : vector<8xf32> to vector<8x1xf32>
    %cst_39 = arith.constant 3.200000e+01 : f32
    %80 = vector.broadcast %cst_39 : f32 to vector<8x1xf32>
    %81 = arith.divf %79, %80 : vector<8x1xf32>
    %82 = vector.broadcast %74 : vector<8x1xf32> to vector<8x32xf32>
    %83 = arith.subf %68, %82 : vector<8x32xf32>
    %cst_40 = arith.constant 9.99999974E-6 : f32
    %84 = vector.broadcast %cst_40 : f32 to vector<8x1xf32>
    %85 = arith.addf %81, %84 : vector<8x1xf32>
    %86 = math.rsqrt %85 : vector<8x1xf32>
    %87 = vector.broadcast %86 : vector<8x1xf32> to vector<8x32xf32>
    %88 = arith.mulf %83, %87 : vector<8x32xf32>
    %89 = vector.broadcast %69 : vector<1x32xf32> to vector<8x32xf32>
    %90 = arith.mulf %88, %89 : vector<8x32xf32>
    %91 = vector.broadcast %70 : vector<1x32xf32> to vector<8x32xf32>
    %92 = arith.addf %90, %91 : vector<8x32xf32>
    %93 = vector.broadcast %3 : vector<8x1xf32> to vector<8x32xf32>
    %94 = arith.mulf %92, %93 : vector<8x32xf32>
    %cst_41 = arith.constant 0.000000e+00 : f32
    %95 = vector.broadcast %cst_41 : f32 to vector<1x32xf32>
    %c0_42 = arith.constant 0 : index
    %c0_43 = arith.constant 0 : index
    %96 = vector.load %arg18[%c0_42, %c0_43] : memref<10x32xf32, #tpu.memory_space<vmem>>, vector<1x32xf32>
    tpu.vector_store %arg18[%c0_42, %c0_43], %95 {strides = array<i32>} : memref<10x32xf32, #tpu.memory_space<vmem>>, vector<1x32xf32>,
    %cst_44 = arith.constant 0.000000e+00 : f32
    %97 = vector.broadcast %cst_44 : f32 to vector<1x32xf32>
    %c9 = arith.constant 9 : index
    %c0_45 = arith.constant 0 : index
    %98 = vector.load %arg18[%c9, %c0_45] : memref<10x32xf32, #tpu.memory_space<vmem>>, vector<1x32xf32>
    tpu.vector_store %arg18[%c9, %c0_45], %97 {strides = array<i32>} : memref<10x32xf32, #tpu.memory_space<vmem>>, vector<1x32xf32>,
    %c1 = arith.constant 1 : index
    %c0_46 = arith.constant 0 : index
    %99 = vector.load %arg18[%c1, %c0_46] : memref<10x32xf32, #tpu.memory_space<vmem>>, vector<8x32xf32>
    tpu.vector_store %arg18[%c1, %c0_46], %94 {strides = array<i32>} : memref<10x32xf32, #tpu.memory_space<vmem>>, vector<8x32xf32>,
    %cst_47 = arith.constant 0.000000e+00 : f32
    %100 = vector.broadcast %cst_47 : f32 to vector<8x64xf32>
    %c0_48 = arith.constant 0 : index
    %c0_49 = arith.constant 0 : index
    %101 = vector.load %arg18[%c0_48, %c0_49] : memref<10x32xf32, #tpu.memory_space<vmem>>, vector<8x32xf32>
    %102 = arith.truncf %101 : vector<8x32xf32> to vector<8x32xbf16>
    %c0_50 = arith.constant 0 : index
    %c0_51 = arith.constant 0 : index
    %c0_52 = arith.constant 0 : index
    %103 = vector.load %arg10[%c0_50, %c0_51, %c0_52] : memref<3x32x64xbf16, #tpu.memory_space<vmem>>, vector<1x32x64xbf16>
    %104 = vector.shape_cast %103 : vector<1x32x64xbf16> to vector<32x64xbf16>
    %cst_53 = arith.constant dense<0.000000e+00> : vector<8x64xf32>
    %105 = tpu.matmul %102, %104, %cst_53 {dimension_numbers = #tpu.dot_dimension_numbers<[1], [0], [0], [1], [0, 0, 1, 1], [], []>} : vector<8x32xbf16>, vector<32x64xbf16>, vector<8x64xf32> -> vector<8x64xf32>
    %106 = arith.addf %100, %105 : vector<8x64xf32>
    %c1_54 = arith.constant 1 : index
    %c0_55 = arith.constant 0 : index
    %107 = vector.load %arg18[%c1_54, %c0_55] : memref<10x32xf32, #tpu.memory_space<vmem>>, vector<8x32xf32>
    %108 = arith.truncf %107 : vector<8x32xf32> to vector<8x32xbf16>
    %c1_56 = arith.constant 1 : index
    %c0_57 = arith.constant 0 : index
    %c0_58 = arith.constant 0 : index
    %109 = vector.load %arg10[%c1_56, %c0_57, %c0_58] : memref<3x32x64xbf16, #tpu.memory_space<vmem>>, vector<1x32x64xbf16>
    %110 = vector.shape_cast %109 : vector<1x32x64xbf16> to vector<32x64xbf16>
    %cst_59 = arith.constant dense<0.000000e+00> : vector<8x64xf32>
    %111 = tpu.matmul %108, %110, %cst_59 {dimension_numbers = #tpu.dot_dimension_numbers<[1], [0], [0], [1], [0, 0, 1, 1], [], []>} : vector<8x32xbf16>, vector<32x64xbf16>, vector<8x64xf32> -> vector<8x64xf32>
    %112 = arith.addf %106, %111 : vector<8x64xf32>
    %c2 = arith.constant 2 : index
    %c0_60 = arith.constant 0 : index
    %113 = vector.load %arg18[%c2, %c0_60] : memref<10x32xf32, #tpu.memory_space<vmem>>, vector<8x32xf32>
    %114 = arith.truncf %113 : vector<8x32xf32> to vector<8x32xbf16>
    %c2_61 = arith.constant 2 : index
    %c0_62 = arith.constant 0 : index
    %c0_63 = arith.constant 0 : index
    %115 = vector.load %arg10[%c2_61, %c0_62, %c0_63] : memref<3x32x64xbf16, #tpu.memory_space<vmem>>, vector<1x32x64xbf16>
    %116 = vector.shape_cast %115 : vector<1x32x64xbf16> to vector<32x64xbf16>
    %cst_64 = arith.constant dense<0.000000e+00> : vector<8x64xf32>
    %117 = tpu.matmul %114, %116, %cst_64 {dimension_numbers = #tpu.dot_dimension_numbers<[1], [0], [0], [1], [0, 0, 1, 1], [], []>} : vector<8x32xbf16>, vector<32x64xbf16>, vector<8x64xf32> -> vector<8x64xf32>
    %118 = arith.addf %112, %117 : vector<8x64xf32>
    %c0_65 = arith.constant 0 : index
    %c0_66 = arith.constant 0 : index
    %119 = vector.load %arg11[%c0_65, %c0_66] : memref<1x64xf32, #tpu.memory_space<vmem>>, vector<1x64xf32>
    %120 = vector.broadcast %119 : vector<1x64xf32> to vector<8x64xf32>
    %121 = arith.addf %118, %120 : vector<8x64xf32>
    %cst_67 = arith.constant 0.000000e+00 : f32
    %122 = vector.broadcast %cst_67 : f32 to vector<8x64xf32>
    %123 = arith.maximumf %121, %122 : vector<8x64xf32>
    %124 = arith.truncf %123 : vector<8x64xf32> to vector<8x64xbf16>
    %c0_68 = arith.constant 0 : index
    %c0_69 = arith.constant 0 : index
    %125 = vector.load %arg12[%c0_68, %c0_69] : memref<64x32xbf16, #tpu.memory_space<vmem>>, vector<64x32xbf16>
    %cst_70 = arith.constant dense<0.000000e+00> : vector<8x32xf32>
    %126 = tpu.matmul %124, %125, %cst_70 {dimension_numbers = #tpu.dot_dimension_numbers<[1], [0], [0], [1], [0, 0, 1, 1], [], []>} : vector<8x64xbf16>, vector<64x32xbf16>, vector<8x32xf32> -> vector<8x32xf32>
    %c0_71 = arith.constant 0 : index
    %c0_72 = arith.constant 0 : index
    %127 = vector.load %arg13[%c0_71, %c0_72] : memref<1x32xf32, #tpu.memory_space<vmem>>, vector<1x32xf32>
    %128 = vector.broadcast %127 : vector<1x32xf32> to vector<8x32xf32>
    %129 = arith.addf %126, %128 : vector<8x32xf32>
    %130 = arith.addf %94, %129 : vector<8x32xf32>
    %c0_73 = arith.constant 0 : index
    %c0_74 = arith.constant 0 : index
    %131 = vector.load %arg14[%c0_73, %c0_74] : memref<1x32xf32, #tpu.memory_space<vmem>>, vector<1x32xf32>
    %c0_75 = arith.constant 0 : index
    %c0_76 = arith.constant 0 : index
    %132 = vector.load %arg15[%c0_75, %c0_76] : memref<1x32xf32, #tpu.memory_space<vmem>>, vector<1x32xf32>
    %cst_77 = arith.constant dense<0.000000e+00> : vector<8xf32>
    %133 = vector.multi_reduction <add>, %130, %cst_77 [1] : vector<8x32xf32> to vector<8xf32>
    %134 = vector.shape_cast %133 : vector<8xf32> to vector<8x1xf32>
    %cst_78 = arith.constant 3.200000e+01 : f32
    %135 = vector.broadcast %cst_78 : f32 to vector<8x1xf32>
    %136 = arith.divf %134, %135 : vector<8x1xf32>
    %137 = vector.broadcast %136 : vector<8x1xf32> to vector<8x32xf32>
    %138 = arith.subf %130, %137 : vector<8x32xf32>
    %139 = arith.mulf %138, %138 : vector<8x32xf32>
    %cst_79 = arith.constant dense<0.000000e+00> : vector<8xf32>
    %140 = vector.multi_reduction <add>, %139, %cst_79 [1] : vector<8x32xf32> to vector<8xf32>
    %141 = vector.shape_cast %140 : vector<8xf32> to vector<8x1xf32>
    %cst_80 = arith.constant 3.200000e+01 : f32
    %142 = vector.broadcast %cst_80 : f32 to vector<8x1xf32>
    %143 = arith.divf %141, %142 : vector<8x1xf32>
    %144 = vector.broadcast %136 : vector<8x1xf32> to vector<8x32xf32>
    %145 = arith.subf %130, %144 : vector<8x32xf32>
    %cst_81 = arith.constant 9.99999974E-6 : f32
    %146 = vector.broadcast %cst_81 : f32 to vector<8x1xf32>
    %147 = arith.addf %143, %146 : vector<8x1xf32>
    %148 = math.rsqrt %147 : vector<8x1xf32>
    %149 = vector.broadcast %148 : vector<8x1xf32> to vector<8x32xf32>
    %150 = arith.mulf %145, %149 : vector<8x32xf32>
    %151 = vector.broadcast %131 : vector<1x32xf32> to vector<8x32xf32>
    %152 = arith.mulf %150, %151 : vector<8x32xf32>
    %153 = vector.broadcast %132 : vector<1x32xf32> to vector<8x32xf32>
    %154 = arith.addf %152, %153 : vector<8x32xf32>
    %155 = vector.broadcast %3 : vector<8x1xf32> to vector<8x32xf32>
    %156 = arith.mulf %154, %155 : vector<8x32xf32>
    %c0_82 = arith.constant 0 : index
    %c0_83 = arith.constant 0 : index
    %c0_84 = arith.constant 0 : index
    %157 = vector.load %arg16[%c0_82, %c0_83, %c0_84] : memref<1x8x32xf32, #tpu.memory_space<vmem>>, vector<1x8x32xf32>
    %158 = vector.shape_cast %157 : vector<1x8x32xf32> to vector<8x32xf32>
    %159 = vector.shape_cast %156 : vector<8x32xf32> to vector<1x8x32xf32>
    tpu.vector_store %arg16[%c0_82, %c0_83, %c0_84], %159 {strides = array<i32>} : memref<1x8x32xf32, #tpu.memory_space<vmem>>, vector<1x8x32xf32>,
    return
  }
  func.func @transform_0(%arg0: i32) -> (i32, i32, i32) {
    %c0_i32 = arith.constant 0 : i32
    %c0_i32_0 = arith.constant 0 : i32
    %c0_i32_1 = arith.constant 0 : i32
    return %arg0, %c0_i32, %c0_i32_0 : i32, i32, i32
  }
  func.func @transform_1(%arg0: i32) -> (i32, i32, i32) {
    %c0_i32 = arith.constant 0 : i32
    %c0_i32_0 = arith.constant 0 : i32
    %c0_i32_1 = arith.constant 0 : i32
    return %arg0, %c0_i32, %c0_i32_0 : i32, i32, i32
  }
  func.func @transform_2(%arg0: i32) -> (i32, i32, i32) {
    %c0_i32 = arith.constant 0 : i32
    %c0_i32_0 = arith.constant 0 : i32
    %c0_i32_1 = arith.constant 0 : i32
    return %arg0, %c0_i32, %c0_i32_0 : i32, i32, i32
  }
  func.func @transform_3(%arg0: i32) -> (i32, i32) {
    %c0_i32 = arith.constant 0 : i32
    %c0_i32_0 = arith.constant 0 : i32
    %c0_i32_1 = arith.constant 0 : i32
    return %c0_i32, %c0_i32_0 : i32, i32
  }
  func.func @transform_4(%arg0: i32) -> (i32, i32) {
    %c0_i32 = arith.constant 0 : i32
    %c0_i32_0 = arith.constant 0 : i32
    %c0_i32_1 = arith.constant 0 : i32
    return %c0_i32, %c0_i32_0 : i32, i32
  }
  func.func @transform_5(%arg0: i32) -> (i32, i32) {
    %c0_i32 = arith.constant 0 : i32
    %c0_i32_0 = arith.constant 0 : i32
    %c0_i32_1 = arith.constant 0 : i32
    return %c0_i32, %c0_i32_0 : i32, i32
  }
  func.func @transform_6(%arg0: i32) -> (i32, i32) {
    %c0_i32 = arith.constant 0 : i32
    %c0_i32_0 = arith.constant 0 : i32
    %c0_i32_1 = arith.constant 0 : i32
    return %c0_i32, %c0_i32_0 : i32, i32
  }
  func.func @transform_7(%arg0: i32) -> (i32, i32) {
    %c0_i32 = arith.constant 0 : i32
    %c0_i32_0 = arith.constant 0 : i32
    %c0_i32_1 = arith.constant 0 : i32
    return %c0_i32, %c0_i32_0 : i32, i32
  }
  func.func @transform_8(%arg0: i32) -> (i32, i32) {
    %c0_i32 = arith.constant 0 : i32
    %c0_i32_0 = arith.constant 0 : i32
    %c0_i32_1 = arith.constant 0 : i32
    return %c0_i32, %c0_i32_0 : i32, i32
  }
  func.func @transform_9(%arg0: i32) -> (i32, i32, i32) {
    %c0_i32 = arith.constant 0 : i32
    %c0_i32_0 = arith.constant 0 : i32
    %c0_i32_1 = arith.constant 0 : i32
    %c0_i32_2 = arith.constant 0 : i32
    return %c0_i32, %c0_i32_0, %c0_i32_1 : i32, i32, i32
  }
  func.func @transform_10(%arg0: i32) -> (i32, i32) {
    %c0_i32 = arith.constant 0 : i32
    %c0_i32_0 = arith.constant 0 : i32
    %c0_i32_1 = arith.constant 0 : i32
    return %c0_i32, %c0_i32_0 : i32, i32
  }
  func.func @transform_11(%arg0: i32) -> (i32, i32) {
    %c0_i32 = arith.constant 0 : i32
    %c0_i32_0 = arith.constant 0 : i32
    %c0_i32_1 = arith.constant 0 : i32
    return %c0_i32, %c0_i32_0 : i32, i32
  }
  func.func @transform_12(%arg0: i32) -> (i32, i32) {
    %c0_i32 = arith.constant 0 : i32
    %c0_i32_0 = arith.constant 0 : i32
    %c0_i32_1 = arith.constant 0 : i32
    return %c0_i32, %c0_i32_0 : i32, i32
  }
  func.func @transform_13(%arg0: i32) -> (i32, i32) {
    %c0_i32 = arith.constant 0 : i32
    %c0_i32_0 = arith.constant 0 : i32
    %c0_i32_1 = arith.constant 0 : i32
    return %c0_i32, %c0_i32_0 : i32, i32
  }
  func.func @transform_14(%arg0: i32) -> (i32, i32) {
    %c0_i32 = arith.constant 0 : i32
    %c0_i32_0 = arith.constant 0 : i32
    %c0_i32_1 = arith.constant 0 : i32
    return %c0_i32, %c0_i32_0 : i32, i32
  }
  func.func @transform_15(%arg0: i32) -> (i32, i32, i32) {
    %c0_i32 = arith.constant 0 : i32
    %c0_i32_0 = arith.constant 0 : i32
    %c0_i32_1 = arith.constant 0 : i32
    return %arg0, %c0_i32, %c0_i32_0 : i32, i32, i32
  }
}

module attributes {stable_mosaic.version = 11 : i64} {
  func.func @_linear_kernel(%arg0: i32, %arg1: memref<32x32xf32, #tpu.memory_space<vmem>>, %arg2: memref<32x128xbf16, #tpu.memory_space<vmem>>, %arg3: memref<1x128xf32, #tpu.memory_space<vmem>>, %arg4: memref<32x128xf32, #tpu.memory_space<vmem>>) attributes {dimension_semantics = [#tpu.dimension_semantics<parallel>], iteration_bounds = array<i64: 1>, scalar_prefetch = 0 : i64, scratch_operands = 0 : i64, tpu.core_type = #tpu.core_type<tc>, window_params = [{transform_indices = @transform_0, window_bounds = array<i64: 32, 32>}, {pipeline_mode = #tpu.pipeline_mode<synchronous>, transform_indices = @transform_1, window_bounds = array<i64: 32, 128>}, {pipeline_mode = #tpu.pipeline_mode<synchronous>, transform_indices = @transform_2, window_bounds = array<i64: 1, 128>}, {transform_indices = @transform_3, window_bounds = array<i64: 32, 128>}]} {
    %c0 = arith.constant 0 : index
    %c0_0 = arith.constant 0 : index
    %0 = vector.load %arg1[%c0, %c0_0] : memref<32x32xf32, #tpu.memory_space<vmem>>, vector<32x32xf32>
    %1 = arith.truncf %0 : vector<32x32xf32> to vector<32x32xbf16>
    %c0_1 = arith.constant 0 : index
    %c0_2 = arith.constant 0 : index
    %2 = vector.load %arg2[%c0_1, %c0_2] : memref<32x128xbf16, #tpu.memory_space<vmem>>, vector<32x128xbf16>
    %cst = arith.constant dense<0.000000e+00> : vector<32x128xf32>
    %3 = tpu.matmul %1, %2, %cst {dimension_numbers = #tpu.dot_dimension_numbers<[1], [0], [0], [1], [0, 0, 1, 1], [], []>} : vector<32x32xbf16>, vector<32x128xbf16>, vector<32x128xf32> -> vector<32x128xf32>
    %c0_3 = arith.constant 0 : index
    %c0_4 = arith.constant 0 : index
    %4 = vector.load %arg3[%c0_3, %c0_4] : memref<1x128xf32, #tpu.memory_space<vmem>>, vector<1x128xf32>
    %5 = vector.broadcast %4 : vector<1x128xf32> to vector<32x128xf32>
    %6 = arith.addf %3, %5 : vector<32x128xf32>
    %c0_5 = arith.constant 0 : index
    %c0_6 = arith.constant 0 : index
    %7 = vector.load %arg4[%c0_5, %c0_6] : memref<32x128xf32, #tpu.memory_space<vmem>>, vector<32x128xf32>
    tpu.vector_store %arg4[%c0_5, %c0_6], %6 {strides = array<i32>} : memref<32x128xf32, #tpu.memory_space<vmem>>, vector<32x128xf32>,
    return
  }
  func.func @transform_0(%arg0: i32) -> (i32, i32) {
    %c0_i32 = arith.constant 0 : i32
    %c0_i32_0 = arith.constant 0 : i32
    return %arg0, %c0_i32 : i32, i32
  }
  func.func @transform_1(%arg0: i32) -> (i32, i32) {
    %c0_i32 = arith.constant 0 : i32
    %c0_i32_0 = arith.constant 0 : i32
    %c0_i32_1 = arith.constant 0 : i32
    return %c0_i32, %c0_i32_0 : i32, i32
  }
  func.func @transform_2(%arg0: i32) -> (i32, i32) {
    %c0_i32 = arith.constant 0 : i32
    %c0_i32_0 = arith.constant 0 : i32
    %c0_i32_1 = arith.constant 0 : i32
    return %c0_i32, %c0_i32_0 : i32, i32
  }
  func.func @transform_3(%arg0: i32) -> (i32, i32) {
    %c0_i32 = arith.constant 0 : i32
    %c0_i32_0 = arith.constant 0 : i32
    return %arg0, %c0_i32 : i32, i32
  }
}

module attributes {stable_mosaic.version = 11 : i64} {
  func.func @layer_kernel(%arg0: i32, %arg1: memref<1x16x32xf32, #tpu.memory_space<vmem>>, %arg2: memref<1x16x1xf32, #tpu.memory_space<vmem>>, %arg3: memref<1x1x16xf32, #tpu.memory_space<vmem>>, %arg4: memref<32x96xbf16, #tpu.memory_space<vmem>>, %arg5: memref<1x96xf32, #tpu.memory_space<vmem>>, %arg6: memref<32x32xbf16, #tpu.memory_space<vmem>>, %arg7: memref<1x32xf32, #tpu.memory_space<vmem>>, %arg8: memref<1x32xf32, #tpu.memory_space<vmem>>, %arg9: memref<1x32xf32, #tpu.memory_space<vmem>>, %arg10: memref<3x32x64xbf16, #tpu.memory_space<vmem>>, %arg11: memref<1x64xf32, #tpu.memory_space<vmem>>, %arg12: memref<64x32xbf16, #tpu.memory_space<vmem>>, %arg13: memref<1x32xf32, #tpu.memory_space<vmem>>, %arg14: memref<1x32xf32, #tpu.memory_space<vmem>>, %arg15: memref<1x32xf32, #tpu.memory_space<vmem>>, %arg16: memref<1x16x32xf32, #tpu.memory_space<vmem>>, %arg17: memref<16x32xbf16, #tpu.memory_space<vmem>>, %arg18: memref<18x32xf32, #tpu.memory_space<vmem>>) attributes {dimension_semantics = [#tpu.dimension_semantics<parallel>], iteration_bounds = array<i64: 2>, scalar_prefetch = 0 : i64, scratch_operands = 2 : i64, tpu.core_type = #tpu.core_type<tc>, window_params = [{transform_indices = @transform_0, window_bounds = array<i64: 1, 16, 32>}, {transform_indices = @transform_1, window_bounds = array<i64: 1, 16, 1>}, {transform_indices = @transform_2, window_bounds = array<i64: 1, 1, 16>}, {pipeline_mode = #tpu.pipeline_mode<synchronous>, transform_indices = @transform_3, window_bounds = array<i64: 32, 96>}, {pipeline_mode = #tpu.pipeline_mode<synchronous>, transform_indices = @transform_4, window_bounds = array<i64: 1, 96>}, {pipeline_mode = #tpu.pipeline_mode<synchronous>, transform_indices = @transform_5, window_bounds = array<i64: 32, 32>}, {pipeline_mode = #tpu.pipeline_mode<synchronous>, transform_indices = @transform_6, window_bounds = array<i64: 1, 32>}, {pipeline_mode = #tpu.pipeline_mode<synchronous>, transform_indices = @transform_7, window_bounds = array<i64: 1, 32>}, {pipeline_mode = #tpu.pipeline_mode<synchronous>, transform_indices = @transform_8, window_bounds = array<i64: 1, 32>}, {pipeline_mode = #tpu.pipeline_mode<synchronous>, transform_indices = @transform_9, window_bounds = array<i64: 3, 32, 64>}, {pipeline_mode = #tpu.pipeline_mode<synchronous>, transform_indices = @transform_10, window_bounds = array<i64: 1, 64>}, {pipeline_mode = #tpu.pipeline_mode<synchronous>, transform_indices = @transform_11, window_bounds = array<i64: 64, 32>}, {pipeline_mode = #tpu.pipeline_mode<synchronous>, transform_indices = @transform_12, window_bounds = array<i64: 1, 32>}, {pipeline_mode = #tpu.pipeline_mode<synchronous>, transform_indices = @transform_13, window_bounds = array<i64: 1, 32>}, {pipeline_mode = #tpu.pipeline_mode<synchronous>, transform_indices = @transform_14, window_bounds = array<i64: 1, 32>}, {transform_indices = @transform_15, window_bounds = array<i64: 1, 16, 32>}]} {
    %c0 = arith.constant 0 : index
    %c0_0 = arith.constant 0 : index
    %c0_1 = arith.constant 0 : index
    %0 = vector.load %arg1[%c0, %c0_0, %c0_1] : memref<1x16x32xf32, #tpu.memory_space<vmem>>, vector<1x16x32xf32>
    %1 = vector.shape_cast %0 : vector<1x16x32xf32> to vector<16x32xf32>
    %c0_2 = arith.constant 0 : index
    %c0_3 = arith.constant 0 : index
    %c0_4 = arith.constant 0 : index
    %2 = vector.load %arg2[%c0_2, %c0_3, %c0_4] : memref<1x16x1xf32, #tpu.memory_space<vmem>>, vector<1x16x1xf32>
    %3 = vector.shape_cast %2 : vector<1x16x1xf32> to vector<16x1xf32>
    %c0_5 = arith.constant 0 : index
    %c0_6 = arith.constant 0 : index
    %c0_7 = arith.constant 0 : index
    %4 = vector.load %arg3[%c0_5, %c0_6, %c0_7] : memref<1x1x16xf32, #tpu.memory_space<vmem>>, vector<1x1x16xf32>
    %5 = vector.shape_cast %4 : vector<1x1x16xf32> to vector<1x16xf32>
    %6 = arith.truncf %1 : vector<16x32xf32> to vector<16x32xbf16>
    %c0_8 = arith.constant 0 : index
    %c0_9 = arith.constant 0 : index
    %7 = vector.load %arg4[%c0_8, %c0_9] : memref<32x96xbf16, #tpu.memory_space<vmem>>, vector<32x96xbf16>
    %cst = arith.constant dense<0.000000e+00> : vector<16x96xf32>
    %8 = tpu.matmul %6, %7, %cst {dimension_numbers = #tpu.dot_dimension_numbers<[1], [0], [0], [1], [0, 0, 1, 1], [], []>} : vector<16x32xbf16>, vector<32x96xbf16>, vector<16x96xf32> -> vector<16x96xf32>
    %c0_10 = arith.constant 0 : index
    %c0_11 = arith.constant 0 : index
    %9 = vector.load %arg5[%c0_10, %c0_11] : memref<1x96xf32, #tpu.memory_space<vmem>>, vector<1x96xf32>
    %10 = vector.broadcast %9 : vector<1x96xf32> to vector<16x96xf32>
    %11 = arith.addf %8, %10 : vector<16x96xf32>
    %12 = vector.extract_strided_slice %11 {offsets = [0, 32], sizes = [16, 16], strides = [1, 1]} : vector<16x96xf32> to vector<16x16xf32>
    %13 = arith.truncf %12 : vector<16x16xf32> to vector<16x16xbf16>
    %14 = vector.extract_strided_slice %11 {offsets = [0, 64], sizes = [16, 16], strides = [1, 1]} : vector<16x96xf32> to vector<16x16xf32>
    %15 = arith.truncf %14 : vector<16x16xf32> to vector<16x16xbf16>
    %16 = vector.extract_strided_slice %11 {offsets = [0, 0], sizes = [16, 16], strides = [1, 1]} : vector<16x96xf32> to vector<16x16xf32>
    %17 = arith.truncf %16 : vector<16x16xf32> to vector<16x16xbf16>
    %cst_12 = arith.constant dense<0.000000e+00> : vector<16x16xf32>
    %18 = tpu.matmul %17, %13, %cst_12 {dimension_numbers = #tpu.dot_dimension_numbers<[1], [1], [0], [0], [0, 0, 1, 0], [], []>} : vector<16x16xbf16>, vector<16x16xbf16>, vector<16x16xf32> -> vector<16x16xf32>
    %cst_13 = arith.constant 2.500000e-01 : f32
    %19 = vector.broadcast %cst_13 : f32 to vector<16x16xf32>
    %20 = arith.mulf %18, %19 : vector<16x16xf32>
    %21 = vector.broadcast %5 : vector<1x16xf32> to vector<16x16xf32>
    %22 = arith.addf %20, %21 : vector<16x16xf32>
    %cst_14 = arith.constant dense<0xFF800000> : vector<16xf32>
    %23 = vector.multi_reduction <maximumf>, %22, %cst_14 [1] : vector<16x16xf32> to vector<16xf32>
    %24 = vector.shape_cast %23 : vector<16xf32> to vector<16x1xf32>
    %25 = vector.broadcast %24 : vector<16x1xf32> to vector<16x16xf32>
    %26 = arith.subf %22, %25 : vector<16x16xf32>
    %27 = math.exp %26 : vector<16x16xf32>
    %cst_15 = arith.constant dense<0.000000e+00> : vector<16xf32>
    %28 = vector.multi_reduction <add>, %27, %cst_15 [1] : vector<16x16xf32> to vector<16xf32>
    %29 = vector.shape_cast %28 : vector<16xf32> to vector<16x1xf32>
    %30 = tpu.reciprocal %29 {approx = true} : vector<16x1xf32> -> vector<16x1xf32>
    %31 = vector.broadcast %30 : vector<16x1xf32> to vector<16x16xf32>
    %32 = arith.mulf %27, %31 : vector<16x16xf32>
    %33 = arith.truncf %32 : vector<16x16xf32> to vector<16x16xbf16>
    %cst_16 = arith.constant dense<0.000000e+00> : vector<16x16xf32>
    %34 = tpu.matmul %33, %15, %cst_16 {dimension_numbers = #tpu.dot_dimension_numbers<[1], [0], [0], [1], [0, 0, 1, 1], [], []>} : vector<16x16xbf16>, vector<16x16xbf16>, vector<16x16xf32> -> vector<16x16xf32>
    %35 = arith.truncf %34 : vector<16x16xf32> to vector<16x16xbf16>
    %c0_17 = arith.constant 0 : index
    %c0_18 = arith.constant 0 : index
    %36 = vector.load %arg17[%c0_17, %c0_18] : memref<16x32xbf16, #tpu.memory_space<vmem>>, vector<16x16xbf16>
    tpu.vector_store %arg17[%c0_17, %c0_18], %35 {strides = array<i32>} : memref<16x32xbf16, #tpu.memory_space<vmem>>, vector<16x16xbf16>,
    %37 = vector.extract_strided_slice %11 {offsets = [0, 48], sizes = [16, 16], strides = [1, 1]} : vector<16x96xf32> to vector<16x16xf32>
    %38 = arith.truncf %37 : vector<16x16xf32> to vector<16x16xbf16>
    %39 = vector.extract_strided_slice %11 {offsets = [0, 80], sizes = [16, 16], strides = [1, 1]} : vector<16x96xf32> to vector<16x16xf32>
    %40 = arith.truncf %39 : vector<16x16xf32> to vector<16x16xbf16>
    %41 = vector.extract_strided_slice %11 {offsets = [0, 16], sizes = [16, 16], strides = [1, 1]} : vector<16x96xf32> to vector<16x16xf32>
    %42 = arith.truncf %41 : vector<16x16xf32> to vector<16x16xbf16>
    %cst_19 = arith.constant dense<0.000000e+00> : vector<16x16xf32>
    %43 = tpu.matmul %42, %38, %cst_19 {dimension_numbers = #tpu.dot_dimension_numbers<[1], [1], [0], [0], [0, 0, 1, 0], [], []>} : vector<16x16xbf16>, vector<16x16xbf16>, vector<16x16xf32> -> vector<16x16xf32>
    %cst_20 = arith.constant 2.500000e-01 : f32
    %44 = vector.broadcast %cst_20 : f32 to vector<16x16xf32>
    %45 = arith.mulf %43, %44 : vector<16x16xf32>
    %46 = vector.broadcast %5 : vector<1x16xf32> to vector<16x16xf32>
    %47 = arith.addf %45, %46 : vector<16x16xf32>
    %cst_21 = arith.constant dense<0xFF800000> : vector<16xf32>
    %48 = vector.multi_reduction <maximumf>, %47, %cst_21 [1] : vector<16x16xf32> to vector<16xf32>
    %49 = vector.shape_cast %48 : vector<16xf32> to vector<16x1xf32>
    %50 = vector.broadcast %49 : vector<16x1xf32> to vector<16x16xf32>
    %51 = arith.subf %47, %50 : vector<16x16xf32>
    %52 = math.exp %51 : vector<16x16xf32>
    %cst_22 = arith.constant dense<0.000000e+00> : vector<16xf32>
    %53 = vector.multi_reduction <add>, %52, %cst_22 [1] : vector<16x16xf32> to vector<16xf32>
    %54 = vector.shape_cast %53 : vector<16xf32> to vector<16x1xf32>
    %55 = tpu.reciprocal %54 {approx = true} : vector<16x1xf32> -> vector<16x1xf32>
    %56 = vector.broadcast %55 : vector<16x1xf32> to vector<16x16xf32>
    %57 = arith.mulf %52, %56 : vector<16x16xf32>
    %58 = arith.truncf %57 : vector<16x16xf32> to vector<16x16xbf16>
    %cst_23 = arith.constant dense<0.000000e+00> : vector<16x16xf32>
    %59 = tpu.matmul %58, %40, %cst_23 {dimension_numbers = #tpu.dot_dimension_numbers<[1], [0], [0], [1], [0, 0, 1, 1], [], []>} : vector<16x16xbf16>, vector<16x16xbf16>, vector<16x16xf32> -> vector<16x16xf32>
    %60 = arith.truncf %59 : vector<16x16xf32> to vector<16x16xbf16>
    %c0_24 = arith.constant 0 : index
    %c16 = arith.constant 16 : index
    %61 = vector.load %arg17[%c0_24, %c16] : memref<16x32xbf16, #tpu.memory_space<vmem>>, vector<16x16xbf16>
    tpu.vector_store %arg17[%c0_24, %c16], %60 {strides = array<i32>} : memref<16x32xbf16, #tpu.memory_space<vmem>>, vector<16x16xbf16>,
    %c0_25 = arith.constant 0 : index
    %c0_26 = arith.constant 0 : index
    %62 = vector.load %arg17[%c0_25, %c0_26] : memref<16x32xbf16, #tpu.memory_space<vmem>>, vector<16x32xbf16>
    %c0_27 = arith.constant 0 : index
    %c0_28 = arith.constant 0 : index
    %63 = vector.load %arg6[%c0_27, %c0_28] : memref<32x32xbf16, #tpu.memory_space<vmem>>, vector<32x32xbf16>
    %cst_29 = arith.constant dense<0.000000e+00> : vector<16x32xf32>
    %64 = tpu.matmul %62, %63, %cst_29 {dimension_numbers = #tpu.dot_dimension_numbers<[1], [0], [0], [1], [0, 0, 1, 1], [], []>} : vector<16x32xbf16>, vector<32x32xbf16>, vector<16x32xf32> -> vector<16x32xf32>
    %c0_30 = arith.constant 0 : index
    %c0_31 = arith.constant 0 : index
    %65 = vector.load %arg7[%c0_30, %c0_31] : memref<1x32xf32, #tpu.memory_space<vmem>>, vector<1x32xf32>
    %66 = vector.broadcast %65 : vector<1x32xf32> to vector<16x32xf32>
    %67 = arith.addf %64, %66 : vector<16x32xf32>
    %68 = arith.addf %1, %67 : vector<16x32xf32>
    %c0_32 = arith.constant 0 : index
    %c0_33 = arith.constant 0 : index
    %69 = vector.load %arg8[%c0_32, %c0_33] : memref<1x32xf32, #tpu.memory_space<vmem>>, vector<1x32xf32>
    %c0_34 = arith.constant 0 : index
    %c0_35 = arith.constant 0 : index
    %70 = vector.load %arg9[%c0_34, %c0_35] : memref<1x32xf32, #tpu.memory_space<vmem>>, vector<1x32xf32>
    %cst_36 = arith.constant dense<0.000000e+00> : vector<16xf32>
    %71 = vector.multi_reduction <add>, %68, %cst_36 [1] : vector<16x32xf32> to vector<16xf32>
    %72 = vector.shape_cast %71 : vector<16xf32> to vector<16x1xf32>
    %cst_37 = arith.constant 3.200000e+01 : f32
    %73 = vector.broadcast %cst_37 : f32 to vector<16x1xf32>
    %74 = arith.divf %72, %73 : vector<16x1xf32>
    %75 = vector.broadcast %74 : vector<16x1xf32> to vector<16x32xf32>
    %76 = arith.subf %68, %75 : vector<16x32xf32>
    %77 = arith.mulf %76, %76 : vector<16x32xf32>
    %cst_38 = arith.constant dense<0.000000e+00> : vector<16xf32>
    %78 = vector.multi_reduction <add>, %77, %cst_38 [1] : vector<16x32xf32> to vector<16xf32>
    %79 = vector.shape_cast %78 : vector<16xf32> to vector<16x1xf32>
    %cst_39 = arith.constant 3.200000e+01 : f32
    %80 = vector.broadcast %cst_39 : f32 to vector<16x1xf32>
    %81 = arith.divf %79, %80 : vector<16x1xf32>
    %82 = vector.broadcast %74 : vector<16x1xf32> to vector<16x32xf32>
    %83 = arith.subf %68, %82 : vector<16x32xf32>
    %cst_40 = arith.constant 9.99999974E-6 : f32
    %84 = vector.broadcast %cst_40 : f32 to vector<16x1xf32>
    %85 = arith.addf %81, %84 : vector<16x1xf32>
    %86 = math.rsqrt %85 : vector<16x1xf32>
    %87 = vector.broadcast %86 : vector<16x1xf32> to vector<16x32xf32>
    %88 = arith.mulf %83, %87 : vector<16x32xf32>
    %89 = vector.broadcast %69 : vector<1x32xf32> to vector<16x32xf32>
    %90 = arith.mulf %88, %89 : vector<16x32xf32>
    %91 = vector.broadcast %70 : vector<1x32xf32> to vector<16x32xf32>
    %92 = arith.addf %90, %91 : vector<16x32xf32>
    %93 = vector.broadcast %3 : vector<16x1xf32> to vector<16x32xf32>
    %94 = arith.mulf %92, %93 : vector<16x32xf32>
    %cst_41 = arith.constant 0.000000e+00 : f32
    %95 = vector.broadcast %cst_41 : f32 to vector<1x32xf32>
    %c0_42 = arith.constant 0 : index
    %c0_43 = arith.constant 0 : index
    %96 = vector.load %arg18[%c0_42, %c0_43] : memref<18x32xf32, #tpu.memory_space<vmem>>, vector<1x32xf32>
    tpu.vector_store %arg18[%c0_42, %c0_43], %95 {strides = array<i32>} : memref<18x32xf32, #tpu.memory_space<vmem>>, vector<1x32xf32>,
    %cst_44 = arith.constant 0.000000e+00 : f32
    %97 = vector.broadcast %cst_44 : f32 to vector<1x32xf32>
    %c17 = arith.constant 17 : index
    %c0_45 = arith.constant 0 : index
    %98 = vector.load %arg18[%c17, %c0_45] : memref<18x32xf32, #tpu.memory_space<vmem>>, vector<1x32xf32>
    tpu.vector_store %arg18[%c17, %c0_45], %97 {strides = array<i32>} : memref<18x32xf32, #tpu.memory_space<vmem>>, vector<1x32xf32>,
    %c1 = arith.constant 1 : index
    %c0_46 = arith.constant 0 : index
    %99 = vector.load %arg18[%c1, %c0_46] : memref<18x32xf32, #tpu.memory_space<vmem>>, vector<16x32xf32>
    tpu.vector_store %arg18[%c1, %c0_46], %94 {strides = array<i32>} : memref<18x32xf32, #tpu.memory_space<vmem>>, vector<16x32xf32>,
    %cst_47 = arith.constant 0.000000e+00 : f32
    %100 = vector.broadcast %cst_47 : f32 to vector<16x64xf32>
    %c0_48 = arith.constant 0 : index
    %c0_49 = arith.constant 0 : index
    %101 = vector.load %arg18[%c0_48, %c0_49] : memref<18x32xf32, #tpu.memory_space<vmem>>, vector<16x32xf32>
    %102 = arith.truncf %101 : vector<16x32xf32> to vector<16x32xbf16>
    %c0_50 = arith.constant 0 : index
    %c0_51 = arith.constant 0 : index
    %c0_52 = arith.constant 0 : index
    %103 = vector.load %arg10[%c0_50, %c0_51, %c0_52] : memref<3x32x64xbf16, #tpu.memory_space<vmem>>, vector<1x32x64xbf16>
    %104 = vector.shape_cast %103 : vector<1x32x64xbf16> to vector<32x64xbf16>
    %cst_53 = arith.constant dense<0.000000e+00> : vector<16x64xf32>
    %105 = tpu.matmul %102, %104, %cst_53 {dimension_numbers = #tpu.dot_dimension_numbers<[1], [0], [0], [1], [0, 0, 1, 1], [], []>} : vector<16x32xbf16>, vector<32x64xbf16>, vector<16x64xf32> -> vector<16x64xf32>
    %106 = arith.addf %100, %105 : vector<16x64xf32>
    %c1_54 = arith.constant 1 : index
    %c0_55 = arith.constant 0 : index
    %107 = vector.load %arg18[%c1_54, %c0_55] : memref<18x32xf32, #tpu.memory_space<vmem>>, vector<16x32xf32>
    %108 = arith.truncf %107 : vector<16x32xf32> to vector<16x32xbf16>
    %c1_56 = arith.constant 1 : index
    %c0_57 = arith.constant 0 : index
    %c0_58 = arith.constant 0 : index
    %109 = vector.load %arg10[%c1_56, %c0_57, %c0_58] : memref<3x32x64xbf16, #tpu.memory_space<vmem>>, vector<1x32x64xbf16>
    %110 = vector.shape_cast %109 : vector<1x32x64xbf16> to vector<32x64xbf16>
    %cst_59 = arith.constant dense<0.000000e+00> : vector<16x64xf32>
    %111 = tpu.matmul %108, %110, %cst_59 {dimension_numbers = #tpu.dot_dimension_numbers<[1], [0], [0], [1], [0, 0, 1, 1], [], []>} : vector<16x32xbf16>, vector<32x64xbf16>, vector<16x64xf32> -> vector<16x64xf32>
    %112 = arith.addf %106, %111 : vector<16x64xf32>
    %c2 = arith.constant 2 : index
    %c0_60 = arith.constant 0 : index
    %113 = vector.load %arg18[%c2, %c0_60] : memref<18x32xf32, #tpu.memory_space<vmem>>, vector<16x32xf32>
    %114 = arith.truncf %113 : vector<16x32xf32> to vector<16x32xbf16>
    %c2_61 = arith.constant 2 : index
    %c0_62 = arith.constant 0 : index
    %c0_63 = arith.constant 0 : index
    %115 = vector.load %arg10[%c2_61, %c0_62, %c0_63] : memref<3x32x64xbf16, #tpu.memory_space<vmem>>, vector<1x32x64xbf16>
    %116 = vector.shape_cast %115 : vector<1x32x64xbf16> to vector<32x64xbf16>
    %cst_64 = arith.constant dense<0.000000e+00> : vector<16x64xf32>
    %117 = tpu.matmul %114, %116, %cst_64 {dimension_numbers = #tpu.dot_dimension_numbers<[1], [0], [0], [1], [0, 0, 1, 1], [], []>} : vector<16x32xbf16>, vector<32x64xbf16>, vector<16x64xf32> -> vector<16x64xf32>
    %118 = arith.addf %112, %117 : vector<16x64xf32>
    %c0_65 = arith.constant 0 : index
    %c0_66 = arith.constant 0 : index
    %119 = vector.load %arg11[%c0_65, %c0_66] : memref<1x64xf32, #tpu.memory_space<vmem>>, vector<1x64xf32>
    %120 = vector.broadcast %119 : vector<1x64xf32> to vector<16x64xf32>
    %121 = arith.addf %118, %120 : vector<16x64xf32>
    %cst_67 = arith.constant 0.000000e+00 : f32
    %122 = vector.broadcast %cst_67 : f32 to vector<16x64xf32>
    %123 = arith.maximumf %121, %122 : vector<16x64xf32>
    %124 = arith.truncf %123 : vector<16x64xf32> to vector<16x64xbf16>
    %c0_68 = arith.constant 0 : index
    %c0_69 = arith.constant 0 : index
    %125 = vector.load %arg12[%c0_68, %c0_69] : memref<64x32xbf16, #tpu.memory_space<vmem>>, vector<64x32xbf16>
    %cst_70 = arith.constant dense<0.000000e+00> : vector<16x32xf32>
    %126 = tpu.matmul %124, %125, %cst_70 {dimension_numbers = #tpu.dot_dimension_numbers<[1], [0], [0], [1], [0, 0, 1, 1], [], []>} : vector<16x64xbf16>, vector<64x32xbf16>, vector<16x32xf32> -> vector<16x32xf32>
    %c0_71 = arith.constant 0 : index
    %c0_72 = arith.constant 0 : index
    %127 = vector.load %arg13[%c0_71, %c0_72] : memref<1x32xf32, #tpu.memory_space<vmem>>, vector<1x32xf32>
    %128 = vector.broadcast %127 : vector<1x32xf32> to vector<16x32xf32>
    %129 = arith.addf %126, %128 : vector<16x32xf32>
    %130 = arith.addf %94, %129 : vector<16x32xf32>
    %c0_73 = arith.constant 0 : index
    %c0_74 = arith.constant 0 : index
    %131 = vector.load %arg14[%c0_73, %c0_74] : memref<1x32xf32, #tpu.memory_space<vmem>>, vector<1x32xf32>
    %c0_75 = arith.constant 0 : index
    %c0_76 = arith.constant 0 : index
    %132 = vector.load %arg15[%c0_75, %c0_76] : memref<1x32xf32, #tpu.memory_space<vmem>>, vector<1x32xf32>
    %cst_77 = arith.constant dense<0.000000e+00> : vector<16xf32>
    %133 = vector.multi_reduction <add>, %130, %cst_77 [1] : vector<16x32xf32> to vector<16xf32>
    %134 = vector.shape_cast %133 : vector<16xf32> to vector<16x1xf32>
    %cst_78 = arith.constant 3.200000e+01 : f32
    %135 = vector.broadcast %cst_78 : f32 to vector<16x1xf32>
    %136 = arith.divf %134, %135 : vector<16x1xf32>
    %137 = vector.broadcast %136 : vector<16x1xf32> to vector<16x32xf32>
    %138 = arith.subf %130, %137 : vector<16x32xf32>
    %139 = arith.mulf %138, %138 : vector<16x32xf32>
    %cst_79 = arith.constant dense<0.000000e+00> : vector<16xf32>
    %140 = vector.multi_reduction <add>, %139, %cst_79 [1] : vector<16x32xf32> to vector<16xf32>
    %141 = vector.shape_cast %140 : vector<16xf32> to vector<16x1xf32>
    %cst_80 = arith.constant 3.200000e+01 : f32
    %142 = vector.broadcast %cst_80 : f32 to vector<16x1xf32>
    %143 = arith.divf %141, %142 : vector<16x1xf32>
    %144 = vector.broadcast %136 : vector<16x1xf32> to vector<16x32xf32>
    %145 = arith.subf %130, %144 : vector<16x32xf32>
    %cst_81 = arith.constant 9.99999974E-6 : f32
    %146 = vector.broadcast %cst_81 : f32 to vector<16x1xf32>
    %147 = arith.addf %143, %146 : vector<16x1xf32>
    %148 = math.rsqrt %147 : vector<16x1xf32>
    %149 = vector.broadcast %148 : vector<16x1xf32> to vector<16x32xf32>
    %150 = arith.mulf %145, %149 : vector<16x32xf32>
    %151 = vector.broadcast %131 : vector<1x32xf32> to vector<16x32xf32>
    %152 = arith.mulf %150, %151 : vector<16x32xf32>
    %153 = vector.broadcast %132 : vector<1x32xf32> to vector<16x32xf32>
    %154 = arith.addf %152, %153 : vector<16x32xf32>
    %155 = vector.broadcast %3 : vector<16x1xf32> to vector<16x32xf32>
    %156 = arith.mulf %154, %155 : vector<16x32xf32>
    %c0_82 = arith.constant 0 : index
    %c0_83 = arith.constant 0 : index
    %c0_84 = arith.constant 0 : index
    %157 = vector.load %arg16[%c0_82, %c0_83, %c0_84] : memref<1x16x32xf32, #tpu.memory_space<vmem>>, vector<1x16x32xf32>
    %158 = vector.shape_cast %157 : vector<1x16x32xf32> to vector<16x32xf32>
    %159 = vector.shape_cast %156 : vector<16x32xf32> to vector<1x16x32xf32>
    tpu.vector_store %arg16[%c0_82, %c0_83, %c0_84], %159 {strides = array<i32>} : memref<1x16x32xf32, #tpu.memory_space<vmem>>, vector<1x16x32xf32>,
    return
  }
  func.func @transform_0(%arg0: i32) -> (i32, i32, i32) {
    %c0_i32 = arith.constant 0 : i32
    %c0_i32_0 = arith.constant 0 : i32
    %c0_i32_1 = arith.constant 0 : i32
    return %arg0, %c0_i32, %c0_i32_0 : i32, i32, i32
  }
  func.func @transform_1(%arg0: i32) -> (i32, i32, i32) {
    %c0_i32 = arith.constant 0 : i32
    %c0_i32_0 = arith.constant 0 : i32
    %c0_i32_1 = arith.constant 0 : i32
    return %arg0, %c0_i32, %c0_i32_0 : i32, i32, i32
  }
  func.func @transform_2(%arg0: i32) -> (i32, i32, i32) {
    %c0_i32 = arith.constant 0 : i32
    %c0_i32_0 = arith.constant 0 : i32
    %c0_i32_1 = arith.constant 0 : i32
    return %arg0, %c0_i32, %c0_i32_0 : i32, i32, i32
  }
  func.func @transform_3(%arg0: i32) -> (i32, i32) {
    %c0_i32 = arith.constant 0 : i32
    %c0_i32_0 = arith.constant 0 : i32
    %c0_i32_1 = arith.constant 0 : i32
    return %c0_i32, %c0_i32_0 : i32, i32
  }
  func.func @transform_4(%arg0: i32) -> (i32, i32) {
    %c0_i32 = arith.constant 0 : i32
    %c0_i32_0 = arith.constant 0 : i32
    %c0_i32_1 = arith.constant 0 : i32
    return %c0_i32, %c0_i32_0 : i32, i32
  }
  func.func @transform_5(%arg0: i32) -> (i32, i32) {
    %c0_i32 = arith.constant 0 : i32
    %c0_i32_0 = arith.constant 0 : i32
    %c0_i32_1 = arith.constant 0 : i32
    return %c0_i32, %c0_i32_0 : i32, i32
  }
  func.func @transform_6(%arg0: i32) -> (i32, i32) {
    %c0_i32 = arith.constant 0 : i32
    %c0_i32_0 = arith.constant 0 : i32
    %c0_i32_1 = arith.constant 0 : i32
    return %c0_i32, %c0_i32_0 : i32, i32
  }
  func.func @transform_7(%arg0: i32) -> (i32, i32) {
    %c0_i32 = arith.constant 0 : i32
    %c0_i32_0 = arith.constant 0 : i32
    %c0_i32_1 = arith.constant 0 : i32
    return %c0_i32, %c0_i32_0 : i32, i32
  }
  func.func @transform_8(%arg0: i32) -> (i32, i32) {
    %c0_i32 = arith.constant 0 : i32
    %c0_i32_0 = arith.constant 0 : i32
    %c0_i32_1 = arith.constant 0 : i32
    return %c0_i32, %c0_i32_0 : i32, i32
  }
  func.func @transform_9(%arg0: i32) -> (i32, i32, i32) {
    %c0_i32 = arith.constant 0 : i32
    %c0_i32_0 = arith.constant 0 : i32
    %c0_i32_1 = arith.constant 0 : i32
    %c0_i32_2 = arith.constant 0 : i32
    return %c0_i32, %c0_i32_0, %c0_i32_1 : i32, i32, i32
  }
  func.func @transform_10(%arg0: i32) -> (i32, i32) {
    %c0_i32 = arith.constant 0 : i32
    %c0_i32_0 = arith.constant 0 : i32
    %c0_i32_1 = arith.constant 0 : i32
    return %c0_i32, %c0_i32_0 : i32, i32
  }
  func.func @transform_11(%arg0: i32) -> (i32, i32) {
    %c0_i32 = arith.constant 0 : i32
    %c0_i32_0 = arith.constant 0 : i32
    %c0_i32_1 = arith.constant 0 : i32
    return %c0_i32, %c0_i32_0 : i32, i32
  }
  func.func @transform_12(%arg0: i32) -> (i32, i32) {
    %c0_i32 = arith.constant 0 : i32
    %c0_i32_0 = arith.constant 0 : i32
    %c0_i32_1 = arith.constant 0 : i32
    return %c0_i32, %c0_i32_0 : i32, i32
  }
  func.func @transform_13(%arg0: i32) -> (i32, i32) {
    %c0_i32 = arith.constant 0 : i32
    %c0_i32_0 = arith.constant 0 : i32
    %c0_i32_1 = arith.constant 0 : i32
    return %c0_i32, %c0_i32_0 : i32, i32
  }
  func.func @transform_14(%arg0: i32) -> (i32, i32) {
    %c0_i32 = arith.constant 0 : i32
    %c0_i32_0 = arith.constant 0 : i32
    %c0_i32_1 = arith.constant 0 : i32
    return %c0_i32, %c0_i32_0 : i32, i32
  }
  func.func @transform_15(%arg0: i32) -> (i32, i32, i32) {
    %c0_i32 = arith.constant 0 : i32
    %c0_i32_0 = arith.constant 0 : i32
    %c0_i32_1 = arith.constant 0 : i32
    return %arg0, %c0_i32, %c0_i32_0 : i32, i32, i32
  }
}

module attributes {stable_mosaic.version = 11 : i64} {
  func.func @postnet_kernel(%arg0: i32, %arg1: memref<1x16x16xf32, #tpu.memory_space<vmem>>, %arg2: memref<5x16x32xbf16, #tpu.memory_space<vmem>>, %arg3: memref<1x32xf32, #tpu.memory_space<vmem>>, %arg4: memref<5x32x32xbf16, #tpu.memory_space<vmem>>, %arg5: memref<1x32xf32, #tpu.memory_space<vmem>>, %arg6: memref<5x32x16xbf16, #tpu.memory_space<vmem>>, %arg7: memref<1x16xf32, #tpu.memory_space<vmem>>, %arg8: memref<1x16x16xf32, #tpu.memory_space<vmem>>, %arg9: memref<20x32xf32, #tpu.memory_space<vmem>>) attributes {dimension_semantics = [#tpu.dimension_semantics<parallel>], iteration_bounds = array<i64: 2>, scalar_prefetch = 0 : i64, scratch_operands = 1 : i64, tpu.core_type = #tpu.core_type<tc>, window_params = [{transform_indices = @transform_0, window_bounds = array<i64: 1, 16, 16>}, {pipeline_mode = #tpu.pipeline_mode<synchronous>, transform_indices = @transform_1, window_bounds = array<i64: 5, 16, 32>}, {pipeline_mode = #tpu.pipeline_mode<synchronous>, transform_indices = @transform_2, window_bounds = array<i64: 1, 32>}, {pipeline_mode = #tpu.pipeline_mode<synchronous>, transform_indices = @transform_3, window_bounds = array<i64: 5, 32, 32>}, {pipeline_mode = #tpu.pipeline_mode<synchronous>, transform_indices = @transform_4, window_bounds = array<i64: 1, 32>}, {pipeline_mode = #tpu.pipeline_mode<synchronous>, transform_indices = @transform_5, window_bounds = array<i64: 5, 32, 16>}, {pipeline_mode = #tpu.pipeline_mode<synchronous>, transform_indices = @transform_6, window_bounds = array<i64: 1, 16>}, {transform_indices = @transform_7, window_bounds = array<i64: 1, 16, 16>}]} {
    %c0 = arith.constant 0 : index
    %c0_0 = arith.constant 0 : index
    %c0_1 = arith.constant 0 : index
    %0 = vector.load %arg1[%c0, %c0_0, %c0_1] : memref<1x16x16xf32, #tpu.memory_space<vmem>>, vector<1x16x16xf32>
    %1 = vector.shape_cast %0 : vector<1x16x16xf32> to vector<16x16xf32>
    %cst = arith.constant 0.000000e+00 : f32
    %2 = vector.broadcast %cst : f32 to vector<2x32xf32>
    %c0_2 = arith.constant 0 : index
    %c0_3 = arith.constant 0 : index
    %3 = vector.load %arg9[%c0_2, %c0_3] : memref<20x32xf32, #tpu.memory_space<vmem>>, vector<2x32xf32>
    tpu.vector_store %arg9[%c0_2, %c0_3], %2 {strides = array<i32>} : memref<20x32xf32, #tpu.memory_space<vmem>>, vector<2x32xf32>,
    %cst_4 = arith.constant 0.000000e+00 : f32
    %4 = vector.broadcast %cst_4 : f32 to vector<2x32xf32>
    %c18 = arith.constant 18 : index
    %c0_5 = arith.constant 0 : index
    %5 = vector.load %arg9[%c18, %c0_5] : memref<20x32xf32, #tpu.memory_space<vmem>>, vector<2x32xf32>
    tpu.vector_store %arg9[%c18, %c0_5], %4 {strides = array<i32>} : memref<20x32xf32, #tpu.memory_space<vmem>>, vector<2x32xf32>,
    %c2 = arith.constant 2 : index
    %c0_6 = arith.constant 0 : index
    %6 = vector.load %arg9[%c2, %c0_6] : memref<20x32xf32, #tpu.memory_space<vmem>>, vector<16x16xf32>
    tpu.vector_store %arg9[%c2, %c0_6], %1 {strides = array<i32>} : memref<20x32xf32, #tpu.memory_space<vmem>>, vector<16x16xf32>,
    %cst_7 = arith.constant 0.000000e+00 : f32
    %7 = vector.broadcast %cst_7 : f32 to vector<16x32xf32>
    %c0_8 = arith.constant 0 : index
    %c0_9 = arith.constant 0 : index
    %8 = vector.load %arg9[%c0_8, %c0_9] : memref<20x32xf32, #tpu.memory_space<vmem>>, vector<16x16xf32>
    %9 = arith.truncf %8 : vector<16x16xf32> to vector<16x16xbf16>
    %c0_10 = arith.constant 0 : index
    %c0_11 = arith.constant 0 : index
    %c0_12 = arith.constant 0 : index
    %10 = vector.load %arg2[%c0_10, %c0_11, %c0_12] : memref<5x16x32xbf16, #tpu.memory_space<vmem>>, vector<1x16x32xbf16>
    %11 = vector.shape_cast %10 : vector<1x16x32xbf16> to vector<16x32xbf16>
    %cst_13 = arith.constant dense<0.000000e+00> : vector<16x32xf32>
    %12 = tpu.matmul %9, %11, %cst_13 {dimension_numbers = #tpu.dot_dimension_numbers<[1], [0], [0], [1], [0, 0, 1, 1], [], []>} : vector<16x16xbf16>, vector<16x32xbf16>, vector<16x32xf32> -> vector<16x32xf32>
    %13 = arith.addf %7, %12 : vector<16x32xf32>
    %c1 = arith.constant 1 : index
    %c0_14 = arith.constant 0 : index
    %14 = vector.load %arg9[%c1, %c0_14] : memref<20x32xf32, #tpu.memory_space<vmem>>, vector<16x16xf32>
    %15 = arith.truncf %14 : vector<16x16xf32> to vector<16x16xbf16>
    %c1_15 = arith.constant 1 : index
    %c0_16 = arith.constant 0 : index
    %c0_17 = arith.constant 0 : index
    %16 = vector.load %arg2[%c1_15, %c0_16, %c0_17] : memref<5x16x32xbf16, #tpu.memory_space<vmem>>, vector<1x16x32xbf16>
    %17 = vector.shape_cast %16 : vector<1x16x32xbf16> to vector<16x32xbf16>
    %cst_18 = arith.constant dense<0.000000e+00> : vector<16x32xf32>
    %18 = tpu.matmul %15, %17, %cst_18 {dimension_numbers = #tpu.dot_dimension_numbers<[1], [0], [0], [1], [0, 0, 1, 1], [], []>} : vector<16x16xbf16>, vector<16x32xbf16>, vector<16x32xf32> -> vector<16x32xf32>
    %19 = arith.addf %13, %18 : vector<16x32xf32>
    %c2_19 = arith.constant 2 : index
    %c0_20 = arith.constant 0 : index
    %20 = vector.load %arg9[%c2_19, %c0_20] : memref<20x32xf32, #tpu.memory_space<vmem>>, vector<16x16xf32>
    %21 = arith.truncf %20 : vector<16x16xf32> to vector<16x16xbf16>
    %c2_21 = arith.constant 2 : index
    %c0_22 = arith.constant 0 : index
    %c0_23 = arith.constant 0 : index
    %22 = vector.load %arg2[%c2_21, %c0_22, %c0_23] : memref<5x16x32xbf16, #tpu.memory_space<vmem>>, vector<1x16x32xbf16>
    %23 = vector.shape_cast %22 : vector<1x16x32xbf16> to vector<16x32xbf16>
    %cst_24 = arith.constant dense<0.000000e+00> : vector<16x32xf32>
    %24 = tpu.matmul %21, %23, %cst_24 {dimension_numbers = #tpu.dot_dimension_numbers<[1], [0], [0], [1], [0, 0, 1, 1], [], []>} : vector<16x16xbf16>, vector<16x32xbf16>, vector<16x32xf32> -> vector<16x32xf32>
    %25 = arith.addf %19, %24 : vector<16x32xf32>
    %c3 = arith.constant 3 : index
    %c0_25 = arith.constant 0 : index
    %26 = vector.load %arg9[%c3, %c0_25] : memref<20x32xf32, #tpu.memory_space<vmem>>, vector<16x16xf32>
    %27 = arith.truncf %26 : vector<16x16xf32> to vector<16x16xbf16>
    %c3_26 = arith.constant 3 : index
    %c0_27 = arith.constant 0 : index
    %c0_28 = arith.constant 0 : index
    %28 = vector.load %arg2[%c3_26, %c0_27, %c0_28] : memref<5x16x32xbf16, #tpu.memory_space<vmem>>, vector<1x16x32xbf16>
    %29 = vector.shape_cast %28 : vector<1x16x32xbf16> to vector<16x32xbf16>
    %cst_29 = arith.constant dense<0.000000e+00> : vector<16x32xf32>
    %30 = tpu.matmul %27, %29, %cst_29 {dimension_numbers = #tpu.dot_dimension_numbers<[1], [0], [0], [1], [0, 0, 1, 1], [], []>} : vector<16x16xbf16>, vector<16x32xbf16>, vector<16x32xf32> -> vector<16x32xf32>
    %31 = arith.addf %25, %30 : vector<16x32xf32>
    %c4 = arith.constant 4 : index
    %c0_30 = arith.constant 0 : index
    %32 = vector.load %arg9[%c4, %c0_30] : memref<20x32xf32, #tpu.memory_space<vmem>>, vector<16x16xf32>
    %33 = arith.truncf %32 : vector<16x16xf32> to vector<16x16xbf16>
    %c4_31 = arith.constant 4 : index
    %c0_32 = arith.constant 0 : index
    %c0_33 = arith.constant 0 : index
    %34 = vector.load %arg2[%c4_31, %c0_32, %c0_33] : memref<5x16x32xbf16, #tpu.memory_space<vmem>>, vector<1x16x32xbf16>
    %35 = vector.shape_cast %34 : vector<1x16x32xbf16> to vector<16x32xbf16>
    %cst_34 = arith.constant dense<0.000000e+00> : vector<16x32xf32>
    %36 = tpu.matmul %33, %35, %cst_34 {dimension_numbers = #tpu.dot_dimension_numbers<[1], [0], [0], [1], [0, 0, 1, 1], [], []>} : vector<16x16xbf16>, vector<16x32xbf16>, vector<16x32xf32> -> vector<16x32xf32>
    %37 = arith.addf %31, %36 : vector<16x32xf32>
    %c0_35 = arith.constant 0 : index
    %c0_36 = arith.constant 0 : index
    %38 = vector.load %arg3[%c0_35, %c0_36] : memref<1x32xf32, #tpu.memory_space<vmem>>, vector<1x32xf32>
    %39 = vector.broadcast %38 : vector<1x32xf32> to vector<16x32xf32>
    %40 = arith.addf %37, %39 : vector<16x32xf32>
    %41 = math.tanh %40 : vector<16x32xf32>
    %c2_37 = arith.constant 2 : index
    %c0_38 = arith.constant 0 : index
    %42 = vector.load %arg9[%c2_37, %c0_38] : memref<20x32xf32, #tpu.memory_space<vmem>>, vector<16x32xf32>
    tpu.vector_store %arg9[%c2_37, %c0_38], %41 {strides = array<i32>} : memref<20x32xf32, #tpu.memory_space<vmem>>, vector<16x32xf32>,
    %cst_39 = arith.constant 0.000000e+00 : f32
    %43 = vector.broadcast %cst_39 : f32 to vector<16x32xf32>
    %c0_40 = arith.constant 0 : index
    %c0_41 = arith.constant 0 : index
    %44 = vector.load %arg9[%c0_40, %c0_41] : memref<20x32xf32, #tpu.memory_space<vmem>>, vector<16x32xf32>
    %45 = arith.truncf %44 : vector<16x32xf32> to vector<16x32xbf16>
    %c0_42 = arith.constant 0 : index
    %c0_43 = arith.constant 0 : index
    %c0_44 = arith.constant 0 : index
    %46 = vector.load %arg4[%c0_42, %c0_43, %c0_44] : memref<5x32x32xbf16, #tpu.memory_space<vmem>>, vector<1x32x32xbf16>
    %47 = vector.shape_cast %46 : vector<1x32x32xbf16> to vector<32x32xbf16>
    %cst_45 = arith.constant dense<0.000000e+00> : vector<16x32xf32>
    %48 = tpu.matmul %45, %47, %cst_45 {dimension_numbers = #tpu.dot_dimension_numbers<[1], [0], [0], [1], [0, 0, 1, 1], [], []>} : vector<16x32xbf16>, vector<32x32xbf16>, vector<16x32xf32> -> vector<16x32xf32>
    %49 = arith.addf %43, %48 : vector<16x32xf32>
    %c1_46 = arith.constant 1 : index
    %c0_47 = arith.constant 0 : index
    %50 = vector.load %arg9[%c1_46, %c0_47] : memref<20x32xf32, #tpu.memory_space<vmem>>, vector<16x32xf32>
    %51 = arith.truncf %50 : vector<16x32xf32> to vector<16x32xbf16>
    %c1_48 = arith.constant 1 : index
    %c0_49 = arith.constant 0 : index
    %c0_50 = arith.constant 0 : index
    %52 = vector.load %arg4[%c1_48, %c0_49, %c0_50] : memref<5x32x32xbf16, #tpu.memory_space<vmem>>, vector<1x32x32xbf16>
    %53 = vector.shape_cast %52 : vector<1x32x32xbf16> to vector<32x32xbf16>
    %cst_51 = arith.constant dense<0.000000e+00> : vector<16x32xf32>
    %54 = tpu.matmul %51, %53, %cst_51 {dimension_numbers = #tpu.dot_dimension_numbers<[1], [0], [0], [1], [0, 0, 1, 1], [], []>} : vector<16x32xbf16>, vector<32x32xbf16>, vector<16x32xf32> -> vector<16x32xf32>
    %55 = arith.addf %49, %54 : vector<16x32xf32>
    %c2_52 = arith.constant 2 : index
    %c0_53 = arith.constant 0 : index
    %56 = vector.load %arg9[%c2_52, %c0_53] : memref<20x32xf32, #tpu.memory_space<vmem>>, vector<16x32xf32>
    %57 = arith.truncf %56 : vector<16x32xf32> to vector<16x32xbf16>
    %c2_54 = arith.constant 2 : index
    %c0_55 = arith.constant 0 : index
    %c0_56 = arith.constant 0 : index
    %58 = vector.load %arg4[%c2_54, %c0_55, %c0_56] : memref<5x32x32xbf16, #tpu.memory_space<vmem>>, vector<1x32x32xbf16>
    %59 = vector.shape_cast %58 : vector<1x32x32xbf16> to vector<32x32xbf16>
    %cst_57 = arith.constant dense<0.000000e+00> : vector<16x32xf32>
    %60 = tpu.matmul %57, %59, %cst_57 {dimension_numbers = #tpu.dot_dimension_numbers<[1], [0], [0], [1], [0, 0, 1, 1], [], []>} : vector<16x32xbf16>, vector<32x32xbf16>, vector<16x32xf32> -> vector<16x32xf32>
    %61 = arith.addf %55, %60 : vector<16x32xf32>
    %c3_58 = arith.constant 3 : index
    %c0_59 = arith.constant 0 : index
    %62 = vector.load %arg9[%c3_58, %c0_59] : memref<20x32xf32, #tpu.memory_space<vmem>>, vector<16x32xf32>
    %63 = arith.truncf %62 : vector<16x32xf32> to vector<16x32xbf16>
    %c3_60 = arith.constant 3 : index
    %c0_61 = arith.constant 0 : index
    %c0_62 = arith.constant 0 : index
    %64 = vector.load %arg4[%c3_60, %c0_61, %c0_62] : memref<5x32x32xbf16, #tpu.memory_space<vmem>>, vector<1x32x32xbf16>
    %65 = vector.shape_cast %64 : vector<1x32x32xbf16> to vector<32x32xbf16>
    %cst_63 = arith.constant dense<0.000000e+00> : vector<16x32xf32>
    %66 = tpu.matmul %63, %65, %cst_63 {dimension_numbers = #tpu.dot_dimension_numbers<[1], [0], [0], [1], [0, 0, 1, 1], [], []>} : vector<16x32xbf16>, vector<32x32xbf16>, vector<16x32xf32> -> vector<16x32xf32>
    %67 = arith.addf %61, %66 : vector<16x32xf32>
    %c4_64 = arith.constant 4 : index
    %c0_65 = arith.constant 0 : index
    %68 = vector.load %arg9[%c4_64, %c0_65] : memref<20x32xf32, #tpu.memory_space<vmem>>, vector<16x32xf32>
    %69 = arith.truncf %68 : vector<16x32xf32> to vector<16x32xbf16>
    %c4_66 = arith.constant 4 : index
    %c0_67 = arith.constant 0 : index
    %c0_68 = arith.constant 0 : index
    %70 = vector.load %arg4[%c4_66, %c0_67, %c0_68] : memref<5x32x32xbf16, #tpu.memory_space<vmem>>, vector<1x32x32xbf16>
    %71 = vector.shape_cast %70 : vector<1x32x32xbf16> to vector<32x32xbf16>
    %cst_69 = arith.constant dense<0.000000e+00> : vector<16x32xf32>
    %72 = tpu.matmul %69, %71, %cst_69 {dimension_numbers = #tpu.dot_dimension_numbers<[1], [0], [0], [1], [0, 0, 1, 1], [], []>} : vector<16x32xbf16>, vector<32x32xbf16>, vector<16x32xf32> -> vector<16x32xf32>
    %73 = arith.addf %67, %72 : vector<16x32xf32>
    %c0_70 = arith.constant 0 : index
    %c0_71 = arith.constant 0 : index
    %74 = vector.load %arg5[%c0_70, %c0_71] : memref<1x32xf32, #tpu.memory_space<vmem>>, vector<1x32xf32>
    %75 = vector.broadcast %74 : vector<1x32xf32> to vector<16x32xf32>
    %76 = arith.addf %73, %75 : vector<16x32xf32>
    %77 = math.tanh %76 : vector<16x32xf32>
    %c2_72 = arith.constant 2 : index
    %c0_73 = arith.constant 0 : index
    %78 = vector.load %arg9[%c2_72, %c0_73] : memref<20x32xf32, #tpu.memory_space<vmem>>, vector<16x32xf32>
    tpu.vector_store %arg9[%c2_72, %c0_73], %77 {strides = array<i32>} : memref<20x32xf32, #tpu.memory_space<vmem>>, vector<16x32xf32>,
    %cst_74 = arith.constant 0.000000e+00 : f32
    %79 = vector.broadcast %cst_74 : f32 to vector<16x16xf32>
    %c0_75 = arith.constant 0 : index
    %c0_76 = arith.constant 0 : index
    %80 = vector.load %arg9[%c0_75, %c0_76] : memref<20x32xf32, #tpu.memory_space<vmem>>, vector<16x32xf32>
    %81 = arith.truncf %80 : vector<16x32xf32> to vector<16x32xbf16>
    %c0_77 = arith.constant 0 : index
    %c0_78 = arith.constant 0 : index
    %c0_79 = arith.constant 0 : index
    %82 = vector.load %arg6[%c0_77, %c0_78, %c0_79] : memref<5x32x16xbf16, #tpu.memory_space<vmem>>, vector<1x32x16xbf16>
    %83 = vector.shape_cast %82 : vector<1x32x16xbf16> to vector<32x16xbf16>
    %cst_80 = arith.constant dense<0.000000e+00> : vector<16x16xf32>
    %84 = tpu.matmul %81, %83, %cst_80 {dimension_numbers = #tpu.dot_dimension_numbers<[1], [0], [0], [1], [0, 0, 1, 1], [], []>} : vector<16x32xbf16>, vector<32x16xbf16>, vector<16x16xf32> -> vector<16x16xf32>
    %85 = arith.addf %79, %84 : vector<16x16xf32>
    %c1_81 = arith.constant 1 : index
    %c0_82 = arith.constant 0 : index
    %86 = vector.load %arg9[%c1_81, %c0_82] : memref<20x32xf32, #tpu.memory_space<vmem>>, vector<16x32xf32>
    %87 = arith.truncf %86 : vector<16x32xf32> to vector<16x32xbf16>
    %c1_83 = arith.constant 1 : index
    %c0_84 = arith.constant 0 : index
    %c0_85 = arith.constant 0 : index
    %88 = vector.load %arg6[%c1_83, %c0_84, %c0_85] : memref<5x32x16xbf16, #tpu.memory_space<vmem>>, vector<1x32x16xbf16>
    %89 = vector.shape_cast %88 : vector<1x32x16xbf16> to vector<32x16xbf16>
    %cst_86 = arith.constant dense<0.000000e+00> : vector<16x16xf32>
    %90 = tpu.matmul %87, %89, %cst_86 {dimension_numbers = #tpu.dot_dimension_numbers<[1], [0], [0], [1], [0, 0, 1, 1], [], []>} : vector<16x32xbf16>, vector<32x16xbf16>, vector<16x16xf32> -> vector<16x16xf32>
    %91 = arith.addf %85, %90 : vector<16x16xf32>
    %c2_87 = arith.constant 2 : index
    %c0_88 = arith.constant 0 : index
    %92 = vector.load %arg9[%c2_87, %c0_88] : memref<20x32xf32, #tpu.memory_space<vmem>>, vector<16x32xf32>
    %93 = arith.truncf %92 : vector<16x32xf32> to vector<16x32xbf16>
    %c2_89 = arith.constant 2 : index
    %c0_90 = arith.constant 0 : index
    %c0_91 = arith.constant 0 : index
    %94 = vector.load %arg6[%c2_89, %c0_90, %c0_91] : memref<5x32x16xbf16, #tpu.memory_space<vmem>>, vector<1x32x16xbf16>
    %95 = vector.shape_cast %94 : vector<1x32x16xbf16> to vector<32x16xbf16>
    %cst_92 = arith.constant dense<0.000000e+00> : vector<16x16xf32>
    %96 = tpu.matmul %93, %95, %cst_92 {dimension_numbers = #tpu.dot_dimension_numbers<[1], [0], [0], [1], [0, 0, 1, 1], [], []>} : vector<16x32xbf16>, vector<32x16xbf16>, vector<16x16xf32> -> vector<16x16xf32>
    %97 = arith.addf %91, %96 : vector<16x16xf32>
    %c3_93 = arith.constant 3 : index
    %c0_94 = arith.constant 0 : index
    %98 = vector.load %arg9[%c3_93, %c0_94] : memref<20x32xf32, #tpu.memory_space<vmem>>, vector<16x32xf32>
    %99 = arith.truncf %98 : vector<16x32xf32> to vector<16x32xbf16>
    %c3_95 = arith.constant 3 : index
    %c0_96 = arith.constant 0 : index
    %c0_97 = arith.constant 0 : index
    %100 = vector.load %arg6[%c3_95, %c0_96, %c0_97] : memref<5x32x16xbf16, #tpu.memory_space<vmem>>, vector<1x32x16xbf16>
    %101 = vector.shape_cast %100 : vector<1x32x16xbf16> to vector<32x16xbf16>
    %cst_98 = arith.constant dense<0.000000e+00> : vector<16x16xf32>
    %102 = tpu.matmul %99, %101, %cst_98 {dimension_numbers = #tpu.dot_dimension_numbers<[1], [0], [0], [1], [0, 0, 1, 1], [], []>} : vector<16x32xbf16>, vector<32x16xbf16>, vector<16x16xf32> -> vector<16x16xf32>
    %103 = arith.addf %97, %102 : vector<16x16xf32>
    %c4_99 = arith.constant 4 : index
    %c0_100 = arith.constant 0 : index
    %104 = vector.load %arg9[%c4_99, %c0_100] : memref<20x32xf32, #tpu.memory_space<vmem>>, vector<16x32xf32>
    %105 = arith.truncf %104 : vector<16x32xf32> to vector<16x32xbf16>
    %c4_101 = arith.constant 4 : index
    %c0_102 = arith.constant 0 : index
    %c0_103 = arith.constant 0 : index
    %106 = vector.load %arg6[%c4_101, %c0_102, %c0_103] : memref<5x32x16xbf16, #tpu.memory_space<vmem>>, vector<1x32x16xbf16>
    %107 = vector.shape_cast %106 : vector<1x32x16xbf16> to vector<32x16xbf16>
    %cst_104 = arith.constant dense<0.000000e+00> : vector<16x16xf32>
    %108 = tpu.matmul %105, %107, %cst_104 {dimension_numbers = #tpu.dot_dimension_numbers<[1], [0], [0], [1], [0, 0, 1, 1], [], []>} : vector<16x32xbf16>, vector<32x16xbf16>, vector<16x16xf32> -> vector<16x16xf32>
    %109 = arith.addf %103, %108 : vector<16x16xf32>
    %c0_105 = arith.constant 0 : index
    %c0_106 = arith.constant 0 : index
    %110 = vector.load %arg7[%c0_105, %c0_106] : memref<1x16xf32, #tpu.memory_space<vmem>>, vector<1x16xf32>
    %111 = vector.broadcast %110 : vector<1x16xf32> to vector<16x16xf32>
    %112 = arith.addf %109, %111 : vector<16x16xf32>
    %113 = arith.addf %112, %1 : vector<16x16xf32>
    %c0_107 = arith.constant 0 : index
    %c0_108 = arith.constant 0 : index
    %c0_109 = arith.constant 0 : index
    %114 = vector.load %arg8[%c0_107, %c0_108, %c0_109] : memref<1x16x16xf32, #tpu.memory_space<vmem>>, vector<1x16x16xf32>
    %115 = vector.shape_cast %114 : vector<1x16x16xf32> to vector<16x16xf32>
    %116 = vector.shape_cast %113 : vector<16x16xf32> to vector<1x16x16xf32>
    tpu.vector_store %arg8[%c0_107, %c0_108, %c0_109], %116 {strides = array<i32>} : memref<1x16x16xf32, #tpu.memory_space<vmem>>, vector<1x16x16xf32>,
    return
  }
  func.func @transform_0(%arg0: i32) -> (i32, i32, i32) {
    %c0_i32 = arith.constant 0 : i32
    %c0_i32_0 = arith.constant 0 : i32
    %c0_i32_1 = arith.constant 0 : i32
    return %arg0, %c0_i32, %c0_i32_0 : i32, i32, i32
  }
  func.func @transform_1(%arg0: i32) -> (i32, i32, i32) {
    %c0_i32 = arith.constant 0 : i32
    %c0_i32_0 = arith.constant 0 : i32
    %c0_i32_1 = arith.constant 0 : i32
    %c0_i32_2 = arith.constant 0 : i32
    return %c0_i32, %c0_i32_0, %c0_i32_1 : i32, i32, i32
  }
  func.func @transform_2(%arg0: i32) -> (i32, i32) {
    %c0_i32 = arith.constant 0 : i32
    %c0_i32_0 = arith.constant 0 : i32
    %c0_i32_1 = arith.constant 0 : i32
    return %c0_i32, %c0_i32_0 : i32, i32
  }
  func.func @transform_3(%arg0: i32) -> (i32, i32, i32) {
    %c0_i32 = arith.constant 0 : i32
    %c0_i32_0 = arith.constant 0 : i32
    %c0_i32_1 = arith.constant 0 : i32
    %c0_i32_2 = arith.constant 0 : i32
    return %c0_i32, %c0_i32_0, %c0_i32_1 : i32, i32, i32
  }
  func.func @transform_4(%arg0: i32) -> (i32, i32) {
    %c0_i32 = arith.constant 0 : i32
    %c0_i32_0 = arith.constant 0 : i32
    %c0_i32_1 = arith.constant 0 : i32
    return %c0_i32, %c0_i32_0 : i32, i32
  }
  func.func @transform_5(%arg0: i32) -> (i32, i32, i32) {
    %c0_i32 = arith.constant 0 : i32
    %c0_i32_0 = arith.constant 0 : i32
    %c0_i32_1 = arith.constant 0 : i32
    %c0_i32_2 = arith.constant 0 : i32
    return %c0_i32, %c0_i32_0, %c0_i32_1 : i32, i32, i32
  }
  func.func @transform_6(%arg0: i32) -> (i32, i32) {
    %c0_i32 = arith.constant 0 : i32
    %c0_i32_0 = arith.constant 0 : i32
    %c0_i32_1 = arith.constant 0 : i32
    return %c0_i32, %c0_i32_0 : i32, i32
  }
  func.func @transform_7(%arg0: i32) -> (i32, i32, i32) {
    %c0_i32 = arith.constant 0 : i32
    %c0_i32_0 = arith.constant 0 : i32
    %c0_i32_1 = arith.constant 0 : i32
    return %arg0, %c0_i32, %c0_i32_0 : i32, i32, i32
  }
}

module attributes {stable_mosaic.version = 11 : i64} {
  func.func @predictor_kernel(%arg0: i32, %arg1: i32, %arg2: memref<1x8x32xf32, #tpu.memory_space<vmem>>, %arg3: memref<1x1x8xf32, #tpu.memory_space<vmem>>, %arg4: memref<1x3x32x32xbf16, #tpu.memory_space<vmem>>, %arg5: memref<1x1x32xf32, #tpu.memory_space<vmem>>, %arg6: memref<1x1x32xf32, #tpu.memory_space<vmem>>, %arg7: memref<1x1x32xf32, #tpu.memory_space<vmem>>, %arg8: memref<1x3x32x32xbf16, #tpu.memory_space<vmem>>, %arg9: memref<1x1x32xf32, #tpu.memory_space<vmem>>, %arg10: memref<1x1x32xf32, #tpu.memory_space<vmem>>, %arg11: memref<1x1x32xf32, #tpu.memory_space<vmem>>, %arg12: memref<1x1x32xf32, #tpu.memory_space<vmem>>, %arg13: memref<1x1x1xf32, #tpu.memory_space<vmem>>, %arg14: memref<1x1x1x8xf32, #tpu.memory_space<vmem>>, %arg15: memref<10x32xf32, #tpu.memory_space<vmem>>) attributes {dimension_semantics = [#tpu.dimension_semantics<parallel>, #tpu.dimension_semantics<arbitrary>], iteration_bounds = array<i64: 2, 3>, scalar_prefetch = 0 : i64, scratch_operands = 1 : i64, tpu.core_type = #tpu.core_type<tc>, window_params = [{transform_indices = @transform_0, window_bounds = array<i64: 1, 8, 32>}, {transform_indices = @transform_1, window_bounds = array<i64: 1, 1, 8>}, {transform_indices = @transform_2, window_bounds = array<i64: 1, 3, 32, 32>}, {transform_indices = @transform_3, window_bounds = array<i64: 1, 1, 32>}, {transform_indices = @transform_4, window_bounds = array<i64: 1, 1, 32>}, {transform_indices = @transform_5, window_bounds = array<i64: 1, 1, 32>}, {transform_indices = @transform_6, window_bounds = array<i64: 1, 3, 32, 32>}, {transform_indices = @transform_7, window_bounds = array<i64: 1, 1, 32>}, {transform_indices = @transform_8, window_bounds = array<i64: 1, 1, 32>}, {transform_indices = @transform_9, window_bounds = array<i64: 1, 1, 32>}, {transform_indices = @transform_10, window_bounds = array<i64: 1, 1, 32>}, {transform_indices = @transform_11, window_bounds = array<i64: 1, 1, 1>}, {transform_indices = @transform_12, window_bounds = array<i64: 1, 1, 1, 8>}]} {
    %cst = arith.constant 0.000000e+00 : f32
    %0 = vector.broadcast %cst : f32 to vector<1x32xf32>
    %c0 = arith.constant 0 : index
    %c0_0 = arith.constant 0 : index
    %1 = vector.load %arg15[%c0, %c0_0] : memref<10x32xf32, #tpu.memory_space<vmem>>, vector<1x32xf32>
    tpu.vector_store %arg15[%c0, %c0_0], %0 {strides = array<i32>} : memref<10x32xf32, #tpu.memory_space<vmem>>, vector<1x32xf32>,
    %cst_1 = arith.constant 0.000000e+00 : f32
    %2 = vector.broadcast %cst_1 : f32 to vector<1x32xf32>
    %c9 = arith.constant 9 : index
    %c0_2 = arith.constant 0 : index
    %3 = vector.load %arg15[%c9, %c0_2] : memref<10x32xf32, #tpu.memory_space<vmem>>, vector<1x32xf32>
    tpu.vector_store %arg15[%c9, %c0_2], %2 {strides = array<i32>} : memref<10x32xf32, #tpu.memory_space<vmem>>, vector<1x32xf32>,
    %c0_3 = arith.constant 0 : index
    %c0_4 = arith.constant 0 : index
    %c0_5 = arith.constant 0 : index
    %4 = vector.load %arg2[%c0_3, %c0_4, %c0_5] : memref<1x8x32xf32, #tpu.memory_space<vmem>>, vector<1x8x32xf32>
    %5 = vector.shape_cast %4 : vector<1x8x32xf32> to vector<8x32xf32>
    %c1 = arith.constant 1 : index
    %c0_6 = arith.constant 0 : index
    %6 = vector.load %arg15[%c1, %c0_6] : memref<10x32xf32, #tpu.memory_space<vmem>>, vector<8x32xf32>
    tpu.vector_store %arg15[%c1, %c0_6], %5 {strides = array<i32>} : memref<10x32xf32, #tpu.memory_space<vmem>>, vector<8x32xf32>,
    %cst_7 = arith.constant 0.000000e+00 : f32
    %7 = vector.broadcast %cst_7 : f32 to vector<8x32xf32>
    %c0_8 = arith.constant 0 : index
    %c0_9 = arith.constant 0 : index
    %8 = vector.load %arg15[%c0_8, %c0_9] : memref<10x32xf32, #tpu.memory_space<vmem>>, vector<8x32xf32>
    %9 = arith.truncf %8 : vector<8x32xf32> to vector<8x32xbf16>
    %c0_10 = arith.constant 0 : index
    %c0_11 = arith.constant 0 : index
    %c0_12 = arith.constant 0 : index
    %c0_13 = arith.constant 0 : index
    %10 = vector.load %arg4[%c0_10, %c0_11, %c0_12, %c0_13] : memref<1x3x32x32xbf16, #tpu.memory_space<vmem>>, vector<1x1x32x32xbf16>
    %11 = vector.shape_cast %10 : vector<1x1x32x32xbf16> to vector<32x32xbf16>
    %cst_14 = arith.constant dense<0.000000e+00> : vector<8x32xf32>
    %12 = tpu.matmul %9, %11, %cst_14 {dimension_numbers = #tpu.dot_dimension_numbers<[1], [0], [0], [1], [0, 0, 1, 1], [], []>} : vector<8x32xbf16>, vector<32x32xbf16>, vector<8x32xf32> -> vector<8x32xf32>
    %13 = arith.addf %7, %12 : vector<8x32xf32>
    %c1_15 = arith.constant 1 : index
    %c0_16 = arith.constant 0 : index
    %14 = vector.load %arg15[%c1_15, %c0_16] : memref<10x32xf32, #tpu.memory_space<vmem>>, vector<8x32xf32>
    %15 = arith.truncf %14 : vector<8x32xf32> to vector<8x32xbf16>
    %c0_17 = arith.constant 0 : index
    %c1_18 = arith.constant 1 : index
    %c0_19 = arith.constant 0 : index
    %c0_20 = arith.constant 0 : index
    %16 = vector.load %arg4[%c0_17, %c1_18, %c0_19, %c0_20] : memref<1x3x32x32xbf16, #tpu.memory_space<vmem>>, vector<1x1x32x32xbf16>
    %17 = vector.shape_cast %16 : vector<1x1x32x32xbf16> to vector<32x32xbf16>
    %cst_21 = arith.constant dense<0.000000e+00> : vector<8x32xf32>
    %18 = tpu.matmul %15, %17, %cst_21 {dimension_numbers = #tpu.dot_dimension_numbers<[1], [0], [0], [1], [0, 0, 1, 1], [], []>} : vector<8x32xbf16>, vector<32x32xbf16>, vector<8x32xf32> -> vector<8x32xf32>
    %19 = arith.addf %13, %18 : vector<8x32xf32>
    %c2 = arith.constant 2 : index
    %c0_22 = arith.constant 0 : index
    %20 = vector.load %arg15[%c2, %c0_22] : memref<10x32xf32, #tpu.memory_space<vmem>>, vector<8x32xf32>
    %21 = arith.truncf %20 : vector<8x32xf32> to vector<8x32xbf16>
    %c0_23 = arith.constant 0 : index
    %c2_24 = arith.constant 2 : index
    %c0_25 = arith.constant 0 : index
    %c0_26 = arith.constant 0 : index
    %22 = vector.load %arg4[%c0_23, %c2_24, %c0_25, %c0_26] : memref<1x3x32x32xbf16, #tpu.memory_space<vmem>>, vector<1x1x32x32xbf16>
    %23 = vector.shape_cast %22 : vector<1x1x32x32xbf16> to vector<32x32xbf16>
    %cst_27 = arith.constant dense<0.000000e+00> : vector<8x32xf32>
    %24 = tpu.matmul %21, %23, %cst_27 {dimension_numbers = #tpu.dot_dimension_numbers<[1], [0], [0], [1], [0, 0, 1, 1], [], []>} : vector<8x32xbf16>, vector<32x32xbf16>, vector<8x32xf32> -> vector<8x32xf32>
    %25 = arith.addf %19, %24 : vector<8x32xf32>
    %c0_28 = arith.constant 0 : index
    %c0_29 = arith.constant 0 : index
    %c0_30 = arith.constant 0 : index
    %26 = vector.load %arg5[%c0_28, %c0_29, %c0_30] : memref<1x1x32xf32, #tpu.memory_space<vmem>>, vector<1x1x32xf32>
    %27 = vector.shape_cast %26 : vector<1x1x32xf32> to vector<1x32xf32>
    %28 = vector.broadcast %27 : vector<1x32xf32> to vector<8x32xf32>
    %29 = arith.addf %25, %28 : vector<8x32xf32>
    %cst_31 = arith.constant 0.000000e+00 : f32
    %30 = vector.broadcast %cst_31 : f32 to vector<8x32xf32>
    %31 = arith.maximumf %29, %30 : vector<8x32xf32>
    %c0_32 = arith.constant 0 : index
    %c0_33 = arith.constant 0 : index
    %c0_34 = arith.constant 0 : index
    %32 = vector.load %arg6[%c0_32, %c0_33, %c0_34] : memref<1x1x32xf32, #tpu.memory_space<vmem>>, vector<1x1x32xf32>
    %33 = vector.shape_cast %32 : vector<1x1x32xf32> to vector<1x32xf32>
    %c0_35 = arith.constant 0 : index
    %c0_36 = arith.constant 0 : index
    %c0_37 = arith.constant 0 : index
    %34 = vector.load %arg7[%c0_35, %c0_36, %c0_37] : memref<1x1x32xf32, #tpu.memory_space<vmem>>, vector<1x1x32xf32>
    %35 = vector.shape_cast %34 : vector<1x1x32xf32> to vector<1x32xf32>
    %cst_38 = arith.constant dense<0.000000e+00> : vector<8xf32>
    %36 = vector.multi_reduction <add>, %31, %cst_38 [1] : vector<8x32xf32> to vector<8xf32>
    %37 = vector.shape_cast %36 : vector<8xf32> to vector<8x1xf32>
    %cst_39 = arith.constant 3.200000e+01 : f32
    %38 = vector.broadcast %cst_39 : f32 to vector<8x1xf32>
    %39 = arith.divf %37, %38 : vector<8x1xf32>
    %40 = vector.broadcast %39 : vector<8x1xf32> to vector<8x32xf32>
    %41 = arith.subf %31, %40 : vector<8x32xf32>
    %42 = arith.mulf %41, %41 : vector<8x32xf32>
    %cst_40 = arith.constant dense<0.000000e+00> : vector<8xf32>
    %43 = vector.multi_reduction <add>, %42, %cst_40 [1] : vector<8x32xf32> to vector<8xf32>
    %44 = vector.shape_cast %43 : vector<8xf32> to vector<8x1xf32>
    %cst_41 = arith.constant 3.200000e+01 : f32
    %45 = vector.broadcast %cst_41 : f32 to vector<8x1xf32>
    %46 = arith.divf %44, %45 : vector<8x1xf32>
    %47 = vector.broadcast %39 : vector<8x1xf32> to vector<8x32xf32>
    %48 = arith.subf %31, %47 : vector<8x32xf32>
    %cst_42 = arith.constant 9.99999974E-6 : f32
    %49 = vector.broadcast %cst_42 : f32 to vector<8x1xf32>
    %50 = arith.addf %46, %49 : vector<8x1xf32>
    %51 = math.rsqrt %50 : vector<8x1xf32>
    %52 = vector.broadcast %51 : vector<8x1xf32> to vector<8x32xf32>
    %53 = arith.mulf %48, %52 : vector<8x32xf32>
    %54 = vector.broadcast %33 : vector<1x32xf32> to vector<8x32xf32>
    %55 = arith.mulf %53, %54 : vector<8x32xf32>
    %56 = vector.broadcast %35 : vector<1x32xf32> to vector<8x32xf32>
    %57 = arith.addf %55, %56 : vector<8x32xf32>
    %c1_43 = arith.constant 1 : index
    %c0_44 = arith.constant 0 : index
    %58 = vector.load %arg15[%c1_43, %c0_44] : memref<10x32xf32, #tpu.memory_space<vmem>>, vector<8x32xf32>
    tpu.vector_store %arg15[%c1_43, %c0_44], %57 {strides = array<i32>} : memref<10x32xf32, #tpu.memory_space<vmem>>, vector<8x32xf32>,
    %cst_45 = arith.constant 0.000000e+00 : f32
    %59 = vector.broadcast %cst_45 : f32 to vector<8x32xf32>
    %c0_46 = arith.constant 0 : index
    %c0_47 = arith.constant 0 : index
    %60 = vector.load %arg15[%c0_46, %c0_47] : memref<10x32xf32, #tpu.memory_space<vmem>>, vector<8x32xf32>
    %61 = arith.truncf %60 : vector<8x32xf32> to vector<8x32xbf16>
    %c0_48 = arith.constant 0 : index
    %c0_49 = arith.constant 0 : index
    %c0_50 = arith.constant 0 : index
    %c0_51 = arith.constant 0 : index
    %62 = vector.load %arg8[%c0_48, %c0_49, %c0_50, %c0_51] : memref<1x3x32x32xbf16, #tpu.memory_space<vmem>>, vector<1x1x32x32xbf16>
    %63 = vector.shape_cast %62 : vector<1x1x32x32xbf16> to vector<32x32xbf16>
    %cst_52 = arith.constant dense<0.000000e+00> : vector<8x32xf32>
    %64 = tpu.matmul %61, %63, %cst_52 {dimension_numbers = #tpu.dot_dimension_numbers<[1], [0], [0], [1], [0, 0, 1, 1], [], []>} : vector<8x32xbf16>, vector<32x32xbf16>, vector<8x32xf32> -> vector<8x32xf32>
    %65 = arith.addf %59, %64 : vector<8x32xf32>
    %c1_53 = arith.constant 1 : index
    %c0_54 = arith.constant 0 : index
    %66 = vector.load %arg15[%c1_53, %c0_54] : memref<10x32xf32, #tpu.memory_space<vmem>>, vector<8x32xf32>
    %67 = arith.truncf %66 : vector<8x32xf32> to vector<8x32xbf16>
    %c0_55 = arith.constant 0 : index
    %c1_56 = arith.constant 1 : index
    %c0_57 = arith.constant 0 : index
    %c0_58 = arith.constant 0 : index
    %68 = vector.load %arg8[%c0_55, %c1_56, %c0_57, %c0_58] : memref<1x3x32x32xbf16, #tpu.memory_space<vmem>>, vector<1x1x32x32xbf16>
    %69 = vector.shape_cast %68 : vector<1x1x32x32xbf16> to vector<32x32xbf16>
    %cst_59 = arith.constant dense<0.000000e+00> : vector<8x32xf32>
    %70 = tpu.matmul %67, %69, %cst_59 {dimension_numbers = #tpu.dot_dimension_numbers<[1], [0], [0], [1], [0, 0, 1, 1], [], []>} : vector<8x32xbf16>, vector<32x32xbf16>, vector<8x32xf32> -> vector<8x32xf32>
    %71 = arith.addf %65, %70 : vector<8x32xf32>
    %c2_60 = arith.constant 2 : index
    %c0_61 = arith.constant 0 : index
    %72 = vector.load %arg15[%c2_60, %c0_61] : memref<10x32xf32, #tpu.memory_space<vmem>>, vector<8x32xf32>
    %73 = arith.truncf %72 : vector<8x32xf32> to vector<8x32xbf16>
    %c0_62 = arith.constant 0 : index
    %c2_63 = arith.constant 2 : index
    %c0_64 = arith.constant 0 : index
    %c0_65 = arith.constant 0 : index
    %74 = vector.load %arg8[%c0_62, %c2_63, %c0_64, %c0_65] : memref<1x3x32x32xbf16, #tpu.memory_space<vmem>>, vector<1x1x32x32xbf16>
    %75 = vector.shape_cast %74 : vector<1x1x32x32xbf16> to vector<32x32xbf16>
    %cst_66 = arith.constant dense<0.000000e+00> : vector<8x32xf32>
    %76 = tpu.matmul %73, %75, %cst_66 {dimension_numbers = #tpu.dot_dimension_numbers<[1], [0], [0], [1], [0, 0, 1, 1], [], []>} : vector<8x32xbf16>, vector<32x32xbf16>, vector<8x32xf32> -> vector<8x32xf32>
    %77 = arith.addf %71, %76 : vector<8x32xf32>
    %c0_67 = arith.constant 0 : index
    %c0_68 = arith.constant 0 : index
    %c0_69 = arith.constant 0 : index
    %78 = vector.load %arg9[%c0_67, %c0_68, %c0_69] : memref<1x1x32xf32, #tpu.memory_space<vmem>>, vector<1x1x32xf32>
    %79 = vector.shape_cast %78 : vector<1x1x32xf32> to vector<1x32xf32>
    %80 = vector.broadcast %79 : vector<1x32xf32> to vector<8x32xf32>
    %81 = arith.addf %77, %80 : vector<8x32xf32>
    %cst_70 = arith.constant 0.000000e+00 : f32
    %82 = vector.broadcast %cst_70 : f32 to vector<8x32xf32>
    %83 = arith.maximumf %81, %82 : vector<8x32xf32>
    %c0_71 = arith.constant 0 : index
    %c0_72 = arith.constant 0 : index
    %c0_73 = arith.constant 0 : index
    %84 = vector.load %arg10[%c0_71, %c0_72, %c0_73] : memref<1x1x32xf32, #tpu.memory_space<vmem>>, vector<1x1x32xf32>
    %85 = vector.shape_cast %84 : vector<1x1x32xf32> to vector<1x32xf32>
    %c0_74 = arith.constant 0 : index
    %c0_75 = arith.constant 0 : index
    %c0_76 = arith.constant 0 : index
    %86 = vector.load %arg11[%c0_74, %c0_75, %c0_76] : memref<1x1x32xf32, #tpu.memory_space<vmem>>, vector<1x1x32xf32>
    %87 = vector.shape_cast %86 : vector<1x1x32xf32> to vector<1x32xf32>
    %cst_77 = arith.constant dense<0.000000e+00> : vector<8xf32>
    %88 = vector.multi_reduction <add>, %83, %cst_77 [1] : vector<8x32xf32> to vector<8xf32>
    %89 = vector.shape_cast %88 : vector<8xf32> to vector<8x1xf32>
    %cst_78 = arith.constant 3.200000e+01 : f32
    %90 = vector.broadcast %cst_78 : f32 to vector<8x1xf32>
    %91 = arith.divf %89, %90 : vector<8x1xf32>
    %92 = vector.broadcast %91 : vector<8x1xf32> to vector<8x32xf32>
    %93 = arith.subf %83, %92 : vector<8x32xf32>
    %94 = arith.mulf %93, %93 : vector<8x32xf32>
    %cst_79 = arith.constant dense<0.000000e+00> : vector<8xf32>
    %95 = vector.multi_reduction <add>, %94, %cst_79 [1] : vector<8x32xf32> to vector<8xf32>
    %96 = vector.shape_cast %95 : vector<8xf32> to vector<8x1xf32>
    %cst_80 = arith.constant 3.200000e+01 : f32
    %97 = vector.broadcast %cst_80 : f32 to vector<8x1xf32>
    %98 = arith.divf %96, %97 : vector<8x1xf32>
    %99 = vector.broadcast %91 : vector<8x1xf32> to vector<8x32xf32>
    %100 = arith.subf %83, %99 : vector<8x32xf32>
    %cst_81 = arith.constant 9.99999974E-6 : f32
    %101 = vector.broadcast %cst_81 : f32 to vector<8x1xf32>
    %102 = arith.addf %98, %101 : vector<8x1xf32>
    %103 = math.rsqrt %102 : vector<8x1xf32>
    %104 = vector.broadcast %103 : vector<8x1xf32> to vector<8x32xf32>
    %105 = arith.mulf %100, %104 : vector<8x32xf32>
    %106 = vector.broadcast %85 : vector<1x32xf32> to vector<8x32xf32>
    %107 = arith.mulf %105, %106 : vector<8x32xf32>
    %108 = vector.broadcast %87 : vector<1x32xf32> to vector<8x32xf32>
    %109 = arith.addf %107, %108 : vector<8x32xf32>
    %c0_82 = arith.constant 0 : index
    %c0_83 = arith.constant 0 : index
    %c0_84 = arith.constant 0 : index
    %110 = vector.load %arg12[%c0_82, %c0_83, %c0_84] : memref<1x1x32xf32, #tpu.memory_space<vmem>>, vector<1x1x32xf32>
    %111 = vector.shape_cast %110 : vector<1x1x32xf32> to vector<1x32xf32>
    %cst_85 = arith.constant dense<0.000000e+00> : vector<1x8xf32>
    %112 = tpu.matmul %111, %109, %cst_85 {dimension_numbers = #tpu.dot_dimension_numbers<[1], [1], [0], [0], [0, 0, 1, 0], [], []>} : vector<1x32xf32>, vector<8x32xf32>, vector<1x8xf32> -> vector<1x8xf32>
    %c0_86 = arith.constant 0 : index
    %c0_87 = arith.constant 0 : index
    %c0_88 = arith.constant 0 : index
    %113 = vector.load %arg13[%c0_86, %c0_87, %c0_88] : memref<1x1x1xf32, #tpu.memory_space<vmem>>, vector<1x1x1xf32>
    %114 = vector.shape_cast %113 : vector<1x1x1xf32> to vector<1x1xf32>
    %115 = vector.broadcast %114 : vector<1x1xf32> to vector<1x8xf32>
    %116 = arith.addf %112, %115 : vector<1x8xf32>
    %c0_89 = arith.constant 0 : index
    %c0_90 = arith.constant 0 : index
    %c0_91 = arith.constant 0 : index
    %117 = vector.load %arg3[%c0_89, %c0_90, %c0_91] : memref<1x1x8xf32, #tpu.memory_space<vmem>>, vector<1x1x8xf32>
    %118 = vector.shape_cast %117 : vector<1x1x8xf32> to vector<1x8xf32>
    %119 = arith.mulf %116, %118 : vector<1x8xf32>
    %c0_92 = arith.constant 0 : index
    %c0_93 = arith.constant 0 : index
    %c0_94 = arith.constant 0 : index
    %c0_95 = arith.constant 0 : index
    %120 = vector.load %arg14[%c0_92, %c0_93, %c0_94, %c0_95] : memref<1x1x1x8xf32, #tpu.memory_space<vmem>>, vector<1x1x1x8xf32>
    %121 = vector.shape_cast %120 : vector<1x1x1x8xf32> to vector<1x8xf32>
    %122 = vector.shape_cast %119 : vector<1x8xf32> to vector<1x1x1x8xf32>
    tpu.vector_store %arg14[%c0_92, %c0_93, %c0_94, %c0_95], %122 {strides = array<i32>} : memref<1x1x1x8xf32, #tpu.memory_space<vmem>>, vector<1x1x1x8xf32>,
    return
  }
  func.func @transform_0(%arg0: i32, %arg1: i32) -> (i32, i32, i32) {
    %c0_i32 = arith.constant 0 : i32
    %c0_i32_0 = arith.constant 0 : i32
    %c0_i32_1 = arith.constant 0 : i32
    return %arg0, %c0_i32, %c0_i32_0 : i32, i32, i32
  }
  func.func @transform_1(%arg0: i32, %arg1: i32) -> (i32, i32, i32) {
    %c0_i32 = arith.constant 0 : i32
    %c0_i32_0 = arith.constant 0 : i32
    %c0_i32_1 = arith.constant 0 : i32
    return %arg0, %c0_i32, %c0_i32_0 : i32, i32, i32
  }
  func.func @transform_2(%arg0: i32, %arg1: i32) -> (i32, i32, i32, i32) {
    %c0_i32 = arith.constant 0 : i32
    %c0_i32_0 = arith.constant 0 : i32
    %c0_i32_1 = arith.constant 0 : i32
    %c0_i32_2 = arith.constant 0 : i32
    return %arg1, %c0_i32, %c0_i32_0, %c0_i32_1 : i32, i32, i32, i32
  }
  func.func @transform_3(%arg0: i32, %arg1: i32) -> (i32, i32, i32) {
    %c0_i32 = arith.constant 0 : i32
    %c0_i32_0 = arith.constant 0 : i32
    %c0_i32_1 = arith.constant 0 : i32
    return %arg1, %c0_i32, %c0_i32_0 : i32, i32, i32
  }
  func.func @transform_4(%arg0: i32, %arg1: i32) -> (i32, i32, i32) {
    %c0_i32 = arith.constant 0 : i32
    %c0_i32_0 = arith.constant 0 : i32
    %c0_i32_1 = arith.constant 0 : i32
    return %arg1, %c0_i32, %c0_i32_0 : i32, i32, i32
  }
  func.func @transform_5(%arg0: i32, %arg1: i32) -> (i32, i32, i32) {
    %c0_i32 = arith.constant 0 : i32
    %c0_i32_0 = arith.constant 0 : i32
    %c0_i32_1 = arith.constant 0 : i32
    return %arg1, %c0_i32, %c0_i32_0 : i32, i32, i32
  }
  func.func @transform_6(%arg0: i32, %arg1: i32) -> (i32, i32, i32, i32) {
    %c0_i32 = arith.constant 0 : i32
    %c0_i32_0 = arith.constant 0 : i32
    %c0_i32_1 = arith.constant 0 : i32
    %c0_i32_2 = arith.constant 0 : i32
    return %arg1, %c0_i32, %c0_i32_0, %c0_i32_1 : i32, i32, i32, i32
  }
  func.func @transform_7(%arg0: i32, %arg1: i32) -> (i32, i32, i32) {
    %c0_i32 = arith.constant 0 : i32
    %c0_i32_0 = arith.constant 0 : i32
    %c0_i32_1 = arith.constant 0 : i32
    return %arg1, %c0_i32, %c0_i32_0 : i32, i32, i32
  }
  func.func @transform_8(%arg0: i32, %arg1: i32) -> (i32, i32, i32) {
    %c0_i32 = arith.constant 0 : i32
    %c0_i32_0 = arith.constant 0 : i32
    %c0_i32_1 = arith.constant 0 : i32
    return %arg1, %c0_i32, %c0_i32_0 : i32, i32, i32
  }
  func.func @transform_9(%arg0: i32, %arg1: i32) -> (i32, i32, i32) {
    %c0_i32 = arith.constant 0 : i32
    %c0_i32_0 = arith.constant 0 : i32
    %c0_i32_1 = arith.constant 0 : i32
    return %arg1, %c0_i32, %c0_i32_0 : i32, i32, i32
  }
  func.func @transform_10(%arg0: i32, %arg1: i32) -> (i32, i32, i32) {
    %c0_i32 = arith.constant 0 : i32
    %c0_i32_0 = arith.constant 0 : i32
    %c0_i32_1 = arith.constant 0 : i32
    return %arg1, %c0_i32, %c0_i32_0 : i32, i32, i32
  }
  func.func @transform_11(%arg0: i32, %arg1: i32) -> (i32, i32, i32) {
    %c0_i32 = arith.constant 0 : i32
    %c0_i32_0 = arith.constant 0 : i32
    %c0_i32_1 = arith.constant 0 : i32
    return %arg1, %c0_i32, %c0_i32_0 : i32, i32, i32
  }
  func.func @transform_12(%arg0: i32, %arg1: i32) -> (i32, i32, i32, i32) {
    %c0_i32 = arith.constant 0 : i32
    %c0_i32_0 = arith.constant 0 : i32
    %c0_i32_1 = arith.constant 0 : i32
    return %arg1, %arg0, %c0_i32, %c0_i32_0 : i32, i32, i32, i32
  }
}

</mosaic_0001>

<llo_original>
// kernel: _lambda_.12
$region0: #{_lambda_.12}
  #allocation0 [shape = 'u32[]', space=smem, size = 0x4, offset = 0x4, fixed_abs, tag = 'smem constant byte address 0x4 - core index']
  #allocation1 [shape = 'u32[144,128]{1,0:T(1,128)}', space=vmem, size = 0x12000, scoped, tag = 'internal scratch']
  %s0 = inlined_call_operand.vmem [shape: f32[32,32], index: 0, kind: input, shape index: {}]
  %s1 = inlined_call_operand.vmem [shape: bf16[32,128], index: 1, kind: input, shape index: {}]
  %s2 = inlined_call_operand.vmem [shape: f32[1,128], index: 2, kind: input, shape index: {}]
  %s3 = inlined_call_operand.vmem [shape: f32[32,128], index: 3, kind: output, shape index: {}]
  %s4 = sld [smem:[#allocation0]]
  $region22: #{_lambda_.12} parent=0
    _
  %s6 = ssub.s32 1, %s4
  %s7 = scalar_select 0, %s6, %s4
  // Predicated region
  $region2: #{_lambda_.12} parent=0 // pred_check
    _
  $region3: #{_lambda_.12} parent=0 // pred_check_branch
    %9 = sbr.rel (0) target = $region5
  $region4: #{_lambda_.12} parent=0 // pred_region
    _
  $region5: #{_lambda_.12} parent=0 // pred_fallthru
    _
  // Predicated region
  $region6: #{_lambda_.12} parent=0 // pred_check
    _
  $region7: #{_lambda_.12} parent=0 // pred_check_branch
    %11 = sbr.rel (0) target = $region9
  $region8: #{_lambda_.12} parent=0 // pred_region
    _
  $region9: #{_lambda_.12} parent=0 // pred_fallthru
    _
  // Predicated region
  $region10: #{_lambda_.12} parent=0 // pred_check
    _
  $region11: #{_lambda_.12} parent=0 // pred_check_branch
    %13 = sbr.rel (0) target = $region13
  $region12: #{_lambda_.12} parent=0 // pred_region
    _
  $region13: #{_lambda_.12} parent=0 // pred_fallthru
    _
  %v15 = vld [vmem:[%s0] sm:$0xff]
  %v16 = vld [vmem:[%s0 + $0x8] sm:$0xff]
  %v17 = vld [vmem:[%s0 + $0x10] sm:$0xff]
  %v18 = vld [vmem:[%s0 + $0x18] sm:$0xff]
  %v19 = vpack.c.bf16 %v16, %v15
  %v20 = vpack.c.bf16 %v18, %v17
  %v21 = vld [vmem:[%s1] sm:$0xf]
  %v22 = vld [vmem:[%s1 + $0x4] sm:$0xf]
  %v23 = vld [vmem:[%s1 + $0x8] sm:$0xf]
  %v24 = vld [vmem:[%s1 + $0xc] sm:$0xf]
  %v25 = vld [vmem:[%s2] sm:$0x1]
  %v27 = vlaneseq
  %v28 = vshrl.u32 %v27, 7
  %v29 = vsub.s32 0, %v28
  %v30 = vrot.slane %v25, %v29
  %v36 = vunpack.c.l.b16 %v21
  %v37 = vunpack.c.l.b16 %v22
  %v38 = vunpack.c.l.b16 %v23
  %v39 = vunpack.c.l.b16 %v24
  %v40 = vpack.c.b16 %v37, %v36
  %v41 = vpack.c.b16 %v39, %v38
  %vm44 = vcmask 261120
  %v46 = vsel %vm44, %v19, 0
  %v49 = vsel %vm44, %v20, 0
  %51 = vmatprep.subr.bf16.mxu0 0
  %52 = vmatpush1.bf16.msra.mxu0 %v40
  %53 = vmatprep.subr.bf16.mxu0 0
  %54 = vmatpush1.bf16.msra.mxu0 %v41
  %55 = vmatprep.subr.bf16.mxu0 0
  %56 = vmatpush1.bf16.msra.mxu0 0
  %57 = vmatprep.subr.bf16.mxu0 0
  %58 = vmatpush1.bf16.msra.mxu0 0
  %59 = vmatprep.subr.bf16.mxu0 0
  %60 = vmatpush1.bf16.msra.mxu0 0
  %61 = vmatprep.subr.bf16.mxu0 0
  %62 = vmatpush1.bf16.msra.mxu0 0
  %63 = vmatprep.subr.bf16.mxu0 0
  %64 = vmatpush1.bf16.msra.mxu0 0
  %65 = vmatprep.subr.bf16.mxu0 0
  %66 = vmatpush1.bf16.msra.mxu0 0
  %67 = vmatprep.subr.bf16.mxu0 0
  %68 = vmatpush1.bf16.msra.mxu0 0
  %69 = vmatprep.subr.bf16.mxu0 0
  %70 = vmatpush1.bf16.msra.mxu0 0
  %71 = vmatprep.subr.bf16.mxu0 0
  %72 = vmatpush1.bf16.msra.mxu0 0
  %73 = vmatprep.subr.bf16.mxu0 0
  %74 = vmatpush1.bf16.msra.mxu0 0
  %75 = vmatprep.subr.bf16.mxu0 0
  %76 = vmatpush1.bf16.msra.mxu0 0
  %77 = vmatprep.subr.bf16.mxu0 0
  %78 = vmatpush1.bf16.msra.mxu0 0
  %79 = vmatprep.subr.bf16.mxu0 0
  %80 = vmatpush1.bf16.msra.mxu0 0
  %81 = vmatprep.subr.bf16.mxu0 0
  %82 = vmatpush1.bf16.msra.mxu0 0
  %83 = vmatprep.mubr.bf16.mxu0 0
  %84 = vmatmul.mubr.bf16.gmra.mrb[0].mxu0 %v46
  %v85 = vpop.f32.mrb[0].mxu0
  %v86 = vadd.f32 %v30, %v85
  %v87 = vpop.f32.mrb[0].mxu0
  %v88 = vpop.f32.mrb[0].mxu0
  %v89 = vadd.f32 %v30, %v88
  %v90 = vpop.f32.mrb[0].mxu0
  %91 = vmatprep.mubr.bf16.mxu0 0
  %92 = vmatmul.mubr.bf16.gmra.mrb[0].mxu0 %v49
  %v93 = vpop.f32.mrb[0].mxu0
  %v94 = vadd.f32 %v30, %v93
  %v95 = vpop.f32.mrb[0].mxu0
  %v96 = vpop.f32.mrb[0].mxu0
  %v97 = vadd.f32 %v30, %v96
  %v98 = vpop.f32.mrb[0].mxu0
  %99 = vdwg.mxu0
  %100 = vst [vmem:[%s3] sm:$0xff] %v86
  %101 = vst [vmem:[%s3 + $0x8] sm:$0xff] %v89
  %102 = vst [vmem:[%s3 + $0x10] sm:$0xff] %v94
  %103 = vst [vmem:[%s3 + $0x18] sm:$0xff] %v97
  // Predicated region
  $region14: #{_lambda_.12} parent=0 // pred_check
    _
  $region15: #{_lambda_.12} parent=0 // pred_check_branch
    %105 = sbr.rel (0) target = $region17
  $region16: #{_lambda_.12} parent=0 // pred_region
    _
  $region17: #{_lambda_.12} parent=0 // pred_fallthru
    _
  // Predicated region
  $region18: #{_lambda_.12} parent=0 // pred_check
    _
  $region19: #{_lambda_.12} parent=0 // pred_check_branch
    %107 = sbr.rel (0) target = $region21
  $region20: #{_lambda_.12} parent=0 // pred_region
    _
  $region21: #{_lambda_.12} parent=0 // pred_fallthru
    _

// kernel: _lambda_.7
$region0: #{_lambda_.7}
  #allocation0 [shape = 'u32[]', space=smem, size = 0x4, offset = 0x4, fixed_abs, tag = 'smem constant byte address 0x4 - core index']
  #allocation1 [shape = 'u32[144,128]{1,0:T(1,128)}', space=vmem, size = 0x12000, scoped, tag = 'internal scratch']
  #allocation2 [shape = 'bf16[8,32]{1,0:T(8,128)(2,1)}', space=vmem, size = 0x800, scoped, tag = 'scratch operand']
  #allocation3 [shape = 'f32[10,32]{1,0:T(8,128)}', space=vmem, size = 0x2000, scoped, tag = 'scratch operand']
  %s0 = inlined_call_operand.vmem [shape: f32[2,8,32], index: 0, kind: input, shape index: {}]
  %s1 = inlined_call_operand.vmem [shape: f32[2,8,1], index: 1, kind: input, shape index: {}]
  %s2 = inlined_call_operand.vmem [shape: f32[2,1,8], index: 2, kind: input, shape index: {}]
  %s3 = inlined_call_operand.vmem [shape: bf16[32,96], index: 3, kind: input, shape index: {}]
  %s4 = inlined_call_operand.vmem [shape: f32[1,96], index: 4, kind: input, shape index: {}]
  %s5 = inlined_call_operand.vmem [shape: bf16[32,32], index: 5, kind: input, shape index: {}]
  %s6 = inlined_call_operand.vmem [shape: f32[1,32], index: 6, kind: input, shape index: {}]
  %s7 = inlined_call_operand.vmem [shape: f32[1,32], index: 7, kind: input, shape index: {}]
  %s8 = inlined_call_operand.vmem [shape: f32[1,32], index: 8, kind: input, shape index: {}]
  %s9 = inlined_call_operand.vmem [shape: bf16[3,32,64], index: 9, kind: input, shape index: {}]
  %s10 = inlined_call_operand.vmem [shape: f32[1,64], index: 10, kind: input, shape index: {}]
  %s11 = inlined_call_operand.vmem [shape: bf16[64,32], index: 11, kind: input, shape index: {}]
  %s12 = inlined_call_operand.vmem [shape: f32[1,32], index: 12, kind: input, shape index: {}]
  %s13 = inlined_call_operand.vmem [shape: f32[1,32], index: 13, kind: input, shape index: {}]
  %s14 = inlined_call_operand.vmem [shape: f32[1,32], index: 14, kind: input, shape index: {}]
  %s15 = inlined_call_operand.vmem [shape: f32[2,8,32], index: 15, kind: output, shape index: {}]
  %s16 = sld [smem:[#allocation0]]
  $region93: #{_lambda_.7} parent=0
    _
  %s18 = ssub.s32 1, %s16
  %s19 = scalar_select 0, %s18, %s16
  loop: start=0, step=1, limit=4
  $region2: #{_lambda_.7} parent=0 // loop_pre_header
    _
  $region3: #{_lambda_.7} parent=0 // loop_header
    %s21 = sphi 0, %s25
    %p22 = scmp.ge.s32.totalorder %s21, 4
    %s31 = sphi 0, %s33
    %s34 = sphi 0, %s31
    %s35 = sphi 0, %s34
    %s51 = sphi 0, %s35
    %s57 = sphi 0, %s59
    %s60 = sphi 0, %s57
    %s61 = sphi 0, %s60
    %s77 = sphi 0, %s61
    %s83 = sphi 0, %s85
    %s86 = sphi 0, %s83
    %s87 = sphi 0, %s86
    %s103 = sphi 0, %s87
    %s107 = sphi 0, %s107
    %s109 = sphi 0, %s107
    %s110 = sphi 0, %s109
    %s124 = sphi 0, %s110
    %s128 = sphi 0, %s128
    %s130 = sphi 0, %s128
    %s131 = sphi 0, %s130
    %s145 = sphi 0, %s131
    %s149 = sphi 0, %s149
    %s151 = sphi 0, %s149
    %s152 = sphi 0, %s151
    %s166 = sphi 0, %s152
    %s170 = sphi 0, %s170
    %s172 = sphi 0, %s170
    %s173 = sphi 0, %s172
    %s187 = sphi 0, %s173
    %s191 = sphi 0, %s191
    %s193 = sphi 0, %s191
    %s194 = sphi 0, %s193
    %s208 = sphi 0, %s194
    %s212 = sphi 0, %s212
    %s214 = sphi 0, %s212
    %s215 = sphi 0, %s214
    %s229 = sphi 0, %s215
    %s233 = sphi 0, %s233
    %s235 = sphi 0, %s233
    %s236 = sphi 0, %s235
    %s250 = sphi 0, %s236
    %s254 = sphi 0, %s254
    %s256 = sphi 0, %s254
    %s257 = sphi 0, %s256
    %s271 = sphi 0, %s257
    %s275 = sphi 0, %s275
    %s277 = sphi 0, %s275
    %s278 = sphi 0, %s277
    %s292 = sphi 0, %s278
    %s296 = sphi 0, %s296
    %s298 = sphi 0, %s296
    %s299 = sphi 0, %s298
    %s313 = sphi 0, %s299
    %s317 = sphi 0, %s317
    %s319 = sphi 0, %s317
    %s320 = sphi 0, %s319
    %s334 = sphi 0, %s320
    %s338 = sphi 0, %s338
    %s340 = sphi 0, %s338
    %s341 = sphi 0, %s340
    %s355 = sphi 0, %s341
    %s361 = sphi 0, %s363
    %s364 = sphi 0, %s361
    %s365 = sphi 0, %s364
    %s381 = sphi 0, %s365
  $region4: #{_lambda_.7} parent=0 // loop_header_branch
    %24 = sbr.rel (%p22) target = $region8
  $region5: #{_lambda_.7} parent=0 // loop_body
    %s26 = ssub.s32 %s21, 1
    %s27 = ssub.s32 %s21, 2
    %s28 = sadd.s32 %s21, 1
    %s29 = ssub.s32 %s21, %s28
    %p30 = scmp.eq.s32.totalorder %s29, 0
    %s32 = sadd.s32 %s31, 1
    %s33 = scalar_select %p30, %s31, %s32
    %p36 = pneg %p30
    %p37 = scmp.eq.s32.totalorder %s21, 1
    %p38 = por %p36, %p37
    %p39 = scmp.ne.s32.totalorder %s31, %s34
    %p40 = scmp.eq.s32.totalorder %s21, 0
    %p41 = por %p39, %p40
    %p42 = scmp.ne.s32.totalorder %s31, %s34
    %p43 = scmp.eq.s32.totalorder %s26, 1
    %p44 = por %p42, %p43
    %p45 = scmp.ne.s32.totalorder %s34, %s35
    %p46 = scmp.eq.s32.totalorder %s26, 0
    %p47 = por %p45, %p46
    %p48 = scmp.ne.s32.totalorder %s34, %s35
    %p49 = scmp.eq.s32.totalorder %s27, 1
    %p50 = por %p48, %p49
    %p52 = scmp.ne.s32.totalorder %s35, %s51
    %p53 = scmp.eq.s32.totalorder %s27, 0
    %p54 = por %p52, %p53
    %s55 = ssub.s32 %s21, %s28
    %p56 = scmp.eq.s32.totalorder %s55, 0
    %s58 = sadd.s32 %s57, 1
    %s59 = scalar_select %p56, %s57, %s58
    %p62 = pneg %p56
    %p63 = scmp.eq.s32.totalorder %s21, 1
    %p64 = por %p62, %p63
    %p65 = scmp.ne.s32.totalorder %s57, %s60
    %p66 = scmp.eq.s32.totalorder %s21, 0
    %p67 = por %p65, %p66
    %p68 = scmp.ne.s32.totalorder %s57, %s60
    %p69 = scmp.eq.s32.totalorder %s26, 1
    %p70 = por %p68, %p69
    %p71 = scmp.ne.s32.totalorder %s60, %s61
    %p72 = scmp.eq.s32.totalorder %s26, 0
    %p73 = por %p71, %p72
    %p74 = scmp.ne.s32.totalorder %s60, %s61
    %p75 = scmp.eq.s32.totalorder %s27, 1
    %p76 = por %p74, %p75
    %p78 = scmp.ne.s32.totalorder %s61, %s77
    %p79 = scmp.eq.s32.totalorder %s27, 0
    %p80 = por %p78, %p79
    %s81 = ssub.s32 %s21, %s28
    %p82 = scmp.eq.s32.totalorder %s81, 0
    %s84 = sadd.s32 %s83, 1
    %s85 = scalar_select %p82, %s83, %s84
    %p88 = pneg %p82
    %p89 = scmp.eq.s32.totalorder %s21, 1
    %p90 = por %p88, %p89
    %p91 = scmp.ne.s32.totalorder %s83, %s86
    %p92 = scmp.eq.s32.totalorder %s21, 0
    %p93 = por %p91, %p92
    %p94 = scmp.ne.s32.totalorder %s83, %s86
    %p95 = scmp.eq.s32.totalorder %s26, 1
    %p96 = por %p94, %p95
    %p97 = scmp.ne.s32.totalorder %s86, %s87
    %p98 = scmp.eq.s32.totalorder %s26, 0
    %p99 = por %p97, %p98
    %p100 = scmp.ne.s32.totalorder %s86, %s87
    %p101 = scmp.eq.s32.totalorder %s27, 1
    %p102 = por %p100, %p101
    %p104 = scmp.ne.s32.totalorder %s87, %s103
    %p105 = scmp.eq.s32.totalorder %s27, 0
    %p106 = por %p104, %p105
    %s108 = sadd.s32 %s107, 1
    %p111 = scmp.eq.s32.totalorder %s21, 1
    %p112 = scmp.ne.s32.totalorder %s107, %s109
    %p113 = scmp.eq.s32.totalorder %s21, 0
    %p114 = por %p112, %p113
    %p115 = scmp.ne.s32.totalorder %s107, %s109
    %p116 = scmp.eq.s32.totalorder %s26, 1
    %p117 = por %p115, %p116
    %p118 = scmp.ne.s32.totalorder %s109, %s110
    %p119 = scmp.eq.s32.totalorder %s26, 0
    %p120 = por %p118, %p119
    %p121 = scmp.ne.s32.totalorder %s109, %s110
    %p122 = scmp.eq.s32.totalorder %s27, 1
    %p123 = por %p121, %p122
    %p125 = scmp.ne.s32.totalorder %s110, %s124
    %p126 = scmp.eq.s32.totalorder %s27, 0
    %p127 = por %p125, %p126
    %s129 = sadd.s32 %s128, 1
    %p132 = scmp.eq.s32.totalorder %s21, 1
    %p133 = scmp.ne.s32.totalorder %s128, %s130
    %p134 = scmp.eq.s32.totalorder %s21, 0
    %p135 = por %p133, %p134
    %p136 = scmp.ne.s32.totalorder %s128, %s130
    %p137 = scmp.eq.s32.totalorder %s26, 1
    %p138 = por %p136, %p137
    %p139 = scmp.ne.s32.totalorder %s130, %s131
    %p140 = scmp.eq.s32.totalorder %s26, 0
    %p141 = por %p139, %p140
    %p142 = scmp.ne.s32.totalorder %s130, %s131
    %p143 = scmp.eq.s32.totalorder %s27, 1
    %p144 = por %p142, %p143
    %p146 = scmp.ne.s32.totalorder %s131, %s145
    %p147 = scmp.eq.s32.totalorder %s27, 0
    %p148 = por %p146, %p147
    %s150 = sadd.s32 %s149, 1
    %p153 = scmp.eq.s32.totalorder %s21, 1
    %p154 = scmp.ne.s32.totalorder %s149, %s151
    %p155 = scmp.eq.s32.totalorder %s21, 0
    %p156 = por %p154, %p155
    %p157 = scmp.ne.s32.totalorder %s149, %s151
    %p158 = scmp.eq.s32.totalorder %s26, 1
    %p159 = por %p157, %p158
    %p160 = scmp.ne.s32.totalorder %s151, %s152
    %p161 = scmp.eq.s32.totalorder %s26, 0
    %p162 = por %p160, %p161
    %p163 = scmp.ne.s32.totalorder %s151, %s152
    %p164 = scmp.eq.s32.totalorder %s27, 1
    %p165 = por %p163, %p164
    %p167 = scmp.ne.s32.totalorder %s152, %s166
    %p168 = scmp.eq.s32.totalorder %s27, 0
    %p169 = por %p167, %p168
    %s171 = sadd.s32 %s170, 1
    %p174 = scmp.eq.s32.totalorder %s21, 1
    %p175 = scmp.ne.s32.totalorder %s170, %s172
    %p176 = scmp.eq.s32.totalorder %s21, 0
    %p177 = por %p175, %p176
    %p178 = scmp.ne.s32.totalorder %s170, %s172
    %p179 = scmp.eq.s32.totalorder %s26, 1
    %p180 = por %p178, %p179
    %p181 = scmp.ne.s32.totalorder %s172, %s173
    %p182 = scmp.eq.s32.totalorder %s26, 0
    %p183 = por %p181, %p182
    %p184 = scmp.ne.s32.totalorder %s172, %s173
    %p185 = scmp.eq.s32.totalorder %s27, 1
    %p186 = por %p184, %p185
    %p188 = scmp.ne.s32.totalorder %s173, %s187
    %p189 = scmp.eq.s32.totalorder %s27, 0
    %p190 = por %p188, %p189
    %s192 = sadd.s32 %s191, 1
    %p195 = scmp.eq.s32.totalorder %s21, 1
    %p196 = scmp.ne.s32.totalorder %s191, %s193
    %p197 = scmp.eq.s32.totalorder %s21, 0
    %p198 = por %p196, %p197
    %p199 = scmp.ne.s32.totalorder %s191, %s193
    %p200 = scmp.eq.s32.totalorder %s26, 1
    %p201 = por %p199, %p200
    %p202 = scmp.ne.s32.totalorder %s193, %s194
    %p203 = scmp.eq.s32.totalorder %s26, 0
    %p204 = por %p202, %p203
    %p205 = scmp.ne.s32.totalorder %s193, %s194
    %p206 = scmp.eq.s32.totalorder %s27, 1
    %p207 = por %p205, %p206
    %p209 = scmp.ne.s32.totalorder %s194, %s208
    %p210 = scmp.eq.s32.totalorder %s27, 0
    %p211 = por %p209, %p210
    %s213 = sadd.s32 %s212, 1
    %p216 = scmp.eq.s32.totalorder %s21, 1
    %p217 = scmp.ne.s32.totalorder %s212, %s214
    %p218 = scmp.eq.s32.totalorder %s21, 0
    %p219 = por %p217, %p218
    %p220 = scmp.ne.s32.totalorder %s212, %s214
    %p221 = scmp.eq.s32.totalorder %s26, 1
    %p222 = por %p220, %p221
    %p223 = scmp.ne.s32.totalorder %s214, %s215
    %p224 = scmp.eq.s32.totalorder %s26, 0
    %p225 = por %p223, %p224
    %p226 = scmp.ne.s32.totalorder %s214, %s215
    %p227 = scmp.eq.s32.totalorder %s27, 1
    %p228 = por %p226, %p227
    %p230 = scmp.ne.s32.totalorder %s215, %s229
    %p231 = scmp.eq.s32.totalorder %s27, 0
    %p232 = por %p230, %p231
    %s234 = sadd.s32 %s233, 1
    %p237 = scmp.eq.s32.totalorder %s21, 1
    %p238 = scmp.ne.s32.totalorder %s233, %s235
    %p239 = scmp.eq.s32.totalorder %s21, 0
    %p240 = por %p238, %p239
    %p241 = scmp.ne.s32.totalorder %s233, %s235
    %p242 = scmp.eq.s32.totalorder %s26, 1
    %p243 = por %p241, %p242
    %p244 = scmp.ne.s32.totalorder %s235, %s236
    %p245 = scmp.eq.s32.totalorder %s26, 0
    %p246 = por %p244, %p245
    %p247 = scmp.ne.s32.totalorder %s235, %s236
    %p248 = scmp.eq.s32.totalorder %s27, 1
    %p249 = por %p247, %p248
    %p251 = scmp.ne.s32.totalorder %s236, %s250
    %p252 = scmp.eq.s32.totalorder %s27, 0
    %p253 = por %p251, %p252
    %s255 = sadd.s32 %s254, 1
    %p258 = scmp.eq.s32.totalorder %s21, 1
    %p259 = scmp.ne.s32.totalorder %s254, %s256
    %p260 = scmp.eq.s32.totalorder %s21, 0
    %p261 = por %p259, %p260
    %p262 = scmp.ne.s32.totalorder %s254, %s256
    %p263 = scmp.eq.s32.totalorder %s26, 1
    %p264 = por %p262, %p263
    %p265 = scmp.ne.s32.totalorder %s256, %s257
    %p266 = scmp.eq.s32.totalorder %s26, 0
    %p267 = por %p265, %p266
    %p268 = scmp.ne.s32.totalorder %s256, %s257
    %p269 = scmp.eq.s32.totalorder %s27, 1
    %p270 = por %p268, %p269
    %p272 = scmp.ne.s32.totalorder %s257, %s271
    %p273 = scmp.eq.s32.totalorder %s27, 0
    %p274 = por %p272, %p273
    %s276 = sadd.s32 %s275, 1
    %p279 = scmp.eq.s32.totalorder %s21, 1
    %p280 = scmp.ne.s32.totalorder %s275, %s277
    %p281 = scmp.eq.s32.totalorder %s21, 0
    %p282 = por %p280, %p281
    %p283 = scmp.ne.s32.totalorder %s275, %s277
    %p284 = scmp.eq.s32.totalorder %s26, 1
    %p285 = por %p283, %p284
    %p286 = scmp.ne.s32.totalorder %s277, %s278
    %p287 = scmp.eq.s32.totalorder %s26, 0
    %p288 = por %p286, %p287
    %p289 = scmp.ne.s32.totalorder %s277, %s278
    %p290 = scmp.eq.s32.totalorder %s27, 1
    %p291 = por %p289, %p290
    %p293 = scmp.ne.s32.totalorder %s278, %s292
    %p294 = scmp.eq.s32.totalorder %s27, 0
    %p295 = por %p293, %p294
    %s297 = sadd.s32 %s296, 1
    %p300 = scmp.eq.s32.totalorder %s21, 1
    %p301 = scmp.ne.s32.totalorder %s296, %s298
    %p302 = scmp.eq.s32.totalorder %s21, 0
    %p303 = por %p301, %p302
    %p304 = scmp.ne.s32.totalorder %s296, %s298
    %p305 = scmp.eq.s32.totalorder %s26, 1
    %p306 = por %p304, %p305
    %p307 = scmp.ne.s32.totalorder %s298, %s299
    %p308 = scmp.eq.s32.totalorder %s26, 0
    %p309 = por %p307, %p308
    %p310 = scmp.ne.s32.totalorder %s298, %s299
    %p311 = scmp.eq.s32.totalorder %s27, 1
    %p312 = por %p310, %p311
    %p314 = scmp.ne.s32.totalorder %s299, %s313
    %p315 = scmp.eq.s32.totalorder %s27, 0
    %p316 = por %p314, %p315
    %s318 = sadd.s32 %s317, 1
    %p321 = scmp.eq.s32.totalorder %s21, 1
    %p322 = scmp.ne.s32.totalorder %s317, %s319
    %p323 = scmp.eq.s32.totalorder %s21, 0
    %p324 = por %p322, %p323
    %p325 = scmp.ne.s32.totalorder %s317, %s319
    %p326 = scmp.eq.s32.totalorder %s26, 1
    %p327 = por %p325, %p326
    %p328 = scmp.ne.s32.totalorder %s319, %s320
    %p329 = scmp.eq.s32.totalorder %s26, 0
    %p330 = por %p328, %p329
    %p331 = scmp.ne.s32.totalorder %s319, %s320
    %p332 = scmp.eq.s32.totalorder %s27, 1
    %p333 = por %p331, %p332
    %p335 = scmp.ne.s32.totalorder %s320, %s334
    %p336 = scmp.eq.s32.totalorder %s27, 0
    %p337 = por %p335, %p336
    %s339 = sadd.s32 %s338, 1
    %p342 = scmp.eq.s32.totalorder %s21, 1
    %p343 = scmp.ne.s32.totalorder %s338, %s340
    %p344 = scmp.eq.s32.totalorder %s21, 0
    %p345 = por %p343, %p344
    %p346 = scmp.ne.s32.totalorder %s338, %s340
    %p347 = scmp.eq.s32.totalorder %s26, 1
    %p348 = por %p346, %p347
    %p349 = scmp.ne.s32.totalorder %s340, %s341
    %p350 = scmp.eq.s32.totalorder %s26, 0
    %p351 = por %p349, %p350
    %p352 = scmp.ne.s32.totalorder %s340, %s341
    %p353 = scmp.eq.s32.totalorder %s27, 1
    %p354 = por %p352, %p353
    %p356 = scmp.ne.s32.totalorder %s341, %s355
    %p357 = scmp.eq.s32.totalorder %s27, 0
    %p358 = por %p356, %p357
    %s359 = ssub.s32 %s21, %s28
    %p360 = scmp.eq.s32.totalorder %s359, 0
    %s362 = sadd.s32 %s361, 1
    %s363 = scalar_select %p360, %s361, %s362
    %p366 = pneg %p360
    %p367 = scmp.eq.s32.totalorder %s21, 1
    %p368 = por %p366, %p367
    %p369 = scmp.ne.s32.totalorder %s361, %s364
    %p370 = scmp.eq.s32.totalorder %s21, 0
    %p371 = por %p369, %p370
    %p372 = scmp.ne.s32.totalorder %s361, %s364
    %p373 = scmp.eq.s32.totalorder %s26, 1
    %p374 = por %p372, %p373
    %p375 = scmp.ne.s32.totalorder %s364, %s365
    %p376 = scmp.eq.s32.totalorder %s26, 0
    %p377 = por %p375, %p376
    %p378 = scmp.ne.s32.totalorder %s364, %s365
    %p379 = scmp.eq.s32.totalorder %s27, 1
    %p380 = por %p378, %p379
    %p382 = scmp.ne.s32.totalorder %s365, %s381
    %p383 = scmp.eq.s32.totalorder %s27, 0
    %p384 = por %p382, %p383
    %p385 = scmp.le.s32.totalorder 1, %s21
    %p386 = scmp.lt.s32.totalorder %s21, 3
    %p387 = pnand %p385, %p386
    %p388 = pneg %p387
    // Predicated region
    $region9: #{_lambda_.7} parent=5 // pred_check
      _
    $region10: #{_lambda_.7} parent=5 // pred_check_branch
      %390 = sbr.rel (%p387) target = $region12
    $region11: #{_lambda_.7} parent=5 // pred_region
      %s391 = ssub.s32 %s21, 1
      // Predicated region
      $region13: #{_lambda_.7} parent=11 // pred_check
        %p392 = pneg %p120
      $region14: #{_lambda_.7} parent=11 // pred_check_branch
        %394 = sbr.rel (%p392) target = $region16
      $region15: #{_lambda_.7} parent=11 // pred_region
        _
      $region16: #{_lambda_.7} parent=11 // pred_fallthru
        _
      // Predicated region
      $region17: #{_lambda_.7} parent=11 // pred_check
        %p395 = pneg %p141
      $region18: #{_lambda_.7} parent=11 // pred_check_branch
        %397 = sbr.rel (%p395) target = $region20
      $region19: #{_lambda_.7} parent=11 // pred_region
        _
      $region20: #{_lambda_.7} parent=11 // pred_fallthru
        _
      // Predicated region
      $region21: #{_lambda_.7} parent=11 // pred_check
        %p398 = pneg %p162
      $region22: #{_lambda_.7} parent=11 // pred_check_branch
        %400 = sbr.rel (%p398) target = $region24
      $region23: #{_lambda_.7} parent=11 // pred_region
        _
      $region24: #{_lambda_.7} parent=11 // pred_fallthru
        _
      // Predicated region
      $region25: #{_lambda_.7} parent=11 // pred_check
        %p401 = pneg %p183
      $region26: #{_lambda_.7} parent=11 // pred_check_branch
        %403 = sbr.rel (%p401) target = $region28
      $region27: #{_lambda_.7} parent=11 // pred_region
        _
      $region28: #{_lambda_.7} parent=11 // pred_fallthru
        _
      // Predicated region
      $region29: #{_lambda_.7} parent=11 // pred_check
        %p404 = pneg %p204
      $region30: #{_lambda_.7} parent=11 // pred_check_branch
        %406 = sbr.rel (%p404) target = $region32
      $region31: #{_lambda_.7} parent=11 // pred_region
        _
      $region32: #{_lambda_.7} parent=11 // pred_fallthru
        _
      // Predicated region
      $region33: #{_lambda_.7} parent=11 // pred_check
        %p407 = pneg %p225
      $region34: #{_lambda_.7} parent=11 // pred_check_branch
        %409 = sbr.rel (%p407) target = $region36
      $region35: #{_lambda_.7} parent=11 // pred_region
        _
      $region36: #{_lambda_.7} parent=11 // pred_fallthru
        _
      // Predicated region
      $region37: #{_lambda_.7} parent=11 // pred_check
        %p410 = pneg %p246
      $region38: #{_lambda_.7} parent=11 // pred_check_branch
        %412 = sbr.rel (%p410) target = $region40
      $region39: #{_lambda_.7} parent=11 // pred_region
        _
      $region40: #{_lambda_.7} parent=11 // pred_fallthru
        _
      // Predicated region
      $region41: #{_lambda_.7} parent=11 // pred_check
        %p413 = pneg %p267
      $region42: #{_lambda_.7} parent=11 // pred_check_branch
        %415 = sbr.rel (%p413) target = $region44
      $region43: #{_lambda_.7} parent=11 // pred_region
        _
      $region44: #{_lambda_.7} parent=11 // pred_fallthru
        _
      // Predicated region
      $region45: #{_lambda_.7} parent=11 // pred_check
        %p416 = pneg %p288
      $region46: #{_lambda_.7} parent=11 // pred_check_branch
        %418 = sbr.rel (%p416) target = $region48
      $region47: #{_lambda_.7} parent=11 // pred_region
        _
      $region48: #{_lambda_.7} parent=11 // pred_fallthru
        _
      // Predicated region
      $region49: #{_lambda_.7} parent=11 // pred_check
        %p419 = pneg %p309
      $region50: #{_lambda_.7} parent=11 // pred_check_branch
        %421 = sbr.rel (%p419) target = $region52
      $region51: #{_lambda_.7} parent=11 // pred_region
        _
      $region52: #{_lambda_.7} parent=11 // pred_fallthru
        _
      // Predicated region
      $region53: #{_lambda_.7} parent=11 // pred_check
        %p422 = pneg %p330
      $region54: #{_lambda_.7} parent=11 // pred_check_branch
        %424 = sbr.rel (%p422) target = $region56
      $region55: #{_lambda_.7} parent=11 // pred_region
        _
      $region56: #{_lambda_.7} parent=11 // pred_fallthru
        _
      // Predicated region
      $region57: #{_lambda_.7} parent=11 // pred_check
        %p425 = pneg %p351
      $region58: #{_lambda_.7} parent=11 // pred_check_branch
        %427 = sbr.rel (%p425) target = $region60
      $region59: #{_lambda_.7} parent=11 // pred_region
        _
      $region60: #{_lambda_.7} parent=11 // pred_fallthru
        _
    $region12: #{_lambda_.7} parent=5 // pred_fallthru
      _
    %p428 = scmp.lt.s32.totalorder %s21, 2
    // Predicated region
    $region61: #{_lambda_.7} parent=5 // pred_check
      %p429 = pneg %p428
    $region62: #{_lambda_.7} parent=5 // pred_check_branch
      %431 = sbr.rel (%p429) target = $region64
    $region63: #{_lambda_.7} parent=5 // pred_region
      // Predicated region
      $region65: #{_lambda_.7} parent=63 // pred_check
        %p432 = pneg %p41
      $region66: #{_lambda_.7} parent=63 // pred_check_branch
        %434 = sbr.rel (%p432) target = $region68
      $region67: #{_lambda_.7} parent=63 // pred_region
        %p435 = scmp.lt.s32.totalorder %s21, 1
        %s436 = scalar_select %p435, %s21, 1
        %s437 = smul.addr %s436, 8
        %s438 = scalar_lea.vmem %s0, %s437
      $region68: #{_lambda_.7} parent=63 // pred_fallthru
        _
      // Predicated region
      $region69: #{_lambda_.7} parent=63 // pred_check
        %p439 = pneg %p67
      $region70: #{_lambda_.7} parent=63 // pred_check_branch
        %441 = sbr.rel (%p439) target = $region72
      $region71: #{_lambda_.7} parent=63 // pred_region
        %p442 = scmp.lt.s32.totalorder %s21, 1
        %s443 = scalar_select %p442, %s21, 1
        %s444 = smul.addr %s443, 8
        %s445 = scalar_lea.vmem %s1, %s444
      $region72: #{_lambda_.7} parent=63 // pred_fallthru
        _
      // Predicated region
      $region73: #{_lambda_.7} parent=63 // pred_check
        %p446 = pneg %p93
      $region74: #{_lambda_.7} parent=63 // pred_check_branch
        %448 = sbr.rel (%p446) target = $region76
      $region75: #{_lambda_.7} parent=63 // pred_region
        %p449 = scmp.lt.s32.totalorder %s21, 1
        %s450 = scalar_select %p449, %s21, 1
        %s451 = scalar_lea.vmem %s2, %s450
      $region76: #{_lambda_.7} parent=63 // pred_fallthru
        _
    $region64: #{_lambda_.7} parent=5 // pred_fallthru
      _
    %p452 = scmp.le.s32.totalorder 1, %s21
    %p453 = scmp.lt.s32.totalorder %s21, 3
    %p454 = pnand %p452, %p453
    %p455 = pneg %p454
    // Predicated region
    $region77: #{_lambda_.7} parent=5 // pred_check
      _
    $region78: #{_lambda_.7} parent=5 // pred_check_branch
      %457 = sbr.rel (%p454) target = $region80
    $region79: #{_lambda_.7} parent=5 // pred_region
      %s458 = ssub.s32 %s21, 1
      %p459 = scmp.lt.s32.totalorder %s26, 1
      %s460 = scalar_select %p459, %s26, 1
      %s461 = smul.addr %s460, 8
      %s462 = scalar_lea.vmem %s0, %s461
      %p463 = pneg %p47
      %p464 = pneg %p44
      %p465 = scmp.lt.s32.totalorder %s26, 1
      %s466 = scalar_select %p465, %s26, 1
      %s467 = smul.addr %s466, 8
      %s468 = scalar_lea.vmem %s1, %s467
      %p469 = pneg %p73
      %p470 = pneg %p70
      %p471 = scmp.lt.s32.totalorder %s26, 1
      %s472 = scalar_select %p471, %s26, 1
      %s473 = scalar_lea.vmem %s2, %s472
      %p474 = pneg %p99
      %p475 = pneg %p96
      %p476 = pneg %p120
      %p477 = pneg %p117
      %p478 = pneg %p141
      %p479 = pneg %p138
      %p480 = pneg %p162
      %p481 = pneg %p159
      %p482 = pneg %p183
      %p483 = pneg %p180
      %p484 = pneg %p204
      %p485 = pneg %p201
      %p486 = pneg %p225
      %p487 = pneg %p222
      %p488 = pneg %p246
      %p489 = pneg %p243
      %p490 = pneg %p267
      %p491 = pneg %p264
      %p492 = pneg %p288
      %p493 = pneg %p285
      %p494 = pneg %p309
      %p495 = pneg %p306
      %p496 = pneg %p330
      %p497 = pneg %p327
      %p498 = pneg %p351
      %p499 = pneg %p348
      %p500 = pneg %p377
      %p501 = pneg %p374
      %p502 = scmp.lt.s32.totalorder %s26, 1
      %s503 = scalar_select %p502, %s26, 1
      %s504 = smul.addr %s503, 8
      %s505 = scalar_lea.vmem %s15, %s504
      %p506 = scmp.lt.s32.totalorder %s26, 1
      %s507 = scalar_select %p506, %s26, 1
      %s508 = smul.addr %s507, 8
      %s509 = scalar_lea.vmem %s0, %s508
      %p510 = scmp.lt.s32.totalorder %s26, 1
      %s511 = scalar_select %p510, %s26, 1
      %s512 = smul.addr %s511, 8
      %s513 = scalar_lea.vmem %s1, %s512
      %p514 = scmp.lt.s32.totalorder %s26, 1
      %s515 = scalar_select %p514, %s26, 1
      %s516 = scalar_lea.vmem %s2, %s515
      %p517 = scmp.lt.s32.totalorder %s26, 1
      %s518 = scalar_select %p517, %s26, 1
      %s519 = smul.addr %s518, 8
      %s520 = scalar_lea.vmem %s15, %s519
      %v522 = vld [vmem:[%s509] sm:$0xff]
      %v523 = vld [vmem:[%s513] sm:$0xff]
      %v524 = vld [vmem:[%s516] sm:$0x1]
      %v525 = vpack.c.bf16 %v522, %v522
      %v526 = vld [vmem:[%s3] sm:$0xf]
      %v527 = vld [vmem:[%s3 + $0x4] sm:$0xf]
      %v528 = vld [vmem:[%s3 + $0x8] sm:$0xf]
      %v529 = vld [vmem:[%s3 + $0xc] sm:$0xf]
      %v530 = vld [vmem:[%s4] sm:$0x1]
      %v532 = vlaneseq
      %v533 = vshrl.u32 %v532, 7
      %v534 = vsub.s32 0, %v533
      %v535 = vrot.slane %v530, %v534
      %v541 = vunpack.c.l.b16 %v526
      %v542 = vunpack.c.l.b16 %v527
      %v543 = vunpack.c.l.b16 %v528
      %v544 = vunpack.c.l.b16 %v529
      %v545 = vpack.c.b16 %v542, %v541
      %v546 = vpack.c.b16 %v544, %v543
      %vm549 = vcmask 261120
      %v551 = vsel %vm549, %v525, 0
      %553 = vmatprep.subr.bf16.mxu0 0
      %554 = vmatpush1.bf16.msra.mxu0 %v545
      %555 = vmatprep.subr.bf16.mxu0 0
      %556 = vmatpush1.bf16.msra.mxu0 %v546
      %557 = vmatprep.subr.bf16.mxu0 0
      %558 = vmatpush1.bf16.msra.mxu0 0
      %559 = vmatprep.subr.bf16.mxu0 0
      %560 = vmatpush1.bf16.msra.mxu0 0
      %561 = vmatprep.subr.bf16.mxu0 0
      %562 = vmatpush1.bf16.msra.mxu0 0
      %563 = vmatprep.subr.bf16.mxu0 0
      %564 = vmatpush1.bf16.msra.mxu0 0
      %565 = vmatprep.subr.bf16.mxu0 0
      %566 = vmatpush1.bf16.msra.mxu0 0
      %567 = vmatprep.subr.bf16.mxu0 0
      %568 = vmatpush1.bf16.msra.mxu0 0
      %569 = vmatprep.subr.bf16.mxu0 0
      %570 = vmatpush1.bf16.msra.mxu0 0
      %571 = vmatprep.subr.bf16.mxu0 0
      %572 = vmatpush1.bf16.msra.mxu0 0
      %573 = vmatprep.subr.bf16.mxu0 0
      %574 = vmatpush1.bf16.msra.mxu0 0
      %575 = vmatprep.subr.bf16.mxu0 0
      %576 = vmatpush1.bf16.msra.mxu0 0
      %577 = vmatprep.subr.bf16.mxu0 0
      %578 = vmatpush1.bf16.msra.mxu0 0
      %579 = vmatprep.subr.bf16.mxu0 0
      %580 = vmatpush1.bf16.msra.mxu0 0
      %581 = vmatprep.subr.bf16.mxu0 0
      %582 = vmatpush1.bf16.msra.mxu0 0
      %583 = vmatprep.subr.bf16.mxu0 0
      %584 = vmatpush1.bf16.msra.mxu0 0
      %585 = vmatprep.mubr.bf16.mxu0 0
      %586 = vmatmul.mubr.bf16.gmra.mrb[0].mxu0 %v551
      %v587 = vpop.f32.mrb[0].mxu0
      %v588 = vadd.f32 %v535, %v587
      %v589 = vpop.f32.mrb[0].mxu0
      %v590 = vpop.f32.mrb[0].mxu0
      %v591 = vpop.f32.mrb[0].mxu0
      %592 = vdwg.mxu0
      %v593 = vpack.c.bf16 %v588, %v588
      %595 = vrot.lane.b32.xlu0 %v593, 96
      %v596 = vpop.permute.xlu0 %595
      %vm597 = vcmask 130048
      %v599 = vsel %vm597, %v593, 0
      %v602 = vsel %vm597, %v596, 0
      %604 = vmatprep.subr.bf16.mxu0 0
      %605 = vmatpush1.bf16.xpose.msra.mxu0 %v602
      %606 = vmatprep.subr.bf16.mxu0 0
      %607 = vmatpush1.bf16.xpose.msra.mxu0 0
      %608 = vmatprep.subr.bf16.mxu0 0
      %609 = vmatpush1.bf16.xpose.msra.mxu0 0
      %610 = vmatprep.subr.bf16.mxu0 0
      %611 = vmatpush1.bf16.xpose.msra.mxu0 0
      %612 = vmatprep.subr.bf16.mxu0 0
      %613 = vmatpush1.bf16.xpose.msra.mxu0 0
      %614 = vmatprep.subr.bf16.mxu0 0
      %615 = vmatpush1.bf16.xpose.msra.mxu0 0
      %616 = vmatprep.subr.bf16.mxu0 0
      %617 = vmatpush1.bf16.xpose.msra.mxu0 0
      %618 = vmatprep.subr.bf16.mxu0 0
      %619 = vmatpush1.bf16.xpose.msra.mxu0 0
      %620 = vmatprep.subr.bf16.mxu0 0
      %621 = vmatpush1.bf16.xpose.msra.mxu0 0
      %622 = vmatprep.subr.bf16.mxu0 0
      %623 = vmatpush1.bf16.xpose.msra.mxu0 0
      %624 = vmatprep.subr.bf16.mxu0 0
      %625 = vmatpush1.bf16.xpose.msra.mxu0 0
      %626 = vmatprep.subr.bf16.mxu0 0
      %627 = vmatpush1.bf16.xpose.msra.mxu0 0
      %628 = vmatprep.subr.bf16.mxu0 0
      %629 = vmatpush1.bf16.xpose.msra.mxu0 0
      %630 = vmatprep.subr.bf16.mxu0 0
      %631 = vmatpush1.bf16.xpose.msra.mxu0 0
      %632 = vmatprep.subr.bf16.mxu0 0
      %633 = vmatpush1.bf16.xpose.msra.mxu0 0
      %634 = vmatprep.subr.bf16.mxu0 0
      %635 = vmatpush1.bf16.xpose.msra.mxu0 0
      %636 = vmatprep.mubr.bf16.mxu0 0
      %637 = vmatmul.mubr.bf16.gmra.mrb[0].mxu0 %v599
      %v638 = vpop.f32.mrb[0].mxu0
      %v639 = vadd.f32 0.0, %v638
      %v640 = vpop.f32.mrb[0].mxu0
      %v641 = vpop.f32.mrb[0].mxu0
      %v642 = vpop.f32.mrb[0].mxu0
      %643 = vdwg.mxu0
      %v644 = vmul.f32 %v639, 0.25
      %v646 = vlaneseq
      %v647 = vshrl.u32 %v646, 7
      %v648 = vsub.s32 0, %v647
      %v649 = vrot.slane %v524, %v648
      %v651 = vadd.f32 %v644, %v649
      %vm652 = vcmask 64512
      %v653 = vsel %vm652, %v651, -inf
      %654 = vmax.xlane.f32.xlu0 %v653
      %v655 = vpop.xlane.xlu0 %654
      %v656 = vsub.f32 %v651, %v655
      %v657 = vmul.f32 %v656, 1.442695
      %v658 = vpow.pop %v657
      %v659 = vsel %vm652, %v658, 0.0
      %660 = vadd.xlane.f32.xlu0 %v659
      %v661 = vpop.xlane.xlu0 %660
      %v662 = vrcp.pop %v661
      %v663 = vmul.f32 %v658, %v662
      %v664 = vpack.c.bf16 %v663, %v663
      %665 = vrot.lane.b32.xlu0 %v593, 64
      %v666 = vpop.permute.xlu0 %665
      %v668 = vsel %vm652, %v664, 0
      %vm670 = vcmask 1043456
      %v672 = vsel %vm670, %v666, 0
      %674 = vmatprep.subr.bf16.mxu0 0
      %675 = vmatpush1.bf16.msra.mxu0 %v672
      %676 = vmatprep.subr.bf16.mxu0 0
      %677 = vmatpush1.bf16.msra.mxu0 0
      %678 = vmatprep.subr.bf16.mxu0 0
      %679 = vmatpush1.bf16.msra.mxu0 0
      %680 = vmatprep.subr.bf16.mxu0 0
      %681 = vmatpush1.bf16.msra.mxu0 0
      %682 = vmatprep.subr.bf16.mxu0 0
      %683 = vmatpush1.bf16.msra.mxu0 0
      %684 = vmatprep.subr.bf16.mxu0 0
      %685 = vmatpush1.bf16.msra.mxu0 0
      %686 = vmatprep.subr.bf16.mxu0 0
      %687 = vmatpush1.bf16.msra.mxu0 0
      %688 = vmatprep.subr.bf16.mxu0 0
      %689 = vmatpush1.bf16.msra.mxu0 0
      %690 = vmatprep.subr.bf16.mxu0 0
      %691 = vmatpush1.bf16.msra.mxu0 0
      %692 = vmatprep.subr.bf16.mxu0 0
      %693 = vmatpush1.bf16.msra.mxu0 0
      %694 = vmatprep.subr.bf16.mxu0 0
      %695 = vmatpush1.bf16.msra.mxu0 0
      %696 = vmatprep.subr.bf16.mxu0 0
      %697 = vmatpush1.bf16.msra.mxu0 0
      %698 = vmatprep.subr.bf16.mxu0 0
      %699 = vmatpush1.bf16.msra.mxu0 0
      %700 = vmatprep.subr.bf16.mxu0 0
      %701 = vmatpush1.bf16.msra.mxu0 0
      %702 = vmatprep.subr.bf16.mxu0 0
      %703 = vmatpush1.bf16.msra.mxu0 0
      %704 = vmatprep.subr.bf16.mxu0 0
      %705 = vmatpush1.bf16.msra.mxu0 0
      %706 = vmatprep.mubr.bf16.mxu0 0
      %707 = vmatmul.mubr.bf16.gmra.mrb[0].mxu0 %v668
      %v708 = vpop.f32.mrb[0].mxu0
      %v709 = vadd.f32 0.0, %v708
      %v710 = vpop.f32.mrb[0].mxu0
      %v711 = vpop.f32.mrb[0].mxu0
      %v712 = vpop.f32.mrb[0].mxu0
      %713 = vdwg.mxu0
      %v714 = vpack.c.bf16 %v709, %v709
      %vm715 = vcmask 125952
      %716 = vst.msk [vmem:[#allocation2] sm:$0xf] %vm715, %v714
      %717 = vrot.lane.b32.xlu0 %v593, 112
      %v718 = vpop.permute.xlu0 %717
      %719 = vrot.lane.b32.xlu0 %v593, 80
      %v720 = vpop.permute.xlu0 %719
      %v722 = vsel %vm597, %v718, 0
      %v725 = vsel %vm597, %v720, 0
      %727 = vmatprep.subr.bf16.mxu0 0
      %728 = vmatpush1.bf16.xpose.msra.mxu0 %v725
      %729 = vmatprep.subr.bf16.mxu0 0
      %730 = vmatpush1.bf16.xpose.msra.mxu0 0
      %731 = vmatprep.subr.bf16.mxu0 0
      %732 = vmatpush1.bf16.xpose.msra.mxu0 0
      %733 = vmatprep.subr.bf16.mxu0 0
      %734 = vmatpush1.bf16.xpose.msra.mxu0 0
      %735 = vmatprep.subr.bf16.mxu0 0
      %736 = vmatpush1.bf16.xpose.msra.mxu0 0
      %737 = vmatprep.subr.bf16.mxu0 0
      %738 = vmatpush1.bf16.xpose.msra.mxu0 0
      %739 = vmatprep.subr.bf16.mxu0 0
      %740 = vmatpush1.bf16.xpose.msra.mxu0 0
      %741 = vmatprep.subr.bf16.mxu0 0
      %742 = vmatpush1.bf16.xpose.msra.mxu0 0
      %743 = vmatprep.subr.bf16.mxu0 0
      %744 = vmatpush1.bf16.xpose.msra.mxu0 0
      %745 = vmatprep.subr.bf16.mxu0 0
      %746 = vmatpush1.bf16.xpose.msra.mxu0 0
      %747 = vmatprep.subr.bf16.mxu0 0
      %748 = vmatpush1.bf16.xpose.msra.mxu0 0
      %749 = vmatprep.subr.bf16.mxu0 0
      %750 = vmatpush1.bf16.xpose.msra.mxu0 0
      %751 = vmatprep.subr.bf16.mxu0 0
      %752 = vmatpush1.bf16.xpose.msra.mxu0 0
      %753 = vmatprep.subr.bf16.mxu0 0
      %754 = vmatpush1.bf16.xpose.msra.mxu0 0
      %755 = vmatprep.subr.bf16.mxu0 0
      %756 = vmatpush1.bf16.xpose.msra.mxu0 0
      %757 = vmatprep.subr.bf16.mxu0 0
      %758 = vmatpush1.bf16.xpose.msra.mxu0 0
      %759 = vmatprep.mubr.bf16.mxu0 0
      %760 = vmatmul.mubr.bf16.gmra.mrb[0].mxu0 %v722
      %v761 = vpop.f32.mrb[0].mxu0
      %v762 = vadd.f32 0.0, %v761
      %v763 = vpop.f32.mrb[0].mxu0
      %v764 = vpop.f32.mrb[0].mxu0
      %v765 = vpop.f32.mrb[0].mxu0
      %766 = vdwg.mxu0
      %v767 = vmul.f32 %v762, 0.25
      %v768 = vadd.f32 %v767, %v649
      %v769 = vsel %vm652, %v768, -inf
      %770 = vmax.xlane.f32.xlu0 %v769
      %v771 = vpop.xlane.xlu0 %770
      %v772 = vsub.f32 %v768, %v771
      %v773 = vmul.f32 %v772, 1.442695
      %v774 = vpow.pop %v773
      %v775 = vsel %vm652, %v774, 0.0
      %776 = vadd.xlane.f32.xlu0 %v775
      %v777 = vpop.xlane.xlu0 %776
      %v778 = vrcp.pop %v777
      %v779 = vmul.f32 %v774, %v778
      %v780 = vpack.c.bf16 %v779, %v779
      %781 = vrot.lane.b32.xlu0 %v593, 48
      %v782 = vpop.permute.xlu0 %781
      %v784 = vsel %vm652, %v780, 0
      %v787 = vsel %vm670, %v782, 0
      %789 = vmatprep.subr.bf16.mxu0 0
      %790 = vmatpush1.bf16.msra.mxu0 %v787
      %791 = vmatprep.subr.bf16.mxu0 0
      %792 = vmatpush1.bf16.msra.mxu0 0
      %793 = vmatprep.subr.bf16.mxu0 0
      %794 = vmatpush1.bf16.msra.mxu0 0
      %795 = vmatprep.subr.bf16.mxu0 0
      %796 = vmatpush1.bf16.msra.mxu0 0
      %797 = vmatprep.subr.bf16.mxu0 0
      %798 = vmatpush1.bf16.msra.mxu0 0
      %799 = vmatprep.subr.bf16.mxu0 0
      %800 = vmatpush1.bf16.msra.mxu0 0
      %801 = vmatprep.subr.bf16.mxu0 0
      %802 = vmatpush1.bf16.msra.mxu0 0
      %803 = vmatprep.subr.bf16.mxu0 0
      %804 = vmatpush1.bf16.msra.mxu0 0
      %805 = vmatprep.subr.bf16.mxu0 0
      %806 = vmatpush1.bf16.msra.mxu0 0
      %807 = vmatprep.subr.bf16.mxu0 0
      %808 = vmatpush1.bf16.msra.mxu0 0
      %809 = vmatprep.subr.bf16.mxu0 0
      %810 = vmatpush1.bf16.msra.mxu0 0
      %811 = vmatprep.subr.bf16.mxu0 0
      %812 = vmatpush1.bf16.msra.mxu0 0
      %813 = vmatprep.subr.bf16.mxu0 0
      %814 = vmatpush1.bf16.msra.mxu0 0
      %815 = vmatprep.subr.bf16.mxu0 0
      %816 = vmatpush1.bf16.msra.mxu0 0
      %817 = vmatprep.subr.bf16.mxu0 0
      %818 = vmatpush1.bf16.msra.mxu0 0
      %819 = vmatprep.subr.bf16.mxu0 0
      %820 = vmatpush1.bf16.msra.mxu0 0
      %821 = vmatprep.mubr.bf16.mxu0 0
      %822 = vmatmul.mubr.bf16.gmra.mrb[0].mxu0 %v784
      %v823 = vpop.f32.mrb[0].mxu0
      %v824 = vadd.f32 0.0, %v823
      %v825 = vpop.f32.mrb[0].mxu0
      %v826 = vpop.f32.mrb[0].mxu0
      %v827 = vpop.f32.mrb[0].mxu0
      %828 = vdwg.mxu0
      %v829 = vpack.c.bf16 %v824, %v824
      %v831 = vunpack.c.l.b16 %v829
      %v832 = vpack.c.b16 %v831, %v831
      %833 = vrot.lane.b32.xlu0 %v832, 16
      %v834 = vpop.permute.xlu0 %833
      %vm836 = vcmask 257152
      %837 = vst.msk [vmem:[#allocation2] sm:$0xf] %vm836, %v834
      %v838 = vld [vmem:[#allocation2] sm:$0xf]
      %v839 = vld [vmem:[%s5] sm:$0xf]
      %v840 = vld [vmem:[%s5 + $0x4] sm:$0xf]
      %v841 = vld [vmem:[%s5 + $0x8] sm:$0xf]
      %v842 = vld [vmem:[%s5 + $0xc] sm:$0xf]
      %v843 = vld [vmem:[%s6] sm:$0x1]
      %v845 = vlaneseq
      %v846 = vshrl.u32 %v845, 7
      %v847 = vsub.s32 0, %v846
      %v848 = vrot.slane %v843, %v847
      %v854 = vunpack.c.l.b16 %v839
      %v855 = vunpack.c.l.b16 %v840
      %v856 = vunpack.c.l.b16 %v841
      %v857 = vunpack.c.l.b16 %v842
      %v858 = vpack.c.b16 %v855, %v854
      %v859 = vpack.c.b16 %v857, %v856
      %v863 = vsel %vm549, %v838, 0
      %865 = vmatprep.subr.bf16.mxu0 0
      %866 = vmatpush1.bf16.msra.mxu0 %v858
      %867 = vmatprep.subr.bf16.mxu0 0
      %868 = vmatpush1.bf16.msra.mxu0 %v859
      %869 = vmatprep.subr.bf16.mxu0 0
      %870 = vmatpush1.bf16.msra.mxu0 0
      %871 = vmatprep.subr.bf16.mxu0 0
      %872 = vmatpush1.bf16.msra.mxu0 0
      %873 = vmatprep.subr.bf16.mxu0 0
      %874 = vmatpush1.bf16.msra.mxu0 0
      %875 = vmatprep.subr.bf16.mxu0 0
      %876 = vmatpush1.bf16.msra.mxu0 0
      %877 = vmatprep.subr.bf16.mxu0 0
      %878 = vmatpush1.bf16.msra.mxu0 0
      %879 = vmatprep.subr.bf16.mxu0 0
      %880 = vmatpush1.bf16.msra.mxu0 0
      %881 = vmatprep.subr.bf16.mxu0 0
      %882 = vmatpush1.bf16.msra.mxu0 0
      %883 = vmatprep.subr.bf16.mxu0 0
      %884 = vmatpush1.bf16.msra.mxu0 0
      %885 = vmatprep.subr.bf16.mxu0 0
      %886 = vmatpush1.bf16.msra.mxu0 0
      %887 = vmatprep.subr.bf16.mxu0 0
      %888 = vmatpush1.bf16.msra.mxu0 0
      %889 = vmatprep.subr.bf16.mxu0 0
      %890 = vmatpush1.bf16.msra.mxu0 0
      %891 = vmatprep.subr.bf16.mxu0 0
      %892 = vmatpush1.bf16.msra.mxu0 0
      %893 = vmatprep.subr.bf16.mxu0 0
      %894 = vmatpush1.bf16.msra.mxu0 0
      %895 = vmatprep.subr.bf16.mxu0 0
      %896 = vmatpush1.bf16.msra.mxu0 0
      %897 = vmatprep.mubr.bf16.mxu0 0
      %898 = vmatmul.mubr.bf16.gmra.mrb[0].mxu0 %v863
      %v899 = vpop.f32.mrb[0].mxu0
      %v900 = vadd.f32 %v848, %v899
      %v901 = vpop.f32.mrb[0].mxu0
      %v902 = vpop.f32.mrb[0].mxu0
      %v903 = vpop.f32.mrb[0].mxu0
      %904 = vdwg.mxu0
      %v905 = vadd.f32 %v522, %v900
      %v906 = vld [vmem:[%s7] sm:$0x1]
      %v907 = vld [vmem:[%s8] sm:$0x1]
      %v908 = vsel %vm549, %v905, 0.0
      %909 = vadd.xlane.f32.xlu0 %v908
      %v910 = vpop.xlane.xlu0 %909
      %v911 = vrcp.pop 32.0
      %v912 = vmul.f32 %v910, %v911
      %v913 = vsub.f32 %v905, %v912
      %v914 = vmul.f32 %v913, %v913
      %v915 = vsel %vm549, %v914, 0.0
      %916 = vadd.xlane.f32.xlu0 %v915
      %v917 = vpop.xlane.xlu0 %916
      %v918 = vmul.f32 %v917, %v911
      %v919 = vadd.f32 %v918, 1e-05
      %v920 = vrsqrt.pop %v919
      %v921 = vmul.f32 %v913, %v920
      %v923 = vlaneseq
      %v924 = vshrl.u32 %v923, 7
      %v925 = vsub.s32 0, %v924
      %v926 = vrot.slane %v906, %v925
      %v928 = vmul.f32 %v921, %v926
      %v930 = vlaneseq
      %v931 = vshrl.u32 %v930, 7
      %v932 = vsub.s32 0, %v931
      %v933 = vrot.slane %v907, %v932
      %v935 = vadd.f32 %v928, %v933
      %937 = vset.pattern.permute.xlu0 0
      %938 = vperm.xlu0 %937, %v523
      %v939 = vpop.permute.xlu0 %938
      %v941 = vmul.f32 %v935, %v939
      %vm942 = vcmask 253952
      %943 = vst.msk [vmem:[#allocation3] sm:$0x1] %vm942, 0.0
      %944 = vst.msk [vmem:[#allocation3 + $0x9] sm:$0x1] %vm942, 0.0
      %945 = vst.msk [vmem:[#allocation3 + $0x1] sm:$0xff] %vm549, %v941
      %v946 = vld [vmem:[#allocation3] sm:$0xff]
      %v947 = vpack.c.bf16 %v946, %v946
      %v948 = vld [vmem:[%s9] sm:$0xf]
      %v949 = vld [vmem:[%s9 + $0x4] sm:$0xf]
      %v950 = vld [vmem:[%s9 + $0x8] sm:$0xf]
      %v951 = vld [vmem:[%s9 + $0xc] sm:$0xf]
      %v952 = vld [vmem:[#allocation3 + $0x1] sm:$0xff]
      %v953 = vpack.c.bf16 %v952, %v952
      %s954 = scalar_lea.vmem %s9, 16
      %v955 = vld [vmem:[%s954] sm:$0xf]
      %v956 = vld [vmem:[%s954 + $0x4] sm:$0xf]
      %v957 = vld [vmem:[%s954 + $0x8] sm:$0xf]
      %v958 = vld [vmem:[%s954 + $0xc] sm:$0xf]
      %v963 = vunpack.c.l.b16 %v955
      %v964 = vunpack.c.l.b16 %v956
      %v965 = vunpack.c.l.b16 %v957
      %v966 = vunpack.c.l.b16 %v958
      %v967 = vpack.c.b16 %v964, %v963
      %v968 = vpack.c.b16 %v966, %v965
      %v972 = vsel %vm549, %v953, 0
      %974 = vmatprep.subr.bf16.mxu0 0
      %975 = vmatpush1.bf16.msra.mxu0 %v967
      %976 = vmatprep.subr.bf16.mxu0 0
      %977 = vmatpush1.bf16.msra.mxu0 %v968
      %978 = vmatprep.subr.bf16.mxu0 0
      %979 = vmatpush1.bf16.msra.mxu0 0
      %980 = vmatprep.subr.bf16.mxu0 0
      %981 = vmatpush1.bf16.msra.mxu0 0
      %982 = vmatprep.subr.bf16.mxu0 0
      %983 = vmatpush1.bf16.msra.mxu0 0
      %984 = vmatprep.subr.bf16.mxu0 0
      %985 = vmatpush1.bf16.msra.mxu0 0
      %986 = vmatprep.subr.bf16.mxu0 0
      %987 = vmatpush1.bf16.msra.mxu0 0
      %988 = vmatprep.subr.bf16.mxu0 0
      %989 = vmatpush1.bf16.msra.mxu0 0
      %990 = vmatprep.subr.bf16.mxu0 0
      %991 = vmatpush1.bf16.msra.mxu0 0
      %992 = vmatprep.subr.bf16.mxu0 0
      %993 = vmatpush1.bf16.msra.mxu0 0
      %994 = vmatprep.subr.bf16.mxu0 0
      %995 = vmatpush1.bf16.msra.mxu0 0
      %996 = vmatprep.subr.bf16.mxu0 0
      %997 = vmatpush1.bf16.msra.mxu0 0
      %998 = vmatprep.subr.bf16.mxu0 0
      %999 = vmatpush1.bf16.msra.mxu0 0
      %1000 = vmatprep.subr.bf16.mxu0 0
      %1001 = vmatpush1.bf16.msra.mxu0 0
      %1002 = vmatprep.subr.bf16.mxu0 0
      %1003 = vmatpush1.bf16.msra.mxu0 0
      %1004 = vmatprep.subr.bf16.mxu0 0
      %1005 = vmatpush1.bf16.msra.mxu0 0
      %1006 = vmatprep.mubr.bf16.mxu0 0
      %1007 = vmatmul.mubr.bf16.gmra.mrb[0].mxu0 %v972
      %v1008 = vpop.f32.mrb[0].mxu0
      %v1009 = vadd.f32 0.0, %v1008
      %v1010 = vpop.f32.mrb[0].mxu0
      %v1011 = vpop.f32.mrb[0].mxu0
      %v1012 = vpop.f32.mrb[0].mxu0
      %1013 = vdwg.mxu0
      %v1018 = vunpack.c.l.b16 %v948
      %v1019 = vunpack.c.l.b16 %v949
      %v1020 = vunpack.c.l.b16 %v950
      %v1021 = vunpack.c.l.b16 %v951
      %v1022 = vpack.c.b16 %v1019, %v1018
      %v1023 = vpack.c.b16 %v1021, %v1020
      %v1027 = vsel %vm549, %v947, 0
      %1029 = vmatprep.subr.bf16.mxu0 0
      %1030 = vmatpush1.bf16.msra.mxu0 %v1022
      %1031 = vmatprep.subr.bf16.mxu0 0
      %1032 = vmatpush1.bf16.msra.mxu0 %v1023
      %1033 = vmatprep.subr.bf16.mxu0 0
      %1034 = vmatpush1.bf16.msra.mxu0 0
      %1035 = vmatprep.subr.bf16.mxu0 0
      %1036 = vmatpush1.bf16.msra.mxu0 0
      %1037 = vmatprep.subr.bf16.mxu0 0
      %1038 = vmatpush1.bf16.msra.mxu0 0
      %1039 = vmatprep.subr.bf16.mxu0 0
      %1040 = vmatpush1.bf16.msra.mxu0 0
      %1041 = vmatprep.subr.bf16.mxu0 0
      %1042 = vmatpush1.bf16.msra.mxu0 0
      %1043 = vmatprep.subr.bf16.mxu0 0
      %1044 = vmatpush1.bf16.msra.mxu0 0
      %1045 = vmatprep.subr.bf16.mxu0 0
      %1046 = vmatpush1.bf16.msra.mxu0 0
      %1047 = vmatprep.subr.bf16.mxu0 0
      %1048 = vmatpush1.bf16.msra.mxu0 0
      %1049 = vmatprep.subr.bf16.mxu0 0
      %1050 = vmatpush1.bf16.msra.mxu0 0
      %1051 = vmatprep.subr.bf16.mxu0 0
      %1052 = vmatpush1.bf16.msra.mxu0 0
      %1053 = vmatprep.subr.bf16.mxu0 0
      %1054 = vmatpush1.bf16.msra.mxu0 0
      %1055 = vmatprep.subr.bf16.mxu0 0
      %1056 = vmatpush1.bf16.msra.mxu0 0
      %1057 = vmatprep.subr.bf16.mxu0 0
      %1058 = vmatpush1.bf16.msra.mxu0 0
      %1059 = vmatprep.subr.bf16.mxu0 0
      %1060 = vmatpush1.bf16.msra.mxu0 0
      %1061 = vmatprep.mubr.bf16.mxu0 0
      %1062 = vmatmul.mubr.bf16.gmra.mrb[0].mxu0 %v1027
      %v1063 = vpop.f32.mrb[0].mxu0
      %v1064 = vadd.f32 %v1009, %v1063
      %v1065 = vpop.f32.mrb[0].mxu0
      %v1066 = vpop.f32.mrb[0].mxu0
      %v1067 = vpop.f32.mrb[0].mxu0
      %1068 = vdwg.mxu0
      %v1069 = vld [vmem:[#allocation3 + $0x2] sm:$0xff]
      %v1070 = vpack.c.bf16 %v1069, %v1069
      %s1071 = scalar_lea.vmem %s9, 32
      %v1072 = vld [vmem:[%s1071] sm:$0xf]
      %v1073 = vld [vmem:[%s1071 + $0x4] sm:$0xf]
      %v1074 = vld [vmem:[%s1071 + $0x8] sm:$0xf]
      %v1075 = vld [vmem:[%s1071 + $0xc] sm:$0xf]
      %v1080 = vunpack.c.l.b16 %v1072
      %v1081 = vunpack.c.l.b16 %v1073
      %v1082 = vunpack.c.l.b16 %v1074
      %v1083 = vunpack.c.l.b16 %v1075
      %v1084 = vpack.c.b16 %v1081, %v1080
      %v1085 = vpack.c.b16 %v1083, %v1082
      %v1089 = vsel %vm549, %v1070, 0
      %1091 = vmatprep.subr.bf16.mxu0 0
      %1092 = vmatpush1.bf16.msra.mxu0 %v1084
      %1093 = vmatprep.subr.bf16.mxu0 0
      %1094 = vmatpush1.bf16.msra.mxu0 %v1085
      %1095 = vmatprep.subr.bf16.mxu0 0
      %1096 = vmatpush1.bf16.msra.mxu0 0
      %1097 = vmatprep.subr.bf16.mxu0 0
      %1098 = vmatpush1.bf16.msra.mxu0 0
      %1099 = vmatprep.subr.bf16.mxu0 0
      %1100 = vmatpush1.bf16.msra.mxu0 0
      %1101 = vmatprep.subr.bf16.mxu0 0
      %1102 = vmatpush1.bf16.msra.mxu0 0
      %1103 = vmatprep.subr.bf16.mxu0 0
      %1104 = vmatpush1.bf16.msra.mxu0 0
      %1105 = vmatprep.subr.bf16.mxu0 0
      %1106 = vmatpush1.bf16.msra.mxu0 0
      %1107 = vmatprep.subr.bf16.mxu0 0
      %1108 = vmatpush1.bf16.msra.mxu0 0
      %1109 = vmatprep.subr.bf16.mxu0 0
      %1110 = vmatpush1.bf16.msra.mxu0 0
      %1111 = vmatprep.subr.bf16.mxu0 0
      %1112 = vmatpush1.bf16.msra.mxu0 0
      %1113 = vmatprep.subr.bf16.mxu0 0
      %1114 = vmatpush1.bf16.msra.mxu0 0
      %1115 = vmatprep.subr.bf16.mxu0 0
      %1116 = vmatpush1.bf16.msra.mxu0 0
      %1117 = vmatprep.subr.bf16.mxu0 0
      %1118 = vmatpush1.bf16.msra.mxu0 0
      %1119 = vmatprep.subr.bf16.mxu0 0
      %1120 = vmatpush1.bf16.msra.mxu0 0
      %1121 = vmatprep.subr.bf16.mxu0 0
      %1122 = vmatpush1.bf16.msra.mxu0 0
      %1123 = vmatprep.mubr.bf16.mxu0 0
      %1124 = vmatmul.mubr.bf16.gmra.mrb[0].mxu0 %v1089
      %v1125 = vpop.f32.mrb[0].mxu0
      %v1126 = vadd.f32 0.0, %v1125
      %v1127 = vpop.f32.mrb[0].mxu0
      %v1128 = vpop.f32.mrb[0].mxu0
      %v1129 = vpop.f32.mrb[0].mxu0
      %1130 = vdwg.mxu0
      %v1131 = vadd.f32 %v1064, %v1126
      %v1132 = vld [vmem:[%s10] sm:$0x1]
      %v1134 = vlaneseq
      %v1135 = vshrl.u32 %v1134, 7
      %v1136 = vsub.s32 0, %v1135
      %v1137 = vrot.slane %v1132, %v1136
      %v1139 = vadd.f32 %v1131, %v1137
      %v1140 = vmax.f32 %v1139, 0.0
      %v1141 = vpack.c.bf16 %v1140, %v1140
      %v1142 = vld [vmem:[%s11] sm:$0xf]
      %v1143 = vld [vmem:[%s11 + $0x4] sm:$0xf]
      %v1144 = vld [vmem:[%s11 + $0x8] sm:$0xf]
      %v1145 = vld [vmem:[%s11 + $0xc] sm:$0xf]
      %v1146 = vld [vmem:[%s11 + $0x10] sm:$0xf]
      %v1147 = vld [vmem:[%s11 + $0x14] sm:$0xf]
      %v1148 = vld [vmem:[%s11 + $0x18] sm:$0xf]
      %v1149 = vld [vmem:[%s11 + $0x1c] sm:$0xf]
      %v1150 = vld [vmem:[%s12] sm:$0x1]
      %v1152 = vlaneseq
      %v1153 = vshrl.u32 %v1152, 7
      %v1154 = vsub.s32 0, %v1153
      %v1155 = vrot.slane %v1150, %v1154
      %v1165 = vunpack.c.l.b16 %v1142
      %v1166 = vunpack.c.l.b16 %v1143
      %v1167 = vunpack.c.l.b16 %v1144
      %v1168 = vunpack.c.l.b16 %v1145
      %v1169 = vunpack.c.l.b16 %v1146
      %v1170 = vunpack.c.l.b16 %v1147
      %v1171 = vunpack.c.l.b16 %v1148
      %v1172 = vunpack.c.l.b16 %v1149
      %v1173 = vpack.c.b16 %v1166, %v1165
      %v1174 = vpack.c.b16 %v1168, %v1167
      %v1175 = vpack.c.b16 %v1170, %v1169
      %v1176 = vpack.c.b16 %v1172, %v1171
      %vm1181 = vcmask 523264
      %v1183 = vsel %vm1181, %v1141, 0
      %1185 = vmatprep.subr.bf16.mxu0 0
      %1186 = vmatpush1.bf16.msra.mxu0 %v1173
      %1187 = vmatprep.subr.bf16.mxu0 0
      %1188 = vmatpush1.bf16.msra.mxu0 %v1174
      %1189 = vmatprep.subr.bf16.mxu0 0
      %1190 = vmatpush1.bf16.msra.mxu0 %v1175
      %1191 = vmatprep.subr.bf16.mxu0 0
      %1192 = vmatpush1.bf16.msra.mxu0 %v1176
      %1193 = vmatprep.subr.bf16.mxu0 0
      %1194 = vmatpush1.bf16.msra.mxu0 0
      %1195 = vmatprep.subr.bf16.mxu0 0
      %1196 = vmatpush1.bf16.msra.mxu0 0
      %1197 = vmatprep.subr.bf16.mxu0 0
      %1198 = vmatpush1.bf16.msra.mxu0 0
      %1199 = vmatprep.subr.bf16.mxu0 0
      %1200 = vmatpush1.bf16.msra.mxu0 0
      %1201 = vmatprep.subr.bf16.mxu0 0
      %1202 = vmatpush1.bf16.msra.mxu0 0
      %1203 = vmatprep.subr.bf16.mxu0 0
      %1204 = vmatpush1.bf16.msra.mxu0 0
      %1205 = vmatprep.subr.bf16.mxu0 0
      %1206 = vmatpush1.bf16.msra.mxu0 0
      %1207 = vmatprep.subr.bf16.mxu0 0
      %1208 = vmatpush1.bf16.msra.mxu0 0
      %1209 = vmatprep.subr.bf16.mxu0 0
      %1210 = vmatpush1.bf16.msra.mxu0 0
      %1211 = vmatprep.subr.bf16.mxu0 0
      %1212 = vmatpush1.bf16.msra.mxu0 0
      %1213 = vmatprep.subr.bf16.mxu0 0
      %1214 = vmatpush1.bf16.msra.mxu0 0
      %1215 = vmatprep.subr.bf16.mxu0 0
      %1216 = vmatpush1.bf16.msra.mxu0 0
      %1217 = vmatprep.mubr.bf16.mxu0 0
      %1218 = vmatmul.mubr.bf16.gmra.mrb[0].mxu0 %v1183
      %v1219 = vpop.f32.mrb[0].mxu0
      %v1220 = vadd.f32 %v1155, %v1219
      %v1221 = vpop.f32.mrb[0].mxu0
      %v1222 = vpop.f32.mrb[0].mxu0
      %v1223 = vpop.f32.mrb[0].mxu0
      %1224 = vdwg.mxu0
      %v1225 = vadd.f32 %v941, %v1220
      %v1226 = vld [vmem:[%s13] sm:$0x1]
      %v1227 = vld [vmem:[%s14] sm:$0x1]
      %v1228 = vsel %vm549, %v1225, 0.0
      %1229 = vadd.xlane.f32.xlu0 %v1228
      %v1230 = vpop.xlane.xlu0 %1229
      %v1231 = vmul.f32 %v1230, %v911
      %v1232 = vsub.f32 %v1225, %v1231
      %v1233 = vmul.f32 %v1232, %v1232
      %v1234 = vsel %vm549, %v1233, 0.0
      %1235 = vadd.xlane.f32.xlu0 %v1234
      %v1236 = vpop.xlane.xlu0 %1235
      %v1237 = vmul.f32 %v1236, %v911
      %v1238 = vadd.f32 %v1237, 1e-05
      %v1239 = vrsqrt.pop %v1238
      %v1240 = vmul.f32 %v1232, %v1239
      %v1242 = vlaneseq
      %v1243 = vshrl.u32 %v1242, 7
      %v1244 = vsub.s32 0, %v1243
      %v1245 = vrot.slane %v1226, %v1244
      %v1247 = vmul.f32 %v1240, %v1245
      %v1249 = vlaneseq
      %v1250 = vshrl.u32 %v1249, 7
      %v1251 = vsub.s32 0, %v1250
      %v1252 = vrot.slane %v1227, %v1251
      %v1254 = vadd.f32 %v1247, %v1252
      %v1255 = vmul.f32 %v1254, %v939
      %1256 = vst.msk [vmem:[%s520] sm:$0xff] %vm549, %v1255
      %p1257 = scmp.lt.s32.totalorder %s26, 1
      %s1258 = scalar_select %p1257, %s26, 1
      %s1259 = smul.addr %s1258, 8
      %s1260 = scalar_lea.vmem %s15, %s1259
      // Predicated region
      $region81: #{_lambda_.7} parent=79 // pred_check
        %p1261 = pneg %p374
      $region82: #{_lambda_.7} parent=79 // pred_check_branch
        %1263 = sbr.rel (%p1261) target = $region84
      $region83: #{_lambda_.7} parent=79 // pred_region
        _
      $region84: #{_lambda_.7} parent=79 // pred_fallthru
        _
    $region80: #{_lambda_.7} parent=5 // pred_fallthru
      _
    %p1264 = scmp.le.s32.totalorder 2, %s21
    // Predicated region
    $region85: #{_lambda_.7} parent=5 // pred_check
      %p1265 = pneg %p1264
    $region86: #{_lambda_.7} parent=5 // pred_check_branch
      %1267 = sbr.rel (%p1265) target = $region88
    $region87: #{_lambda_.7} parent=5 // pred_region
      %s1268 = ssub.s32 %s21, 2
      // Predicated region
      $region89: #{_lambda_.7} parent=87 // pred_check
        %p1269 = pneg %p380
      $region90: #{_lambda_.7} parent=87 // pred_check_branch
        %1271 = sbr.rel (%p1269) target = $region92
      $region91: #{_lambda_.7} parent=87 // pred_region
        %p1272 = scmp.lt.s32.totalorder %s27, 1
        %s1273 = scalar_select %p1272, %s27, 1
        %s1274 = smul.addr %s1273, 8
        %s1275 = scalar_lea.vmem %s15, %s1274
      $region92: #{_lambda_.7} parent=87 // pred_fallthru
        _
    $region88: #{_lambda_.7} parent=5 // pred_fallthru
      _
  $region6: #{_lambda_.7} parent=0 // loop_footer
    %s25 = sadd.s32 1, %s21
  $region7: #{_lambda_.7} parent=0 // loop_footer_branch
    %20 = sbr.rel target = $region3
  $region8: #{_lambda_.7} parent=0 // loop_exit
    _

// kernel: _lambda_.10
$region0: #{_lambda_.10}
  #allocation0 [shape = 'u32[]', space=smem, size = 0x4, offset = 0x4, fixed_abs, tag = 'smem constant byte address 0x4 - core index']
  #allocation1 [shape = 'u32[144,128]{1,0:T(1,128)}', space=vmem, size = 0x12000, scoped, tag = 'internal scratch']
  #allocation2 [shape = 'bf16[16,32]{1,0:T(16,128)(2,1)}', space=vmem, size = 0x1000, scoped, tag = 'scratch operand']
  #allocation3 [shape = 'f32[18,32]{1,0:T(8,128)}', space=vmem, size = 0x3000, scoped, tag = 'scratch operand']
  %s0 = inlined_call_operand.vmem [shape: f32[2,16,32], index: 0, kind: input, shape index: {}]
  %s1 = inlined_call_operand.vmem [shape: f32[2,16,1], index: 1, kind: input, shape index: {}]
  %s2 = inlined_call_operand.vmem [shape: f32[2,1,16], index: 2, kind: input, shape index: {}]
  %s3 = inlined_call_operand.vmem [shape: bf16[32,96], index: 3, kind: input, shape index: {}]
  %s4 = inlined_call_operand.vmem [shape: f32[1,96], index: 4, kind: input, shape index: {}]
  %s5 = inlined_call_operand.vmem [shape: bf16[32,32], index: 5, kind: input, shape index: {}]
  %s6 = inlined_call_operand.vmem [shape: f32[1,32], index: 6, kind: input, shape index: {}]
  %s7 = inlined_call_operand.vmem [shape: f32[1,32], index: 7, kind: input, shape index: {}]
  %s8 = inlined_call_operand.vmem [shape: f32[1,32], index: 8, kind: input, shape index: {}]
  %s9 = inlined_call_operand.vmem [shape: bf16[3,32,64], index: 9, kind: input, shape index: {}]
  %s10 = inlined_call_operand.vmem [shape: f32[1,64], index: 10, kind: input, shape index: {}]
  %s11 = inlined_call_operand.vmem [shape: bf16[64,32], index: 11, kind: input, shape index: {}]
  %s12 = inlined_call_operand.vmem [shape: f32[1,32], index: 12, kind: input, shape index: {}]
  %s13 = inlined_call_operand.vmem [shape: f32[1,32], index: 13, kind: input, shape index: {}]
  %s14 = inlined_call_operand.vmem [shape: f32[1,32], index: 14, kind: input, shape index: {}]
  %s15 = inlined_call_operand.vmem [shape: f32[2,16,32], index: 15, kind: output, shape index: {}]
  %s16 = sld [smem:[#allocation0]]
  $region93: #{_lambda_.10} parent=0
    _
  %s18 = ssub.s32 1, %s16
  %s19 = scalar_select 0, %s18, %s16
  loop: start=0, step=1, limit=4
  $region2: #{_lambda_.10} parent=0 // loop_pre_header
    _
  $region3: #{_lambda_.10} parent=0 // loop_header
    %s21 = sphi 0, %s25
    %p22 = scmp.ge.s32.totalorder %s21, 4
    %s31 = sphi 0, %s33
    %s34 = sphi 0, %s31
    %s35 = sphi 0, %s34
    %s51 = sphi 0, %s35
    %s57 = sphi 0, %s59
    %s60 = sphi 0, %s57
    %s61 = sphi 0, %s60
    %s77 = sphi 0, %s61
    %s83 = sphi 0, %s85
    %s86 = sphi 0, %s83
    %s87 = sphi 0, %s86
    %s103 = sphi 0, %s87
    %s107 = sphi 0, %s107
    %s109 = sphi 0, %s107
    %s110 = sphi 0, %s109
    %s124 = sphi 0, %s110
    %s128 = sphi 0, %s128
    %s130 = sphi 0, %s128
    %s131 = sphi 0, %s130
    %s145 = sphi 0, %s131
    %s149 = sphi 0, %s149
    %s151 = sphi 0, %s149
    %s152 = sphi 0, %s151
    %s166 = sphi 0, %s152
    %s170 = sphi 0, %s170
    %s172 = sphi 0, %s170
    %s173 = sphi 0, %s172
    %s187 = sphi 0, %s173
    %s191 = sphi 0, %s191
    %s193 = sphi 0, %s191
    %s194 = sphi 0, %s193
    %s208 = sphi 0, %s194
    %s212 = sphi 0, %s212
    %s214 = sphi 0, %s212
    %s215 = sphi 0, %s214
    %s229 = sphi 0, %s215
    %s233 = sphi 0, %s233
    %s235 = sphi 0, %s233
    %s236 = sphi 0, %s235
    %s250 = sphi 0, %s236
    %s254 = sphi 0, %s254
    %s256 = sphi 0, %s254
    %s257 = sphi 0, %s256
    %s271 = sphi 0, %s257
    %s275 = sphi 0, %s275
    %s277 = sphi 0, %s275
    %s278 = sphi 0, %s277
    %s292 = sphi 0, %s278
    %s296 = sphi 0, %s296
    %s298 = sphi 0, %s296
    %s299 = sphi 0, %s298
    %s313 = sphi 0, %s299
    %s317 = sphi 0, %s317
    %s319 = sphi 0, %s317
    %s320 = sphi 0, %s319
    %s334 = sphi 0, %s320
    %s338 = sphi 0, %s338
    %s340 = sphi 0, %s338
    %s341 = sphi 0, %s340
    %s355 = sphi 0, %s341
    %s361 = sphi 0, %s363
    %s364 = sphi 0, %s361
    %s365 = sphi 0, %s364
    %s381 = sphi 0, %s365
  $region4: #{_lambda_.10} parent=0 // loop_header_branch
    %24 = sbr.rel (%p22) target = $region8
  $region5: #{_lambda_.10} parent=0 // loop_body
    %s26 = ssub.s32 %s21, 1
    %s27 = ssub.s32 %s21, 2
    %s28 = sadd.s32 %s21, 1
    %s29 = ssub.s32 %s21, %s28
    %p30 = scmp.eq.s32.totalorder %s29, 0
    %s32 = sadd.s32 %s31, 1
    %s33 = scalar_select %p30, %s31, %s32
    %p36 = pneg %p30
    %p37 = scmp.eq.s32.totalorder %s21, 1
    %p38 = por %p36, %p37
    %p39 = scmp.ne.s32.totalorder %s31, %s34
    %p40 = scmp.eq.s32.totalorder %s21, 0
    %p41 = por %p39, %p40
    %p42 = scmp.ne.s32.totalorder %s31, %s34
    %p43 = scmp.eq.s32.totalorder %s26, 1
    %p44 = por %p42, %p43
    %p45 = scmp.ne.s32.totalorder %s34, %s35
    %p46 = scmp.eq.s32.totalorder %s26, 0
    %p47 = por %p45, %p46
    %p48 = scmp.ne.s32.totalorder %s34, %s35
    %p49 = scmp.eq.s32.totalorder %s27, 1
    %p50 = por %p48, %p49
    %p52 = scmp.ne.s32.totalorder %s35, %s51
    %p53 = scmp.eq.s32.totalorder %s27, 0
    %p54 = por %p52, %p53
    %s55 = ssub.s32 %s21, %s28
    %p56 = scmp.eq.s32.totalorder %s55, 0
    %s58 = sadd.s32 %s57, 1
    %s59 = scalar_select %p56, %s57, %s58
    %p62 = pneg %p56
    %p63 = scmp.eq.s32.totalorder %s21, 1
    %p64 = por %p62, %p63
    %p65 = scmp.ne.s32.totalorder %s57, %s60
    %p66 = scmp.eq.s32.totalorder %s21, 0
    %p67 = por %p65, %p66
    %p68 = scmp.ne.s32.totalorder %s57, %s60
    %p69 = scmp.eq.s32.totalorder %s26, 1
    %p70 = por %p68, %p69
    %p71 = scmp.ne.s32.totalorder %s60, %s61
    %p72 = scmp.eq.s32.totalorder %s26, 0
    %p73 = por %p71, %p72
    %p74 = scmp.ne.s32.totalorder %s60, %s61
    %p75 = scmp.eq.s32.totalorder %s27, 1
    %p76 = por %p74, %p75
    %p78 = scmp.ne.s32.totalorder %s61, %s77
    %p79 = scmp.eq.s32.totalorder %s27, 0
    %p80 = por %p78, %p79
    %s81 = ssub.s32 %s21, %s28
    %p82 = scmp.eq.s32.totalorder %s81, 0
    %s84 = sadd.s32 %s83, 1
    %s85 = scalar_select %p82, %s83, %s84
    %p88 = pneg %p82
    %p89 = scmp.eq.s32.totalorder %s21, 1
    %p90 = por %p88, %p89
    %p91 = scmp.ne.s32.totalorder %s83, %s86
    %p92 = scmp.eq.s32.totalorder %s21, 0
    %p93 = por %p91, %p92
    %p94 = scmp.ne.s32.totalorder %s83, %s86
    %p95 = scmp.eq.s32.totalorder %s26, 1
    %p96 = por %p94, %p95
    %p97 = scmp.ne.s32.totalorder %s86, %s87
    %p98 = scmp.eq.s32.totalorder %s26, 0
    %p99 = por %p97, %p98
    %p100 = scmp.ne.s32.totalorder %s86, %s87
    %p101 = scmp.eq.s32.totalorder %s27, 1
    %p102 = por %p100, %p101
    %p104 = scmp.ne.s32.totalorder %s87, %s103
    %p105 = scmp.eq.s32.totalorder %s27, 0
    %p106 = por %p104, %p105
    %s108 = sadd.s32 %s107, 1
    %p111 = scmp.eq.s32.totalorder %s21, 1
    %p112 = scmp.ne.s32.totalorder %s107, %s109
    %p113 = scmp.eq.s32.totalorder %s21, 0
    %p114 = por %p112, %p113
    %p115 = scmp.ne.s32.totalorder %s107, %s109
    %p116 = scmp.eq.s32.totalorder %s26, 1
    %p117 = por %p115, %p116
    %p118 = scmp.ne.s32.totalorder %s109, %s110
    %p119 = scmp.eq.s32.totalorder %s26, 0
    %p120 = por %p118, %p119
    %p121 = scmp.ne.s32.totalorder %s109, %s110
    %p122 = scmp.eq.s32.totalorder %s27, 1
    %p123 = por %p121, %p122
    %p125 = scmp.ne.s32.totalorder %s110, %s124
    %p126 = scmp.eq.s32.totalorder %s27, 0
    %p127 = por %p125, %p126
    %s129 = sadd.s32 %s128, 1
    %p132 = scmp.eq.s32.totalorder %s21, 1
    %p133 = scmp.ne.s32.totalorder %s128, %s130
    %p134 = scmp.eq.s32.totalorder %s21, 0
    %p135 = por %p133, %p134
    %p136 = scmp.ne.s32.totalorder %s128, %s130
    %p137 = scmp.eq.s32.totalorder %s26, 1
    %p138 = por %p136, %p137
    %p139 = scmp.ne.s32.totalorder %s130, %s131
    %p140 = scmp.eq.s32.totalorder %s26, 0
    %p141 = por %p139, %p140
    %p142 = scmp.ne.s32.totalorder %s130, %s131
    %p143 = scmp.eq.s32.totalorder %s27, 1
    %p144 = por %p142, %p143
    %p146 = scmp.ne.s32.totalorder %s131, %s145
    %p147 = scmp.eq.s32.totalorder %s27, 0
    %p148 = por %p146, %p147
    %s150 = sadd.s32 %s149, 1
    %p153 = scmp.eq.s32.totalorder %s21, 1
    %p154 = scmp.ne.s32.totalorder %s149, %s151
    %p155 = scmp.eq.s32.totalorder %s21, 0
    %p156 = por %p154, %p155
    %p157 = scmp.ne.s32.totalorder %s149, %s151
    %p158 = scmp.eq.s32.totalorder %s26, 1
    %p159 = por %p157, %p158
    %p160 = scmp.ne.s32.totalorder %s151, %s152
    %p161 = scmp.eq.s32.totalorder %s26, 0
    %p162 = por %p160, %p161
    %p163 = scmp.ne.s32.totalorder %s151, %s152
    %p164 = scmp.eq.s32.totalorder %s27, 1
    %p165 = por %p163, %p164
    %p167 = scmp.ne.s32.totalorder %s152, %s166
    %p168 = scmp.eq.s32.totalorder %s27, 0
    %p169 = por %p167, %p168
    %s171 = sadd.s32 %s170, 1
    %p174 = scmp.eq.s32.totalorder %s21, 1
    %p175 = scmp.ne.s32.totalorder %s170, %s172
    %p176 = scmp.eq.s32.totalorder %s21, 0
    %p177 = por %p175, %p176
    %p178 = scmp.ne.s32.totalorder %s170, %s172
    %p179 = scmp.eq.s32.totalorder %s26, 1
    %p180 = por %p178, %p179
    %p181 = scmp.ne.s32.totalorder %s172, %s173
    %p182 = scmp.eq.s32.totalorder %s26, 0
    %p183 = por %p181, %p182
    %p184 = scmp.ne.s32.totalorder %s172, %s173
    %p185 = scmp.eq.s32.totalorder %s27, 1
    %p186 = por %p184, %p185
    %p188 = scmp.ne.s32.totalorder %s173, %s187
    %p189 = scmp.eq.s32.totalorder %s27, 0
    %p190 = por %p188, %p189
    %s192 = sadd.s32 %s191, 1
    %p195 = scmp.eq.s32.totalorder %s21, 1
    %p196 = scmp.ne.s32.totalorder %s191, %s193
    %p197 = scmp.eq.s32.totalorder %s21, 0
    %p198 = por %p196, %p197
    %p199 = scmp.ne.s32.totalorder %s191, %s193
    %p200 = scmp.eq.s32.totalorder %s26, 1
    %p201 = por %p199, %p200
    %p202 = scmp.ne.s32.totalorder %s193, %s194
    %p203 = scmp.eq.s32.totalorder %s26, 0
    %p204 = por %p202, %p203
    %p205 = scmp.ne.s32.totalorder %s193, %s194
    %p206 = scmp.eq.s32.totalorder %s27, 1
    %p207 = por %p205, %p206
    %p209 = scmp.ne.s32.totalorder %s194, %s208
    %p210 = scmp.eq.s32.totalorder %s27, 0
    %p211 = por %p209, %p210
    %s213 = sadd.s32 %s212, 1
    %p216 = scmp.eq.s32.totalorder %s21, 1
    %p217 = scmp.ne.s32.totalorder %s212, %s214
    %p218 = scmp.eq.s32.totalorder %s21, 0
    %p219 = por %p217, %p218
    %p220 = scmp.ne.s32.totalorder %s212, %s214
    %p221 = scmp.eq.s32.totalorder %s26, 1
    %p222 = por %p220, %p221
    %p223 = scmp.ne.s32.totalorder %s214, %s215
    %p224 = scmp.eq.s32.totalorder %s26, 0
    %p225 = por %p223, %p224
    %p226 = scmp.ne.s32.totalorder %s214, %s215
    %p227 = scmp.eq.s32.totalorder %s27, 1
    %p228 = por %p226, %p227
    %p230 = scmp.ne.s32.totalorder %s215, %s229
    %p231 = scmp.eq.s32.totalorder %s27, 0
    %p232 = por %p230, %p231
    %s234 = sadd.s32 %s233, 1
    %p237 = scmp.eq.s32.totalorder %s21, 1
    %p238 = scmp.ne.s32.totalorder %s233, %s235
    %p239 = scmp.eq.s32.totalorder %s21, 0
    %p240 = por %p238, %p239
    %p241 = scmp.ne.s32.totalorder %s233, %s235
    %p242 = scmp.eq.s32.totalorder %s26, 1
    %p243 = por %p241, %p242
    %p244 = scmp.ne.s32.totalorder %s235, %s236
    %p245 = scmp.eq.s32.totalorder %s26, 0
    %p246 = por %p244, %p245
    %p247 = scmp.ne.s32.totalorder %s235, %s236
    %p248 = scmp.eq.s32.totalorder %s27, 1
    %p249 = por %p247, %p248
    %p251 = scmp.ne.s32.totalorder %s236, %s250
    %p252 = scmp.eq.s32.totalorder %s27, 0
    %p253 = por %p251, %p252
    %s255 = sadd.s32 %s254, 1
    %p258 = scmp.eq.s32.totalorder %s21, 1
    %p259 = scmp.ne.s32.totalorder %s254, %s256
    %p260 = scmp.eq.s32.totalorder %s21, 0
    %p261 = por %p259, %p260
    %p262 = scmp.ne.s32.totalorder %s254, %s256
    %p263 = scmp.eq.s32.totalorder %s26, 1
    %p264 = por %p262, %p263
    %p265 = scmp.ne.s32.totalorder %s256, %s257
    %p266 = scmp.eq.s32.totalorder %s26, 0
    %p267 = por %p265, %p266
    %p268 = scmp.ne.s32.totalorder %s256, %s257
    %p269 = scmp.eq.s32.totalorder %s27, 1
    %p270 = por %p268, %p269
    %p272 = scmp.ne.s32.totalorder %s257, %s271
    %p273 = scmp.eq.s32.totalorder %s27, 0
    %p274 = por %p272, %p273
    %s276 = sadd.s32 %s275, 1
    %p279 = scmp.eq.s32.totalorder %s21, 1
    %p280 = scmp.ne.s32.totalorder %s275, %s277
    %p281 = scmp.eq.s32.totalorder %s21, 0
    %p282 = por %p280, %p281
    %p283 = scmp.ne.s32.totalorder %s275, %s277
    %p284 = scmp.eq.s32.totalorder %s26, 1
    %p285 = por %p283, %p284
    %p286 = scmp.ne.s32.totalorder %s277, %s278
    %p287 = scmp.eq.s32.totalorder %s26, 0
    %p288 = por %p286, %p287
    %p289 = scmp.ne.s32.totalorder %s277, %s278
    %p290 = scmp.eq.s32.totalorder %s27, 1
    %p291 = por %p289, %p290
    %p293 = scmp.ne.s32.totalorder %s278, %s292
    %p294 = scmp.eq.s32.totalorder %s27, 0
    %p295 = por %p293, %p294
    %s297 = sadd.s32 %s296, 1
    %p300 = scmp.eq.s32.totalorder %s21, 1
    %p301 = scmp.ne.s32.totalorder %s296, %s298
    %p302 = scmp.eq.s32.totalorder %s21, 0
    %p303 = por %p301, %p302
    %p304 = scmp.ne.s32.totalorder %s296, %s298
    %p305 = scmp.eq.s32.totalorder %s26, 1
    %p306 = por %p304, %p305
    %p307 = scmp.ne.s32.totalorder %s298, %s299
    %p308 = scmp.eq.s32.totalorder %s26, 0
    %p309 = por %p307, %p308
    %p310 = scmp.ne.s32.totalorder %s298, %s299
    %p311 = scmp.eq.s32.totalorder %s27, 1
    %p312 = por %p310, %p311
    %p314 = scmp.ne.s32.totalorder %s299, %s313
    %p315 = scmp.eq.s32.totalorder %s27, 0
    %p316 = por %p314, %p315
    %s318 = sadd.s32 %s317, 1
    %p321 = scmp.eq.s32.totalorder %s21, 1
    %p322 = scmp.ne.s32.totalorder %s317, %s319
    %p323 = scmp.eq.s32.totalorder %s21, 0
    %p324 = por %p322, %p323
    %p325 = scmp.ne.s32.totalorder %s317, %s319
    %p326 = scmp.eq.s32.totalorder %s26, 1
    %p327 = por %p325, %p326
    %p328 = scmp.ne.s32.totalorder %s319, %s320
    %p329 = scmp.eq.s32.totalorder %s26, 0
    %p330 = por %p328, %p329
    %p331 = scmp.ne.s32.totalorder %s319, %s320
    %p332 = scmp.eq.s32.totalorder %s27, 1
    %p333 = por %p331, %p332
    %p335 = scmp.ne.s32.totalorder %s320, %s334
    %p336 = scmp.eq.s32.totalorder %s27, 0
    %p337 = por %p335, %p336
    %s339 = sadd.s32 %s338, 1
    %p342 = scmp.eq.s32.totalorder %s21, 1
    %p343 = scmp.ne.s32.totalorder %s338, %s340
    %p344 = scmp.eq.s32.totalorder %s21, 0
    %p345 = por %p343, %p344
    %p346 = scmp.ne.s32.totalorder %s338, %s340
    %p347 = scmp.eq.s32.totalorder %s26, 1
    %p348 = por %p346, %p347
    %p349 = scmp.ne.s32.totalorder %s340, %s341
    %p350 = scmp.eq.s32.totalorder %s26, 0
    %p351 = por %p349, %p350
    %p352 = scmp.ne.s32.totalorder %s340, %s341
    %p353 = scmp.eq.s32.totalorder %s27, 1
    %p354 = por %p352, %p353
    %p356 = scmp.ne.s32.totalorder %s341, %s355
    %p357 = scmp.eq.s32.totalorder %s27, 0
    %p358 = por %p356, %p357
    %s359 = ssub.s32 %s21, %s28
    %p360 = scmp.eq.s32.totalorder %s359, 0
    %s362 = sadd.s32 %s361, 1
    %s363 = scalar_select %p360, %s361, %s362
    %p366 = pneg %p360
    %p367 = scmp.eq.s32.totalorder %s21, 1
    %p368 = por %p366, %p367
    %p369 = scmp.ne.s32.totalorder %s361, %s364
    %p370 = scmp.eq.s32.totalorder %s21, 0
    %p371 = por %p369, %p370
    %p372 = scmp.ne.s32.totalorder %s361, %s364
    %p373 = scmp.eq.s32.totalorder %s26, 1
    %p374 = por %p372, %p373
    %p375 = scmp.ne.s32.totalorder %s364, %s365
    %p376 = scmp.eq.s32.totalorder %s26, 0
    %p377 = por %p375, %p376
    %p378 = scmp.ne.s32.totalorder %s364, %s365
    %p379 = scmp.eq.s32.totalorder %s27, 1
    %p380 = por %p378, %p379
    %p382 = scmp.ne.s32.totalorder %s365, %s381
    %p383 = scmp.eq.s32.totalorder %s27, 0
    %p384 = por %p382, %p383
    %p385 = scmp.le.s32.totalorder 1, %s21
    %p386 = scmp.lt.s32.totalorder %s21, 3
    %p387 = pnand %p385, %p386
    %p388 = pneg %p387
    // Predicated region
    $region9: #{_lambda_.10} parent=5 // pred_check
      _
    $region10: #{_lambda_.10} parent=5 // pred_check_branch
      %390 = sbr.rel (%p387) target = $region12
    $region11: #{_lambda_.10} parent=5 // pred_region
      %s391 = ssub.s32 %s21, 1
      // Predicated region
      $region13: #{_lambda_.10} parent=11 // pred_check
        %p392 = pneg %p120
      $region14: #{_lambda_.10} parent=11 // pred_check_branch
        %394 = sbr.rel (%p392) target = $region16
      $region15: #{_lambda_.10} parent=11 // pred_region
        _
      $region16: #{_lambda_.10} parent=11 // pred_fallthru
        _
      // Predicated region
      $region17: #{_lambda_.10} parent=11 // pred_check
        %p395 = pneg %p141
      $region18: #{_lambda_.10} parent=11 // pred_check_branch
        %397 = sbr.rel (%p395) target = $region20
      $region19: #{_lambda_.10} parent=11 // pred_region
        _
      $region20: #{_lambda_.10} parent=11 // pred_fallthru
        _
      // Predicated region
      $region21: #{_lambda_.10} parent=11 // pred_check
        %p398 = pneg %p162
      $region22: #{_lambda_.10} parent=11 // pred_check_branch
        %400 = sbr.rel (%p398) target = $region24
      $region23: #{_lambda_.10} parent=11 // pred_region
        _
      $region24: #{_lambda_.10} parent=11 // pred_fallthru
        _
      // Predicated region
      $region25: #{_lambda_.10} parent=11 // pred_check
        %p401 = pneg %p183
      $region26: #{_lambda_.10} parent=11 // pred_check_branch
        %403 = sbr.rel (%p401) target = $region28
      $region27: #{_lambda_.10} parent=11 // pred_region
        _
      $region28: #{_lambda_.10} parent=11 // pred_fallthru
        _
      // Predicated region
      $region29: #{_lambda_.10} parent=11 // pred_check
        %p404 = pneg %p204
      $region30: #{_lambda_.10} parent=11 // pred_check_branch
        %406 = sbr.rel (%p404) target = $region32
      $region31: #{_lambda_.10} parent=11 // pred_region
        _
      $region32: #{_lambda_.10} parent=11 // pred_fallthru
        _
      // Predicated region
      $region33: #{_lambda_.10} parent=11 // pred_check
        %p407 = pneg %p225
      $region34: #{_lambda_.10} parent=11 // pred_check_branch
        %409 = sbr.rel (%p407) target = $region36
      $region35: #{_lambda_.10} parent=11 // pred_region
        _
      $region36: #{_lambda_.10} parent=11 // pred_fallthru
        _
      // Predicated region
      $region37: #{_lambda_.10} parent=11 // pred_check
        %p410 = pneg %p246
      $region38: #{_lambda_.10} parent=11 // pred_check_branch
        %412 = sbr.rel (%p410) target = $region40
      $region39: #{_lambda_.10} parent=11 // pred_region
        _
      $region40: #{_lambda_.10} parent=11 // pred_fallthru
        _
      // Predicated region
      $region41: #{_lambda_.10} parent=11 // pred_check
        %p413 = pneg %p267
      $region42: #{_lambda_.10} parent=11 // pred_check_branch
        %415 = sbr.rel (%p413) target = $region44
      $region43: #{_lambda_.10} parent=11 // pred_region
        _
      $region44: #{_lambda_.10} parent=11 // pred_fallthru
        _
      // Predicated region
      $region45: #{_lambda_.10} parent=11 // pred_check
        %p416 = pneg %p288
      $region46: #{_lambda_.10} parent=11 // pred_check_branch
        %418 = sbr.rel (%p416) target = $region48
      $region47: #{_lambda_.10} parent=11 // pred_region
        _
      $region48: #{_lambda_.10} parent=11 // pred_fallthru
        _
      // Predicated region
      $region49: #{_lambda_.10} parent=11 // pred_check
        %p419 = pneg %p309
      $region50: #{_lambda_.10} parent=11 // pred_check_branch
        %421 = sbr.rel (%p419) target = $region52
      $region51: #{_lambda_.10} parent=11 // pred_region
        _
      $region52: #{_lambda_.10} parent=11 // pred_fallthru
        _
      // Predicated region
      $region53: #{_lambda_.10} parent=11 // pred_check
        %p422 = pneg %p330
      $region54: #{_lambda_.10} parent=11 // pred_check_branch
        %424 = sbr.rel (%p422) target = $region56
      $region55: #{_lambda_.10} parent=11 // pred_region
        _
      $region56: #{_lambda_.10} parent=11 // pred_fallthru
        _
      // Predicated region
      $region57: #{_lambda_.10} parent=11 // pred_check
        %p425 = pneg %p351
      $region58: #{_lambda_.10} parent=11 // pred_check_branch
        %427 = sbr.rel (%p425) target = $region60
      $region59: #{_lambda_.10} parent=11 // pred_region
        _
      $region60: #{_lambda_.10} parent=11 // pred_fallthru
        _
    $region12: #{_lambda_.10} parent=5 // pred_fallthru
      _
    %p428 = scmp.lt.s32.totalorder %s21, 2
    // Predicated region
    $region61: #{_lambda_.10} parent=5 // pred_check
      %p429 = pneg %p428
    $region62: #{_lambda_.10} parent=5 // pred_check_branch
      %431 = sbr.rel (%p429) target = $region64
    $region63: #{_lambda_.10} parent=5 // pred_region
      // Predicated region
      $region65: #{_lambda_.10} parent=63 // pred_check
        %p432 = pneg %p41
      $region66: #{_lambda_.10} parent=63 // pred_check_branch
        %434 = sbr.rel (%p432) target = $region68
      $region67: #{_lambda_.10} parent=63 // pred_region
        %p435 = scmp.lt.s32.totalorder %s21, 1
        %s436 = scalar_select %p435, %s21, 1
        %s437 = smul.addr %s436, 2
        %s438 = smul.addr %s437, 8
        %s439 = scalar_lea.vmem %s0, %s438
      $region68: #{_lambda_.10} parent=63 // pred_fallthru
        _
      // Predicated region
      $region69: #{_lambda_.10} parent=63 // pred_check
        %p440 = pneg %p67
      $region70: #{_lambda_.10} parent=63 // pred_check_branch
        %442 = sbr.rel (%p440) target = $region72
      $region71: #{_lambda_.10} parent=63 // pred_region
        %p443 = scmp.lt.s32.totalorder %s21, 1
        %s444 = scalar_select %p443, %s21, 1
        %s445 = smul.addr %s444, 2
        %s446 = smul.addr %s445, 8
        %s447 = scalar_lea.vmem %s1, %s446
      $region72: #{_lambda_.10} parent=63 // pred_fallthru
        _
      // Predicated region
      $region73: #{_lambda_.10} parent=63 // pred_check
        %p448 = pneg %p93
      $region74: #{_lambda_.10} parent=63 // pred_check_branch
        %450 = sbr.rel (%p448) target = $region76
      $region75: #{_lambda_.10} parent=63 // pred_region
        %p451 = scmp.lt.s32.totalorder %s21, 1
        %s452 = scalar_select %p451, %s21, 1
        %s453 = scalar_lea.vmem %s2, %s452
      $region76: #{_lambda_.10} parent=63 // pred_fallthru
        _
    $region64: #{_lambda_.10} parent=5 // pred_fallthru
      _
    %p454 = scmp.le.s32.totalorder 1, %s21
    %p455 = scmp.lt.s32.totalorder %s21, 3
    %p456 = pnand %p454, %p455
    %p457 = pneg %p456
    // Predicated region
    $region77: #{_lambda_.10} parent=5 // pred_check
      _
    $region78: #{_lambda_.10} parent=5 // pred_check_branch
      %459 = sbr.rel (%p456) target = $region80
    $region79: #{_lambda_.10} parent=5 // pred_region
      %s460 = ssub.s32 %s21, 1
      %p461 = scmp.lt.s32.totalorder %s26, 1
      %s462 = scalar_select %p461, %s26, 1
      %s463 = smul.addr %s462, 2
      %s464 = smul.addr %s463, 8
      %s465 = scalar_lea.vmem %s0, %s464
      %p466 = pneg %p47
      %p467 = pneg %p44
      %p468 = scmp.lt.s32.totalorder %s26, 1
      %s469 = scalar_select %p468, %s26, 1
      %s470 = smul.addr %s469, 2
      %s471 = smul.addr %s470, 8
      %s472 = scalar_lea.vmem %s1, %s471
      %p473 = pneg %p73
      %p474 = pneg %p70
      %p475 = scmp.lt.s32.totalorder %s26, 1
      %s476 = scalar_select %p475, %s26, 1
      %s477 = scalar_lea.vmem %s2, %s476
      %p478 = pneg %p99
      %p479 = pneg %p96
      %p480 = pneg %p120
      %p481 = pneg %p117
      %p482 = pneg %p141
      %p483 = pneg %p138
      %p484 = pneg %p162
      %p485 = pneg %p159
      %p486 = pneg %p183
      %p487 = pneg %p180
      %p488 = pneg %p204
      %p489 = pneg %p201
      %p490 = pneg %p225
      %p491 = pneg %p222
      %p492 = pneg %p246
      %p493 = pneg %p243
      %p494 = pneg %p267
      %p495 = pneg %p264
      %p496 = pneg %p288
      %p497 = pneg %p285
      %p498 = pneg %p309
      %p499 = pneg %p306
      %p500 = pneg %p330
      %p501 = pneg %p327
      %p502 = pneg %p351
      %p503 = pneg %p348
      %p504 = pneg %p377
      %p505 = pneg %p374
      %p506 = scmp.lt.s32.totalorder %s26, 1
      %s507 = scalar_select %p506, %s26, 1
      %s508 = smul.addr %s507, 2
      %s509 = smul.addr %s508, 8
      %s510 = scalar_lea.vmem %s15, %s509
      %p511 = scmp.lt.s32.totalorder %s26, 1
      %s512 = scalar_select %p511, %s26, 1
      %s513 = smul.addr %s512, 2
      %s514 = smul.addr %s513, 8
      %s515 = scalar_lea.vmem %s0, %s514
      %p516 = scmp.lt.s32.totalorder %s26, 1
      %s517 = scalar_select %p516, %s26, 1
      %s518 = smul.addr %s517, 2
      %s519 = smul.addr %s518, 8
      %s520 = scalar_lea.vmem %s1, %s519
      %p521 = scmp.lt.s32.totalorder %s26, 1
      %s522 = scalar_select %p521, %s26, 1
      %s523 = scalar_lea.vmem %s2, %s522
      %p524 = scmp.lt.s32.totalorder %s26, 1
      %s525 = scalar_select %p524, %s26, 1
      %s526 = smul.addr %s525, 2
      %s527 = smul.addr %s526, 8
      %s528 = scalar_lea.vmem %s15, %s527
      %v530 = vld [vmem:[%s515] sm:$0xff]
      %v531 = vld [vmem:[%s515 + $0x8] sm:$0xff]
      %v532 = vld [vmem:[%s520] sm:$0xff]
      %v533 = vld [vmem:[%s520 + $0x8] sm:$0xff]
      %v534 = vld [vmem:[%s523] sm:$0x1]
      %v535 = vpack.c.bf16 %v531, %v530
      %v536 = vld [vmem:[%s3] sm:$0xf]
      %v537 = vld [vmem:[%s3 + $0x4] sm:$0xf]
      %v538 = vld [vmem:[%s3 + $0x8] sm:$0xf]
      %v539 = vld [vmem:[%s3 + $0xc] sm:$0xf]
      %v540 = vld [vmem:[%s4] sm:$0x1]
      %v542 = vlaneseq
      %v543 = vshrl.u32 %v542, 7
      %v544 = vsub.s32 0, %v543
      %v545 = vrot.slane %v540, %v544
      %v551 = vunpack.c.l.b16 %v536
      %v552 = vunpack.c.l.b16 %v537
      %v553 = vunpack.c.l.b16 %v538
      %v554 = vunpack.c.l.b16 %v539
      %v555 = vpack.c.b16 %v552, %v551
      %v556 = vpack.c.b16 %v554, %v553
      %vm559 = vcmask 261120
      %v561 = vsel %vm559, %v535, 0
      %563 = vmatprep.subr.bf16.mxu0 0
      %564 = vmatpush1.bf16.msra.mxu0 %v555
      %565 = vmatprep.subr.bf16.mxu0 0
      %566 = vmatpush1.bf16.msra.mxu0 %v556
      %567 = vmatprep.subr.bf16.mxu0 0
      %568 = vmatpush1.bf16.msra.mxu0 0
      %569 = vmatprep.subr.bf16.mxu0 0
      %570 = vmatpush1.bf16.msra.mxu0 0
      %571 = vmatprep.subr.bf16.mxu0 0
      %572 = vmatpush1.bf16.msra.mxu0 0
      %573 = vmatprep.subr.bf16.mxu0 0
      %574 = vmatpush1.bf16.msra.mxu0 0
      %575 = vmatprep.subr.bf16.mxu0 0
      %576 = vmatpush1.bf16.msra.mxu0 0
      %577 = vmatprep.subr.bf16.mxu0 0
      %578 = vmatpush1.bf16.msra.mxu0 0
      %579 = vmatprep.subr.bf16.mxu0 0
      %580 = vmatpush1.bf16.msra.mxu0 0
      %581 = vmatprep.subr.bf16.mxu0 0
      %582 = vmatpush1.bf16.msra.mxu0 0
      %583 = vmatprep.subr.bf16.mxu0 0
      %584 = vmatpush1.bf16.msra.mxu0 0
      %585 = vmatprep.subr.bf16.mxu0 0
      %586 = vmatpush1.bf16.msra.mxu0 0
      %587 = vmatprep.subr.bf16.mxu0 0
      %588 = vmatpush1.bf16.msra.mxu0 0
      %589 = vmatprep.subr.bf16.mxu0 0
      %590 = vmatpush1.bf16.msra.mxu0 0
      %591 = vmatprep.subr.bf16.mxu0 0
      %592 = vmatpush1.bf16.msra.mxu0 0
      %593 = vmatprep.subr.bf16.mxu0 0
      %594 = vmatpush1.bf16.msra.mxu0 0
      %595 = vmatprep.mubr.bf16.mxu0 0
      %596 = vmatmul.mubr.bf16.gmra.mrb[0].mxu0 %v561
      %v597 = vpop.f32.mrb[0].mxu0
      %v598 = vadd.f32 %v545, %v597
      %v599 = vpop.f32.mrb[0].mxu0
      %v600 = vpop.f32.mrb[0].mxu0
      %v601 = vadd.f32 %v545, %v600
      %v602 = vpop.f32.mrb[0].mxu0
      %603 = vdwg.mxu0
      %v604 = vpack.c.bf16 %v601, %v598
      %606 = vrot.lane.b32.xlu0 %v604, 96
      %v607 = vpop.permute.xlu0 %606
      %vm608 = vcmask 130048
      %v610 = vsel %vm608, %v604, 0
      %v613 = vsel %vm608, %v607, 0
      %615 = vmatprep.subr.bf16.mxu0 0
      %616 = vmatpush1.bf16.xpose.msra.mxu0 %v613
      %617 = vmatprep.subr.bf16.mxu0 0
      %618 = vmatpush1.bf16.xpose.msra.mxu0 0
      %619 = vmatprep.subr.bf16.mxu0 0
      %620 = vmatpush1.bf16.xpose.msra.mxu0 0
      %621 = vmatprep.subr.bf16.mxu0 0
      %622 = vmatpush1.bf16.xpose.msra.mxu0 0
      %623 = vmatprep.subr.bf16.mxu0 0
      %624 = vmatpush1.bf16.xpose.msra.mxu0 0
      %625 = vmatprep.subr.bf16.mxu0 0
      %626 = vmatpush1.bf16.xpose.msra.mxu0 0
      %627 = vmatprep.subr.bf16.mxu0 0
      %628 = vmatpush1.bf16.xpose.msra.mxu0 0
      %629 = vmatprep.subr.bf16.mxu0 0
      %630 = vmatpush1.bf16.xpose.msra.mxu0 0
      %631 = vmatprep.subr.bf16.mxu0 0
      %632 = vmatpush1.bf16.xpose.msra.mxu0 0
      %633 = vmatprep.subr.bf16.mxu0 0
      %634 = vmatpush1.bf16.xpose.msra.mxu0 0
      %635 = vmatprep.subr.bf16.mxu0 0
      %636 = vmatpush1.bf16.xpose.msra.mxu0 0
      %637 = vmatprep.subr.bf16.mxu0 0
      %638 = vmatpush1.bf16.xpose.msra.mxu0 0
      %639 = vmatprep.subr.bf16.mxu0 0
      %640 = vmatpush1.bf16.xpose.msra.mxu0 0
      %641 = vmatprep.subr.bf16.mxu0 0
      %642 = vmatpush1.bf16.xpose.msra.mxu0 0
      %643 = vmatprep.subr.bf16.mxu0 0
      %644 = vmatpush1.bf16.xpose.msra.mxu0 0
      %645 = vmatprep.subr.bf16.mxu0 0
      %646 = vmatpush1.bf16.xpose.msra.mxu0 0
      %647 = vmatprep.mubr.bf16.mxu0 0
      %648 = vmatmul.mubr.bf16.gmra.mrb[0].mxu0 %v610
      %v649 = vpop.f32.mrb[0].mxu0
      %v650 = vadd.f32 0.0, %v649
      %v651 = vpop.f32.mrb[0].mxu0
      %v652 = vpop.f32.mrb[0].mxu0
      %v653 = vadd.f32 0.0, %v652
      %v654 = vpop.f32.mrb[0].mxu0
      %655 = vdwg.mxu0
      %v656 = vmul.f32 %v650, 0.25
      %v657 = vmul.f32 %v653, 0.25
      %v659 = vlaneseq
      %v660 = vshrl.u32 %v659, 7
      %v661 = vsub.s32 0, %v660
      %v662 = vrot.slane %v534, %v661
      %v664 = vadd.f32 %v656, %v662
      %v665 = vadd.f32 %v657, %v662
      %v666 = vsel %vm608, %v664, -inf
      %667 = vmax.xlane.f32.xlu0 %v666
      %v668 = vpop.xlane.xlu0 %667
      %v669 = vsel %vm608, %v665, -inf
      %670 = vmax.xlane.f32.xlu0 %v669
      %v671 = vpop.xlane.xlu0 %670
      %v672 = vsub.f32 %v664, %v668
      %v673 = vsub.f32 %v665, %v671
      %v674 = vmul.f32 %v672, 1.442695
      %v675 = vpow.pop %v674
      %v676 = vmul.f32 %v673, 1.442695
      %v677 = vpow.pop %v676
      %v678 = vsel %vm608, %v675, 0.0
      %679 = vadd.xlane.f32.xlu0 %v678
      %v680 = vpop.xlane.xlu0 %679
      %v681 = vsel %vm608, %v677, 0.0
      %682 = vadd.xlane.f32.xlu0 %v681
      %v683 = vpop.xlane.xlu0 %682
      %v684 = vrcp.pop %v680
      %v685 = vrcp.pop %v683
      %v686 = vmul.f32 %v675, %v684
      %v687 = vmul.f32 %v677, %v685
      %v688 = vpack.c.bf16 %v687, %v686
      %689 = vrot.lane.b32.xlu0 %v604, 64
      %v690 = vpop.permute.xlu0 %689
      %v693 = vsel %vm608, %v688, 0
      %695 = vmatprep.subr.bf16.mxu0 0
      %696 = vmatpush1.bf16.msra.mxu0 %v690
      %697 = vmatprep.subr.bf16.mxu0 0
      %698 = vmatpush1.bf16.msra.mxu0 0
      %699 = vmatprep.subr.bf16.mxu0 0
      %700 = vmatpush1.bf16.msra.mxu0 0
      %701 = vmatprep.subr.bf16.mxu0 0
      %702 = vmatpush1.bf16.msra.mxu0 0
      %703 = vmatprep.subr.bf16.mxu0 0
      %704 = vmatpush1.bf16.msra.mxu0 0
      %705 = vmatprep.subr.bf16.mxu0 0
      %706 = vmatpush1.bf16.msra.mxu0 0
      %707 = vmatprep.subr.bf16.mxu0 0
      %708 = vmatpush1.bf16.msra.mxu0 0
      %709 = vmatprep.subr.bf16.mxu0 0
      %710 = vmatpush1.bf16.msra.mxu0 0
      %711 = vmatprep.subr.bf16.mxu0 0
      %712 = vmatpush1.bf16.msra.mxu0 0
      %713 = vmatprep.subr.bf16.mxu0 0
      %714 = vmatpush1.bf16.msra.mxu0 0
      %715 = vmatprep.subr.bf16.mxu0 0
      %716 = vmatpush1.bf16.msra.mxu0 0
      %717 = vmatprep.subr.bf16.mxu0 0
      %718 = vmatpush1.bf16.msra.mxu0 0
      %719 = vmatprep.subr.bf16.mxu0 0
      %720 = vmatpush1.bf16.msra.mxu0 0
      %721 = vmatprep.subr.bf16.mxu0 0
      %722 = vmatpush1.bf16.msra.mxu0 0
      %723 = vmatprep.subr.bf16.mxu0 0
      %724 = vmatpush1.bf16.msra.mxu0 0
      %725 = vmatprep.subr.bf16.mxu0 0
      %726 = vmatpush1.bf16.msra.mxu0 0
      %727 = vmatprep.mubr.bf16.mxu0 0
      %728 = vmatmul.mubr.bf16.gmra.mrb[0].mxu0 %v693
      %v729 = vpop.f32.mrb[0].mxu0
      %v730 = vadd.f32 0.0, %v729
      %v731 = vpop.f32.mrb[0].mxu0
      %v732 = vpop.f32.mrb[0].mxu0
      %v733 = vadd.f32 0.0, %v732
      %v734 = vpop.f32.mrb[0].mxu0
      %735 = vdwg.mxu0
      %v736 = vpack.c.bf16 %v733, %v730
      %737 = vst.msk [vmem:[#allocation2] sm:$0xff] %vm608, %v736
      %738 = vrot.lane.b32.xlu0 %v604, 112
      %v739 = vpop.permute.xlu0 %738
      %740 = vrot.lane.b32.xlu0 %v604, 80
      %v741 = vpop.permute.xlu0 %740
      %v743 = vsel %vm608, %v739, 0
      %v746 = vsel %vm608, %v741, 0
      %748 = vmatprep.subr.bf16.mxu0 0
      %749 = vmatpush1.bf16.xpose.msra.mxu0 %v746
      %750 = vmatprep.subr.bf16.mxu0 0
      %751 = vmatpush1.bf16.xpose.msra.mxu0 0
      %752 = vmatprep.subr.bf16.mxu0 0
      %753 = vmatpush1.bf16.xpose.msra.mxu0 0
      %754 = vmatprep.subr.bf16.mxu0 0
      %755 = vmatpush1.bf16.xpose.msra.mxu0 0
      %756 = vmatprep.subr.bf16.mxu0 0
      %757 = vmatpush1.bf16.xpose.msra.mxu0 0
      %758 = vmatprep.subr.bf16.mxu0 0
      %759 = vmatpush1.bf16.xpose.msra.mxu0 0
      %760 = vmatprep.subr.bf16.mxu0 0
      %761 = vmatpush1.bf16.xpose.msra.mxu0 0
      %762 = vmatprep.subr.bf16.mxu0 0
      %763 = vmatpush1.bf16.xpose.msra.mxu0 0
      %764 = vmatprep.subr.bf16.mxu0 0
      %765 = vmatpush1.bf16.xpose.msra.mxu0 0
      %766 = vmatprep.subr.bf16.mxu0 0
      %767 = vmatpush1.bf16.xpose.msra.mxu0 0
      %768 = vmatprep.subr.bf16.mxu0 0
      %769 = vmatpush1.bf16.xpose.msra.mxu0 0
      %770 = vmatprep.subr.bf16.mxu0 0
      %771 = vmatpush1.bf16.xpose.msra.mxu0 0
      %772 = vmatprep.subr.bf16.mxu0 0
      %773 = vmatpush1.bf16.xpose.msra.mxu0 0
      %774 = vmatprep.subr.bf16.mxu0 0
      %775 = vmatpush1.bf16.xpose.msra.mxu0 0
      %776 = vmatprep.subr.bf16.mxu0 0
      %777 = vmatpush1.bf16.xpose.msra.mxu0 0
      %778 = vmatprep.subr.bf16.mxu0 0
      %779 = vmatpush1.bf16.xpose.msra.mxu0 0
      %780 = vmatprep.mubr.bf16.mxu0 0
      %781 = vmatmul.mubr.bf16.gmra.mrb[0].mxu0 %v743
      %v782 = vpop.f32.mrb[0].mxu0
      %v783 = vadd.f32 0.0, %v782
      %v784 = vpop.f32.mrb[0].mxu0
      %v785 = vpop.f32.mrb[0].mxu0
      %v786 = vadd.f32 0.0, %v785
      %v787 = vpop.f32.mrb[0].mxu0
      %788 = vdwg.mxu0
      %v789 = vmul.f32 %v783, 0.25
      %v790 = vmul.f32 %v786, 0.25
      %v791 = vadd.f32 %v789, %v662
      %v792 = vadd.f32 %v790, %v662
      %v793 = vsel %vm608, %v791, -inf
      %794 = vmax.xlane.f32.xlu0 %v793
      %v795 = vpop.xlane.xlu0 %794
      %v796 = vsel %vm608, %v792, -inf
      %797 = vmax.xlane.f32.xlu0 %v796
      %v798 = vpop.xlane.xlu0 %797
      %v799 = vsub.f32 %v791, %v795
      %v800 = vsub.f32 %v792, %v798
      %v801 = vmul.f32 %v799, 1.442695
      %v802 = vpow.pop %v801
      %v803 = vmul.f32 %v800, 1.442695
      %v804 = vpow.pop %v803
      %v805 = vsel %vm608, %v802, 0.0
      %806 = vadd.xlane.f32.xlu0 %v805
      %v807 = vpop.xlane.xlu0 %806
      %v808 = vsel %vm608, %v804, 0.0
      %809 = vadd.xlane.f32.xlu0 %v808
      %v810 = vpop.xlane.xlu0 %809
      %v811 = vrcp.pop %v807
      %v812 = vrcp.pop %v810
      %v813 = vmul.f32 %v802, %v811
      %v814 = vmul.f32 %v804, %v812
      %v815 = vpack.c.bf16 %v814, %v813
      %816 = vrot.lane.b32.xlu0 %v604, 48
      %v817 = vpop.permute.xlu0 %816
      %v820 = vsel %vm608, %v815, 0
      %822 = vmatprep.subr.bf16.mxu0 0
      %823 = vmatpush1.bf16.msra.mxu0 %v817
      %824 = vmatprep.subr.bf16.mxu0 0
      %825 = vmatpush1.bf16.msra.mxu0 0
      %826 = vmatprep.subr.bf16.mxu0 0
      %827 = vmatpush1.bf16.msra.mxu0 0
      %828 = vmatprep.subr.bf16.mxu0 0
      %829 = vmatpush1.bf16.msra.mxu0 0
      %830 = vmatprep.subr.bf16.mxu0 0
      %831 = vmatpush1.bf16.msra.mxu0 0
      %832 = vmatprep.subr.bf16.mxu0 0
      %833 = vmatpush1.bf16.msra.mxu0 0
      %834 = vmatprep.subr.bf16.mxu0 0
      %835 = vmatpush1.bf16.msra.mxu0 0
      %836 = vmatprep.subr.bf16.mxu0 0
      %837 = vmatpush1.bf16.msra.mxu0 0
      %838 = vmatprep.subr.bf16.mxu0 0
      %839 = vmatpush1.bf16.msra.mxu0 0
      %840 = vmatprep.subr.bf16.mxu0 0
      %841 = vmatpush1.bf16.msra.mxu0 0
      %842 = vmatprep.subr.bf16.mxu0 0
      %843 = vmatpush1.bf16.msra.mxu0 0
      %844 = vmatprep.subr.bf16.mxu0 0
      %845 = vmatpush1.bf16.msra.mxu0 0
      %846 = vmatprep.subr.bf16.mxu0 0
      %847 = vmatpush1.bf16.msra.mxu0 0
      %848 = vmatprep.subr.bf16.mxu0 0
      %849 = vmatpush1.bf16.msra.mxu0 0
      %850 = vmatprep.subr.bf16.mxu0 0
      %851 = vmatpush1.bf16.msra.mxu0 0
      %852 = vmatprep.subr.bf16.mxu0 0
      %853 = vmatpush1.bf16.msra.mxu0 0
      %854 = vmatprep.mubr.bf16.mxu0 0
      %855 = vmatmul.mubr.bf16.gmra.mrb[0].mxu0 %v820
      %v856 = vpop.f32.mrb[0].mxu0
      %v857 = vadd.f32 0.0, %v856
      %v858 = vpop.f32.mrb[0].mxu0
      %v859 = vpop.f32.mrb[0].mxu0
      %v860 = vadd.f32 0.0, %v859
      %v861 = vpop.f32.mrb[0].mxu0
      %862 = vdwg.mxu0
      %v863 = vpack.c.bf16 %v860, %v857
      %865 = vrot.lane.b32.xlu0 %v863, 16
      %v866 = vpop.permute.xlu0 %865
      %vm868 = vcmask 261248
      %869 = vst.msk [vmem:[#allocation2] sm:$0xff] %vm868, %v866
      %v870 = vld [vmem:[#allocation2] sm:$0xff]
      %v871 = vld [vmem:[%s5] sm:$0xf]
      %v872 = vld [vmem:[%s5 + $0x4] sm:$0xf]
      %v873 = vld [vmem:[%s5 + $0x8] sm:$0xf]
      %v874 = vld [vmem:[%s5 + $0xc] sm:$0xf]
      %v875 = vld [vmem:[%s6] sm:$0x1]
      %v877 = vlaneseq
      %v878 = vshrl.u32 %v877, 7
      %v879 = vsub.s32 0, %v878
      %v880 = vrot.slane %v875, %v879
      %v886 = vunpack.c.l.b16 %v871
      %v887 = vunpack.c.l.b16 %v872
      %v888 = vunpack.c.l.b16 %v873
      %v889 = vunpack.c.l.b16 %v874
      %v890 = vpack.c.b16 %v887, %v886
      %v891 = vpack.c.b16 %v889, %v888
      %v895 = vsel %vm559, %v870, 0
      %897 = vmatprep.subr.bf16.mxu0 0
      %898 = vmatpush1.bf16.msra.mxu0 %v890
      %899 = vmatprep.subr.bf16.mxu0 0
      %900 = vmatpush1.bf16.msra.mxu0 %v891
      %901 = vmatprep.subr.bf16.mxu0 0
      %902 = vmatpush1.bf16.msra.mxu0 0
      %903 = vmatprep.subr.bf16.mxu0 0
      %904 = vmatpush1.bf16.msra.mxu0 0
      %905 = vmatprep.subr.bf16.mxu0 0
      %906 = vmatpush1.bf16.msra.mxu0 0
      %907 = vmatprep.subr.bf16.mxu0 0
      %908 = vmatpush1.bf16.msra.mxu0 0
      %909 = vmatprep.subr.bf16.mxu0 0
      %910 = vmatpush1.bf16.msra.mxu0 0
      %911 = vmatprep.subr.bf16.mxu0 0
      %912 = vmatpush1.bf16.msra.mxu0 0
      %913 = vmatprep.subr.bf16.mxu0 0
      %914 = vmatpush1.bf16.msra.mxu0 0
      %915 = vmatprep.subr.bf16.mxu0 0
      %916 = vmatpush1.bf16.msra.mxu0 0
      %917 = vmatprep.subr.bf16.mxu0 0
      %918 = vmatpush1.bf16.msra.mxu0 0
      %919 = vmatprep.subr.bf16.mxu0 0
      %920 = vmatpush1.bf16.msra.mxu0 0
      %921 = vmatprep.subr.bf16.mxu0 0
      %922 = vmatpush1.bf16.msra.mxu0 0
      %923 = vmatprep.subr.bf16.mxu0 0
      %924 = vmatpush1.bf16.msra.mxu0 0
      %925 = vmatprep.subr.bf16.mxu0 0
      %926 = vmatpush1.bf16.msra.mxu0 0
      %927 = vmatprep.subr.bf16.mxu0 0
      %928 = vmatpush1.bf16.msra.mxu0 0
      %929 = vmatprep.mubr.bf16.mxu0 0
      %930 = vmatmul.mubr.bf16.gmra.mrb[0].mxu0 %v895
      %v931 = vpop.f32.mrb[0].mxu0
      %v932 = vadd.f32 %v880, %v931
      %v933 = vpop.f32.mrb[0].mxu0
      %v934 = vpop.f32.mrb[0].mxu0
      %v935 = vadd.f32 %v880, %v934
      %v936 = vpop.f32.mrb[0].mxu0
      %937 = vdwg.mxu0
      %v938 = vadd.f32 %v530, %v932
      %v939 = vadd.f32 %v531, %v935
      %v940 = vld [vmem:[%s7] sm:$0x1]
      %v941 = vld [vmem:[%s8] sm:$0x1]
      %v942 = vsel %vm559, %v938, 0.0
      %943 = vadd.xlane.f32.xlu0 %v942
      %v944 = vpop.xlane.xlu0 %943
      %v945 = vsel %vm559, %v939, 0.0
      %946 = vadd.xlane.f32.xlu0 %v945
      %v947 = vpop.xlane.xlu0 %946
      %v948 = vrcp.pop 32.0
      %v949 = vmul.f32 %v944, %v948
      %v950 = vmul.f32 %v947, %v948
      %v951 = vsub.f32 %v938, %v949
      %v952 = vsub.f32 %v939, %v950
      %v953 = vmul.f32 %v951, %v951
      %v954 = vmul.f32 %v952, %v952
      %v955 = vsel %vm559, %v953, 0.0
      %956 = vadd.xlane.f32.xlu0 %v955
      %v957 = vpop.xlane.xlu0 %956
      %v958 = vsel %vm559, %v954, 0.0
      %959 = vadd.xlane.f32.xlu0 %v958
      %v960 = vpop.xlane.xlu0 %959
      %v961 = vmul.f32 %v957, %v948
      %v962 = vmul.f32 %v960, %v948
      %v963 = vadd.f32 %v961, 1e-05
      %v964 = vadd.f32 %v962, 1e-05
      %v965 = vrsqrt.pop %v963
      %v966 = vrsqrt.pop %v964
      %v967 = vmul.f32 %v951, %v965
      %v968 = vmul.f32 %v952, %v966
      %v970 = vlaneseq
      %v971 = vshrl.u32 %v970, 7
      %v972 = vsub.s32 0, %v971
      %v973 = vrot.slane %v940, %v972
      %v975 = vmul.f32 %v967, %v973
      %v976 = vmul.f32 %v968, %v973
      %v978 = vlaneseq
      %v979 = vshrl.u32 %v978, 7
      %v980 = vsub.s32 0, %v979
      %v981 = vrot.slane %v941, %v980
      %v983 = vadd.f32 %v975, %v981
      %v984 = vadd.f32 %v976, %v981
      %986 = vset.pattern.permute.xlu0 0
      %987 = vperm.xlu0 %986, %v532
      %v988 = vpop.permute.xlu0 %987
      %991 = vset.pattern.permute.xlu0 0
      %992 = vperm.xlu0 %991, %v533
      %v993 = vpop.permute.xlu0 %992
      %v995 = vmul.f32 %v983, %v988
      %v996 = vmul.f32 %v984, %v993
      %vm997 = vcmask 253952
      %998 = vst.msk [vmem:[#allocation3] sm:$0x1] %vm997, 0.0
      %999 = vst.msk [vmem:[#allocation3 + $0x11] sm:$0x1] %vm997, 0.0
      %1000 = vst.msk [vmem:[#allocation3 + $0x1] sm:$0xff] %vm559, %v995
      %1001 = vst.msk [vmem:[#allocation3 + $0x9] sm:$0xff] %vm559, %v996
      %v1002 = vld [vmem:[#allocation3] sm:$0xff]
      %v1003 = vld [vmem:[#allocation3 + $0x8] sm:$0xff]
      %v1004 = vpack.c.bf16 %v1003, %v1002
      %v1005 = vld [vmem:[%s9] sm:$0xf]
      %v1006 = vld [vmem:[%s9 + $0x4] sm:$0xf]
      %v1007 = vld [vmem:[%s9 + $0x8] sm:$0xf]
      %v1008 = vld [vmem:[%s9 + $0xc] sm:$0xf]
      %v1009 = vld [vmem:[#allocation3 + $0x1] sm:$0xff]
      %v1010 = vld [vmem:[#allocation3 + $0x9] sm:$0xff]
      %v1011 = vpack.c.bf16 %v1010, %v1009
      %s1012 = scalar_lea.vmem %s9, 16
      %v1013 = vld [vmem:[%s1012] sm:$0xf]
      %v1014 = vld [vmem:[%s1012 + $0x4] sm:$0xf]
      %v1015 = vld [vmem:[%s1012 + $0x8] sm:$0xf]
      %v1016 = vld [vmem:[%s1012 + $0xc] sm:$0xf]
      %v1021 = vunpack.c.l.b16 %v1013
      %v1022 = vunpack.c.l.b16 %v1014
      %v1023 = vunpack.c.l.b16 %v1015
      %v1024 = vunpack.c.l.b16 %v1016
      %v1025 = vpack.c.b16 %v1022, %v1021
      %v1026 = vpack.c.b16 %v1024, %v1023
      %v1030 = vsel %vm559, %v1011, 0
      %1032 = vmatprep.subr.bf16.mxu0 0
      %1033 = vmatpush1.bf16.msra.mxu0 %v1025
      %1034 = vmatprep.subr.bf16.mxu0 0
      %1035 = vmatpush1.bf16.msra.mxu0 %v1026
      %1036 = vmatprep.subr.bf16.mxu0 0
      %1037 = vmatpush1.bf16.msra.mxu0 0
      %1038 = vmatprep.subr.bf16.mxu0 0
      %1039 = vmatpush1.bf16.msra.mxu0 0
      %1040 = vmatprep.subr.bf16.mxu0 0
      %1041 = vmatpush1.bf16.msra.mxu0 0
      %1042 = vmatprep.subr.bf16.mxu0 0
      %1043 = vmatpush1.bf16.msra.mxu0 0
      %1044 = vmatprep.subr.bf16.mxu0 0
      %1045 = vmatpush1.bf16.msra.mxu0 0
      %1046 = vmatprep.subr.bf16.mxu0 0
      %1047 = vmatpush1.bf16.msra.mxu0 0
      %1048 = vmatprep.subr.bf16.mxu0 0
      %1049 = vmatpush1.bf16.msra.mxu0 0
      %1050 = vmatprep.subr.bf16.mxu0 0
      %1051 = vmatpush1.bf16.msra.mxu0 0
      %1052 = vmatprep.subr.bf16.mxu0 0
      %1053 = vmatpush1.bf16.msra.mxu0 0
      %1054 = vmatprep.subr.bf16.mxu0 0
      %1055 = vmatpush1.bf16.msra.mxu0 0
      %1056 = vmatprep.subr.bf16.mxu0 0
      %1057 = vmatpush1.bf16.msra.mxu0 0
      %1058 = vmatprep.subr.bf16.mxu0 0
      %1059 = vmatpush1.bf16.msra.mxu0 0
      %1060 = vmatprep.subr.bf16.mxu0 0
      %1061 = vmatpush1.bf16.msra.mxu0 0
      %1062 = vmatprep.subr.bf16.mxu0 0
      %1063 = vmatpush1.bf16.msra.mxu0 0
      %1064 = vmatprep.mubr.bf16.mxu0 0
      %1065 = vmatmul.mubr.bf16.gmra.mrb[0].mxu0 %v1030
      %v1066 = vpop.f32.mrb[0].mxu0
      %v1067 = vadd.f32 0.0, %v1066
      %v1068 = vpop.f32.mrb[0].mxu0
      %v1069 = vpop.f32.mrb[0].mxu0
      %v1070 = vadd.f32 0.0, %v1069
      %v1071 = vpop.f32.mrb[0].mxu0
      %1072 = vdwg.mxu0
      %v1077 = vunpack.c.l.b16 %v1005
      %v1078 = vunpack.c.l.b16 %v1006
      %v1079 = vunpack.c.l.b16 %v1007
      %v1080 = vunpack.c.l.b16 %v1008
      %v1081 = vpack.c.b16 %v1078, %v1077
      %v1082 = vpack.c.b16 %v1080, %v1079
      %v1086 = vsel %vm559, %v1004, 0
      %1088 = vmatprep.subr.bf16.mxu0 0
      %1089 = vmatpush1.bf16.msra.mxu0 %v1081
      %1090 = vmatprep.subr.bf16.mxu0 0
      %1091 = vmatpush1.bf16.msra.mxu0 %v1082
      %1092 = vmatprep.subr.bf16.mxu0 0
      %1093 = vmatpush1.bf16.msra.mxu0 0
      %1094 = vmatprep.subr.bf16.mxu0 0
      %1095 = vmatpush1.bf16.msra.mxu0 0
      %1096 = vmatprep.subr.bf16.mxu0 0
      %1097 = vmatpush1.bf16.msra.mxu0 0
      %1098 = vmatprep.subr.bf16.mxu0 0
      %1099 = vmatpush1.bf16.msra.mxu0 0
      %1100 = vmatprep.subr.bf16.mxu0 0
      %1101 = vmatpush1.bf16.msra.mxu0 0
      %1102 = vmatprep.subr.bf16.mxu0 0
      %1103 = vmatpush1.bf16.msra.mxu0 0
      %1104 = vmatprep.subr.bf16.mxu0 0
      %1105 = vmatpush1.bf16.msra.mxu0 0
      %1106 = vmatprep.subr.bf16.mxu0 0
      %1107 = vmatpush1.bf16.msra.mxu0 0
      %1108 = vmatprep.subr.bf16.mxu0 0
      %1109 = vmatpush1.bf16.msra.mxu0 0
      %1110 = vmatprep.subr.bf16.mxu0 0
      %1111 = vmatpush1.bf16.msra.mxu0 0
      %1112 = vmatprep.subr.bf16.mxu0 0
      %1113 = vmatpush1.bf16.msra.mxu0 0
      %1114 = vmatprep.subr.bf16.mxu0 0
      %1115 = vmatpush1.bf16.msra.mxu0 0
      %1116 = vmatprep.subr.bf16.mxu0 0
      %1117 = vmatpush1.bf16.msra.mxu0 0
      %1118 = vmatprep.subr.bf16.mxu0 0
      %1119 = vmatpush1.bf16.msra.mxu0 0
      %1120 = vmatprep.mubr.bf16.mxu0 0
      %1121 = vmatmul.mubr.bf16.gmra.mrb[0].mxu0 %v1086
      %v1122 = vpop.f32.mrb[0].mxu0
      %v1123 = vadd.f32 %v1067, %v1122
      %v1124 = vpop.f32.mrb[0].mxu0
      %v1125 = vpop.f32.mrb[0].mxu0
      %v1126 = vadd.f32 %v1070, %v1125
      %v1127 = vpop.f32.mrb[0].mxu0
      %1128 = vdwg.mxu0
      %v1129 = vld [vmem:[#allocation3 + $0x2] sm:$0xff]
      %v1130 = vld [vmem:[#allocation3 + $0xa] sm:$0xff]
      %v1131 = vpack.c.bf16 %v1130, %v1129
      %s1132 = scalar_lea.vmem %s9, 32
      %v1133 = vld [vmem:[%s1132] sm:$0xf]
      %v1134 = vld [vmem:[%s1132 + $0x4] sm:$0xf]
      %v1135 = vld [vmem:[%s1132 + $0x8] sm:$0xf]
      %v1136 = vld [vmem:[%s1132 + $0xc] sm:$0xf]
      %v1141 = vunpack.c.l.b16 %v1133
      %v1142 = vunpack.c.l.b16 %v1134
      %v1143 = vunpack.c.l.b16 %v1135
      %v1144 = vunpack.c.l.b16 %v1136
      %v1145 = vpack.c.b16 %v1142, %v1141
      %v1146 = vpack.c.b16 %v1144, %v1143
      %v1150 = vsel %vm559, %v1131, 0
      %1152 = vmatprep.subr.bf16.mxu0 0
      %1153 = vmatpush1.bf16.msra.mxu0 %v1145
      %1154 = vmatprep.subr.bf16.mxu0 0
      %1155 = vmatpush1.bf16.msra.mxu0 %v1146
      %1156 = vmatprep.subr.bf16.mxu0 0
      %1157 = vmatpush1.bf16.msra.mxu0 0
      %1158 = vmatprep.subr.bf16.mxu0 0
      %1159 = vmatpush1.bf16.msra.mxu0 0
      %1160 = vmatprep.subr.bf16.mxu0 0
      %1161 = vmatpush1.bf16.msra.mxu0 0
      %1162 = vmatprep.subr.bf16.mxu0 0
      %1163 = vmatpush1.bf16.msra.mxu0 0
      %1164 = vmatprep.subr.bf16.mxu0 0
      %1165 = vmatpush1.bf16.msra.mxu0 0
      %1166 = vmatprep.subr.bf16.mxu0 0
      %1167 = vmatpush1.bf16.msra.mxu0 0
      %1168 = vmatprep.subr.bf16.mxu0 0
      %1169 = vmatpush1.bf16.msra.mxu0 0
      %1170 = vmatprep.subr.bf16.mxu0 0
      %1171 = vmatpush1.bf16.msra.mxu0 0
      %1172 = vmatprep.subr.bf16.mxu0 0
      %1173 = vmatpush1.bf16.msra.mxu0 0
      %1174 = vmatprep.subr.bf16.mxu0 0
      %1175 = vmatpush1.bf16.msra.mxu0 0
      %1176 = vmatprep.subr.bf16.mxu0 0
      %1177 = vmatpush1.bf16.msra.mxu0 0
      %1178 = vmatprep.subr.bf16.mxu0 0
      %1179 = vmatpush1.bf16.msra.mxu0 0
      %1180 = vmatprep.subr.bf16.mxu0 0
      %1181 = vmatpush1.bf16.msra.mxu0 0
      %1182 = vmatprep.subr.bf16.mxu0 0
      %1183 = vmatpush1.bf16.msra.mxu0 0
      %1184 = vmatprep.mubr.bf16.mxu0 0
      %1185 = vmatmul.mubr.bf16.gmra.mrb[0].mxu0 %v1150
      %v1186 = vpop.f32.mrb[0].mxu0
      %v1187 = vadd.f32 0.0, %v1186
      %v1188 = vpop.f32.mrb[0].mxu0
      %v1189 = vpop.f32.mrb[0].mxu0
      %v1190 = vadd.f32 0.0, %v1189
      %v1191 = vpop.f32.mrb[0].mxu0
      %1192 = vdwg.mxu0
      %v1193 = vadd.f32 %v1123, %v1187
      %v1194 = vadd.f32 %v1126, %v1190
      %v1195 = vld [vmem:[%s10] sm:$0x1]
      %v1197 = vlaneseq
      %v1198 = vshrl.u32 %v1197, 7
      %v1199 = vsub.s32 0, %v1198
      %v1200 = vrot.slane %v1195, %v1199
      %v1202 = vadd.f32 %v1193, %v1200
      %v1203 = vadd.f32 %v1194, %v1200
      %v1204 = vmax.f32 %v1202, 0.0
      %v1205 = vmax.f32 %v1203, 0.0
      %v1206 = vpack.c.bf16 %v1205, %v1204
      %v1207 = vld [vmem:[%s11] sm:$0xf]
      %v1208 = vld [vmem:[%s11 + $0x4] sm:$0xf]
      %v1209 = vld [vmem:[%s11 + $0x8] sm:$0xf]
      %v1210 = vld [vmem:[%s11 + $0xc] sm:$0xf]
      %v1211 = vld [vmem:[%s11 + $0x10] sm:$0xf]
      %v1212 = vld [vmem:[%s11 + $0x14] sm:$0xf]
      %v1213 = vld [vmem:[%s11 + $0x18] sm:$0xf]
      %v1214 = vld [vmem:[%s11 + $0x1c] sm:$0xf]
      %v1215 = vld [vmem:[%s12] sm:$0x1]
      %v1217 = vlaneseq
      %v1218 = vshrl.u32 %v1217, 7
      %v1219 = vsub.s32 0, %v1218
      %v1220 = vrot.slane %v1215, %v1219
      %v1230 = vunpack.c.l.b16 %v1207
      %v1231 = vunpack.c.l.b16 %v1208
      %v1232 = vunpack.c.l.b16 %v1209
      %v1233 = vunpack.c.l.b16 %v1210
      %v1234 = vunpack.c.l.b16 %v1211
      %v1235 = vunpack.c.l.b16 %v1212
      %v1236 = vunpack.c.l.b16 %v1213
      %v1237 = vunpack.c.l.b16 %v1214
      %v1238 = vpack.c.b16 %v1231, %v1230
      %v1239 = vpack.c.b16 %v1233, %v1232
      %v1240 = vpack.c.b16 %v1235, %v1234
      %v1241 = vpack.c.b16 %v1237, %v1236
      %vm1246 = vcmask 523264
      %v1248 = vsel %vm1246, %v1206, 0
      %1250 = vmatprep.subr.bf16.mxu0 0
      %1251 = vmatpush1.bf16.msra.mxu0 %v1238
      %1252 = vmatprep.subr.bf16.mxu0 0
      %1253 = vmatpush1.bf16.msra.mxu0 %v1239
      %1254 = vmatprep.subr.bf16.mxu0 0
      %1255 = vmatpush1.bf16.msra.mxu0 %v1240
      %1256 = vmatprep.subr.bf16.mxu0 0
      %1257 = vmatpush1.bf16.msra.mxu0 %v1241
      %1258 = vmatprep.subr.bf16.mxu0 0
      %1259 = vmatpush1.bf16.msra.mxu0 0
      %1260 = vmatprep.subr.bf16.mxu0 0
      %1261 = vmatpush1.bf16.msra.mxu0 0
      %1262 = vmatprep.subr.bf16.mxu0 0
      %1263 = vmatpush1.bf16.msra.mxu0 0
      %1264 = vmatprep.subr.bf16.mxu0 0
      %1265 = vmatpush1.bf16.msra.mxu0 0
      %1266 = vmatprep.subr.bf16.mxu0 0
      %1267 = vmatpush1.bf16.msra.mxu0 0
      %1268 = vmatprep.subr.bf16.mxu0 0
      %1269 = vmatpush1.bf16.msra.mxu0 0
      %1270 = vmatprep.subr.bf16.mxu0 0
      %1271 = vmatpush1.bf16.msra.mxu0 0
      %1272 = vmatprep.subr.bf16.mxu0 0
      %1273 = vmatpush1.bf16.msra.mxu0 0
      %1274 = vmatprep.subr.bf16.mxu0 0
      %1275 = vmatpush1.bf16.msra.mxu0 0
      %1276 = vmatprep.subr.bf16.mxu0 0
      %1277 = vmatpush1.bf16.msra.mxu0 0
      %1278 = vmatprep.subr.bf16.mxu0 0
      %1279 = vmatpush1.bf16.msra.mxu0 0
      %1280 = vmatprep.subr.bf16.mxu0 0
      %1281 = vmatpush1.bf16.msra.mxu0 0
      %1282 = vmatprep.mubr.bf16.mxu0 0
      %1283 = vmatmul.mubr.bf16.gmra.mrb[0].mxu0 %v1248
      %v1284 = vpop.f32.mrb[0].mxu0
      %v1285 = vadd.f32 %v1220, %v1284
      %v1286 = vpop.f32.mrb[0].mxu0
      %v1287 = vpop.f32.mrb[0].mxu0
      %v1288 = vadd.f32 %v1220, %v1287
      %v1289 = vpop.f32.mrb[0].mxu0
      %1290 = vdwg.mxu0
      %v1291 = vadd.f32 %v995, %v1285
      %v1292 = vadd.f32 %v996, %v1288
      %v1293 = vld [vmem:[%s13] sm:$0x1]
      %v1294 = vld [vmem:[%s14] sm:$0x1]
      %v1295 = vsel %vm559, %v1291, 0.0
      %1296 = vadd.xlane.f32.xlu0 %v1295
      %v1297 = vpop.xlane.xlu0 %1296
      %v1298 = vsel %vm559, %v1292, 0.0
      %1299 = vadd.xlane.f32.xlu0 %v1298
      %v1300 = vpop.xlane.xlu0 %1299
      %v1301 = vmul.f32 %v1297, %v948
      %v1302 = vmul.f32 %v1300, %v948
      %v1303 = vsub.f32 %v1291, %v1301
      %v1304 = vsub.f32 %v1292, %v1302
      %v1305 = vmul.f32 %v1303, %v1303
      %v1306 = vmul.f32 %v1304, %v1304
      %v1307 = vsel %vm559, %v1305, 0.0
      %1308 = vadd.xlane.f32.xlu0 %v1307
      %v1309 = vpop.xlane.xlu0 %1308
      %v1310 = vsel %vm559, %v1306, 0.0
      %1311 = vadd.xlane.f32.xlu0 %v1310
      %v1312 = vpop.xlane.xlu0 %1311
      %v1313 = vmul.f32 %v1309, %v948
      %v1314 = vmul.f32 %v1312, %v948
      %v1315 = vadd.f32 %v1313, 1e-05
      %v1316 = vadd.f32 %v1314, 1e-05
      %v1317 = vrsqrt.pop %v1315
      %v1318 = vrsqrt.pop %v1316
      %v1319 = vmul.f32 %v1303, %v1317
      %v1320 = vmul.f32 %v1304, %v1318
      %v1322 = vlaneseq
      %v1323 = vshrl.u32 %v1322, 7
      %v1324 = vsub.s32 0, %v1323
      %v1325 = vrot.slane %v1293, %v1324
      %v1327 = vmul.f32 %v1319, %v1325
      %v1328 = vmul.f32 %v1320, %v1325
      %v1330 = vlaneseq
      %v1331 = vshrl.u32 %v1330, 7
      %v1332 = vsub.s32 0, %v1331
      %v1333 = vrot.slane %v1294, %v1332
      %v1335 = vadd.f32 %v1327, %v1333
      %v1336 = vadd.f32 %v1328, %v1333
      %v1337 = vmul.f32 %v1335, %v988
      %v1338 = vmul.f32 %v1336, %v993
      %1339 = vst.msk [vmem:[%s528] sm:$0xff] %vm559, %v1337
      %1340 = vst.msk [vmem:[%s528 + $0x8] sm:$0xff] %vm559, %v1338
      %p1341 = scmp.lt.s32.totalorder %s26, 1
      %s1342 = scalar_select %p1341, %s26, 1
      %s1343 = smul.addr %s1342, 2
      %s1344 = smul.addr %s1343, 8
      %s1345 = scalar_lea.vmem %s15, %s1344
      // Predicated region
      $region81: #{_lambda_.10} parent=79 // pred_check
        %p1346 = pneg %p374
      $region82: #{_lambda_.10} parent=79 // pred_check_branch
        %1348 = sbr.rel (%p1346) target = $region84
      $region83: #{_lambda_.10} parent=79 // pred_region
        _
      $region84: #{_lambda_.10} parent=79 // pred_fallthru
        _
    $region80: #{_lambda_.10} parent=5 // pred_fallthru
      _
    %p1349 = scmp.le.s32.totalorder 2, %s21
    // Predicated region
    $region85: #{_lambda_.10} parent=5 // pred_check
      %p1350 = pneg %p1349
    $region86: #{_lambda_.10} parent=5 // pred_check_branch
      %1352 = sbr.rel (%p1350) target = $region88
    $region87: #{_lambda_.10} parent=5 // pred_region
      %s1353 = ssub.s32 %s21, 2
      // Predicated region
      $region89: #{_lambda_.10} parent=87 // pred_check
        %p1354 = pneg %p380
      $region90: #{_lambda_.10} parent=87 // pred_check_branch
        %1356 = sbr.rel (%p1354) target = $region92
      $region91: #{_lambda_.10} parent=87 // pred_region
        %p1357 = scmp.lt.s32.totalorder %s27, 1
        %s1358 = scalar_select %p1357, %s27, 1
        %s1359 = smul.addr %s1358, 2
        %s1360 = smul.addr %s1359, 8
        %s1361 = scalar_lea.vmem %s15, %s1360
      $region92: #{_lambda_.10} parent=87 // pred_fallthru
        _
    $region88: #{_lambda_.10} parent=5 // pred_fallthru
      _
  $region6: #{_lambda_.10} parent=0 // loop_footer
    %s25 = sadd.s32 1, %s21
  $region7: #{_lambda_.10} parent=0 // loop_footer_branch
    %20 = sbr.rel target = $region3
  $region8: #{_lambda_.10} parent=0 // loop_exit
    _

// kernel: _lambda_.9
$region0: #{_lambda_.9}
  #allocation0 [shape = 'u32[]', space=smem, size = 0x4, offset = 0x4, fixed_abs, tag = 'smem constant byte address 0x4 - core index']
  #allocation1 [shape = 'u32[144,128]{1,0:T(1,128)}', space=vmem, size = 0x12000, scoped, tag = 'internal scratch']
  #allocation2 [shape = 'f32[10,32]{1,0:T(8,128)}', space=vmem, size = 0x2000, scoped, tag = 'scratch operand']
  %s0 = inlined_call_operand.vmem [shape: f32[2,8,32], index: 0, kind: input, shape index: {}]
  %s1 = inlined_call_operand.vmem [shape: f32[2,1,8], index: 1, kind: input, shape index: {}]
  %s2 = inlined_call_operand.vmem [shape: bf16[3,3,32,32], index: 2, kind: input, shape index: {}]
  %s3 = inlined_call_operand.vmem [shape: f32[3,1,32], index: 3, kind: input, shape index: {}]
  %s4 = inlined_call_operand.vmem [shape: f32[3,1,32], index: 4, kind: input, shape index: {}]
  %s5 = inlined_call_operand.vmem [shape: f32[3,1,32], index: 5, kind: input, shape index: {}]
  %s6 = inlined_call_operand.vmem [shape: bf16[3,3,32,32], index: 6, kind: input, shape index: {}]
  %s7 = inlined_call_operand.vmem [shape: f32[3,1,32], index: 7, kind: input, shape index: {}]
  %s8 = inlined_call_operand.vmem [shape: f32[3,1,32], index: 8, kind: input, shape index: {}]
  %s9 = inlined_call_operand.vmem [shape: f32[3,1,32], index: 9, kind: input, shape index: {}]
  %s10 = inlined_call_operand.vmem [shape: f32[3,1,32], index: 10, kind: input, shape index: {}]
  %s11 = inlined_call_operand.vmem [shape: f32[3,1,1], index: 11, kind: input, shape index: {}]
  %s12 = inlined_call_operand.vmem [shape: f32[3,2,1,8], index: 12, kind: output, shape index: {}]
  %s13 = sld [smem:[#allocation0]]
  $region81: #{_lambda_.9} parent=0
    _
  %s15 = ssub.s32 1, %s13
  %s16 = scalar_select 0, %s15, %s13
  loop: start=0, step=1, limit=8
  $region2: #{_lambda_.9} parent=0 // loop_pre_header
    _
  $region3: #{_lambda_.9} parent=0 // loop_header
    %s18 = sphi 0, %s22
    %p19 = scmp.ge.s32.totalorder %s18, 8
    %s25 = sphi 0, %s37
    %s26 = sphi 0, %s33
    %s27 = sphi 0, %s25
    %s28 = sphi 0, %s26
    %s29 = sphi 0, %s27
    %s30 = sphi 0, %s28
    %s40 = sphi 0, %s42
    %s43 = sphi 0, %s40
    %s44 = sphi 0, %s43
    %s60 = sphi 0, %s44
    %s66 = sphi 0, %s68
    %s69 = sphi 0, %s66
    %s70 = sphi 0, %s69
    %s86 = sphi 0, %s70
    %s92 = sphi 0, %s94
    %s95 = sphi 0, %s92
    %s96 = sphi 0, %s95
    %s112 = sphi 0, %s96
    %s118 = sphi 0, %s120
    %s121 = sphi 0, %s118
    %s122 = sphi 0, %s121
    %s138 = sphi 0, %s122
    %s144 = sphi 0, %s146
    %s147 = sphi 0, %s144
    %s148 = sphi 0, %s147
    %s164 = sphi 0, %s148
    %s170 = sphi 0, %s172
    %s173 = sphi 0, %s170
    %s174 = sphi 0, %s173
    %s190 = sphi 0, %s174
    %s196 = sphi 0, %s198
    %s199 = sphi 0, %s196
    %s200 = sphi 0, %s199
    %s216 = sphi 0, %s200
    %s222 = sphi 0, %s224
    %s225 = sphi 0, %s222
    %s226 = sphi 0, %s225
    %s242 = sphi 0, %s226
    %s248 = sphi 0, %s250
    %s251 = sphi 0, %s248
    %s252 = sphi 0, %s251
    %s268 = sphi 0, %s252
    %s274 = sphi 0, %s276
    %s277 = sphi 0, %s274
    %s278 = sphi 0, %s277
    %s294 = sphi 0, %s278
    %s300 = sphi 0, %s302
    %s303 = sphi 0, %s300
    %s304 = sphi 0, %s303
    %s320 = sphi 0, %s304
    %s326 = sphi 0, %s328
    %s329 = sphi 0, %s326
    %s330 = sphi 0, %s329
    %s346 = sphi 0, %s330
    %s354 = sphi 0, %s356
    %s357 = sphi 0, %s354
    %s358 = sphi 0, %s357
    %s374 = sphi 0, %s358
  $region4: #{_lambda_.9} parent=0 // loop_header_branch
    %21 = sbr.rel (%p19) target = $region8
  $region5: #{_lambda_.9} parent=0 // loop_body
    %s23 = ssub.s32 %s18, 1
    %s24 = ssub.s32 %s18, 2
    %s31 = sadd.s32 1, %s26
    %p32 = scmp.ge.s32.totalorder %s31, 3
    %s33 = scalar_select %p32, 0, %s31
    %s34 = sadd.s32 1, %s25
    %s35 = scalar_select %p32, %s34, %s25
    %p36 = scmp.ge.s32.totalorder %s35, 2
    %s37 = scalar_select %p36, 0, %s35
    %s38 = ssub.s32 %s25, %s37
    %p39 = scmp.eq.s32.totalorder %s38, 0
    %s41 = sadd.s32 %s40, 1
    %s42 = scalar_select %p39, %s40, %s41
    %p45 = pneg %p39
    %p46 = scmp.eq.s32.totalorder %s18, 5
    %p47 = por %p45, %p46
    %p48 = scmp.ne.s32.totalorder %s40, %s43
    %p49 = scmp.eq.s32.totalorder %s18, 0
    %p50 = por %p48, %p49
    %p51 = scmp.ne.s32.totalorder %s40, %s43
    %p52 = scmp.eq.s32.totalorder %s23, 5
    %p53 = por %p51, %p52
    %p54 = scmp.ne.s32.totalorder %s43, %s44
    %p55 = scmp.eq.s32.totalorder %s23, 0
    %p56 = por %p54, %p55
    %p57 = scmp.ne.s32.totalorder %s43, %s44
    %p58 = scmp.eq.s32.totalorder %s24, 5
    %p59 = por %p57, %p58
    %p61 = scmp.ne.s32.totalorder %s44, %s60
    %p62 = scmp.eq.s32.totalorder %s24, 0
    %p63 = por %p61, %p62
    %s64 = ssub.s32 %s25, %s37
    %p65 = scmp.eq.s32.totalorder %s64, 0
    %s67 = sadd.s32 %s66, 1
    %s68 = scalar_select %p65, %s66, %s67
    %p71 = pneg %p65
    %p72 = scmp.eq.s32.totalorder %s18, 5
    %p73 = por %p71, %p72
    %p74 = scmp.ne.s32.totalorder %s66, %s69
    %p75 = scmp.eq.s32.totalorder %s18, 0
    %p76 = por %p74, %p75
    %p77 = scmp.ne.s32.totalorder %s66, %s69
    %p78 = scmp.eq.s32.totalorder %s23, 5
    %p79 = por %p77, %p78
    %p80 = scmp.ne.s32.totalorder %s69, %s70
    %p81 = scmp.eq.s32.totalorder %s23, 0
    %p82 = por %p80, %p81
    %p83 = scmp.ne.s32.totalorder %s69, %s70
    %p84 = scmp.eq.s32.totalorder %s24, 5
    %p85 = por %p83, %p84
    %p87 = scmp.ne.s32.totalorder %s70, %s86
    %p88 = scmp.eq.s32.totalorder %s24, 0
    %p89 = por %p87, %p88
    %s90 = ssub.s32 %s26, %s33
    %p91 = scmp.eq.s32.totalorder %s90, 0
    %s93 = sadd.s32 %s92, 1
    %s94 = scalar_select %p91, %s92, %s93
    %p97 = pneg %p91
    %p98 = scmp.eq.s32.totalorder %s18, 5
    %p99 = por %p97, %p98
    %p100 = scmp.ne.s32.totalorder %s92, %s95
    %p101 = scmp.eq.s32.totalorder %s18, 0
    %p102 = por %p100, %p101
    %p103 = scmp.ne.s32.totalorder %s92, %s95
    %p104 = scmp.eq.s32.totalorder %s23, 5
    %p105 = por %p103, %p104
    %p106 = scmp.ne.s32.totalorder %s95, %s96
    %p107 = scmp.eq.s32.totalorder %s23, 0
    %p108 = por %p106, %p107
    %p109 = scmp.ne.s32.totalorder %s95, %s96
    %p110 = scmp.eq.s32.totalorder %s24, 5
    %p111 = por %p109, %p110
    %p113 = scmp.ne.s32.totalorder %s96, %s112
    %p114 = scmp.eq.s32.totalorder %s24, 0
    %p115 = por %p113, %p114
    %s116 = ssub.s32 %s26, %s33
    %p117 = scmp.eq.s32.totalorder %s116, 0
    %s119 = sadd.s32 %s118, 1
    %s120 = scalar_select %p117, %s118, %s119
    %p123 = pneg %p117
    %p124 = scmp.eq.s32.totalorder %s18, 5
    %p125 = por %p123, %p124
    %p126 = scmp.ne.s32.totalorder %s118, %s121
    %p127 = scmp.eq.s32.totalorder %s18, 0
    %p128 = por %p126, %p127
    %p129 = scmp.ne.s32.totalorder %s118, %s121
    %p130 = scmp.eq.s32.totalorder %s23, 5
    %p131 = por %p129, %p130
    %p132 = scmp.ne.s32.totalorder %s121, %s122
    %p133 = scmp.eq.s32.totalorder %s23, 0
    %p134 = por %p132, %p133
    %p135 = scmp.ne.s32.totalorder %s121, %s122
    %p136 = scmp.eq.s32.totalorder %s24, 5
    %p137 = por %p135, %p136
    %p139 = scmp.ne.s32.totalorder %s122, %s138
    %p140 = scmp.eq.s32.totalorder %s24, 0
    %p141 = por %p139, %p140
    %s142 = ssub.s32 %s26, %s33
    %p143 = scmp.eq.s32.totalorder %s142, 0
    %s145 = sadd.s32 %s144, 1
    %s146 = scalar_select %p143, %s144, %s145
    %p149 = pneg %p143
    %p150 = scmp.eq.s32.totalorder %s18, 5
    %p151 = por %p149, %p150
    %p152 = scmp.ne.s32.totalorder %s144, %s147
    %p153 = scmp.eq.s32.totalorder %s18, 0
    %p154 = por %p152, %p153
    %p155 = scmp.ne.s32.totalorder %s144, %s147
    %p156 = scmp.eq.s32.totalorder %s23, 5
    %p157 = por %p155, %p156
    %p158 = scmp.ne.s32.totalorder %s147, %s148
    %p159 = scmp.eq.s32.totalorder %s23, 0
    %p160 = por %p158, %p159
    %p161 = scmp.ne.s32.totalorder %s147, %s148
    %p162 = scmp.eq.s32.totalorder %s24, 5
    %p163 = por %p161, %p162
    %p165 = scmp.ne.s32.totalorder %s148, %s164
    %p166 = scmp.eq.s32.totalorder %s24, 0
    %p167 = por %p165, %p166
    %s168 = ssub.s32 %s26, %s33
    %p169 = scmp.eq.s32.totalorder %s168, 0
    %s171 = sadd.s32 %s170, 1
    %s172 = scalar_select %p169, %s170, %s171
    %p175 = pneg %p169
    %p176 = scmp.eq.s32.totalorder %s18, 5
    %p177 = por %p175, %p176
    %p178 = scmp.ne.s32.totalorder %s170, %s173
    %p179 = scmp.eq.s32.totalorder %s18, 0
    %p180 = por %p178, %p179
    %p181 = scmp.ne.s32.totalorder %s170, %s173
    %p182 = scmp.eq.s32.totalorder %s23, 5
    %p183 = por %p181, %p182
    %p184 = scmp.ne.s32.totalorder %s173, %s174
    %p185 = scmp.eq.s32.totalorder %s23, 0
    %p186 = por %p184, %p185
    %p187 = scmp.ne.s32.totalorder %s173, %s174
    %p188 = scmp.eq.s32.totalorder %s24, 5
    %p189 = por %p187, %p188
    %p191 = scmp.ne.s32.totalorder %s174, %s190
    %p192 = scmp.eq.s32.totalorder %s24, 0
    %p193 = por %p191, %p192
    %s194 = ssub.s32 %s26, %s33
    %p195 = scmp.eq.s32.totalorder %s194, 0
    %s197 = sadd.s32 %s196, 1
    %s198 = scalar_select %p195, %s196, %s197
    %p201 = pneg %p195
    %p202 = scmp.eq.s32.totalorder %s18, 5
    %p203 = por %p201, %p202
    %p204 = scmp.ne.s32.totalorder %s196, %s199
    %p205 = scmp.eq.s32.totalorder %s18, 0
    %p206 = por %p204, %p205
    %p207 = scmp.ne.s32.totalorder %s196, %s199
    %p208 = scmp.eq.s32.totalorder %s23, 5
    %p209 = por %p207, %p208
    %p210 = scmp.ne.s32.totalorder %s199, %s200
    %p211 = scmp.eq.s32.totalorder %s23, 0
    %p212 = por %p210, %p211
    %p213 = scmp.ne.s32.totalorder %s199, %s200
    %p214 = scmp.eq.s32.totalorder %s24, 5
    %p215 = por %p213, %p214
    %p217 = scmp.ne.s32.totalorder %s200, %s216
    %p218 = scmp.eq.s32.totalorder %s24, 0
    %p219 = por %p217, %p218
    %s220 = ssub.s32 %s26, %s33
    %p221 = scmp.eq.s32.totalorder %s220, 0
    %s223 = sadd.s32 %s222, 1
    %s224 = scalar_select %p221, %s222, %s223
    %p227 = pneg %p221
    %p228 = scmp.eq.s32.totalorder %s18, 5
    %p229 = por %p227, %p228
    %p230 = scmp.ne.s32.totalorder %s222, %s225
    %p231 = scmp.eq.s32.totalorder %s18, 0
    %p232 = por %p230, %p231
    %p233 = scmp.ne.s32.totalorder %s222, %s225
    %p234 = scmp.eq.s32.totalorder %s23, 5
    %p235 = por %p233, %p234
    %p236 = scmp.ne.s32.totalorder %s225, %s226
    %p237 = scmp.eq.s32.totalorder %s23, 0
    %p238 = por %p236, %p237
    %p239 = scmp.ne.s32.totalorder %s225, %s226
    %p240 = scmp.eq.s32.totalorder %s24, 5
    %p241 = por %p239, %p240
    %p243 = scmp.ne.s32.totalorder %s226, %s242
    %p244 = scmp.eq.s32.totalorder %s24, 0
    %p245 = por %p243, %p244
    %s246 = ssub.s32 %s26, %s33
    %p247 = scmp.eq.s32.totalorder %s246, 0
    %s249 = sadd.s32 %s248, 1
    %s250 = scalar_select %p247, %s248, %s249
    %p253 = pneg %p247
    %p254 = scmp.eq.s32.totalorder %s18, 5
    %p255 = por %p253, %p254
    %p256 = scmp.ne.s32.totalorder %s248, %s251
    %p257 = scmp.eq.s32.totalorder %s18, 0
    %p258 = por %p256, %p257
    %p259 = scmp.ne.s32.totalorder %s248, %s251
    %p260 = scmp.eq.s32.totalorder %s23, 5
    %p261 = por %p259, %p260
    %p262 = scmp.ne.s32.totalorder %s251, %s252
    %p263 = scmp.eq.s32.totalorder %s23, 0
    %p264 = por %p262, %p263
    %p265 = scmp.ne.s32.totalorder %s251, %s252
    %p266 = scmp.eq.s32.totalorder %s24, 5
    %p267 = por %p265, %p266
    %p269 = scmp.ne.s32.totalorder %s252, %s268
    %p270 = scmp.eq.s32.totalorder %s24, 0
    %p271 = por %p269, %p270
    %s272 = ssub.s32 %s26, %s33
    %p273 = scmp.eq.s32.totalorder %s272, 0
    %s275 = sadd.s32 %s274, 1
    %s276 = scalar_select %p273, %s274, %s275
    %p279 = pneg %p273
    %p280 = scmp.eq.s32.totalorder %s18, 5
    %p281 = por %p279, %p280
    %p282 = scmp.ne.s32.totalorder %s274, %s277
    %p283 = scmp.eq.s32.totalorder %s18, 0
    %p284 = por %p282, %p283
    %p285 = scmp.ne.s32.totalorder %s274, %s277
    %p286 = scmp.eq.s32.totalorder %s23, 5
    %p287 = por %p285, %p286
    %p288 = scmp.ne.s32.totalorder %s277, %s278
    %p289 = scmp.eq.s32.totalorder %s23, 0
    %p290 = por %p288, %p289
    %p291 = scmp.ne.s32.totalorder %s277, %s278
    %p292 = scmp.eq.s32.totalorder %s24, 5
    %p293 = por %p291, %p292
    %p295 = scmp.ne.s32.totalorder %s278, %s294
    %p296 = scmp.eq.s32.totalorder %s24, 0
    %p297 = por %p295, %p296
    %s298 = ssub.s32 %s26, %s33
    %p299 = scmp.eq.s32.totalorder %s298, 0
    %s301 = sadd.s32 %s300, 1
    %s302 = scalar_select %p299, %s300, %s301
    %p305 = pneg %p299
    %p306 = scmp.eq.s32.totalorder %s18, 5
    %p307 = por %p305, %p306
    %p308 = scmp.ne.s32.totalorder %s300, %s303
    %p309 = scmp.eq.s32.totalorder %s18, 0
    %p310 = por %p308, %p309
    %p311 = scmp.ne.s32.totalorder %s300, %s303
    %p312 = scmp.eq.s32.totalorder %s23, 5
    %p313 = por %p311, %p312
    %p314 = scmp.ne.s32.totalorder %s303, %s304
    %p315 = scmp.eq.s32.totalorder %s23, 0
    %p316 = por %p314, %p315
    %p317 = scmp.ne.s32.totalorder %s303, %s304
    %p318 = scmp.eq.s32.totalorder %s24, 5
    %p319 = por %p317, %p318
    %p321 = scmp.ne.s32.totalorder %s304, %s320
    %p322 = scmp.eq.s32.totalorder %s24, 0
    %p323 = por %p321, %p322
    %s324 = ssub.s32 %s26, %s33
    %p325 = scmp.eq.s32.totalorder %s324, 0
    %s327 = sadd.s32 %s326, 1
    %s328 = scalar_select %p325, %s326, %s327
    %p331 = pneg %p325
    %p332 = scmp.eq.s32.totalorder %s18, 5
    %p333 = por %p331, %p332
    %p334 = scmp.ne.s32.totalorder %s326, %s329
    %p335 = scmp.eq.s32.totalorder %s18, 0
    %p336 = por %p334, %p335
    %p337 = scmp.ne.s32.totalorder %s326, %s329
    %p338 = scmp.eq.s32.totalorder %s23, 5
    %p339 = por %p337, %p338
    %p340 = scmp.ne.s32.totalorder %s329, %s330
    %p341 = scmp.eq.s32.totalorder %s23, 0
    %p342 = por %p340, %p341
    %p343 = scmp.ne.s32.totalorder %s329, %s330
    %p344 = scmp.eq.s32.totalorder %s24, 5
    %p345 = por %p343, %p344
    %p347 = scmp.ne.s32.totalorder %s330, %s346
    %p348 = scmp.eq.s32.totalorder %s24, 0
    %p349 = por %p347, %p348
    %s350 = ssub.s32 %s26, %s33
    %s351 = ssub.s32 %s25, %s37
    %s352 = sor.u32 %s350, %s351
    %p353 = scmp.eq.s32.totalorder %s352, 0
    %s355 = sadd.s32 %s354, 1
    %s356 = scalar_select %p353, %s354, %s355
    %p359 = pneg %p353
    %p360 = scmp.eq.s32.totalorder %s18, 5
    %p361 = por %p359, %p360
    %p362 = scmp.ne.s32.totalorder %s354, %s357
    %p363 = scmp.eq.s32.totalorder %s18, 0
    %p364 = por %p362, %p363
    %p365 = scmp.ne.s32.totalorder %s354, %s357
    %p366 = scmp.eq.s32.totalorder %s23, 5
    %p367 = por %p365, %p366
    %p368 = scmp.ne.s32.totalorder %s357, %s358
    %p369 = scmp.eq.s32.totalorder %s23, 0
    %p370 = por %p368, %p369
    %p371 = scmp.ne.s32.totalorder %s357, %s358
    %p372 = scmp.eq.s32.totalorder %s24, 5
    %p373 = por %p371, %p372
    %p375 = scmp.ne.s32.totalorder %s358, %s374
    %p376 = scmp.eq.s32.totalorder %s24, 0
    %p377 = por %p375, %p376
    %p378 = scmp.le.s32.totalorder 1, %s18
    %p379 = scmp.lt.s32.totalorder %s18, 7
    %p380 = pnand %p378, %p379
    %p381 = pneg %p380
    // Predicated region
    $region9: #{_lambda_.9} parent=5 // pred_check
      _
    $region10: #{_lambda_.9} parent=5 // pred_check_branch
      %383 = sbr.rel (%p380) target = $region12
    $region11: #{_lambda_.9} parent=5 // pred_region
      %s384 = ssub.s32 %s18, 1
    $region12: #{_lambda_.9} parent=5 // pred_fallthru
      _
    %p385 = scmp.lt.s32.totalorder %s18, 6
    // Predicated region
    $region13: #{_lambda_.9} parent=5 // pred_check
      %p386 = pneg %p385
    $region14: #{_lambda_.9} parent=5 // pred_check_branch
      %388 = sbr.rel (%p386) target = $region16
    $region15: #{_lambda_.9} parent=5 // pred_region
      // Predicated region
      $region17: #{_lambda_.9} parent=15 // pred_check
        %p389 = pneg %p50
      $region18: #{_lambda_.9} parent=15 // pred_check_branch
        %391 = sbr.rel (%p389) target = $region20
      $region19: #{_lambda_.9} parent=15 // pred_region
        %p392 = scmp.lt.s32.totalorder %s25, 1
        %s393 = scalar_select %p392, %s25, 1
        %s394 = smul.addr %s393, 8
        %s395 = scalar_lea.vmem %s0, %s394
      $region20: #{_lambda_.9} parent=15 // pred_fallthru
        _
      // Predicated region
      $region21: #{_lambda_.9} parent=15 // pred_check
        %p396 = pneg %p76
      $region22: #{_lambda_.9} parent=15 // pred_check_branch
        %398 = sbr.rel (%p396) target = $region24
      $region23: #{_lambda_.9} parent=15 // pred_region
        %p399 = scmp.lt.s32.totalorder %s25, 1
        %s400 = scalar_select %p399, %s25, 1
        %s401 = scalar_lea.vmem %s1, %s400
      $region24: #{_lambda_.9} parent=15 // pred_fallthru
        _
      // Predicated region
      $region25: #{_lambda_.9} parent=15 // pred_check
        %p402 = pneg %p102
      $region26: #{_lambda_.9} parent=15 // pred_check_branch
        %404 = sbr.rel (%p402) target = $region28
      $region27: #{_lambda_.9} parent=15 // pred_region
        %p405 = scmp.lt.s32.totalorder %s26, 2
        %s406 = scalar_select %p405, %s26, 2
        %s407 = smul.addr %s406, 12
        %s408 = smul.addr %s407, 4
        %s409 = scalar_lea.vmem %s2, %s408
      $region28: #{_lambda_.9} parent=15 // pred_fallthru
        _
      // Predicated region
      $region29: #{_lambda_.9} parent=15 // pred_check
        %p410 = pneg %p128
      $region30: #{_lambda_.9} parent=15 // pred_check_branch
        %412 = sbr.rel (%p410) target = $region32
      $region31: #{_lambda_.9} parent=15 // pred_region
        %p413 = scmp.lt.s32.totalorder %s26, 2
        %s414 = scalar_select %p413, %s26, 2
        %s415 = scalar_lea.vmem %s3, %s414
      $region32: #{_lambda_.9} parent=15 // pred_fallthru
        _
      // Predicated region
      $region33: #{_lambda_.9} parent=15 // pred_check
        %p416 = pneg %p154
      $region34: #{_lambda_.9} parent=15 // pred_check_branch
        %418 = sbr.rel (%p416) target = $region36
      $region35: #{_lambda_.9} parent=15 // pred_region
        %p419 = scmp.lt.s32.totalorder %s26, 2
        %s420 = scalar_select %p419, %s26, 2
        %s421 = scalar_lea.vmem %s4, %s420
      $region36: #{_lambda_.9} parent=15 // pred_fallthru
        _
      // Predicated region
      $region37: #{_lambda_.9} parent=15 // pred_check
        %p422 = pneg %p180
      $region38: #{_lambda_.9} parent=15 // pred_check_branch
        %424 = sbr.rel (%p422) target = $region40
      $region39: #{_lambda_.9} parent=15 // pred_region
        %p425 = scmp.lt.s32.totalorder %s26, 2
        %s426 = scalar_select %p425, %s26, 2
        %s427 = scalar_lea.vmem %s5, %s426
      $region40: #{_lambda_.9} parent=15 // pred_fallthru
        _
      // Predicated region
      $region41: #{_lambda_.9} parent=15 // pred_check
        %p428 = pneg %p206
      $region42: #{_lambda_.9} parent=15 // pred_check_branch
        %430 = sbr.rel (%p428) target = $region44
      $region43: #{_lambda_.9} parent=15 // pred_region
        %p431 = scmp.lt.s32.totalorder %s26, 2
        %s432 = scalar_select %p431, %s26, 2
        %s433 = smul.addr %s432, 12
        %s434 = smul.addr %s433, 4
        %s435 = scalar_lea.vmem %s6, %s434
      $region44: #{_lambda_.9} parent=15 // pred_fallthru
        _
      // Predicated region
      $region45: #{_lambda_.9} parent=15 // pred_check
        %p436 = pneg %p232
      $region46: #{_lambda_.9} parent=15 // pred_check_branch
        %438 = sbr.rel (%p436) target = $region48
      $region47: #{_lambda_.9} parent=15 // pred_region
        %p439 = scmp.lt.s32.totalorder %s26, 2
        %s440 = scalar_select %p439, %s26, 2
        %s441 = scalar_lea.vmem %s7, %s440
      $region48: #{_lambda_.9} parent=15 // pred_fallthru
        _
      // Predicated region
      $region49: #{_lambda_.9} parent=15 // pred_check
        %p442 = pneg %p258
      $region50: #{_lambda_.9} parent=15 // pred_check_branch
        %444 = sbr.rel (%p442) target = $region52
      $region51: #{_lambda_.9} parent=15 // pred_region
        %p445 = scmp.lt.s32.totalorder %s26, 2
        %s446 = scalar_select %p445, %s26, 2
        %s447 = scalar_lea.vmem %s8, %s446
      $region52: #{_lambda_.9} parent=15 // pred_fallthru
        _
      // Predicated region
      $region53: #{_lambda_.9} parent=15 // pred_check
        %p448 = pneg %p284
      $region54: #{_lambda_.9} parent=15 // pred_check_branch
        %450 = sbr.rel (%p448) target = $region56
      $region55: #{_lambda_.9} parent=15 // pred_region
        %p451 = scmp.lt.s32.totalorder %s26, 2
        %s452 = scalar_select %p451, %s26, 2
        %s453 = scalar_lea.vmem %s9, %s452
      $region56: #{_lambda_.9} parent=15 // pred_fallthru
        _
      // Predicated region
      $region57: #{_lambda_.9} parent=15 // pred_check
        %p454 = pneg %p310
      $region58: #{_lambda_.9} parent=15 // pred_check_branch
        %456 = sbr.rel (%p454) target = $region60
      $region59: #{_lambda_.9} parent=15 // pred_region
        %p457 = scmp.lt.s32.totalorder %s26, 2
        %s458 = scalar_select %p457, %s26, 2
        %s459 = scalar_lea.vmem %s10, %s458
      $region60: #{_lambda_.9} parent=15 // pred_fallthru
        _
      // Predicated region
      $region61: #{_lambda_.9} parent=15 // pred_check
        %p460 = pneg %p336
      $region62: #{_lambda_.9} parent=15 // pred_check_branch
        %462 = sbr.rel (%p460) target = $region64
      $region63: #{_lambda_.9} parent=15 // pred_region
        %p463 = scmp.lt.s32.totalorder %s26, 2
        %s464 = scalar_select %p463, %s26, 2
        %s465 = scalar_lea.vmem %s11, %s464
      $region64: #{_lambda_.9} parent=15 // pred_fallthru
        _
    $region16: #{_lambda_.9} parent=5 // pred_fallthru
      _
    %p466 = scmp.le.s32.totalorder 1, %s18
    %p467 = scmp.lt.s32.totalorder %s18, 7
    %p468 = pnand %p466, %p467
    %p469 = pneg %p468
    // Predicated region
    $region65: #{_lambda_.9} parent=5 // pred_check
      _
    $region66: #{_lambda_.9} parent=5 // pred_check_branch
      %471 = sbr.rel (%p468) target = $region68
    $region67: #{_lambda_.9} parent=5 // pred_region
      %s472 = ssub.s32 %s18, 1
      %p473 = scmp.lt.s32.totalorder %s27, 1
      %s474 = scalar_select %p473, %s27, 1
      %s475 = smul.addr %s474, 8
      %s476 = scalar_lea.vmem %s0, %s475
      %p477 = pneg %p56
      %p478 = pneg %p53
      %p479 = scmp.lt.s32.totalorder %s27, 1
      %s480 = scalar_select %p479, %s27, 1
      %s481 = scalar_lea.vmem %s1, %s480
      %p482 = pneg %p82
      %p483 = pneg %p79
      %p484 = scmp.lt.s32.totalorder %s28, 2
      %s485 = scalar_select %p484, %s28, 2
      %s486 = smul.addr %s485, 12
      %s487 = smul.addr %s486, 4
      %s488 = scalar_lea.vmem %s2, %s487
      %p489 = pneg %p108
      %p490 = pneg %p105
      %p491 = scmp.lt.s32.totalorder %s28, 2
      %s492 = scalar_select %p491, %s28, 2
      %s493 = scalar_lea.vmem %s3, %s492
      %p494 = pneg %p134
      %p495 = pneg %p131
      %p496 = scmp.lt.s32.totalorder %s28, 2
      %s497 = scalar_select %p496, %s28, 2
      %s498 = scalar_lea.vmem %s4, %s497
      %p499 = pneg %p160
      %p500 = pneg %p157
      %p501 = scmp.lt.s32.totalorder %s28, 2
      %s502 = scalar_select %p501, %s28, 2
      %s503 = scalar_lea.vmem %s5, %s502
      %p504 = pneg %p186
      %p505 = pneg %p183
      %p506 = scmp.lt.s32.totalorder %s28, 2
      %s507 = scalar_select %p506, %s28, 2
      %s508 = smul.addr %s507, 12
      %s509 = smul.addr %s508, 4
      %s510 = scalar_lea.vmem %s6, %s509
      %p511 = pneg %p212
      %p512 = pneg %p209
      %p513 = scmp.lt.s32.totalorder %s28, 2
      %s514 = scalar_select %p513, %s28, 2
      %s515 = scalar_lea.vmem %s7, %s514
      %p516 = pneg %p238
      %p517 = pneg %p235
      %p518 = scmp.lt.s32.totalorder %s28, 2
      %s519 = scalar_select %p518, %s28, 2
      %s520 = scalar_lea.vmem %s8, %s519
      %p521 = pneg %p264
      %p522 = pneg %p261
      %p523 = scmp.lt.s32.totalorder %s28, 2
      %s524 = scalar_select %p523, %s28, 2
      %s525 = scalar_lea.vmem %s9, %s524
      %p526 = pneg %p290
      %p527 = pneg %p287
      %p528 = scmp.lt.s32.totalorder %s28, 2
      %s529 = scalar_select %p528, %s28, 2
      %s530 = scalar_lea.vmem %s10, %s529
      %p531 = pneg %p316
      %p532 = pneg %p313
      %p533 = scmp.lt.s32.totalorder %s28, 2
      %s534 = scalar_select %p533, %s28, 2
      %s535 = scalar_lea.vmem %s11, %s534
      %p536 = pneg %p342
      %p537 = pneg %p339
      %p538 = pneg %p370
      %p539 = pneg %p367
      %p540 = scmp.lt.s32.totalorder %s28, 2
      %s541 = scalar_select %p540, %s28, 2
      %p542 = scmp.lt.s32.totalorder %s27, 1
      %s543 = scalar_select %p542, %s27, 1
      %s544 = smul.addr %s541, 2
      %s545 = sadd.s32 %s543, %s544
      %s546 = scalar_lea.vmem %s12, %s545
      %p547 = scmp.lt.s32.totalorder %s27, 1
      %s548 = scalar_select %p547, %s27, 1
      %s549 = smul.addr %s548, 8
      %s550 = scalar_lea.vmem %s0, %s549
      %p551 = scmp.lt.s32.totalorder %s27, 1
      %s552 = scalar_select %p551, %s27, 1
      %s553 = scalar_lea.vmem %s1, %s552
      %p554 = scmp.lt.s32.totalorder %s28, 2
      %s555 = scalar_select %p554, %s28, 2
      %s556 = smul.addr %s555, 12
      %s557 = smul.addr %s556, 4
      %s558 = scalar_lea.vmem %s2, %s557
      %p559 = scmp.lt.s32.totalorder %s28, 2
      %s560 = scalar_select %p559, %s28, 2
      %s561 = scalar_lea.vmem %s3, %s560
      %p562 = scmp.lt.s32.totalorder %s28, 2
      %s563 = scalar_select %p562, %s28, 2
      %s564 = scalar_lea.vmem %s4, %s563
      %p565 = scmp.lt.s32.totalorder %s28, 2
      %s566 = scalar_select %p565, %s28, 2
      %s567 = scalar_lea.vmem %s5, %s566
      %p568 = scmp.lt.s32.totalorder %s28, 2
      %s569 = scalar_select %p568, %s28, 2
      %s570 = smul.addr %s569, 12
      %s571 = smul.addr %s570, 4
      %s572 = scalar_lea.vmem %s6, %s571
      %p573 = scmp.lt.s32.totalorder %s28, 2
      %s574 = scalar_select %p573, %s28, 2
      %s575 = scalar_lea.vmem %s7, %s574
      %p576 = scmp.lt.s32.totalorder %s28, 2
      %s577 = scalar_select %p576, %s28, 2
      %s578 = scalar_lea.vmem %s8, %s577
      %p579 = scmp.lt.s32.totalorder %s28, 2
      %s580 = scalar_select %p579, %s28, 2
      %s581 = scalar_lea.vmem %s9, %s580
      %p582 = scmp.lt.s32.totalorder %s28, 2
      %s583 = scalar_select %p582, %s28, 2
      %s584 = scalar_lea.vmem %s10, %s583
      %p585 = scmp.lt.s32.totalorder %s28, 2
      %s586 = scalar_select %p585, %s28, 2
      %s587 = scalar_lea.vmem %s11, %s586
      %p588 = scmp.lt.s32.totalorder %s28, 2
      %s589 = scalar_select %p588, %s28, 2
      %p590 = scmp.lt.s32.totalorder %s27, 1
      %s591 = scalar_select %p590, %s27, 1
      %s592 = smul.addr %s589, 2
      %s593 = sadd.s32 %s591, %s592
      %s594 = scalar_lea.vmem %s12, %s593
      %vm596 = vcmask 253952
      %597 = vst.msk [vmem:[#allocation2] sm:$0x1] %vm596, 0.0
      %598 = vst.msk [vmem:[#allocation2 + $0x9] sm:$0x1] %vm596, 0.0
      %v599 = vld [vmem:[%s550] sm:$0xff]
      %vm600 = vcmask 261120
      %601 = vst.msk [vmem:[#allocation2 + $0x1] sm:$0xff] %vm600, %v599
      %v602 = vld [vmem:[#allocation2] sm:$0xff]
      %v603 = vpack.c.bf16 %v602, %v602
      %v604 = vld [vmem:[%s558] sm:$0xf]
      %v605 = vld [vmem:[%s558 + $0x4] sm:$0xf]
      %v606 = vld [vmem:[%s558 + $0x8] sm:$0xf]
      %v607 = vld [vmem:[%s558 + $0xc] sm:$0xf]
      %v608 = vld [vmem:[#allocation2 + $0x1] sm:$0xff]
      %v609 = vpack.c.bf16 %v608, %v608
      %s610 = scalar_lea.vmem %s558, 16
      %v611 = vld [vmem:[%s610] sm:$0xf]
      %v612 = vld [vmem:[%s610 + $0x4] sm:$0xf]
      %v613 = vld [vmem:[%s610 + $0x8] sm:$0xf]
      %v614 = vld [vmem:[%s610 + $0xc] sm:$0xf]
      %v619 = vunpack.c.l.b16 %v611
      %v620 = vunpack.c.l.b16 %v612
      %v621 = vunpack.c.l.b16 %v613
      %v622 = vunpack.c.l.b16 %v614
      %v623 = vpack.c.b16 %v620, %v619
      %v624 = vpack.c.b16 %v622, %v621
      %v628 = vsel %vm600, %v609, 0
      %630 = vmatprep.subr.bf16.mxu0 0
      %631 = vmatpush1.bf16.msra.mxu0 %v623
      %632 = vmatprep.subr.bf16.mxu0 0
      %633 = vmatpush1.bf16.msra.mxu0 %v624
      %634 = vmatprep.subr.bf16.mxu0 0
      %635 = vmatpush1.bf16.msra.mxu0 0
      %636 = vmatprep.subr.bf16.mxu0 0
      %637 = vmatpush1.bf16.msra.mxu0 0
      %638 = vmatprep.subr.bf16.mxu0 0
      %639 = vmatpush1.bf16.msra.mxu0 0
      %640 = vmatprep.subr.bf16.mxu0 0
      %641 = vmatpush1.bf16.msra.mxu0 0
      %642 = vmatprep.subr.bf16.mxu0 0
      %643 = vmatpush1.bf16.msra.mxu0 0
      %644 = vmatprep.subr.bf16.mxu0 0
      %645 = vmatpush1.bf16.msra.mxu0 0
      %646 = vmatprep.subr.bf16.mxu0 0
      %647 = vmatpush1.bf16.msra.mxu0 0
      %648 = vmatprep.subr.bf16.mxu0 0
      %649 = vmatpush1.bf16.msra.mxu0 0
      %650 = vmatprep.subr.bf16.mxu0 0
      %651 = vmatpush1.bf16.msra.mxu0 0
      %652 = vmatprep.subr.bf16.mxu0 0
      %653 = vmatpush1.bf16.msra.mxu0 0
      %654 = vmatprep.subr.bf16.mxu0 0
      %655 = vmatpush1.bf16.msra.mxu0 0
      %656 = vmatprep.subr.bf16.mxu0 0
      %657 = vmatpush1.bf16.msra.mxu0 0
      %658 = vmatprep.subr.bf16.mxu0 0
      %659 = vmatpush1.bf16.msra.mxu0 0
      %660 = vmatprep.subr.bf16.mxu0 0
      %661 = vmatpush1.bf16.msra.mxu0 0
      %662 = vmatprep.mubr.bf16.mxu0 0
      %663 = vmatmul.mubr.bf16.gmra.mrb[0].mxu0 %v628
      %v664 = vpop.f32.mrb[0].mxu0
      %v665 = vadd.f32 0.0, %v664
      %v666 = vpop.f32.mrb[0].mxu0
      %v667 = vpop.f32.mrb[0].mxu0
      %v668 = vpop.f32.mrb[0].mxu0
      %669 = vdwg.mxu0
      %v674 = vunpack.c.l.b16 %v604
      %v675 = vunpack.c.l.b16 %v605
      %v676 = vunpack.c.l.b16 %v606
      %v677 = vunpack.c.l.b16 %v607
      %v678 = vpack.c.b16 %v675, %v674
      %v679 = vpack.c.b16 %v677, %v676
      %v683 = vsel %vm600, %v603, 0
      %685 = vmatprep.subr.bf16.mxu0 0
      %686 = vmatpush1.bf16.msra.mxu0 %v678
      %687 = vmatprep.subr.bf16.mxu0 0
      %688 = vmatpush1.bf16.msra.mxu0 %v679
      %689 = vmatprep.subr.bf16.mxu0 0
      %690 = vmatpush1.bf16.msra.mxu0 0
      %691 = vmatprep.subr.bf16.mxu0 0
      %692 = vmatpush1.bf16.msra.mxu0 0
      %693 = vmatprep.subr.bf16.mxu0 0
      %694 = vmatpush1.bf16.msra.mxu0 0
      %695 = vmatprep.subr.bf16.mxu0 0
      %696 = vmatpush1.bf16.msra.mxu0 0
      %697 = vmatprep.subr.bf16.mxu0 0
      %698 = vmatpush1.bf16.msra.mxu0 0
      %699 = vmatprep.subr.bf16.mxu0 0
      %700 = vmatpush1.bf16.msra.mxu0 0
      %701 = vmatprep.subr.bf16.mxu0 0
      %702 = vmatpush1.bf16.msra.mxu0 0
      %703 = vmatprep.subr.bf16.mxu0 0
      %704 = vmatpush1.bf16.msra.mxu0 0
      %705 = vmatprep.subr.bf16.mxu0 0
      %706 = vmatpush1.bf16.msra.mxu0 0
      %707 = vmatprep.subr.bf16.mxu0 0
      %708 = vmatpush1.bf16.msra.mxu0 0
      %709 = vmatprep.subr.bf16.mxu0 0
      %710 = vmatpush1.bf16.msra.mxu0 0
      %711 = vmatprep.subr.bf16.mxu0 0
      %712 = vmatpush1.bf16.msra.mxu0 0
      %713 = vmatprep.subr.bf16.mxu0 0
      %714 = vmatpush1.bf16.msra.mxu0 0
      %715 = vmatprep.subr.bf16.mxu0 0
      %716 = vmatpush1.bf16.msra.mxu0 0
      %717 = vmatprep.mubr.bf16.mxu0 0
      %718 = vmatmul.mubr.bf16.gmra.mrb[0].mxu0 %v683
      %v719 = vpop.f32.mrb[0].mxu0
      %v720 = vadd.f32 %v665, %v719
      %v721 = vpop.f32.mrb[0].mxu0
      %v722 = vpop.f32.mrb[0].mxu0
      %v723 = vpop.f32.mrb[0].mxu0
      %724 = vdwg.mxu0
      %v725 = vld [vmem:[#allocation2 + $0x2] sm:$0xff]
      %v726 = vpack.c.bf16 %v725, %v725
      %s727 = scalar_lea.vmem %s558, 32
      %v728 = vld [vmem:[%s727] sm:$0xf]
      %v729 = vld [vmem:[%s727 + $0x4] sm:$0xf]
      %v730 = vld [vmem:[%s727 + $0x8] sm:$0xf]
      %v731 = vld [vmem:[%s727 + $0xc] sm:$0xf]
      %v736 = vunpack.c.l.b16 %v728
      %v737 = vunpack.c.l.b16 %v729
      %v738 = vunpack.c.l.b16 %v730
      %v739 = vunpack.c.l.b16 %v731
      %v740 = vpack.c.b16 %v737, %v736
      %v741 = vpack.c.b16 %v739, %v738
      %v745 = vsel %vm600, %v726, 0
      %747 = vmatprep.subr.bf16.mxu0 0
      %748 = vmatpush1.bf16.msra.mxu0 %v740
      %749 = vmatprep.subr.bf16.mxu0 0
      %750 = vmatpush1.bf16.msra.mxu0 %v741
      %751 = vmatprep.subr.bf16.mxu0 0
      %752 = vmatpush1.bf16.msra.mxu0 0
      %753 = vmatprep.subr.bf16.mxu0 0
      %754 = vmatpush1.bf16.msra.mxu0 0
      %755 = vmatprep.subr.bf16.mxu0 0
      %756 = vmatpush1.bf16.msra.mxu0 0
      %757 = vmatprep.subr.bf16.mxu0 0
      %758 = vmatpush1.bf16.msra.mxu0 0
      %759 = vmatprep.subr.bf16.mxu0 0
      %760 = vmatpush1.bf16.msra.mxu0 0
      %761 = vmatprep.subr.bf16.mxu0 0
      %762 = vmatpush1.bf16.msra.mxu0 0
      %763 = vmatprep.subr.bf16.mxu0 0
      %764 = vmatpush1.bf16.msra.mxu0 0
      %765 = vmatprep.subr.bf16.mxu0 0
      %766 = vmatpush1.bf16.msra.mxu0 0
      %767 = vmatprep.subr.bf16.mxu0 0
      %768 = vmatpush1.bf16.msra.mxu0 0
      %769 = vmatprep.subr.bf16.mxu0 0
      %770 = vmatpush1.bf16.msra.mxu0 0
      %771 = vmatprep.subr.bf16.mxu0 0
      %772 = vmatpush1.bf16.msra.mxu0 0
      %773 = vmatprep.subr.bf16.mxu0 0
      %774 = vmatpush1.bf16.msra.mxu0 0
      %775 = vmatprep.subr.bf16.mxu0 0
      %776 = vmatpush1.bf16.msra.mxu0 0
      %777 = vmatprep.subr.bf16.mxu0 0
      %778 = vmatpush1.bf16.msra.mxu0 0
      %779 = vmatprep.mubr.bf16.mxu0 0
      %780 = vmatmul.mubr.bf16.gmra.mrb[0].mxu0 %v745
      %v781 = vpop.f32.mrb[0].mxu0
      %v782 = vadd.f32 0.0, %v781
      %v783 = vpop.f32.mrb[0].mxu0
      %v784 = vpop.f32.mrb[0].mxu0
      %v785 = vpop.f32.mrb[0].mxu0
      %786 = vdwg.mxu0
      %v787 = vadd.f32 %v720, %v782
      %v788 = vld [vmem:[%s561] sm:$0x1]
      %v790 = vlaneseq
      %v791 = vshrl.u32 %v790, 7
      %v792 = vsub.s32 0, %v791
      %v793 = vrot.slane %v788, %v792
      %v795 = vadd.f32 %v787, %v793
      %v796 = vmax.f32 %v795, 0.0
      %v797 = vld [vmem:[%s564] sm:$0x1]
      %v798 = vld [vmem:[%s567] sm:$0x1]
      %v799 = vsel %vm600, %v796, 0.0
      %800 = vadd.xlane.f32.xlu0 %v799
      %v801 = vpop.xlane.xlu0 %800
      %v802 = vrcp.pop 32.0
      %v803 = vmul.f32 %v801, %v802
      %v804 = vsub.f32 %v796, %v803
      %v805 = vmul.f32 %v804, %v804
      %v806 = vsel %vm600, %v805, 0.0
      %807 = vadd.xlane.f32.xlu0 %v806
      %v808 = vpop.xlane.xlu0 %807
      %v809 = vmul.f32 %v808, %v802
      %v810 = vadd.f32 %v809, 1e-05
      %v811 = vrsqrt.pop %v810
      %v812 = vmul.f32 %v804, %v811
      %v814 = vlaneseq
      %v815 = vshrl.u32 %v814, 7
      %v816 = vsub.s32 0, %v815
      %v817 = vrot.slane %v797, %v816
      %v819 = vmul.f32 %v812, %v817
      %v821 = vlaneseq
      %v822 = vshrl.u32 %v821, 7
      %v823 = vsub.s32 0, %v822
      %v824 = vrot.slane %v798, %v823
      %v826 = vadd.f32 %v819, %v824
      %827 = vst.msk [vmem:[#allocation2 + $0x1] sm:$0xff] %vm600, %v826
      %v828 = vld [vmem:[#allocation2] sm:$0xff]
      %v829 = vpack.c.bf16 %v828, %v828
      %v830 = vld [vmem:[%s572] sm:$0xf]
      %v831 = vld [vmem:[%s572 + $0x4] sm:$0xf]
      %v832 = vld [vmem:[%s572 + $0x8] sm:$0xf]
      %v833 = vld [vmem:[%s572 + $0xc] sm:$0xf]
      %v834 = vld [vmem:[#allocation2 + $0x1] sm:$0xff]
      %v835 = vpack.c.bf16 %v834, %v834
      %s836 = scalar_lea.vmem %s572, 16
      %v837 = vld [vmem:[%s836] sm:$0xf]
      %v838 = vld [vmem:[%s836 + $0x4] sm:$0xf]
      %v839 = vld [vmem:[%s836 + $0x8] sm:$0xf]
      %v840 = vld [vmem:[%s836 + $0xc] sm:$0xf]
      %v845 = vunpack.c.l.b16 %v837
      %v846 = vunpack.c.l.b16 %v838
      %v847 = vunpack.c.l.b16 %v839
      %v848 = vunpack.c.l.b16 %v840
      %v849 = vpack.c.b16 %v846, %v845
      %v850 = vpack.c.b16 %v848, %v847
      %v854 = vsel %vm600, %v835, 0
      %856 = vmatprep.subr.bf16.mxu0 0
      %857 = vmatpush1.bf16.msra.mxu0 %v849
      %858 = vmatprep.subr.bf16.mxu0 0
      %859 = vmatpush1.bf16.msra.mxu0 %v850
      %860 = vmatprep.subr.bf16.mxu0 0
      %861 = vmatpush1.bf16.msra.mxu0 0
      %862 = vmatprep.subr.bf16.mxu0 0
      %863 = vmatpush1.bf16.msra.mxu0 0
      %864 = vmatprep.subr.bf16.mxu0 0
      %865 = vmatpush1.bf16.msra.mxu0 0
      %866 = vmatprep.subr.bf16.mxu0 0
      %867 = vmatpush1.bf16.msra.mxu0 0
      %868 = vmatprep.subr.bf16.mxu0 0
      %869 = vmatpush1.bf16.msra.mxu0 0
      %870 = vmatprep.subr.bf16.mxu0 0
      %871 = vmatpush1.bf16.msra.mxu0 0
      %872 = vmatprep.subr.bf16.mxu0 0
      %873 = vmatpush1.bf16.msra.mxu0 0
      %874 = vmatprep.subr.bf16.mxu0 0
      %875 = vmatpush1.bf16.msra.mxu0 0
      %876 = vmatprep.subr.bf16.mxu0 0
      %877 = vmatpush1.bf16.msra.mxu0 0
      %878 = vmatprep.subr.bf16.mxu0 0
      %879 = vmatpush1.bf16.msra.mxu0 0
      %880 = vmatprep.subr.bf16.mxu0 0
      %881 = vmatpush1.bf16.msra.mxu0 0
      %882 = vmatprep.subr.bf16.mxu0 0
      %883 = vmatpush1.bf16.msra.mxu0 0
      %884 = vmatprep.subr.bf16.mxu0 0
      %885 = vmatpush1.bf16.msra.mxu0 0
      %886 = vmatprep.subr.bf16.mxu0 0
      %887 = vmatpush1.bf16.msra.mxu0 0
      %888 = vmatprep.mubr.bf16.mxu0 0
      %889 = vmatmul.mubr.bf16.gmra.mrb[0].mxu0 %v854
      %v890 = vpop.f32.mrb[0].mxu0
      %v891 = vadd.f32 0.0, %v890
      %v892 = vpop.f32.mrb[0].mxu0
      %v893 = vpop.f32.mrb[0].mxu0
      %v894 = vpop.f32.mrb[0].mxu0
      %895 = vdwg.mxu0
      %v900 = vunpack.c.l.b16 %v830
      %v901 = vunpack.c.l.b16 %v831
      %v902 = vunpack.c.l.b16 %v832
      %v903 = vunpack.c.l.b16 %v833
      %v904 = vpack.c.b16 %v901, %v900
      %v905 = vpack.c.b16 %v903, %v902
      %v909 = vsel %vm600, %v829, 0
      %911 = vmatprep.subr.bf16.mxu0 0
      %912 = vmatpush1.bf16.msra.mxu0 %v904
      %913 = vmatprep.subr.bf16.mxu0 0
      %914 = vmatpush1.bf16.msra.mxu0 %v905
      %915 = vmatprep.subr.bf16.mxu0 0
      %916 = vmatpush1.bf16.msra.mxu0 0
      %917 = vmatprep.subr.bf16.mxu0 0
      %918 = vmatpush1.bf16.msra.mxu0 0
      %919 = vmatprep.subr.bf16.mxu0 0
      %920 = vmatpush1.bf16.msra.mxu0 0
      %921 = vmatprep.subr.bf16.mxu0 0
      %922 = vmatpush1.bf16.msra.mxu0 0
      %923 = vmatprep.subr.bf16.mxu0 0
      %924 = vmatpush1.bf16.msra.mxu0 0
      %925 = vmatprep.subr.bf16.mxu0 0
      %926 = vmatpush1.bf16.msra.mxu0 0
      %927 = vmatprep.subr.bf16.mxu0 0
      %928 = vmatpush1.bf16.msra.mxu0 0
      %929 = vmatprep.subr.bf16.mxu0 0
      %930 = vmatpush1.bf16.msra.mxu0 0
      %931 = vmatprep.subr.bf16.mxu0 0
      %932 = vmatpush1.bf16.msra.mxu0 0
      %933 = vmatprep.subr.bf16.mxu0 0
      %934 = vmatpush1.bf16.msra.mxu0 0
      %935 = vmatprep.subr.bf16.mxu0 0
      %936 = vmatpush1.bf16.msra.mxu0 0
      %937 = vmatprep.subr.bf16.mxu0 0
      %938 = vmatpush1.bf16.msra.mxu0 0
      %939 = vmatprep.subr.bf16.mxu0 0
      %940 = vmatpush1.bf16.msra.mxu0 0
      %941 = vmatprep.subr.bf16.mxu0 0
      %942 = vmatpush1.bf16.msra.mxu0 0
      %943 = vmatprep.mubr.bf16.mxu0 0
      %944 = vmatmul.mubr.bf16.gmra.mrb[0].mxu0 %v909
      %v945 = vpop.f32.mrb[0].mxu0
      %v946 = vadd.f32 %v891, %v945
      %v947 = vpop.f32.mrb[0].mxu0
      %v948 = vpop.f32.mrb[0].mxu0
      %v949 = vpop.f32.mrb[0].mxu0
      %950 = vdwg.mxu0
      %v951 = vld [vmem:[#allocation2 + $0x2] sm:$0xff]
      %v952 = vpack.c.bf16 %v951, %v951
      %s953 = scalar_lea.vmem %s572, 32
      %v954 = vld [vmem:[%s953] sm:$0xf]
      %v955 = vld [vmem:[%s953 + $0x4] sm:$0xf]
      %v956 = vld [vmem:[%s953 + $0x8] sm:$0xf]
      %v957 = vld [vmem:[%s953 + $0xc] sm:$0xf]
      %v962 = vunpack.c.l.b16 %v954
      %v963 = vunpack.c.l.b16 %v955
      %v964 = vunpack.c.l.b16 %v956
      %v965 = vunpack.c.l.b16 %v957
      %v966 = vpack.c.b16 %v963, %v962
      %v967 = vpack.c.b16 %v965, %v964
      %v971 = vsel %vm600, %v952, 0
      %973 = vmatprep.subr.bf16.mxu0 0
      %974 = vmatpush1.bf16.msra.mxu0 %v966
      %975 = vmatprep.subr.bf16.mxu0 0
      %976 = vmatpush1.bf16.msra.mxu0 %v967
      %977 = vmatprep.subr.bf16.mxu0 0
      %978 = vmatpush1.bf16.msra.mxu0 0
      %979 = vmatprep.subr.bf16.mxu0 0
      %980 = vmatpush1.bf16.msra.mxu0 0
      %981 = vmatprep.subr.bf16.mxu0 0
      %982 = vmatpush1.bf16.msra.mxu0 0
      %983 = vmatprep.subr.bf16.mxu0 0
      %984 = vmatpush1.bf16.msra.mxu0 0
      %985 = vmatprep.subr.bf16.mxu0 0
      %986 = vmatpush1.bf16.msra.mxu0 0
      %987 = vmatprep.subr.bf16.mxu0 0
      %988 = vmatpush1.bf16.msra.mxu0 0
      %989 = vmatprep.subr.bf16.mxu0 0
      %990 = vmatpush1.bf16.msra.mxu0 0
      %991 = vmatprep.subr.bf16.mxu0 0
      %992 = vmatpush1.bf16.msra.mxu0 0
      %993 = vmatprep.subr.bf16.mxu0 0
      %994 = vmatpush1.bf16.msra.mxu0 0
      %995 = vmatprep.subr.bf16.mxu0 0
      %996 = vmatpush1.bf16.msra.mxu0 0
      %997 = vmatprep.subr.bf16.mxu0 0
      %998 = vmatpush1.bf16.msra.mxu0 0
      %999 = vmatprep.subr.bf16.mxu0 0
      %1000 = vmatpush1.bf16.msra.mxu0 0
      %1001 = vmatprep.subr.bf16.mxu0 0
      %1002 = vmatpush1.bf16.msra.mxu0 0
      %1003 = vmatprep.subr.bf16.mxu0 0
      %1004 = vmatpush1.bf16.msra.mxu0 0
      %1005 = vmatprep.mubr.bf16.mxu0 0
      %1006 = vmatmul.mubr.bf16.gmra.mrb[0].mxu0 %v971
      %v1007 = vpop.f32.mrb[0].mxu0
      %v1008 = vadd.f32 0.0, %v1007
      %v1009 = vpop.f32.mrb[0].mxu0
      %v1010 = vpop.f32.mrb[0].mxu0
      %v1011 = vpop.f32.mrb[0].mxu0
      %1012 = vdwg.mxu0
      %v1013 = vadd.f32 %v946, %v1008
      %v1014 = vld [vmem:[%s575] sm:$0x1]
      %v1016 = vlaneseq
      %v1017 = vshrl.u32 %v1016, 7
      %v1018 = vsub.s32 0, %v1017
      %v1019 = vrot.slane %v1014, %v1018
      %v1021 = vadd.f32 %v1013, %v1019
      %v1022 = vmax.f32 %v1021, 0.0
      %v1023 = vld [vmem:[%s578] sm:$0x1]
      %v1024 = vld [vmem:[%s581] sm:$0x1]
      %v1025 = vsel %vm600, %v1022, 0.0
      %1026 = vadd.xlane.f32.xlu0 %v1025
      %v1027 = vpop.xlane.xlu0 %1026
      %v1028 = vmul.f32 %v1027, %v802
      %v1029 = vsub.f32 %v1022, %v1028
      %v1030 = vmul.f32 %v1029, %v1029
      %v1031 = vsel %vm600, %v1030, 0.0
      %1032 = vadd.xlane.f32.xlu0 %v1031
      %v1033 = vpop.xlane.xlu0 %1032
      %v1034 = vmul.f32 %v1033, %v802
      %v1035 = vadd.f32 %v1034, 1e-05
      %v1036 = vrsqrt.pop %v1035
      %v1037 = vmul.f32 %v1029, %v1036
      %v1039 = vlaneseq
      %v1040 = vshrl.u32 %v1039, 7
      %v1041 = vsub.s32 0, %v1040
      %v1042 = vrot.slane %v1023, %v1041
      %v1044 = vmul.f32 %v1037, %v1042
      %v1046 = vlaneseq
      %v1047 = vshrl.u32 %v1046, 7
      %v1048 = vsub.s32 0, %v1047
      %v1049 = vrot.slane %v1024, %v1048
      %v1051 = vadd.f32 %v1044, %v1049
      %v1052 = vld [vmem:[%s584] sm:$0x1]
      %v1053 = vld [vmem:[%s587] sm:$0x1]
      %1055 = vset.pattern.permute.xlu0 0
      %1056 = vperm.xlu0 %1055, %v1053
      %v1057 = vpop.permute.xlu0 %1056
      %v1059 = vlaneseq
      %v1060 = vshrl.u32 %v1059, 7
      %v1061 = vsub.s32 0, %v1060
      %v1062 = vrot.slane %v1057, %v1061
      %v1064 = vsel %vm600, %v1052, 0
      %v1067 = vsel %vm600, %v1051, 0
      %1069 = vmatprep.subr.mxu0 0.0
      %1070 = vmatpush1.xpose.msra.mxu0 %v1067
      %1071 = vmatprep.subr.mxu0 0.0
      %1072 = vmatpush1.xpose.msra.mxu0 0.0
      %1073 = vmatprep.subr.mxu0 0.0
      %1074 = vmatpush1.xpose.msra.mxu0 0.0
      %1075 = vmatprep.subr.mxu0 0.0
      %1076 = vmatpush1.xpose.msra.mxu0 0.0
      %1077 = vmatprep.subr.mxu0 0.0
      %1078 = vmatpush1.xpose.msra.mxu0 0.0
      %1079 = vmatprep.subr.mxu0 0.0
      %1080 = vmatpush1.xpose.msra.mxu0 0.0
      %1081 = vmatprep.subr.mxu0 0.0
      %1082 = vmatpush1.xpose.msra.mxu0 0.0
      %1083 = vmatprep.subr.mxu0 0.0
      %1084 = vmatpush1.xpose.msra.mxu0 0.0
      %1085 = vmatprep.subr.mxu0 0.0
      %1086 = vmatpush1.xpose.msra.mxu0 0.0
      %1087 = vmatprep.subr.mxu0 0.0
      %1088 = vmatpush1.xpose.msra.mxu0 0.0
      %1089 = vmatprep.subr.mxu0 0.0
      %1090 = vmatpush1.xpose.msra.mxu0 0.0
      %1091 = vmatprep.subr.mxu0 0.0
      %1092 = vmatpush1.xpose.msra.mxu0 0.0
      %1093 = vmatprep.subr.mxu0 0.0
      %1094 = vmatpush1.xpose.msra.mxu0 0.0
      %1095 = vmatprep.subr.mxu0 0.0
      %1096 = vmatpush1.xpose.msra.mxu0 0.0
      %1097 = vmatprep.subr.mxu0 0.0
      %1098 = vmatpush1.xpose.msra.mxu0 0.0
      %1099 = vmatprep.subr.mxu0 0.0
      %1100 = vmatpush1.xpose.msra.mxu0 0.0
      %1101 = vmatprep.subr.mxu0 0.0
      %1102 = vmatpush1.xpose.msra.mxu0 0.0
      %1103 = vmatprep.subr.mxu0 0.0
      %1104 = vmatpush1.xpose.msra.mxu0 0.0
      %1105 = vmatprep.subr.mxu0 0.0
      %1106 = vmatpush1.xpose.msra.mxu0 0.0
      %1107 = vmatprep.subr.mxu0 0.0
      %1108 = vmatpush1.xpose.msra.mxu0 0.0
      %1109 = vmatprep.subr.mxu0 0.0
      %1110 = vmatpush1.xpose.msra.mxu0 0.0
      %1111 = vmatprep.subr.mxu0 0.0
      %1112 = vmatpush1.xpose.msra.mxu0 0.0
      %1113 = vmatprep.subr.mxu0 0.0
      %1114 = vmatpush1.xpose.msra.mxu0 0.0
      %1115 = vmatprep.subr.mxu0 0.0
      %1116 = vmatpush1.xpose.msra.mxu0 0.0
      %1117 = vmatprep.subr.mxu0 0.0
      %1118 = vmatpush1.xpose.msra.mxu0 0.0
      %1119 = vmatprep.subr.mxu0 0.0
      %1120 = vmatpush1.xpose.msra.mxu0 0.0
      %1121 = vmatprep.subr.mxu0 0.0
      %1122 = vmatpush1.xpose.msra.mxu0 0.0
      %1123 = vmatprep.subr.mxu0 0.0
      %1124 = vmatpush1.xpose.msra.mxu0 0.0
      %1125 = vmatprep.subr.mxu0 0.0
      %1126 = vmatpush1.xpose.msra.mxu0 0.0
      %1127 = vmatprep.subr.mxu0 0.0
      %1128 = vmatpush1.xpose.msra.mxu0 0.0
      %1129 = vmatprep.subr.mxu0 0.0
      %1130 = vmatpush1.xpose.msra.mxu0 0.0
      %1131 = vmatprep.subr.mxu0 0.0
      %1132 = vmatpush1.xpose.msra.mxu0 0.0
      %1133 = vmatprep.mubr.f32.mxu0 0.0
      %1134 = vmatmul.mubr.f32.gmra.mrb[0].mxu0 %v1064
      %v1135 = vpop.f32.mrb[0].mxu0
      %v1136 = vadd.f32 %v1062, %v1135
      %v1137 = vpop.f32.mrb[0].mxu0
      %1138 = vdwg.mxu0
      %v1139 = vld [vmem:[%s553] sm:$0x1]
      %v1140 = vmul.f32 %v1136, %v1139
      %vm1141 = vcmask 57344
      %1142 = vst.msk [vmem:[%s594] sm:$0x1] %vm1141, %v1140
      %p1143 = scmp.lt.s32.totalorder %s28, 2
      %s1144 = scalar_select %p1143, %s28, 2
      %p1145 = scmp.lt.s32.totalorder %s27, 1
      %s1146 = scalar_select %p1145, %s27, 1
      %s1147 = smul.addr %s1144, 2
      %s1148 = sadd.s32 %s1146, %s1147
      %s1149 = scalar_lea.vmem %s12, %s1148
      // Predicated region
      $region69: #{_lambda_.9} parent=67 // pred_check
        %p1150 = pneg %p367
      $region70: #{_lambda_.9} parent=67 // pred_check_branch
        %1152 = sbr.rel (%p1150) target = $region72
      $region71: #{_lambda_.9} parent=67 // pred_region
        _
      $region72: #{_lambda_.9} parent=67 // pred_fallthru
        _
    $region68: #{_lambda_.9} parent=5 // pred_fallthru
      _
    %p1153 = scmp.le.s32.totalorder 2, %s18
    // Predicated region
    $region73: #{_lambda_.9} parent=5 // pred_check
      %p1154 = pneg %p1153
    $region74: #{_lambda_.9} parent=5 // pred_check_branch
      %1156 = sbr.rel (%p1154) target = $region76
    $region75: #{_lambda_.9} parent=5 // pred_region
      %s1157 = ssub.s32 %s18, 2
      // Predicated region
      $region77: #{_lambda_.9} parent=75 // pred_check
        %p1158 = pneg %p373
      $region78: #{_lambda_.9} parent=75 // pred_check_branch
        %1160 = sbr.rel (%p1158) target = $region80
      $region79: #{_lambda_.9} parent=75 // pred_region
        %p1161 = scmp.lt.s32.totalorder %s30, 2
        %s1162 = scalar_select %p1161, %s30, 2
        %p1163 = scmp.lt.s32.totalorder %s29, 1
        %s1164 = scalar_select %p1163, %s29, 1
        %s1165 = smul.addr %s1162, 2
        %s1166 = sadd.s32 %s1164, %s1165
        %s1167 = scalar_lea.vmem %s12, %s1166
      $region80: #{_lambda_.9} parent=75 // pred_fallthru
        _
    $region76: #{_lambda_.9} parent=5 // pred_fallthru
      _
  $region6: #{_lambda_.9} parent=0 // loop_footer
    %s22 = sadd.s32 1, %s18
  $region7: #{_lambda_.9} parent=0 // loop_footer_branch
    %17 = sbr.rel target = $region3
  $region8: #{_lambda_.9} parent=0 // loop_exit
    _

// kernel: _lambda_.13
$region0: #{_lambda_.13}
  #allocation0 [shape = 'u32[]', space=smem, size = 0x4, offset = 0x4, fixed_abs, tag = 'smem constant byte address 0x4 - core index']
  #allocation1 [shape = 'u32[144,128]{1,0:T(1,128)}', space=vmem, size = 0x12000, scoped, tag = 'internal scratch']
  #allocation2 [shape = 'f32[20,32]{1,0:T(8,128)}', space=vmem, size = 0x3000, scoped, tag = 'scratch operand']
  %s0 = inlined_call_operand.vmem [shape: f32[2,16,16], index: 0, kind: input, shape index: {}]
  %s1 = inlined_call_operand.vmem [shape: bf16[5,16,32], index: 1, kind: input, shape index: {}]
  %s2 = inlined_call_operand.vmem [shape: f32[1,32], index: 2, kind: input, shape index: {}]
  %s3 = inlined_call_operand.vmem [shape: bf16[5,32,32], index: 3, kind: input, shape index: {}]
  %s4 = inlined_call_operand.vmem [shape: f32[1,32], index: 4, kind: input, shape index: {}]
  %s5 = inlined_call_operand.vmem [shape: bf16[5,32,16], index: 5, kind: input, shape index: {}]
  %s6 = inlined_call_operand.vmem [shape: f32[1,16], index: 6, kind: input, shape index: {}]
  %s7 = inlined_call_operand.hbm [shape: f32[2,16,16], index: 7, kind: output, shape index: {}]
  %s8 = sld [smem:[#allocation0]]
  $region61: #{_lambda_.13} parent=0
    _
  %s10 = ssub.s32 1, %s8
  %s11 = scalar_select 0, %s10, %s8
  $region1: #{_lambda_.13} parent=0
    #allocation3 [shape = 'u8[16384]{0}', space=vmem, size = 0x4000, scoped, tag = 'output window, operand 0']
    #allocation4 [shape = 's32[2]{0}', space=sflag, size = 0x8, scoped, tag = 'scoped memory for _lambda_.13']
    %12 = vsyncpa [#allocation4], 0
    %s13 = scalar_lea.sflag [#allocation4], 1
    %14 = vsyncpa %s13, 0
    loop: start=0, step=1, limit=4
    $region2: #{_lambda_.13} parent=1 // loop_pre_header
      _
    $region3: #{_lambda_.13} parent=1 // loop_header
      %s16 = sphi 0, %s20
      %p17 = scmp.ge.s32.totalorder %s16, 4
      %s26 = sphi 0, %s28
      %s29 = sphi 0, %s26
      %s30 = sphi 0, %s29
      %s46 = sphi 0, %s30
      %s50 = sphi 0, %s50
      %s52 = sphi 0, %s50
      %s53 = sphi 0, %s52
      %s67 = sphi 0, %s53
      %s71 = sphi 0, %s71
      %s73 = sphi 0, %s71
      %s74 = sphi 0, %s73
      %s88 = sphi 0, %s74
      %s92 = sphi 0, %s92
      %s94 = sphi 0, %s92
      %s95 = sphi 0, %s94
      %s109 = sphi 0, %s95
      %s113 = sphi 0, %s113
      %s115 = sphi 0, %s113
      %s116 = sphi 0, %s115
      %s130 = sphi 0, %s116
      %s134 = sphi 0, %s134
      %s136 = sphi 0, %s134
      %s137 = sphi 0, %s136
      %s151 = sphi 0, %s137
      %s155 = sphi 0, %s155
      %s157 = sphi 0, %s155
      %s158 = sphi 0, %s157
      %s172 = sphi 0, %s158
      %s178 = sphi 0, %s180
      %s181 = sphi 0, %s178
      %s182 = sphi 0, %s181
      %s198 = sphi 0, %s182
    $region4: #{_lambda_.13} parent=1 // loop_header_branch
      %19 = sbr.rel (%p17) target = $region8
    $region5: #{_lambda_.13} parent=1 // loop_body
      %s21 = ssub.s32 %s16, 1
      %s22 = ssub.s32 %s16, 2
      %s23 = sadd.s32 %s16, 1
      %s24 = ssub.s32 %s16, %s23
      %p25 = scmp.eq.s32.totalorder %s24, 0
      %s27 = sadd.s32 %s26, 1
      %s28 = scalar_select %p25, %s26, %s27
      %p31 = pneg %p25
      %p32 = scmp.eq.s32.totalorder %s16, 1
      %p33 = por %p31, %p32
      %p34 = scmp.ne.s32.totalorder %s26, %s29
      %p35 = scmp.eq.s32.totalorder %s16, 0
      %p36 = por %p34, %p35
      %p37 = scmp.ne.s32.totalorder %s26, %s29
      %p38 = scmp.eq.s32.totalorder %s21, 1
      %p39 = por %p37, %p38
      %p40 = scmp.ne.s32.totalorder %s29, %s30
      %p41 = scmp.eq.s32.totalorder %s21, 0
      %p42 = por %p40, %p41
      %p43 = scmp.ne.s32.totalorder %s29, %s30
      %p44 = scmp.eq.s32.totalorder %s22, 1
      %p45 = por %p43, %p44
      %p47 = scmp.ne.s32.totalorder %s30, %s46
      %p48 = scmp.eq.s32.totalorder %s22, 0
      %p49 = por %p47, %p48
      %s51 = sadd.s32 %s50, 1
      %p54 = scmp.eq.s32.totalorder %s16, 1
      %p55 = scmp.ne.s32.totalorder %s50, %s52
      %p56 = scmp.eq.s32.totalorder %s16, 0
      %p57 = por %p55, %p56
      %p58 = scmp.ne.s32.totalorder %s50, %s52
      %p59 = scmp.eq.s32.totalorder %s21, 1
      %p60 = por %p58, %p59
      %p61 = scmp.ne.s32.totalorder %s52, %s53
      %p62 = scmp.eq.s32.totalorder %s21, 0
      %p63 = por %p61, %p62
      %p64 = scmp.ne.s32.totalorder %s52, %s53
      %p65 = scmp.eq.s32.totalorder %s22, 1
      %p66 = por %p64, %p65
      %p68 = scmp.ne.s32.totalorder %s53, %s67
      %p69 = scmp.eq.s32.totalorder %s22, 0
      %p70 = por %p68, %p69
      %s72 = sadd.s32 %s71, 1
      %p75 = scmp.eq.s32.totalorder %s16, 1
      %p76 = scmp.ne.s32.totalorder %s71, %s73
      %p77 = scmp.eq.s32.totalorder %s16, 0
      %p78 = por %p76, %p77
      %p79 = scmp.ne.s32.totalorder %s71, %s73
      %p80 = scmp.eq.s32.totalorder %s21, 1
      %p81 = por %p79, %p80
      %p82 = scmp.ne.s32.totalorder %s73, %s74
      %p83 = scmp.eq.s32.totalorder %s21, 0
      %p84 = por %p82, %p83
      %p85 = scmp.ne.s32.totalorder %s73, %s74
      %p86 = scmp.eq.s32.totalorder %s22, 1
      %p87 = por %p85, %p86
      %p89 = scmp.ne.s32.totalorder %s74, %s88
      %p90 = scmp.eq.s32.totalorder %s22, 0
      %p91 = por %p89, %p90
      %s93 = sadd.s32 %s92, 1
      %p96 = scmp.eq.s32.totalorder %s16, 1
      %p97 = scmp.ne.s32.totalorder %s92, %s94
      %p98 = scmp.eq.s32.totalorder %s16, 0
      %p99 = por %p97, %p98
      %p100 = scmp.ne.s32.totalorder %s92, %s94
      %p101 = scmp.eq.s32.totalorder %s21, 1
      %p102 = por %p100, %p101
      %p103 = scmp.ne.s32.totalorder %s94, %s95
      %p104 = scmp.eq.s32.totalorder %s21, 0
      %p105 = por %p103, %p104
      %p106 = scmp.ne.s32.totalorder %s94, %s95
      %p107 = scmp.eq.s32.totalorder %s22, 1
      %p108 = por %p106, %p107
      %p110 = scmp.ne.s32.totalorder %s95, %s109
      %p111 = scmp.eq.s32.totalorder %s22, 0
      %p112 = por %p110, %p111
      %s114 = sadd.s32 %s113, 1
      %p117 = scmp.eq.s32.totalorder %s16, 1
      %p118 = scmp.ne.s32.totalorder %s113, %s115
      %p119 = scmp.eq.s32.totalorder %s16, 0
      %p120 = por %p118, %p119
      %p121 = scmp.ne.s32.totalorder %s113, %s115
      %p122 = scmp.eq.s32.totalorder %s21, 1
      %p123 = por %p121, %p122
      %p124 = scmp.ne.s32.totalorder %s115, %s116
      %p125 = scmp.eq.s32.totalorder %s21, 0
      %p126 = por %p124, %p125
      %p127 = scmp.ne.s32.totalorder %s115, %s116
      %p128 = scmp.eq.s32.totalorder %s22, 1
      %p129 = por %p127, %p128
      %p131 = scmp.ne.s32.totalorder %s116, %s130
      %p132 = scmp.eq.s32.totalorder %s22, 0
      %p133 = por %p131, %p132
      %s135 = sadd.s32 %s134, 1
      %p138 = scmp.eq.s32.totalorder %s16, 1
      %p139 = scmp.ne.s32.totalorder %s134, %s136
      %p140 = scmp.eq.s32.totalorder %s16, 0
      %p141 = por %p139, %p140
      %p142 = scmp.ne.s32.totalorder %s134, %s136
      %p143 = scmp.eq.s32.totalorder %s21, 1
      %p144 = por %p142, %p143
      %p145 = scmp.ne.s32.totalorder %s136, %s137
      %p146 = scmp.eq.s32.totalorder %s21, 0
      %p147 = por %p145, %p146
      %p148 = scmp.ne.s32.totalorder %s136, %s137
      %p149 = scmp.eq.s32.totalorder %s22, 1
      %p150 = por %p148, %p149
      %p152 = scmp.ne.s32.totalorder %s137, %s151
      %p153 = scmp.eq.s32.totalorder %s22, 0
      %p154 = por %p152, %p153
      %s156 = sadd.s32 %s155, 1
      %p159 = scmp.eq.s32.totalorder %s16, 1
      %p160 = scmp.ne.s32.totalorder %s155, %s157
      %p161 = scmp.eq.s32.totalorder %s16, 0
      %p162 = por %p160, %p161
      %p163 = scmp.ne.s32.totalorder %s155, %s157
      %p164 = scmp.eq.s32.totalorder %s21, 1
      %p165 = por %p163, %p164
      %p166 = scmp.ne.s32.totalorder %s157, %s158
      %p167 = scmp.eq.s32.totalorder %s21, 0
      %p168 = por %p166, %p167
      %p169 = scmp.ne.s32.totalorder %s157, %s158
      %p170 = scmp.eq.s32.totalorder %s22, 1
      %p171 = por %p169, %p170
      %p173 = scmp.ne.s32.totalorder %s158, %s172
      %p174 = scmp.eq.s32.totalorder %s22, 0
      %p175 = por %p173, %p174
      %s176 = ssub.s32 %s16, %s23
      %p177 = scmp.eq.s32.totalorder %s176, 0
      %s179 = sadd.s32 %s178, 1
      %s180 = scalar_select %p177, %s178, %s179
      %p183 = pneg %p177
      %p184 = scmp.eq.s32.totalorder %s16, 1
      %p185 = por %p183, %p184
      %p186 = scmp.ne.s32.totalorder %s178, %s181
      %p187 = scmp.eq.s32.totalorder %s16, 0
      %p188 = por %p186, %p187
      %p189 = scmp.ne.s32.totalorder %s178, %s181
      %p190 = scmp.eq.s32.totalorder %s21, 1
      %p191 = por %p189, %p190
      %p192 = scmp.ne.s32.totalorder %s181, %s182
      %p193 = scmp.eq.s32.totalorder %s21, 0
      %p194 = por %p192, %p193
      %p195 = scmp.ne.s32.totalorder %s181, %s182
      %p196 = scmp.eq.s32.totalorder %s22, 1
      %p197 = por %p195, %p196
      %p199 = scmp.ne.s32.totalorder %s182, %s198
      %p200 = scmp.eq.s32.totalorder %s22, 0
      %p201 = por %p199, %p200
      %p202 = scmp.le.s32.totalorder 1, %s16
      %p203 = scmp.lt.s32.totalorder %s16, 3
      %p204 = pnand %p202, %p203
      %p205 = pneg %p204
      // Predicated region
      $region9: #{_lambda_.13} parent=5 // pred_check
        _
      $region10: #{_lambda_.13} parent=5 // pred_check_branch
        %207 = sbr.rel (%p204) target = $region12
      $region11: #{_lambda_.13} parent=5 // pred_region
        %s208 = ssub.s32 %s16, 1
        // Predicated region
        $region13: #{_lambda_.13} parent=11 // pred_check
          %p209 = pneg %p63
        $region14: #{_lambda_.13} parent=11 // pred_check_branch
          %211 = sbr.rel (%p209) target = $region16
        $region15: #{_lambda_.13} parent=11 // pred_region
          _
        $region16: #{_lambda_.13} parent=11 // pred_fallthru
          _
        // Predicated region
        $region17: #{_lambda_.13} parent=11 // pred_check
          %p212 = pneg %p84
        $region18: #{_lambda_.13} parent=11 // pred_check_branch
          %214 = sbr.rel (%p212) target = $region20
        $region19: #{_lambda_.13} parent=11 // pred_region
          _
        $region20: #{_lambda_.13} parent=11 // pred_fallthru
          _
        // Predicated region
        $region21: #{_lambda_.13} parent=11 // pred_check
          %p215 = pneg %p105
        $region22: #{_lambda_.13} parent=11 // pred_check_branch
          %217 = sbr.rel (%p215) target = $region24
        $region23: #{_lambda_.13} parent=11 // pred_region
          _
        $region24: #{_lambda_.13} parent=11 // pred_fallthru
          _
        // Predicated region
        $region25: #{_lambda_.13} parent=11 // pred_check
          %p218 = pneg %p126
        $region26: #{_lambda_.13} parent=11 // pred_check_branch
          %220 = sbr.rel (%p218) target = $region28
        $region27: #{_lambda_.13} parent=11 // pred_region
          _
        $region28: #{_lambda_.13} parent=11 // pred_fallthru
          _
        // Predicated region
        $region29: #{_lambda_.13} parent=11 // pred_check
          %p221 = pneg %p147
        $region30: #{_lambda_.13} parent=11 // pred_check_branch
          %223 = sbr.rel (%p221) target = $region32
        $region31: #{_lambda_.13} parent=11 // pred_region
          _
        $region32: #{_lambda_.13} parent=11 // pred_fallthru
          _
        // Predicated region
        $region33: #{_lambda_.13} parent=11 // pred_check
          %p224 = pneg %p168
        $region34: #{_lambda_.13} parent=11 // pred_check_branch
          %226 = sbr.rel (%p224) target = $region36
        $region35: #{_lambda_.13} parent=11 // pred_region
          _
        $region36: #{_lambda_.13} parent=11 // pred_fallthru
          _
      $region12: #{_lambda_.13} parent=5 // pred_fallthru
        _
      %p227 = scmp.lt.s32.totalorder %s16, 2
      // Predicated region
      $region37: #{_lambda_.13} parent=5 // pred_check
        %p228 = pneg %p227
      $region38: #{_lambda_.13} parent=5 // pred_check_branch
        %230 = sbr.rel (%p228) target = $region40
      $region39: #{_lambda_.13} parent=5 // pred_region
        // Predicated region
        $region41: #{_lambda_.13} parent=39 // pred_check
          %p231 = pneg %p36
        $region42: #{_lambda_.13} parent=39 // pred_check_branch
          %233 = sbr.rel (%p231) target = $region44
        $region43: #{_lambda_.13} parent=39 // pred_region
          %p234 = scmp.lt.s32.totalorder %s16, 1
          %s235 = scalar_select %p234, %s16, 1
          %s236 = smul.addr %s235, 2
          %s237 = smul.addr %s236, 8
          %s238 = scalar_lea.vmem %s0, %s237
        $region44: #{_lambda_.13} parent=39 // pred_fallthru
          _
      $region40: #{_lambda_.13} parent=5 // pred_fallthru
        _
      %p239 = scmp.le.s32.totalorder 1, %s16
      %p240 = scmp.lt.s32.totalorder %s16, 3
      %p241 = pnand %p239, %p240
      %p242 = pneg %p241
      // Predicated region
      $region45: #{_lambda_.13} parent=5 // pred_check
        _
      $region46: #{_lambda_.13} parent=5 // pred_check_branch
        %244 = sbr.rel (%p241) target = $region48
      $region47: #{_lambda_.13} parent=5 // pred_region
        %s245 = ssub.s32 %s16, 1
        %p246 = scmp.lt.s32.totalorder %s21, 1
        %s247 = scalar_select %p246, %s21, 1
        %s248 = smul.addr %s247, 2
        %s249 = smul.addr %s248, 8
        %s250 = scalar_lea.vmem %s0, %s249
        %p251 = pneg %p42
        %p252 = pneg %p39
        %p253 = pneg %p63
        %p254 = pneg %p60
        %p255 = pneg %p84
        %p256 = pneg %p81
        %p257 = pneg %p105
        %p258 = pneg %p102
        %p259 = pneg %p126
        %p260 = pneg %p123
        %p261 = pneg %p147
        %p262 = pneg %p144
        %p263 = pneg %p168
        %p264 = pneg %p165
        %p265 = pneg %p194
        %p266 = pneg %p191
        %s267 = sand.u32 %s181, 1
        %s268 = scalar_lea.sflag [#allocation4], %s267
        %s269 = sand.u32 %s181, 1
        %s270 = smul.addr %s269, 16
        %s271 = scalar_lea.vmem [#allocation3], %s270
        %p272 = scmp.lt.s32.totalorder %s21, 1
        %s273 = scalar_select %p272, %s21, 1
        %s274 = smul.addr %s273, 2
        %s275 = smul.addr %s274, 8
        %s276 = scalar_lea.vmem %s0, %s275
        %v278 = vld [vmem:[%s276] sm:$0xff]
        %v279 = vld [vmem:[%s276 + $0x8] sm:$0xff]
        %vm280 = vcmask 254976
        %281 = vst.msk [vmem:[#allocation2] sm:$0x3] %vm280, 0.0
        %282 = vst.msk [vmem:[#allocation2 + $0x12] sm:$0x3] %vm280, 0.0
        %vm283 = vcmask 130048
        %284 = vst.msk [vmem:[#allocation2 + $0x2] sm:$0xff] %vm283, %v278
        %285 = vst.msk [vmem:[#allocation2 + $0xa] sm:$0xff] %vm283, %v279
        %v286 = vld [vmem:[#allocation2] sm:$0xff]
        %v287 = vld [vmem:[#allocation2 + $0x8] sm:$0xff]
        %v288 = vpack.c.bf16 %v287, %v286
        %v289 = vld [vmem:[%s1] sm:$0xf]
        %v290 = vld [vmem:[%s1 + $0x4] sm:$0xf]
        %v291 = vld [vmem:[#allocation2 + $0x1] sm:$0xff]
        %v292 = vld [vmem:[#allocation2 + $0x9] sm:$0xff]
        %v293 = vpack.c.bf16 %v292, %v291
        %s294 = scalar_lea.vmem %s1, 8
        %v295 = vld [vmem:[%s294] sm:$0xf]
        %v296 = vld [vmem:[%s294 + $0x4] sm:$0xf]
        %v299 = vunpack.c.l.b16 %v295
        %v300 = vunpack.c.l.b16 %v296
        %v301 = vpack.c.b16 %v300, %v299
        %v304 = vsel %vm283, %v293, 0
        %306 = vmatprep.subr.bf16.mxu0 0
        %307 = vmatpush1.bf16.msra.mxu0 %v301
        %308 = vmatprep.subr.bf16.mxu0 0
        %309 = vmatpush1.bf16.msra.mxu0 0
        %310 = vmatprep.subr.bf16.mxu0 0
        %311 = vmatpush1.bf16.msra.mxu0 0
        %312 = vmatprep.subr.bf16.mxu0 0
        %313 = vmatpush1.bf16.msra.mxu0 0
        %314 = vmatprep.subr.bf16.mxu0 0
        %315 = vmatpush1.bf16.msra.mxu0 0
        %316 = vmatprep.subr.bf16.mxu0 0
        %317 = vmatpush1.bf16.msra.mxu0 0
        %318 = vmatprep.subr.bf16.mxu0 0
        %319 = vmatpush1.bf16.msra.mxu0 0
        %320 = vmatprep.subr.bf16.mxu0 0
        %321 = vmatpush1.bf16.msra.mxu0 0
        %322 = vmatprep.subr.bf16.mxu0 0
        %323 = vmatpush1.bf16.msra.mxu0 0
        %324 = vmatprep.subr.bf16.mxu0 0
        %325 = vmatpush1.bf16.msra.mxu0 0
        %326 = vmatprep.subr.bf16.mxu0 0
        %327 = vmatpush1.bf16.msra.mxu0 0
        %328 = vmatprep.subr.bf16.mxu0 0
        %329 = vmatpush1.bf16.msra.mxu0 0
        %330 = vmatprep.subr.bf16.mxu0 0
        %331 = vmatpush1.bf16.msra.mxu0 0
        %332 = vmatprep.subr.bf16.mxu0 0
        %333 = vmatpush1.bf16.msra.mxu0 0
        %334 = vmatprep.subr.bf16.mxu0 0
        %335 = vmatpush1.bf16.msra.mxu0 0
        %336 = vmatprep.subr.bf16.mxu0 0
        %337 = vmatpush1.bf16.msra.mxu0 0
        %338 = vmatprep.mubr.bf16.mxu0 0
        %339 = vmatmul.mubr.bf16.gmra.mrb[0].mxu0 %v304
        %v340 = vpop.f32.mrb[0].mxu0
        %v341 = vadd.f32 0.0, %v340
        %v342 = vpop.f32.mrb[0].mxu0
        %v343 = vpop.f32.mrb[0].mxu0
        %v344 = vadd.f32 0.0, %v343
        %v345 = vpop.f32.mrb[0].mxu0
        %346 = vdwg.mxu0
        %v349 = vunpack.c.l.b16 %v289
        %v350 = vunpack.c.l.b16 %v290
        %v351 = vpack.c.b16 %v350, %v349
        %v354 = vsel %vm283, %v288, 0
        %356 = vmatprep.subr.bf16.mxu0 0
        %357 = vmatpush1.bf16.msra.mxu0 %v351
        %358 = vmatprep.subr.bf16.mxu0 0
        %359 = vmatpush1.bf16.msra.mxu0 0
        %360 = vmatprep.subr.bf16.mxu0 0
        %361 = vmatpush1.bf16.msra.mxu0 0
        %362 = vmatprep.subr.bf16.mxu0 0
        %363 = vmatpush1.bf16.msra.mxu0 0
        %364 = vmatprep.subr.bf16.mxu0 0
        %365 = vmatpush1.bf16.msra.mxu0 0
        %366 = vmatprep.subr.bf16.mxu0 0
        %367 = vmatpush1.bf16.msra.mxu0 0
        %368 = vmatprep.subr.bf16.mxu0 0
        %369 = vmatpush1.bf16.msra.mxu0 0
        %370 = vmatprep.subr.bf16.mxu0 0
        %371 = vmatpush1.bf16.msra.mxu0 0
        %372 = vmatprep.subr.bf16.mxu0 0
        %373 = vmatpush1.bf16.msra.mxu0 0
        %374 = vmatprep.subr.bf16.mxu0 0
        %375 = vmatpush1.bf16.msra.mxu0 0
        %376 = vmatprep.subr.bf16.mxu0 0
        %377 = vmatpush1.bf16.msra.mxu0 0
        %378 = vmatprep.subr.bf16.mxu0 0
        %379 = vmatpush1.bf16.msra.mxu0 0
        %380 = vmatprep.subr.bf16.mxu0 0
        %381 = vmatpush1.bf16.msra.mxu0 0
        %382 = vmatprep.subr.bf16.mxu0 0
        %383 = vmatpush1.bf16.msra.mxu0 0
        %384 = vmatprep.subr.bf16.mxu0 0
        %385 = vmatpush1.bf16.msra.mxu0 0
        %386 = vmatprep.subr.bf16.mxu0 0
        %387 = vmatpush1.bf16.msra.mxu0 0
        %388 = vmatprep.mubr.bf16.mxu0 0
        %389 = vmatmul.mubr.bf16.gmra.mrb[0].mxu0 %v354
        %v390 = vpop.f32.mrb[0].mxu0
        %v391 = vadd.f32 %v341, %v390
        %v392 = vpop.f32.mrb[0].mxu0
        %v393 = vpop.f32.mrb[0].mxu0
        %v394 = vadd.f32 %v344, %v393
        %v395 = vpop.f32.mrb[0].mxu0
        %396 = vdwg.mxu0
        %v397 = vld [vmem:[#allocation2 + $0x2] sm:$0xff]
        %v398 = vld [vmem:[#allocation2 + $0xa] sm:$0xff]
        %v399 = vpack.c.bf16 %v398, %v397
        %s400 = scalar_lea.vmem %s1, 16
        %v401 = vld [vmem:[%s400] sm:$0xf]
        %v402 = vld [vmem:[%s400 + $0x4] sm:$0xf]
        %v405 = vunpack.c.l.b16 %v401
        %v406 = vunpack.c.l.b16 %v402
        %v407 = vpack.c.b16 %v406, %v405
        %v410 = vsel %vm283, %v399, 0
        %412 = vmatprep.subr.bf16.mxu0 0
        %413 = vmatpush1.bf16.msra.mxu0 %v407
        %414 = vmatprep.subr.bf16.mxu0 0
        %415 = vmatpush1.bf16.msra.mxu0 0
        %416 = vmatprep.subr.bf16.mxu0 0
        %417 = vmatpush1.bf16.msra.mxu0 0
        %418 = vmatprep.subr.bf16.mxu0 0
        %419 = vmatpush1.bf16.msra.mxu0 0
        %420 = vmatprep.subr.bf16.mxu0 0
        %421 = vmatpush1.bf16.msra.mxu0 0
        %422 = vmatprep.subr.bf16.mxu0 0
        %423 = vmatpush1.bf16.msra.mxu0 0
        %424 = vmatprep.subr.bf16.mxu0 0
        %425 = vmatpush1.bf16.msra.mxu0 0
        %426 = vmatprep.subr.bf16.mxu0 0
        %427 = vmatpush1.bf16.msra.mxu0 0
        %428 = vmatprep.subr.bf16.mxu0 0
        %429 = vmatpush1.bf16.msra.mxu0 0
        %430 = vmatprep.subr.bf16.mxu0 0
        %431 = vmatpush1.bf16.msra.mxu0 0
        %432 = vmatprep.subr.bf16.mxu0 0
        %433 = vmatpush1.bf16.msra.mxu0 0
        %434 = vmatprep.subr.bf16.mxu0 0
        %435 = vmatpush1.bf16.msra.mxu0 0
        %436 = vmatprep.subr.bf16.mxu0 0
        %437 = vmatpush1.bf16.msra.mxu0 0
        %438 = vmatprep.subr.bf16.mxu0 0
        %439 = vmatpush1.bf16.msra.mxu0 0
        %440 = vmatprep.subr.bf16.mxu0 0
        %441 = vmatpush1.bf16.msra.mxu0 0
        %442 = vmatprep.subr.bf16.mxu0 0
        %443 = vmatpush1.bf16.msra.mxu0 0
        %444 = vmatprep.mubr.bf16.mxu0 0
        %445 = vmatmul.mubr.bf16.gmra.mrb[0].mxu0 %v410
        %v446 = vpop.f32.mrb[0].mxu0
        %v447 = vadd.f32 0.0, %v446
        %v448 = vpop.f32.mrb[0].mxu0
        %v449 = vpop.f32.mrb[0].mxu0
        %v450 = vadd.f32 0.0, %v449
        %v451 = vpop.f32.mrb[0].mxu0
        %452 = vdwg.mxu0
        %v453 = vadd.f32 %v391, %v447
        %v454 = vadd.f32 %v394, %v450
        %v455 = vld [vmem:[#allocation2 + $0x3] sm:$0xff]
        %v456 = vld [vmem:[#allocation2 + $0xb] sm:$0xff]
        %v457 = vpack.c.bf16 %v456, %v455
        %s458 = scalar_lea.vmem %s1, 24
        %v459 = vld [vmem:[%s458] sm:$0xf]
        %v460 = vld [vmem:[%s458 + $0x4] sm:$0xf]
        %v463 = vunpack.c.l.b16 %v459
        %v464 = vunpack.c.l.b16 %v460
        %v465 = vpack.c.b16 %v464, %v463
        %v468 = vsel %vm283, %v457, 0
        %470 = vmatprep.subr.bf16.mxu0 0
        %471 = vmatpush1.bf16.msra.mxu0 %v465
        %472 = vmatprep.subr.bf16.mxu0 0
        %473 = vmatpush1.bf16.msra.mxu0 0
        %474 = vmatprep.subr.bf16.mxu0 0
        %475 = vmatpush1.bf16.msra.mxu0 0
        %476 = vmatprep.subr.bf16.mxu0 0
        %477 = vmatpush1.bf16.msra.mxu0 0
        %478 = vmatprep.subr.bf16.mxu0 0
        %479 = vmatpush1.bf16.msra.mxu0 0
        %480 = vmatprep.subr.bf16.mxu0 0
        %481 = vmatpush1.bf16.msra.mxu0 0
        %482 = vmatprep.subr.bf16.mxu0 0
        %483 = vmatpush1.bf16.msra.mxu0 0
        %484 = vmatprep.subr.bf16.mxu0 0
        %485 = vmatpush1.bf16.msra.mxu0 0
        %486 = vmatprep.subr.bf16.mxu0 0
        %487 = vmatpush1.bf16.msra.mxu0 0
        %488 = vmatprep.subr.bf16.mxu0 0
        %489 = vmatpush1.bf16.msra.mxu0 0
        %490 = vmatprep.subr.bf16.mxu0 0
        %491 = vmatpush1.bf16.msra.mxu0 0
        %492 = vmatprep.subr.bf16.mxu0 0
        %493 = vmatpush1.bf16.msra.mxu0 0
        %494 = vmatprep.subr.bf16.mxu0 0
        %495 = vmatpush1.bf16.msra.mxu0 0
        %496 = vmatprep.subr.bf16.mxu0 0
        %497 = vmatpush1.bf16.msra.mxu0 0
        %498 = vmatprep.subr.bf16.mxu0 0
        %499 = vmatpush1.bf16.msra.mxu0 0
        %500 = vmatprep.subr.bf16.mxu0 0
        %501 = vmatpush1.bf16.msra.mxu0 0
        %502 = vmatprep.mubr.bf16.mxu0 0
        %503 = vmatmul.mubr.bf16.gmra.mrb[0].mxu0 %v468
        %v504 = vpop.f32.mrb[0].mxu0
        %v505 = vadd.f32 0.0, %v504
        %v506 = vpop.f32.mrb[0].mxu0
        %v507 = vpop.f32.mrb[0].mxu0
        %v508 = vadd.f32 0.0, %v507
        %v509 = vpop.f32.mrb[0].mxu0
        %510 = vdwg.mxu0
        %v511 = vadd.f32 %v453, %v505
        %v512 = vadd.f32 %v454, %v508
        %v513 = vld [vmem:[#allocation2 + $0x4] sm:$0xff]
        %v514 = vld [vmem:[#allocation2 + $0xc] sm:$0xff]
        %v515 = vpack.c.bf16 %v514, %v513
        %s516 = scalar_lea.vmem %s1, 32
        %v517 = vld [vmem:[%s516] sm:$0xf]
        %v518 = vld [vmem:[%s516 + $0x4] sm:$0xf]
        %v521 = vunpack.c.l.b16 %v517
        %v522 = vunpack.c.l.b16 %v518
        %v523 = vpack.c.b16 %v522, %v521
        %v526 = vsel %vm283, %v515, 0
        %528 = vmatprep.subr.bf16.mxu0 0
        %529 = vmatpush1.bf16.msra.mxu0 %v523
        %530 = vmatprep.subr.bf16.mxu0 0
        %531 = vmatpush1.bf16.msra.mxu0 0
        %532 = vmatprep.subr.bf16.mxu0 0
        %533 = vmatpush1.bf16.msra.mxu0 0
        %534 = vmatprep.subr.bf16.mxu0 0
        %535 = vmatpush1.bf16.msra.mxu0 0
        %536 = vmatprep.subr.bf16.mxu0 0
        %537 = vmatpush1.bf16.msra.mxu0 0
        %538 = vmatprep.subr.bf16.mxu0 0
        %539 = vmatpush1.bf16.msra.mxu0 0
        %540 = vmatprep.subr.bf16.mxu0 0
        %541 = vmatpush1.bf16.msra.mxu0 0
        %542 = vmatprep.subr.bf16.mxu0 0
        %543 = vmatpush1.bf16.msra.mxu0 0
        %544 = vmatprep.subr.bf16.mxu0 0
        %545 = vmatpush1.bf16.msra.mxu0 0
        %546 = vmatprep.subr.bf16.mxu0 0
        %547 = vmatpush1.bf16.msra.mxu0 0
        %548 = vmatprep.subr.bf16.mxu0 0
        %549 = vmatpush1.bf16.msra.mxu0 0
        %550 = vmatprep.subr.bf16.mxu0 0
        %551 = vmatpush1.bf16.msra.mxu0 0
        %552 = vmatprep.subr.bf16.mxu0 0
        %553 = vmatpush1.bf16.msra.mxu0 0
        %554 = vmatprep.subr.bf16.mxu0 0
        %555 = vmatpush1.bf16.msra.mxu0 0
        %556 = vmatprep.subr.bf16.mxu0 0
        %557 = vmatpush1.bf16.msra.mxu0 0
        %558 = vmatprep.subr.bf16.mxu0 0
        %559 = vmatpush1.bf16.msra.mxu0 0
        %560 = vmatprep.mubr.bf16.mxu0 0
        %561 = vmatmul.mubr.bf16.gmra.mrb[0].mxu0 %v526
        %v562 = vpop.f32.mrb[0].mxu0
        %v563 = vadd.f32 0.0, %v562
        %v564 = vpop.f32.mrb[0].mxu0
        %v565 = vpop.f32.mrb[0].mxu0
        %v566 = vadd.f32 0.0, %v565
        %v567 = vpop.f32.mrb[0].mxu0
        %568 = vdwg.mxu0
        %v569 = vadd.f32 %v511, %v563
        %v570 = vadd.f32 %v512, %v566
        %v571 = vld [vmem:[%s2] sm:$0x1]
        %v573 = vlaneseq
        %v574 = vshrl.u32 %v573, 7
        %v575 = vsub.s32 0, %v574
        %v576 = vrot.slane %v571, %v575
        %v578 = vadd.f32 %v569, %v576
        %v579 = vadd.f32 %v570, %v576
        %v580 = vtanh.pop %v578
        %v581 = vtanh.pop %v579
        %vm582 = vcmask 261120
        %583 = vst.msk [vmem:[#allocation2 + $0x2] sm:$0xff] %vm582, %v580
        %584 = vst.msk [vmem:[#allocation2 + $0xa] sm:$0xff] %vm582, %v581
        %v585 = vld [vmem:[#allocation2] sm:$0xff]
        %v586 = vld [vmem:[#allocation2 + $0x8] sm:$0xff]
        %v587 = vpack.c.bf16 %v586, %v585
        %v588 = vld [vmem:[%s3] sm:$0xf]
        %v589 = vld [vmem:[%s3 + $0x4] sm:$0xf]
        %v590 = vld [vmem:[%s3 + $0x8] sm:$0xf]
        %v591 = vld [vmem:[%s3 + $0xc] sm:$0xf]
        %v592 = vld [vmem:[#allocation2 + $0x1] sm:$0xff]
        %v593 = vld [vmem:[#allocation2 + $0x9] sm:$0xff]
        %v594 = vpack.c.bf16 %v593, %v592
        %s595 = scalar_lea.vmem %s3, 16
        %v596 = vld [vmem:[%s595] sm:$0xf]
        %v597 = vld [vmem:[%s595 + $0x4] sm:$0xf]
        %v598 = vld [vmem:[%s595 + $0x8] sm:$0xf]
        %v599 = vld [vmem:[%s595 + $0xc] sm:$0xf]
        %v604 = vunpack.c.l.b16 %v596
        %v605 = vunpack.c.l.b16 %v597
        %v606 = vunpack.c.l.b16 %v598
        %v607 = vunpack.c.l.b16 %v599
        %v608 = vpack.c.b16 %v605, %v604
        %v609 = vpack.c.b16 %v607, %v606
        %v613 = vsel %vm582, %v594, 0
        %615 = vmatprep.subr.bf16.mxu0 0
        %616 = vmatpush1.bf16.msra.mxu0 %v608
        %617 = vmatprep.subr.bf16.mxu0 0
        %618 = vmatpush1.bf16.msra.mxu0 %v609
        %619 = vmatprep.subr.bf16.mxu0 0
        %620 = vmatpush1.bf16.msra.mxu0 0
        %621 = vmatprep.subr.bf16.mxu0 0
        %622 = vmatpush1.bf16.msra.mxu0 0
        %623 = vmatprep.subr.bf16.mxu0 0
        %624 = vmatpush1.bf16.msra.mxu0 0
        %625 = vmatprep.subr.bf16.mxu0 0
        %626 = vmatpush1.bf16.msra.mxu0 0
        %627 = vmatprep.subr.bf16.mxu0 0
        %628 = vmatpush1.bf16.msra.mxu0 0
        %629 = vmatprep.subr.bf16.mxu0 0
        %630 = vmatpush1.bf16.msra.mxu0 0
        %631 = vmatprep.subr.bf16.mxu0 0
        %632 = vmatpush1.bf16.msra.mxu0 0
        %633 = vmatprep.subr.bf16.mxu0 0
        %634 = vmatpush1.bf16.msra.mxu0 0
        %635 = vmatprep.subr.bf16.mxu0 0
        %636 = vmatpush1.bf16.msra.mxu0 0
        %637 = vmatprep.subr.bf16.mxu0 0
        %638 = vmatpush1.bf16.msra.mxu0 0
        %639 = vmatprep.subr.bf16.mxu0 0
        %640 = vmatpush1.bf16.msra.mxu0 0
        %641 = vmatprep.subr.bf16.mxu0 0
        %642 = vmatpush1.bf16.msra.mxu0 0
        %643 = vmatprep.subr.bf16.mxu0 0
        %644 = vmatpush1.bf16.msra.mxu0 0
        %645 = vmatprep.subr.bf16.mxu0 0
        %646 = vmatpush1.bf16.msra.mxu0 0
        %647 = vmatprep.mubr.bf16.mxu0 0
        %648 = vmatmul.mubr.bf16.gmra.mrb[0].mxu0 %v613
        %v649 = vpop.f32.mrb[0].mxu0
        %v650 = vadd.f32 0.0, %v649
        %v651 = vpop.f32.mrb[0].mxu0
        %v652 = vpop.f32.mrb[0].mxu0
        %v653 = vadd.f32 0.0, %v652
        %v654 = vpop.f32.mrb[0].mxu0
        %655 = vdwg.mxu0
        %v660 = vunpack.c.l.b16 %v588
        %v661 = vunpack.c.l.b16 %v589
        %v662 = vunpack.c.l.b16 %v590
        %v663 = vunpack.c.l.b16 %v591
        %v664 = vpack.c.b16 %v661, %v660
        %v665 = vpack.c.b16 %v663, %v662
        %v669 = vsel %vm582, %v587, 0
        %671 = vmatprep.subr.bf16.mxu0 0
        %672 = vmatpush1.bf16.msra.mxu0 %v664
        %673 = vmatprep.subr.bf16.mxu0 0
        %674 = vmatpush1.bf16.msra.mxu0 %v665
        %675 = vmatprep.subr.bf16.mxu0 0
        %676 = vmatpush1.bf16.msra.mxu0 0
        %677 = vmatprep.subr.bf16.mxu0 0
        %678 = vmatpush1.bf16.msra.mxu0 0
        %679 = vmatprep.subr.bf16.mxu0 0
        %680 = vmatpush1.bf16.msra.mxu0 0
        %681 = vmatprep.subr.bf16.mxu0 0
        %682 = vmatpush1.bf16.msra.mxu0 0
        %683 = vmatprep.subr.bf16.mxu0 0
        %684 = vmatpush1.bf16.msra.mxu0 0
        %685 = vmatprep.subr.bf16.mxu0 0
        %686 = vmatpush1.bf16.msra.mxu0 0
        %687 = vmatprep.subr.bf16.mxu0 0
        %688 = vmatpush1.bf16.msra.mxu0 0
        %689 = vmatprep.subr.bf16.mxu0 0
        %690 = vmatpush1.bf16.msra.mxu0 0
        %691 = vmatprep.subr.bf16.mxu0 0
        %692 = vmatpush1.bf16.msra.mxu0 0
        %693 = vmatprep.subr.bf16.mxu0 0
        %694 = vmatpush1.bf16.msra.mxu0 0
        %695 = vmatprep.subr.bf16.mxu0 0
        %696 = vmatpush1.bf16.msra.mxu0 0
        %697 = vmatprep.subr.bf16.mxu0 0
        %698 = vmatpush1.bf16.msra.mxu0 0
        %699 = vmatprep.subr.bf16.mxu0 0
        %700 = vmatpush1.bf16.msra.mxu0 0
        %701 = vmatprep.subr.bf16.mxu0 0
        %702 = vmatpush1.bf16.msra.mxu0 0
        %703 = vmatprep.mubr.bf16.mxu0 0
        %704 = vmatmul.mubr.bf16.gmra.mrb[0].mxu0 %v669
        %v705 = vpop.f32.mrb[0].mxu0
        %v706 = vadd.f32 %v650, %v705
        %v707 = vpop.f32.mrb[0].mxu0
        %v708 = vpop.f32.mrb[0].mxu0
        %v709 = vadd.f32 %v653, %v708
        %v710 = vpop.f32.mrb[0].mxu0
        %711 = vdwg.mxu0
        %v712 = vld [vmem:[#allocation2 + $0x2] sm:$0xff]
        %v713 = vld [vmem:[#allocation2 + $0xa] sm:$0xff]
        %v714 = vpack.c.bf16 %v713, %v712
        %s715 = scalar_lea.vmem %s3, 32
        %v716 = vld [vmem:[%s715] sm:$0xf]
        %v717 = vld [vmem:[%s715 + $0x4] sm:$0xf]
        %v718 = vld [vmem:[%s715 + $0x8] sm:$0xf]
        %v719 = vld [vmem:[%s715 + $0xc] sm:$0xf]
        %v724 = vunpack.c.l.b16 %v716
        %v725 = vunpack.c.l.b16 %v717
        %v726 = vunpack.c.l.b16 %v718
        %v727 = vunpack.c.l.b16 %v719
        %v728 = vpack.c.b16 %v725, %v724
        %v729 = vpack.c.b16 %v727, %v726
        %v733 = vsel %vm582, %v714, 0
        %735 = vmatprep.subr.bf16.mxu0 0
        %736 = vmatpush1.bf16.msra.mxu0 %v728
        %737 = vmatprep.subr.bf16.mxu0 0
        %738 = vmatpush1.bf16.msra.mxu0 %v729
        %739 = vmatprep.subr.bf16.mxu0 0
        %740 = vmatpush1.bf16.msra.mxu0 0
        %741 = vmatprep.subr.bf16.mxu0 0
        %742 = vmatpush1.bf16.msra.mxu0 0
        %743 = vmatprep.subr.bf16.mxu0 0
        %744 = vmatpush1.bf16.msra.mxu0 0
        %745 = vmatprep.subr.bf16.mxu0 0
        %746 = vmatpush1.bf16.msra.mxu0 0
        %747 = vmatprep.subr.bf16.mxu0 0
        %748 = vmatpush1.bf16.msra.mxu0 0
        %749 = vmatprep.subr.bf16.mxu0 0
        %750 = vmatpush1.bf16.msra.mxu0 0
        %751 = vmatprep.subr.bf16.mxu0 0
        %752 = vmatpush1.bf16.msra.mxu0 0
        %753 = vmatprep.subr.bf16.mxu0 0
        %754 = vmatpush1.bf16.msra.mxu0 0
        %755 = vmatprep.subr.bf16.mxu0 0
        %756 = vmatpush1.bf16.msra.mxu0 0
        %757 = vmatprep.subr.bf16.mxu0 0
        %758 = vmatpush1.bf16.msra.mxu0 0
        %759 = vmatprep.subr.bf16.mxu0 0
        %760 = vmatpush1.bf16.msra.mxu0 0
        %761 = vmatprep.subr.bf16.mxu0 0
        %762 = vmatpush1.bf16.msra.mxu0 0
        %763 = vmatprep.subr.bf16.mxu0 0
        %764 = vmatpush1.bf16.msra.mxu0 0
        %765 = vmatprep.subr.bf16.mxu0 0
        %766 = vmatpush1.bf16.msra.mxu0 0
        %767 = vmatprep.mubr.bf16.mxu0 0
        %768 = vmatmul.mubr.bf16.gmra.mrb[0].mxu0 %v733
        %v769 = vpop.f32.mrb[0].mxu0
        %v770 = vadd.f32 0.0, %v769
        %v771 = vpop.f32.mrb[0].mxu0
        %v772 = vpop.f32.mrb[0].mxu0
        %v773 = vadd.f32 0.0, %v772
        %v774 = vpop.f32.mrb[0].mxu0
        %775 = vdwg.mxu0
        %v776 = vadd.f32 %v706, %v770
        %v777 = vadd.f32 %v709, %v773
        %v778 = vld [vmem:[#allocation2 + $0x3] sm:$0xff]
        %v779 = vld [vmem:[#allocation2 + $0xb] sm:$0xff]
        %v780 = vpack.c.bf16 %v779, %v778
        %s781 = scalar_lea.vmem %s3, 48
        %v782 = vld [vmem:[%s781] sm:$0xf]
        %v783 = vld [vmem:[%s781 + $0x4] sm:$0xf]
        %v784 = vld [vmem:[%s781 + $0x8] sm:$0xf]
        %v785 = vld [vmem:[%s781 + $0xc] sm:$0xf]
        %v790 = vunpack.c.l.b16 %v782
        %v791 = vunpack.c.l.b16 %v783
        %v792 = vunpack.c.l.b16 %v784
        %v793 = vunpack.c.l.b16 %v785
        %v794 = vpack.c.b16 %v791, %v790
        %v795 = vpack.c.b16 %v793, %v792
        %v799 = vsel %vm582, %v780, 0
        %801 = vmatprep.subr.bf16.mxu0 0
        %802 = vmatpush1.bf16.msra.mxu0 %v794
        %803 = vmatprep.subr.bf16.mxu0 0
        %804 = vmatpush1.bf16.msra.mxu0 %v795
        %805 = vmatprep.subr.bf16.mxu0 0
        %806 = vmatpush1.bf16.msra.mxu0 0
        %807 = vmatprep.subr.bf16.mxu0 0
        %808 = vmatpush1.bf16.msra.mxu0 0
        %809 = vmatprep.subr.bf16.mxu0 0
        %810 = vmatpush1.bf16.msra.mxu0 0
        %811 = vmatprep.subr.bf16.mxu0 0
        %812 = vmatpush1.bf16.msra.mxu0 0
        %813 = vmatprep.subr.bf16.mxu0 0
        %814 = vmatpush1.bf16.msra.mxu0 0
        %815 = vmatprep.subr.bf16.mxu0 0
        %816 = vmatpush1.bf16.msra.mxu0 0
        %817 = vmatprep.subr.bf16.mxu0 0
        %818 = vmatpush1.bf16.msra.mxu0 0
        %819 = vmatprep.subr.bf16.mxu0 0
        %820 = vmatpush1.bf16.msra.mxu0 0
        %821 = vmatprep.subr.bf16.mxu0 0
        %822 = vmatpush1.bf16.msra.mxu0 0
        %823 = vmatprep.subr.bf16.mxu0 0
        %824 = vmatpush1.bf16.msra.mxu0 0
        %825 = vmatprep.subr.bf16.mxu0 0
        %826 = vmatpush1.bf16.msra.mxu0 0
        %827 = vmatprep.subr.bf16.mxu0 0
        %828 = vmatpush1.bf16.msra.mxu0 0
        %829 = vmatprep.subr.bf16.mxu0 0
        %830 = vmatpush1.bf16.msra.mxu0 0
        %831 = vmatprep.subr.bf16.mxu0 0
        %832 = vmatpush1.bf16.msra.mxu0 0
        %833 = vmatprep.mubr.bf16.mxu0 0
        %834 = vmatmul.mubr.bf16.gmra.mrb[0].mxu0 %v799
        %v835 = vpop.f32.mrb[0].mxu0
        %v836 = vadd.f32 0.0, %v835
        %v837 = vpop.f32.mrb[0].mxu0
        %v838 = vpop.f32.mrb[0].mxu0
        %v839 = vadd.f32 0.0, %v838
        %v840 = vpop.f32.mrb[0].mxu0
        %841 = vdwg.mxu0
        %v842 = vadd.f32 %v776, %v836
        %v843 = vadd.f32 %v777, %v839
        %v844 = vld [vmem:[#allocation2 + $0x4] sm:$0xff]
        %v845 = vld [vmem:[#allocation2 + $0xc] sm:$0xff]
        %v846 = vpack.c.bf16 %v845, %v844
        %s847 = scalar_lea.vmem %s3, 64
        %v848 = vld [vmem:[%s847] sm:$0xf]
        %v849 = vld [vmem:[%s847 + $0x4] sm:$0xf]
        %v850 = vld [vmem:[%s847 + $0x8] sm:$0xf]
        %v851 = vld [vmem:[%s847 + $0xc] sm:$0xf]
        %v856 = vunpack.c.l.b16 %v848
        %v857 = vunpack.c.l.b16 %v849
        %v858 = vunpack.c.l.b16 %v850
        %v859 = vunpack.c.l.b16 %v851
        %v860 = vpack.c.b16 %v857, %v856
        %v861 = vpack.c.b16 %v859, %v858
        %v865 = vsel %vm582, %v846, 0
        %867 = vmatprep.subr.bf16.mxu0 0
        %868 = vmatpush1.bf16.msra.mxu0 %v860
        %869 = vmatprep.subr.bf16.mxu0 0
        %870 = vmatpush1.bf16.msra.mxu0 %v861
        %871 = vmatprep.subr.bf16.mxu0 0
        %872 = vmatpush1.bf16.msra.mxu0 0
        %873 = vmatprep.subr.bf16.mxu0 0
        %874 = vmatpush1.bf16.msra.mxu0 0
        %875 = vmatprep.subr.bf16.mxu0 0
        %876 = vmatpush1.bf16.msra.mxu0 0
        %877 = vmatprep.subr.bf16.mxu0 0
        %878 = vmatpush1.bf16.msra.mxu0 0
        %879 = vmatprep.subr.bf16.mxu0 0
        %880 = vmatpush1.bf16.msra.mxu0 0
        %881 = vmatprep.subr.bf16.mxu0 0
        %882 = vmatpush1.bf16.msra.mxu0 0
        %883 = vmatprep.subr.bf16.mxu0 0
        %884 = vmatpush1.bf16.msra.mxu0 0
        %885 = vmatprep.subr.bf16.mxu0 0
        %886 = vmatpush1.bf16.msra.mxu0 0
        %887 = vmatprep.subr.bf16.mxu0 0
        %888 = vmatpush1.bf16.msra.mxu0 0
        %889 = vmatprep.subr.bf16.mxu0 0
        %890 = vmatpush1.bf16.msra.mxu0 0
        %891 = vmatprep.subr.bf16.mxu0 0
        %892 = vmatpush1.bf16.msra.mxu0 0
        %893 = vmatprep.subr.bf16.mxu0 0
        %894 = vmatpush1.bf16.msra.mxu0 0
        %895 = vmatprep.subr.bf16.mxu0 0
        %896 = vmatpush1.bf16.msra.mxu0 0
        %897 = vmatprep.subr.bf16.mxu0 0
        %898 = vmatpush1.bf16.msra.mxu0 0
        %899 = vmatprep.mubr.bf16.mxu0 0
        %900 = vmatmul.mubr.bf16.gmra.mrb[0].mxu0 %v865
        %v901 = vpop.f32.mrb[0].mxu0
        %v902 = vadd.f32 0.0, %v901
        %v903 = vpop.f32.mrb[0].mxu0
        %v904 = vpop.f32.mrb[0].mxu0
        %v905 = vadd.f32 0.0, %v904
        %v906 = vpop.f32.mrb[0].mxu0
        %907 = vdwg.mxu0
        %v908 = vadd.f32 %v842, %v902
        %v909 = vadd.f32 %v843, %v905
        %v910 = vld [vmem:[%s4] sm:$0x1]
        %v912 = vlaneseq
        %v913 = vshrl.u32 %v912, 7
        %v914 = vsub.s32 0, %v913
        %v915 = vrot.slane %v910, %v914
        %v917 = vadd.f32 %v908, %v915
        %v918 = vadd.f32 %v909, %v915
        %v919 = vtanh.pop %v917
        %v920 = vtanh.pop %v918
        %921 = vst.msk [vmem:[#allocation2 + $0x2] sm:$0xff] %vm582, %v919
        %922 = vst.msk [vmem:[#allocation2 + $0xa] sm:$0xff] %vm582, %v920
        %v923 = vld [vmem:[#allocation2] sm:$0xff]
        %v924 = vld [vmem:[#allocation2 + $0x8] sm:$0xff]
        %v925 = vpack.c.bf16 %v924, %v923
        %v926 = vld [vmem:[%s5] sm:$0xf]
        %v927 = vld [vmem:[%s5 + $0x4] sm:$0xf]
        %v928 = vld [vmem:[%s5 + $0x8] sm:$0xf]
        %v929 = vld [vmem:[%s5 + $0xc] sm:$0xf]
        %v930 = vld [vmem:[#allocation2 + $0x1] sm:$0xff]
        %v931 = vld [vmem:[#allocation2 + $0x9] sm:$0xff]
        %v932 = vpack.c.bf16 %v931, %v930
        %s933 = scalar_lea.vmem %s5, 16
        %v934 = vld [vmem:[%s933] sm:$0xf]
        %v935 = vld [vmem:[%s933 + $0x4] sm:$0xf]
        %v936 = vld [vmem:[%s933 + $0x8] sm:$0xf]
        %v937 = vld [vmem:[%s933 + $0xc] sm:$0xf]
        %v942 = vunpack.c.l.b16 %v934
        %v943 = vunpack.c.l.b16 %v935
        %v944 = vunpack.c.l.b16 %v936
        %v945 = vunpack.c.l.b16 %v937
        %v946 = vpack.c.b16 %v943, %v942
        %v947 = vpack.c.b16 %v945, %v944
        %v951 = vsel %vm582, %v932, 0
        %953 = vmatprep.subr.bf16.mxu0 0
        %954 = vmatpush1.bf16.msra.mxu0 %v946
        %955 = vmatprep.subr.bf16.mxu0 0
        %956 = vmatpush1.bf16.msra.mxu0 %v947
        %957 = vmatprep.subr.bf16.mxu0 0
        %958 = vmatpush1.bf16.msra.mxu0 0
        %959 = vmatprep.subr.bf16.mxu0 0
        %960 = vmatpush1.bf16.msra.mxu0 0
        %961 = vmatprep.subr.bf16.mxu0 0
        %962 = vmatpush1.bf16.msra.mxu0 0
        %963 = vmatprep.subr.bf16.mxu0 0
        %964 = vmatpush1.bf16.msra.mxu0 0
        %965 = vmatprep.subr.bf16.mxu0 0
        %966 = vmatpush1.bf16.msra.mxu0 0
        %967 = vmatprep.subr.bf16.mxu0 0
        %968 = vmatpush1.bf16.msra.mxu0 0
        %969 = vmatprep.subr.bf16.mxu0 0
        %970 = vmatpush1.bf16.msra.mxu0 0
        %971 = vmatprep.subr.bf16.mxu0 0
        %972 = vmatpush1.bf16.msra.mxu0 0
        %973 = vmatprep.subr.bf16.mxu0 0
        %974 = vmatpush1.bf16.msra.mxu0 0
        %975 = vmatprep.subr.bf16.mxu0 0
        %976 = vmatpush1.bf16.msra.mxu0 0
        %977 = vmatprep.subr.bf16.mxu0 0
        %978 = vmatpush1.bf16.msra.mxu0 0
        %979 = vmatprep.subr.bf16.mxu0 0
        %980 = vmatpush1.bf16.msra.mxu0 0
        %981 = vmatprep.subr.bf16.mxu0 0
        %982 = vmatpush1.bf16.msra.mxu0 0
        %983 = vmatprep.subr.bf16.mxu0 0
        %984 = vmatpush1.bf16.msra.mxu0 0
        %985 = vmatprep.mubr.bf16.mxu0 0
        %986 = vmatmul.mubr.bf16.gmra.mrb[0].mxu0 %v951
        %v987 = vpop.f32.mrb[0].mxu0
        %v988 = vadd.f32 0.0, %v987
        %v989 = vpop.f32.mrb[0].mxu0
        %v990 = vpop.f32.mrb[0].mxu0
        %v991 = vadd.f32 0.0, %v990
        %v992 = vpop.f32.mrb[0].mxu0
        %993 = vdwg.mxu0
        %v998 = vunpack.c.l.b16 %v926
        %v999 = vunpack.c.l.b16 %v927
        %v1000 = vunpack.c.l.b16 %v928
        %v1001 = vunpack.c.l.b16 %v929
        %v1002 = vpack.c.b16 %v999, %v998
        %v1003 = vpack.c.b16 %v1001, %v1000
        %v1007 = vsel %vm582, %v925, 0
        %1009 = vmatprep.subr.bf16.mxu0 0
        %1010 = vmatpush1.bf16.msra.mxu0 %v1002
        %1011 = vmatprep.subr.bf16.mxu0 0
        %1012 = vmatpush1.bf16.msra.mxu0 %v1003
        %1013 = vmatprep.subr.bf16.mxu0 0
        %1014 = vmatpush1.bf16.msra.mxu0 0
        %1015 = vmatprep.subr.bf16.mxu0 0
        %1016 = vmatpush1.bf16.msra.mxu0 0
        %1017 = vmatprep.subr.bf16.mxu0 0
        %1018 = vmatpush1.bf16.msra.mxu0 0
        %1019 = vmatprep.subr.bf16.mxu0 0
        %1020 = vmatpush1.bf16.msra.mxu0 0
        %1021 = vmatprep.subr.bf16.mxu0 0
        %1022 = vmatpush1.bf16.msra.mxu0 0
        %1023 = vmatprep.subr.bf16.mxu0 0
        %1024 = vmatpush1.bf16.msra.mxu0 0
        %1025 = vmatprep.subr.bf16.mxu0 0
        %1026 = vmatpush1.bf16.msra.mxu0 0
        %1027 = vmatprep.subr.bf16.mxu0 0
        %1028 = vmatpush1.bf16.msra.mxu0 0
        %1029 = vmatprep.subr.bf16.mxu0 0
        %1030 = vmatpush1.bf16.msra.mxu0 0
        %1031 = vmatprep.subr.bf16.mxu0 0
        %1032 = vmatpush1.bf16.msra.mxu0 0
        %1033 = vmatprep.subr.bf16.mxu0 0
        %1034 = vmatpush1.bf16.msra.mxu0 0
        %1035 = vmatprep.subr.bf16.mxu0 0
        %1036 = vmatpush1.bf16.msra.mxu0 0
        %1037 = vmatprep.subr.bf16.mxu0 0
        %1038 = vmatpush1.bf16.msra.mxu0 0
        %1039 = vmatprep.subr.bf16.mxu0 0
        %1040 = vmatpush1.bf16.msra.mxu0 0
        %1041 = vmatprep.mubr.bf16.mxu0 0
        %1042 = vmatmul.mubr.bf16.gmra.mrb[0].mxu0 %v1007
        %v1043 = vpop.f32.mrb[0].mxu0
        %v1044 = vadd.f32 %v988, %v1043
        %v1045 = vpop.f32.mrb[0].mxu0
        %v1046 = vpop.f32.mrb[0].mxu0
        %v1047 = vadd.f32 %v991, %v1046
        %v1048 = vpop.f32.mrb[0].mxu0
        %1049 = vdwg.mxu0
        %v1050 = vld [vmem:[#allocation2 + $0x2] sm:$0xff]
        %v1051 = vld [vmem:[#allocation2 + $0xa] sm:$0xff]
        %v1052 = vpack.c.bf16 %v1051, %v1050
        %s1053 = scalar_lea.vmem %s5, 32
        %v1054 = vld [vmem:[%s1053] sm:$0xf]
        %v1055 = vld [vmem:[%s1053 + $0x4] sm:$0xf]
        %v1056 = vld [vmem:[%s1053 + $0x8] sm:$0xf]
        %v1057 = vld [vmem:[%s1053 + $0xc] sm:$0xf]
        %v1062 = vunpack.c.l.b16 %v1054
        %v1063 = vunpack.c.l.b16 %v1055
        %v1064 = vunpack.c.l.b16 %v1056
        %v1065 = vunpack.c.l.b16 %v1057
        %v1066 = vpack.c.b16 %v1063, %v1062
        %v1067 = vpack.c.b16 %v1065, %v1064
        %v1071 = vsel %vm582, %v1052, 0
        %1073 = vmatprep.subr.bf16.mxu0 0
        %1074 = vmatpush1.bf16.msra.mxu0 %v1066
        %1075 = vmatprep.subr.bf16.mxu0 0
        %1076 = vmatpush1.bf16.msra.mxu0 %v1067
        %1077 = vmatprep.subr.bf16.mxu0 0
        %1078 = vmatpush1.bf16.msra.mxu0 0
        %1079 = vmatprep.subr.bf16.mxu0 0
        %1080 = vmatpush1.bf16.msra.mxu0 0
        %1081 = vmatprep.subr.bf16.mxu0 0
        %1082 = vmatpush1.bf16.msra.mxu0 0
        %1083 = vmatprep.subr.bf16.mxu0 0
        %1084 = vmatpush1.bf16.msra.mxu0 0
        %1085 = vmatprep.subr.bf16.mxu0 0
        %1086 = vmatpush1.bf16.msra.mxu0 0
        %1087 = vmatprep.subr.bf16.mxu0 0
        %1088 = vmatpush1.bf16.msra.mxu0 0
        %1089 = vmatprep.subr.bf16.mxu0 0
        %1090 = vmatpush1.bf16.msra.mxu0 0
        %1091 = vmatprep.subr.bf16.mxu0 0
        %1092 = vmatpush1.bf16.msra.mxu0 0
        %1093 = vmatprep.subr.bf16.mxu0 0
        %1094 = vmatpush1.bf16.msra.mxu0 0
        %1095 = vmatprep.subr.bf16.mxu0 0
        %1096 = vmatpush1.bf16.msra.mxu0 0
        %1097 = vmatprep.subr.bf16.mxu0 0
        %1098 = vmatpush1.bf16.msra.mxu0 0
        %1099 = vmatprep.subr.bf16.mxu0 0
        %1100 = vmatpush1.bf16.msra.mxu0 0
        %1101 = vmatprep.subr.bf16.mxu0 0
        %1102 = vmatpush1.bf16.msra.mxu0 0
        %1103 = vmatprep.subr.bf16.mxu0 0
        %1104 = vmatpush1.bf16.msra.mxu0 0
        %1105 = vmatprep.mubr.bf16.mxu0 0
        %1106 = vmatmul.mubr.bf16.gmra.mrb[0].mxu0 %v1071
        %v1107 = vpop.f32.mrb[0].mxu0
        %v1108 = vadd.f32 0.0, %v1107
        %v1109 = vpop.f32.mrb[0].mxu0
        %v1110 = vpop.f32.mrb[0].mxu0
        %v1111 = vadd.f32 0.0, %v1110
        %v1112 = vpop.f32.mrb[0].mxu0
        %1113 = vdwg.mxu0
        %v1114 = vadd.f32 %v1044, %v1108
        %v1115 = vadd.f32 %v1047, %v1111
        %v1116 = vld [vmem:[#allocation2 + $0x3] sm:$0xff]
        %v1117 = vld [vmem:[#allocation2 + $0xb] sm:$0xff]
        %v1118 = vpack.c.bf16 %v1117, %v1116
        %s1119 = scalar_lea.vmem %s5, 48
        %v1120 = vld [vmem:[%s1119] sm:$0xf]
        %v1121 = vld [vmem:[%s1119 + $0x4] sm:$0xf]
        %v1122 = vld [vmem:[%s1119 + $0x8] sm:$0xf]
        %v1123 = vld [vmem:[%s1119 + $0xc] sm:$0xf]
        %v1128 = vunpack.c.l.b16 %v1120
        %v1129 = vunpack.c.l.b16 %v1121
        %v1130 = vunpack.c.l.b16 %v1122
        %v1131 = vunpack.c.l.b16 %v1123
        %v1132 = vpack.c.b16 %v1129, %v1128
        %v1133 = vpack.c.b16 %v1131, %v1130
        %v1137 = vsel %vm582, %v1118, 0
        %1139 = vmatprep.subr.bf16.mxu0 0
        %1140 = vmatpush1.bf16.msra.mxu0 %v1132
        %1141 = vmatprep.subr.bf16.mxu0 0
        %1142 = vmatpush1.bf16.msra.mxu0 %v1133
        %1143 = vmatprep.subr.bf16.mxu0 0
        %1144 = vmatpush1.bf16.msra.mxu0 0
        %1145 = vmatprep.subr.bf16.mxu0 0
        %1146 = vmatpush1.bf16.msra.mxu0 0
        %1147 = vmatprep.subr.bf16.mxu0 0
        %1148 = vmatpush1.bf16.msra.mxu0 0
        %1149 = vmatprep.subr.bf16.mxu0 0
        %1150 = vmatpush1.bf16.msra.mxu0 0
        %1151 = vmatprep.subr.bf16.mxu0 0
        %1152 = vmatpush1.bf16.msra.mxu0 0
        %1153 = vmatprep.subr.bf16.mxu0 0
        %1154 = vmatpush1.bf16.msra.mxu0 0
        %1155 = vmatprep.subr.bf16.mxu0 0
        %1156 = vmatpush1.bf16.msra.mxu0 0
        %1157 = vmatprep.subr.bf16.mxu0 0
        %1158 = vmatpush1.bf16.msra.mxu0 0
        %1159 = vmatprep.subr.bf16.mxu0 0
        %1160 = vmatpush1.bf16.msra.mxu0 0
        %1161 = vmatprep.subr.bf16.mxu0 0
        %1162 = vmatpush1.bf16.msra.mxu0 0
        %1163 = vmatprep.subr.bf16.mxu0 0
        %1164 = vmatpush1.bf16.msra.mxu0 0
        %1165 = vmatprep.subr.bf16.mxu0 0
        %1166 = vmatpush1.bf16.msra.mxu0 0
        %1167 = vmatprep.subr.bf16.mxu0 0
        %1168 = vmatpush1.bf16.msra.mxu0 0
        %1169 = vmatprep.subr.bf16.mxu0 0
        %1170 = vmatpush1.bf16.msra.mxu0 0
        %1171 = vmatprep.mubr.bf16.mxu0 0
        %1172 = vmatmul.mubr.bf16.gmra.mrb[0].mxu0 %v1137
        %v1173 = vpop.f32.mrb[0].mxu0
        %v1174 = vadd.f32 0.0, %v1173
        %v1175 = vpop.f32.mrb[0].mxu0
        %v1176 = vpop.f32.mrb[0].mxu0
        %v1177 = vadd.f32 0.0, %v1176
        %v1178 = vpop.f32.mrb[0].mxu0
        %1179 = vdwg.mxu0
        %v1180 = vadd.f32 %v1114, %v1174
        %v1181 = vadd.f32 %v1115, %v1177
        %v1182 = vld [vmem:[#allocation2 + $0x4] sm:$0xff]
        %v1183 = vld [vmem:[#allocation2 + $0xc] sm:$0xff]
        %v1184 = vpack.c.bf16 %v1183, %v1182
        %s1185 = scalar_lea.vmem %s5, 64
        %v1186 = vld [vmem:[%s1185] sm:$0xf]
        %v1187 = vld [vmem:[%s1185 + $0x4] sm:$0xf]
        %v1188 = vld [vmem:[%s1185 + $0x8] sm:$0xf]
        %v1189 = vld [vmem:[%s1185 + $0xc] sm:$0xf]
        %v1194 = vunpack.c.l.b16 %v1186
        %v1195 = vunpack.c.l.b16 %v1187
        %v1196 = vunpack.c.l.b16 %v1188
        %v1197 = vunpack.c.l.b16 %v1189
        %v1198 = vpack.c.b16 %v1195, %v1194
        %v1199 = vpack.c.b16 %v1197, %v1196
        %v1203 = vsel %vm582, %v1184, 0
        %1205 = vmatprep.subr.bf16.mxu0 0
        %1206 = vmatpush1.bf16.msra.mxu0 %v1198
        %1207 = vmatprep.subr.bf16.mxu0 0
        %1208 = vmatpush1.bf16.msra.mxu0 %v1199
        %1209 = vmatprep.subr.bf16.mxu0 0
        %1210 = vmatpush1.bf16.msra.mxu0 0
        %1211 = vmatprep.subr.bf16.mxu0 0
        %1212 = vmatpush1.bf16.msra.mxu0 0
        %1213 = vmatprep.subr.bf16.mxu0 0
        %1214 = vmatpush1.bf16.msra.mxu0 0
        %1215 = vmatprep.subr.bf16.mxu0 0
        %1216 = vmatpush1.bf16.msra.mxu0 0
        %1217 = vmatprep.subr.bf16.mxu0 0
        %1218 = vmatpush1.bf16.msra.mxu0 0
        %1219 = vmatprep.subr.bf16.mxu0 0
        %1220 = vmatpush1.bf16.msra.mxu0 0
        %1221 = vmatprep.subr.bf16.mxu0 0
        %1222 = vmatpush1.bf16.msra.mxu0 0
        %1223 = vmatprep.subr.bf16.mxu0 0
        %1224 = vmatpush1.bf16.msra.mxu0 0
        %1225 = vmatprep.subr.bf16.mxu0 0
        %1226 = vmatpush1.bf16.msra.mxu0 0
        %1227 = vmatprep.subr.bf16.mxu0 0
        %1228 = vmatpush1.bf16.msra.mxu0 0
        %1229 = vmatprep.subr.bf16.mxu0 0
        %1230 = vmatpush1.bf16.msra.mxu0 0
        %1231 = vmatprep.subr.bf16.mxu0 0
        %1232 = vmatpush1.bf16.msra.mxu0 0
        %1233 = vmatprep.subr.bf16.mxu0 0
        %1234 = vmatpush1.bf16.msra.mxu0 0
        %1235 = vmatprep.subr.bf16.mxu0 0
        %1236 = vmatpush1.bf16.msra.mxu0 0
        %1237 = vmatprep.mubr.bf16.mxu0 0
        %1238 = vmatmul.mubr.bf16.gmra.mrb[0].mxu0 %v1203
        %v1239 = vpop.f32.mrb[0].mxu0
        %v1240 = vadd.f32 0.0, %v1239
        %v1241 = vpop.f32.mrb[0].mxu0
        %v1242 = vpop.f32.mrb[0].mxu0
        %v1243 = vadd.f32 0.0, %v1242
        %v1244 = vpop.f32.mrb[0].mxu0
        %1245 = vdwg.mxu0
        %v1246 = vadd.f32 %v1180, %v1240
        %v1247 = vadd.f32 %v1181, %v1243
        %v1248 = vld [vmem:[%s6] sm:$0x1]
        %v1250 = vlaneseq
        %v1251 = vshrl.u32 %v1250, 7
        %v1252 = vsub.s32 0, %v1251
        %v1253 = vrot.slane %v1248, %v1252
        %v1255 = vadd.f32 %v1246, %v1253
        %v1256 = vadd.f32 %v1247, %v1253
        %v1257 = vadd.f32 %v1255, %v278
        %v1258 = vadd.f32 %v1256, %v279
        %1259 = vst.msk [vmem:[%s271] sm:$0xff] %vm283, %v1257
        %1260 = vst.msk [vmem:[%s271 + $0x8] sm:$0xff] %vm283, %v1258
        %s1261 = sand.u32 %s181, 1
        %s1262 = scalar_lea.sflag [#allocation4], %s1261
        %s1263 = sand.u32 %s181, 1
        %s1264 = smul.addr %s1263, 16
        %s1265 = scalar_lea.vmem [#allocation3], %s1264
        // Predicated region
        $region49: #{_lambda_.13} parent=47 // pred_check
          %p1266 = pneg %p191
        $region50: #{_lambda_.13} parent=47 // pred_check_branch
          %1268 = sbr.rel (%p1266) target = $region52
        $region51: #{_lambda_.13} parent=47 // pred_region
          %s1270 = ssub.s32 256, 256
          %1271 = vsyncadd %s1262, %s1270
          %s1272 = smul.addr %s21, 2
          %s1273 = smul.addr %s1272, 128
          %s1274 = scalar_lea.hbm %s7, %s1273
          %s1275 = sshll.u32 %s1265, 4
          %s1276 = int_to_ptr.vmem [resolvable:$true] %s1275
          %1281 = dma.vmem_to_hbm [thread:$0]  %s1276, 256, %s1274, %s1262, 128, 128, 8
        $region52: #{_lambda_.13} parent=47 // pred_fallthru
          _
      $region48: #{_lambda_.13} parent=5 // pred_fallthru
        _
      %p1282 = scmp.le.s32.totalorder 2, %s16
      // Predicated region
      $region53: #{_lambda_.13} parent=5 // pred_check
        %p1283 = pneg %p1282
      $region54: #{_lambda_.13} parent=5 // pred_check_branch
        %1285 = sbr.rel (%p1283) target = $region56
      $region55: #{_lambda_.13} parent=5 // pred_region
        %s1286 = ssub.s32 %s16, 2
        // Predicated region
        $region57: #{_lambda_.13} parent=55 // pred_check
          %p1287 = pneg %p197
        $region58: #{_lambda_.13} parent=55 // pred_check_branch
          %1289 = sbr.rel (%p1287) target = $region60
        $region59: #{_lambda_.13} parent=55 // pred_region
          %s1290 = sand.u32 %s182, 1
          %s1291 = scalar_lea.sflag [#allocation4], %s1290
          %s1292 = sand.u32 %s182, 1
          %s1293 = smul.addr %s1292, 16
          %s1294 = scalar_lea.vmem [#allocation3], %s1293
          %1295 = dma.done %s1291, 256
        $region60: #{_lambda_.13} parent=55 // pred_fallthru
          _
      $region56: #{_lambda_.13} parent=5 // pred_fallthru
        _
    $region6: #{_lambda_.13} parent=1 // loop_footer
      %s20 = sadd.s32 1, %s16
    $region7: #{_lambda_.13} parent=1 // loop_footer_branch
      %15 = sbr.rel target = $region3
    $region8: #{_lambda_.13} parent=1 // loop_exit
      _
    %1296 = vsyncpa [#allocation4], 1
    %s1297 = scalar_lea.sflag [#allocation4], 1
    %1298 = vsyncpa %s1297, 1

</llo_original>
